<compile_context>
chip_gen: v5e
topology: v5e:2x2
jax: 0.10.0
libtpu: 0.0.40
codegen_flags: <defaults>
</compile_context>

<pallas_src>
import jax
import jax.numpy as jnp
from jax.experimental import pallas as pl
from jax.experimental.pallas import tpu as pltpu

IMG_FEAT = 64 * 64   # 4096, fixed by the module definition
H1, H2 = 512, 256


def _disc_kernel(img_ref, lab_ref, w1i_ref, w1l_ref, b1_ref,
                 w2_ref, b2_ref, w3_ref, b3_ref, o_ref):
    # Layer 1: bf16 into the MXU, f32 accumulate.  Image part (K=4096) dominates;
    # the tiny label part is a second MXU pass instead of a wrapper-side concat.
    h1 = (jnp.dot(img_ref[...].astype(jnp.bfloat16), w1i_ref[...],
                  preferred_element_type=jnp.float32)
          + jnp.dot(lab_ref[...].astype(jnp.bfloat16), w1l_ref[...],
                    preferred_element_type=jnp.float32)
          + b1_ref[...])
    h1 = jnp.where(h1 > 0, h1, 0.2 * h1)                       # LeakyReLU(0.2)

    # Layer 2: (B,512) @ (512,256), bf16 MXU, f32 accumulate.
    h2 = jnp.dot(h1.astype(jnp.bfloat16), w2_ref[...],
                 preferred_element_type=jnp.float32) + b2_ref[...]
    h2 = jnp.where(h2 > 0, h2, 0.2 * h2)                       # LeakyReLU(0.2)

    # Layer 3: (256 -> 1) as a VPU multiply + lane reduce (no 1-lane MXU pass).
    h3 = jnp.sum(h2 * w3_ref[...], axis=-1, keepdims=True) + b3_ref[...]

    # Sigmoid: exp on the EUP, divide as an approximate reciprocal (EUP slot).
    o_ref[...] = pl.reciprocal(1.0 + jnp.exp(-h3), approx=True)


def discriminator_forward(images, labels, params):
    """images: (B, 1, 64, 64) float32, labels: (B, label_dim) float32."""
    w1_img, w1_lab, b1, w2, b2, w3, b3 = params
    B = images.shape[0]

    # Row-major flatten, same as torch .view.  No padding, no concat.
    img2d = images.reshape(B, IMG_FEAT)

    vmem = pl.BlockSpec(memory_space=pltpu.MemorySpace.VMEM)   # whole array in VMEM

    return pl.pallas_call(
        _disc_kernel,
        out_shape=jax.ShapeDtypeStruct((B, 1), jnp.float32),
        in_specs=[vmem] * 9,
        out_specs=vmem,
        compiler_params=pltpu.CompilerParams(
            vmem_limit_bytes=32 << 20,    # plenty of headroom; fits v5e/v6e/v7x
        ),
    )(img2d, labels, w1_img, w1_lab, b1, w2, b2, w3, b3)


def init_params(key, label_dim):
    """PyTorch nn.Linear default init (U(-1/sqrt(fan_in), +)); matmul weights bf16."""
    def linear(k, fan_in, fan_out):
        kw, kb = jax.random.split(k)
        bound = 1.0 / jnp.sqrt(jnp.float32(fan_in))
        w = jax.random.uniform(kw, (fan_in, fan_out), jnp.float32, -bound, bound)
        b = jax.random.uniform(kb, (1, fan_out), jnp.float32, -bound, bound)
        return w, b

    k1, k2, k3 = jax.random.split(key, 3)
    w1, b1 = linear(k1, IMG_FEAT + label_dim, H1)
    w2, b2 = linear(k2, H1, H2)
    w3, b3 = linear(k3, H2, 1)

    w1_img = w1[:IMG_FEAT].astype(jnp.bfloat16)     # (4096, 512)
    w1_lab = w1[IMG_FEAT:].astype(jnp.bfloat16)     # (label_dim, 512)
    w2 = w2.astype(jnp.bfloat16)                    # (512, 256)
    w3_row = w3.T                                   # (1, 256) f32 — used on the VPU
    return (w1_img, w1_lab, b1, w2, b2, w3_row, b3)


def reference_forward(images, labels, params):
    """Pure-JAX reference with the same bf16-weight / f32-accumulate numerics."""
    w1_img, w1_lab, b1, w2, b2, w3, b3 = params
    B = images.shape[0]
    img = images.reshape(B, IMG_FEAT).astype(jnp.bfloat16)
    lab = labels.astype(jnp.bfloat16)
    h1 = (jnp.dot(img, w1_img, preferred_element_type=jnp.float32)
          + jnp.dot(lab, w1_lab, preferred_element_type=jnp.float32) + b1)
    h1 = jnp.where(h1 > 0, h1, 0.2 * h1)
    h2 = jnp.dot(h1.astype(jnp.bfloat16), w2, preferred_element_type=jnp.float32) + b2
    h2 = jnp.where(h2 > 0, h2, 0.2 * h2)
    h3 = jnp.sum(h2 * w3, axis=-1, keepdims=True) + b3
    return jax.nn.sigmoid(h3)


def reference_forward_f32(images, labels, params):
    """Full-f32 reference of the original PyTorch module semantics (sanity check)."""
    w1_img, w1_lab, b1, w2, b2, w3, b3 = params
    B = images.shape[0]
    x = jnp.concatenate([images.reshape(B, -1), labels], axis=1)
    w1 = jnp.concatenate(
        [w1_img.astype(jnp.float32), w1_lab.astype(jnp.float32)], axis=0)
    h = x @ w1 + b1
    h = jnp.where(h > 0, h, 0.2 * h)
    h = h @ w2.astype(jnp.float32) + b2
    h = jnp.where(h > 0, h, 0.2 * h)
    h = h @ w3.T + b3
    return jax.nn.sigmoid(h)


if __name__ == "__main__":
    B = 4
    LABEL_DIM = 10

    key = jax.random.PRNGKey(0)
    k_img, k_lab, k_par = jax.random.split(key, 3)

    images = jax.random.normal(k_img, (B, 1, 64, 64), jnp.float32)
    labels = jax.random.normal(k_lab, (B, LABEL_DIM), jnp.float32)
    params = init_params(k_par, LABEL_DIM)

    out = jax.block_until_ready(discriminator_forward(images, labels, params))

    ref = reference_forward(images, labels, params)
    ref32 = reference_forward_f32(images, labels, params)
    assert out.shape == (B, 1)
    assert jnp.allclose(out, ref, atol=5e-3, rtol=5e-3), (out, ref)
    assert jnp.allclose(out, ref32, atol=5e-2), (out, ref32)

    print("KERNEL_OK")
</pallas_src>

<mosaic_0001>
module attributes {stable_mosaic.version = 11 : i64} {
  func.func @_disc_kernel(%arg0: memref<4x4096xf32, #tpu.memory_space<vmem>>, %arg1: memref<4x10xf32, #tpu.memory_space<vmem>>, %arg2: memref<4096x512xbf16, #tpu.memory_space<vmem>>, %arg3: memref<10x512xbf16, #tpu.memory_space<vmem>>, %arg4: memref<1x512xf32, #tpu.memory_space<vmem>>, %arg5: memref<512x256xbf16, #tpu.memory_space<vmem>>, %arg6: memref<1x256xf32, #tpu.memory_space<vmem>>, %arg7: memref<1x256xf32, #tpu.memory_space<vmem>>, %arg8: memref<1x1xf32, #tpu.memory_space<vmem>>, %arg9: memref<4x1xf32, #tpu.memory_space<vmem>>) attributes {dimension_semantics = [], scalar_prefetch = 0 : i64, scratch_operands = 0 : i64, tpu.core_type = #tpu.core_type<tc>} {
    %c0 = arith.constant 0 : index
    %c0_0 = arith.constant 0 : index
    %0 = vector.load %arg0[%c0, %c0_0] : memref<4x4096xf32, #tpu.memory_space<vmem>>, vector<4x4096xf32>
    %1 = arith.truncf %0 : vector<4x4096xf32> to vector<4x4096xbf16>
    %c0_1 = arith.constant 0 : index
    %c0_2 = arith.constant 0 : index
    %2 = vector.load %arg2[%c0_1, %c0_2] : memref<4096x512xbf16, #tpu.memory_space<vmem>>, vector<4096x512xbf16>
    %cst = arith.constant dense<0.000000e+00> : vector<4x512xf32>
    %3 = tpu.matmul %1, %2, %cst {dimension_numbers = #tpu.dot_dimension_numbers<[1], [0], [0], [1], [0, 0, 1, 1], [], []>} : vector<4x4096xbf16>, vector<4096x512xbf16>, vector<4x512xf32> -> vector<4x512xf32>
    %c0_3 = arith.constant 0 : index
    %c0_4 = arith.constant 0 : index
    %4 = vector.load %arg1[%c0_3, %c0_4] : memref<4x10xf32, #tpu.memory_space<vmem>>, vector<4x10xf32>
    %5 = arith.truncf %4 : vector<4x10xf32> to vector<4x10xbf16>
    %c0_5 = arith.constant 0 : index
    %c0_6 = arith.constant 0 : index
    %6 = vector.load %arg3[%c0_5, %c0_6] : memref<10x512xbf16, #tpu.memory_space<vmem>>, vector<10x512xbf16>
    %cst_7 = arith.constant dense<0.000000e+00> : vector<4x512xf32>
    %7 = tpu.matmul %5, %6, %cst_7 {dimension_numbers = #tpu.dot_dimension_numbers<[1], [0], [0], [1], [0, 0, 1, 1], [], []>} : vector<4x10xbf16>, vector<10x512xbf16>, vector<4x512xf32> -> vector<4x512xf32>
    %8 = arith.addf %3, %7 : vector<4x512xf32>
    %c0_8 = arith.constant 0 : index
    %c0_9 = arith.constant 0 : index
    %9 = vector.load %arg4[%c0_8, %c0_9] : memref<1x512xf32, #tpu.memory_space<vmem>>, vector<1x512xf32>
    %10 = vector.broadcast %9 : vector<1x512xf32> to vector<4x512xf32>
    %11 = arith.addf %8, %10 : vector<4x512xf32>
    %cst_10 = arith.constant 0.000000e+00 : f32
    %12 = vector.broadcast %cst_10 : f32 to vector<4x512xf32>
    %13 = arith.cmpf ogt, %11, %12 : vector<4x512xf32>
    %cst_11 = arith.constant 2.000000e-01 : f32
    %14 = vector.broadcast %cst_11 : f32 to vector<4x512xf32>
    %15 = arith.mulf %14, %11 : vector<4x512xf32>
    %16 = arith.select %13, %11, %15 : vector<4x512xi1>, vector<4x512xf32>
    %17 = arith.truncf %16 : vector<4x512xf32> to vector<4x512xbf16>
    %c0_12 = arith.constant 0 : index
    %c0_13 = arith.constant 0 : index
    %18 = vector.load %arg5[%c0_12, %c0_13] : memref<512x256xbf16, #tpu.memory_space<vmem>>, vector<512x256xbf16>
    %cst_14 = arith.constant dense<0.000000e+00> : vector<4x256xf32>
    %19 = tpu.matmul %17, %18, %cst_14 {dimension_numbers = #tpu.dot_dimension_numbers<[1], [0], [0], [1], [0, 0, 1, 1], [], []>} : vector<4x512xbf16>, vector<512x256xbf16>, vector<4x256xf32> -> vector<4x256xf32>
    %c0_15 = arith.constant 0 : index
    %c0_16 = arith.constant 0 : index
    %20 = vector.load %arg6[%c0_15, %c0_16] : memref<1x256xf32, #tpu.memory_space<vmem>>, vector<1x256xf32>
    %21 = vector.broadcast %20 : vector<1x256xf32> to vector<4x256xf32>
    %22 = arith.addf %19, %21 : vector<4x256xf32>
    %cst_17 = arith.constant 0.000000e+00 : f32
    %23 = vector.broadcast %cst_17 : f32 to vector<4x256xf32>
    %24 = arith.cmpf ogt, %22, %23 : vector<4x256xf32>
    %cst_18 = arith.constant 2.000000e-01 : f32
    %25 = vector.broadcast %cst_18 : f32 to vector<4x256xf32>
    %26 = arith.mulf %25, %22 : vector<4x256xf32>
    %27 = arith.select %24, %22, %26 : vector<4x256xi1>, vector<4x256xf32>
    %c0_19 = arith.constant 0 : index
    %c0_20 = arith.constant 0 : index
    %28 = vector.load %arg7[%c0_19, %c0_20] : memref<1x256xf32, #tpu.memory_space<vmem>>, vector<1x256xf32>
    %29 = vector.broadcast %28 : vector<1x256xf32> to vector<4x256xf32>
    %30 = arith.mulf %27, %29 : vector<4x256xf32>
    %cst_21 = arith.constant dense<0.000000e+00> : vector<4xf32>
    %31 = vector.multi_reduction <add>, %30, %cst_21 [1] : vector<4x256xf32> to vector<4xf32>
    %32 = vector.shape_cast %31 : vector<4xf32> to vector<4x1xf32>
    %c0_22 = arith.constant 0 : index
    %c0_23 = arith.constant 0 : index
    %33 = vector.load %arg8[%c0_22, %c0_23] : memref<1x1xf32, #tpu.memory_space<vmem>>, vector<1x1xf32>
    %34 = vector.broadcast %33 : vector<1x1xf32> to vector<4x1xf32>
    %35 = arith.addf %32, %34 : vector<4x1xf32>
    %cst_24 = arith.constant 0.000000e+00 : f32
    %36 = vector.broadcast %cst_24 : f32 to vector<4x1xf32>
    %37 = arith.subf %36, %35 : vector<4x1xf32>
    %38 = math.exp %37 : vector<4x1xf32>
    %cst_25 = arith.constant 1.000000e+00 : f32
    %39 = vector.broadcast %cst_25 : f32 to vector<4x1xf32>
    %40 = arith.addf %39, %38 : vector<4x1xf32>
    %41 = tpu.reciprocal %40 {approx = true} : vector<4x1xf32> -> vector<4x1xf32>
    %c0_26 = arith.constant 0 : index
    %c0_27 = arith.constant 0 : index
    %42 = vector.load %arg9[%c0_26, %c0_27] : memref<4x1xf32, #tpu.memory_space<vmem>>, vector<4x1xf32>
    tpu.vector_store %arg9[%c0_26, %c0_27], %41 {strides = array<i32>} : memref<4x1xf32, #tpu.memory_space<vmem>>, vector<4x1xf32>,
    return
  }
}

</mosaic_0001>

<llo_original>
// kernel: tpu_custom_call.1
$region0: #{tpu_custom_call.1}
  #allocation0 [shape = 'u32[]', space=smem, size = 0x4, offset = 0x4, fixed_abs, tag = 'smem constant byte address 0x4 - core index']
  #allocation1 [shape = 'u32[72,128]{1,0:T(1,128)}', space=vmem, size = 0x9000, scoped, tag = 'internal scratch']
  #allocation2 [shape = 'f32[1,1]{1,0:T(1,128)S(1)}', space=vmem, size = 0x200, scoped, tag = 'scoped memory for tpu_custom_call.1']
  %s0 = inlined_call_operand.hbm [shape: f32[4,4096], index: 0, kind: input, shape index: {}]
  %s1 = inlined_call_operand.hbm [shape: f32[4,10], index: 1, kind: input, shape index: {}]
  %s2 = inlined_call_operand.hbm [shape: bf16[4096,512], index: 2, kind: input, shape index: {}]
  %s3 = inlined_call_operand.hbm [shape: bf16[10,512], index: 3, kind: input, shape index: {}]
  %s4 = inlined_call_operand.hbm [shape: f32[1,512], index: 4, kind: input, shape index: {}]
  %s5 = inlined_call_operand.hbm [shape: bf16[512,256], index: 5, kind: input, shape index: {}]
  %s6 = inlined_call_operand.hbm [shape: f32[1,256], index: 6, kind: input, shape index: {}]
  %s7 = inlined_call_operand.hbm [shape: f32[1,256], index: 7, kind: input, shape index: {}]
  %s8 = inlined_call_operand.<no memory space> [shape: f32[1,1], index: 8, kind: input, shape index: {}]
  %s9 = inlined_call_operand.vmem [shape: f32[4,1], index: 9, kind: output, shape index: {}]
  %s10 = sld [smem:[#allocation0]]
  $region78: #{tpu_custom_call.1} parent=0
    _
  %s12 = ssub.s32 1, %s10
  %s13 = scalar_select 0, %s12, %s10
  %v14 = vstv %s8
  %15 = vst [vmem:[#allocation2] sm:$0x1] %v14
  $region1: #{tpu_custom_call.1} parent=0
    #allocation3 [shape = 'u8[65536]{0}', space=vmem, size = 0x10000, scoped, tag = 'input window, operand 0, single buffered']
    #allocation4 [shape = 's32[1]{0}', space=sflag, size = 0x4, scoped, tag = 'scoped memory for tpu_custom_call.1']
    #allocation5 [shape = 'u8[2048]{0}', space=vmem, size = 0x800, scoped, tag = 'input window, operand 1, single buffered']
    #allocation6 [shape = 's32[1]{0}', space=sflag, size = 0x4, scoped, tag = 'scoped memory for tpu_custom_call.1']
    #allocation7 [shape = 'u8[4194304]{0}', space=vmem, size = 0x400000, scoped, tag = 'input window, operand 2, single buffered']
    #allocation8 [shape = 'u8[16384]{0}', space=vmem, size = 0x4000, scoped, tag = 'input window, operand 3, single buffered']
    #allocation9 [shape = 's32[1]{0}', space=sflag, size = 0x4, scoped, tag = 'scoped memory for tpu_custom_call.1']
    #allocation10 [shape = 'u8[2048]{0}', space=vmem, size = 0x800, scoped, tag = 'input window, operand 4, single buffered']
    #allocation11 [shape = 'u8[262144]{0}', space=vmem, size = 0x40000, scoped, tag = 'input window, operand 5, single buffered']
    #allocation12 [shape = 's32[1]{0}', space=sflag, size = 0x4, scoped, tag = 'scoped memory for tpu_custom_call.1']
    #allocation13 [shape = 'u8[1024]{0}', space=vmem, size = 0x400, scoped, tag = 'input window, operand 6, single buffered']
    #allocation14 [shape = 'u8[1024]{0}', space=vmem, size = 0x400, scoped, tag = 'input window, operand 7, single buffered']
    #allocation15 [shape = 's32[1]{0}', space=sflag, size = 0x4, scoped, tag = 'scoped memory for tpu_custom_call.1']
    %16 = vsyncpa [#allocation4], 0
    %17 = vsyncpa [#allocation6], 0
    %18 = vsyncpa [#allocation9], 0
    %19 = vsyncpa [#allocation12], 0
    %20 = vsyncpa [#allocation15], 0
    // Predicated region
    $region2: #{tpu_custom_call.1} parent=1 // pred_check
      _
    $region3: #{tpu_custom_call.1} parent=1 // pred_check_branch
      %22 = sbr.rel (0) target = $region5
    $region4: #{tpu_custom_call.1} parent=1 // pred_region
      %24 = vsyncadd [#allocation4], 0
      %s26 = sshll.u32 %s0, 4
      %s27 = int_to_ptr.hbm [resolvable:$true] %s26
      %s28 = sshll.u32 [#allocation3], 4
      %s29 = int_to_ptr.vmem [resolvable:$true] %s28
      %31 = dma.hbm_to_vmem [thread:$0]  %s27, 2048, %s29, [#allocation4]
    $region5: #{tpu_custom_call.1} parent=1 // pred_fallthru
      _
    // Predicated region
    $region6: #{tpu_custom_call.1} parent=1 // pred_check
      _
    $region7: #{tpu_custom_call.1} parent=1 // pred_check_branch
      %33 = sbr.rel (0) target = $region9
    $region8: #{tpu_custom_call.1} parent=1 // pred_region
      %35 = vsyncadd [#allocation6], 0
      %s37 = sshll.u32 %s1, 4
      %s38 = int_to_ptr.hbm [resolvable:$true] %s37
      %s39 = sshll.u32 [#allocation5], 4
      %s40 = int_to_ptr.vmem [resolvable:$true] %s39
      %42 = dma.hbm_to_vmem [thread:$0]  %s38, 64, %s40, [#allocation6]
    $region9: #{tpu_custom_call.1} parent=1 // pred_fallthru
      _
    // Predicated region
    $region10: #{tpu_custom_call.1} parent=1 // pred_check
      _
    $region11: #{tpu_custom_call.1} parent=1 // pred_check_branch
      %44 = sbr.rel (0) target = $region13
    $region12: #{tpu_custom_call.1} parent=1 // pred_region
      %46 = vsyncadd [#allocation6], 0
      %s47 = sshll.u32 %s2, 4
      %s48 = int_to_ptr.hbm [resolvable:$true] %s47
      %s49 = sshll.u32 [#allocation7], 4
      %s50 = int_to_ptr.vmem [resolvable:$true] %s49
      %55 = dma.hbm_to_vmem [thread:$0]  %s48, 131072, %s50, [#allocation6], 256, 256, 16
    $region13: #{tpu_custom_call.1} parent=1 // pred_fallthru
      _
    // Predicated region
    $region14: #{tpu_custom_call.1} parent=1 // pred_check
      _
    $region15: #{tpu_custom_call.1} parent=1 // pred_check_branch
      %57 = sbr.rel (0) target = $region17
    $region16: #{tpu_custom_call.1} parent=1 // pred_region
      %59 = vsyncadd [#allocation9], 0
      %s60 = sshll.u32 %s3, 4
      %s61 = int_to_ptr.hbm [resolvable:$true] %s60
      %s62 = sshll.u32 [#allocation8], 4
      %s63 = int_to_ptr.vmem [resolvable:$true] %s62
      %68 = dma.hbm_to_vmem [thread:$0]  %s61, 512, %s63, [#allocation9], 256, 256, 16
    $region17: #{tpu_custom_call.1} parent=1 // pred_fallthru
      _
    // Predicated region
    $region18: #{tpu_custom_call.1} parent=1 // pred_check
      _
    $region19: #{tpu_custom_call.1} parent=1 // pred_check_branch
      %70 = sbr.rel (0) target = $region21
    $region20: #{tpu_custom_call.1} parent=1 // pred_region
      %72 = vsyncadd [#allocation9], 0
      %s74 = sshll.u32 %s4, 4
      %s75 = int_to_ptr.hbm [resolvable:$true] %s74
      %s76 = sshll.u32 [#allocation10], 4
      %s77 = int_to_ptr.vmem [resolvable:$true] %s76
      %79 = dma.hbm_to_vmem [thread:$0]  %s75, 64, %s77, [#allocation9]
    $region21: #{tpu_custom_call.1} parent=1 // pred_fallthru
      _
    // Predicated region
    $region22: #{tpu_custom_call.1} parent=1 // pred_check
      _
    $region23: #{tpu_custom_call.1} parent=1 // pred_check_branch
      %81 = sbr.rel (0) target = $region25
    $region24: #{tpu_custom_call.1} parent=1 // pred_region
      %83 = vsyncadd [#allocation12], 0
      %s84 = sshll.u32 %s5, 4
      %s85 = int_to_ptr.hbm [resolvable:$true] %s84
      %s86 = sshll.u32 [#allocation11], 4
      %s87 = int_to_ptr.vmem [resolvable:$true] %s86
      %92 = dma.hbm_to_vmem [thread:$0]  %s85, 8192, %s87, [#allocation12], 128, 128, 8
    $region25: #{tpu_custom_call.1} parent=1 // pred_fallthru
      _
    // Predicated region
    $region26: #{tpu_custom_call.1} parent=1 // pred_check
      _
    $region27: #{tpu_custom_call.1} parent=1 // pred_check_branch
      %94 = sbr.rel (0) target = $region29
    $region28: #{tpu_custom_call.1} parent=1 // pred_region
      %96 = vsyncadd [#allocation12], 0
      %s98 = sshll.u32 %s6, 4
      %s99 = int_to_ptr.hbm [resolvable:$true] %s98
      %s100 = sshll.u32 [#allocation13], 4
      %s101 = int_to_ptr.vmem [resolvable:$true] %s100
      %103 = dma.hbm_to_vmem [thread:$0]  %s99, 32, %s101, [#allocation12]
    $region29: #{tpu_custom_call.1} parent=1 // pred_fallthru
      _
    // Predicated region
    $region30: #{tpu_custom_call.1} parent=1 // pred_check
      _
    $region31: #{tpu_custom_call.1} parent=1 // pred_check_branch
      %105 = sbr.rel (0) target = $region33
    $region32: #{tpu_custom_call.1} parent=1 // pred_region
      %107 = vsyncadd [#allocation15], 0
      %s109 = sshll.u32 %s7, 4
      %s110 = int_to_ptr.hbm [resolvable:$true] %s109
      %s111 = sshll.u32 [#allocation14], 4
      %s112 = int_to_ptr.vmem [resolvable:$true] %s111
      %114 = dma.hbm_to_vmem [thread:$0]  %s110, 32, %s112, [#allocation15]
    $region33: #{tpu_custom_call.1} parent=1 // pred_fallthru
      _
    // Predicated region
    $region34: #{tpu_custom_call.1} parent=1 // pred_check
      _
    $region35: #{tpu_custom_call.1} parent=1 // pred_check_branch
      %116 = sbr.rel (0) target = $region37
    $region36: #{tpu_custom_call.1} parent=1 // pred_region
      _
    $region37: #{tpu_custom_call.1} parent=1 // pred_fallthru
      _
    // Predicated region
    $region38: #{tpu_custom_call.1} parent=1 // pred_check
      _
    $region39: #{tpu_custom_call.1} parent=1 // pred_check_branch
      %118 = sbr.rel (0) target = $region41
    $region40: #{tpu_custom_call.1} parent=1 // pred_region
      %120 = dma.done [#allocation4], 2048
    $region41: #{tpu_custom_call.1} parent=1 // pred_fallthru
      _
    // Predicated region
    $region42: #{tpu_custom_call.1} parent=1 // pred_check
      _
    $region43: #{tpu_custom_call.1} parent=1 // pred_check_branch
      %122 = sbr.rel (0) target = $region45
    $region44: #{tpu_custom_call.1} parent=1 // pred_region
      %124 = dma.done [#allocation6], 64
    $region45: #{tpu_custom_call.1} parent=1 // pred_fallthru
      _
    // Predicated region
    $region46: #{tpu_custom_call.1} parent=1 // pred_check
      _
    $region47: #{tpu_custom_call.1} parent=1 // pred_check_branch
      %126 = sbr.rel (0) target = $region49
    $region48: #{tpu_custom_call.1} parent=1 // pred_region
      %128 = dma.done [#allocation6], 131072
    $region49: #{tpu_custom_call.1} parent=1 // pred_fallthru
      _
    // Predicated region
    $region50: #{tpu_custom_call.1} parent=1 // pred_check
      _
    $region51: #{tpu_custom_call.1} parent=1 // pred_check_branch
      %130 = sbr.rel (0) target = $region53
    $region52: #{tpu_custom_call.1} parent=1 // pred_region
      %132 = dma.done [#allocation9], 512
    $region53: #{tpu_custom_call.1} parent=1 // pred_fallthru
      _
    // Predicated region
    $region54: #{tpu_custom_call.1} parent=1 // pred_check
      _
    $region55: #{tpu_custom_call.1} parent=1 // pred_check_branch
      %134 = sbr.rel (0) target = $region57
    $region56: #{tpu_custom_call.1} parent=1 // pred_region
      %136 = dma.done [#allocation9], 64
    $region57: #{tpu_custom_call.1} parent=1 // pred_fallthru
      _
    // Predicated region
    $region58: #{tpu_custom_call.1} parent=1 // pred_check
      _
    $region59: #{tpu_custom_call.1} parent=1 // pred_check_branch
      %138 = sbr.rel (0) target = $region61
    $region60: #{tpu_custom_call.1} parent=1 // pred_region
      %140 = dma.done [#allocation12], 8192
    $region61: #{tpu_custom_call.1} parent=1 // pred_fallthru
      _
    // Predicated region
    $region62: #{tpu_custom_call.1} parent=1 // pred_check
      _
    $region63: #{tpu_custom_call.1} parent=1 // pred_check_branch
      %142 = sbr.rel (0) target = $region65
    $region64: #{tpu_custom_call.1} parent=1 // pred_region
      %144 = dma.done [#allocation12], 32
    $region65: #{tpu_custom_call.1} parent=1 // pred_fallthru
      _
    // Predicated region
    $region66: #{tpu_custom_call.1} parent=1 // pred_check
      _
    $region67: #{tpu_custom_call.1} parent=1 // pred_check_branch
      %146 = sbr.rel (0) target = $region69
    $region68: #{tpu_custom_call.1} parent=1 // pred_region
      %148 = dma.done [#allocation15], 32
    $region69: #{tpu_custom_call.1} parent=1 // pred_fallthru
      _
    %v150 = vld [vmem:[#allocation3] sm:$0xff]
    %v151 = vld [vmem:[#allocation3 + $0x8] sm:$0xff]
    %v152 = vld [vmem:[#allocation3 + $0x10] sm:$0xff]
    %v153 = vld [vmem:[#allocation3 + $0x18] sm:$0xff]
    %v154 = vld [vmem:[#allocation3 + $0x20] sm:$0xff]
    %v155 = vld [vmem:[#allocation3 + $0x28] sm:$0xff]
    %v156 = vld [vmem:[#allocation3 + $0x30] sm:$0xff]
    %v157 = vld [vmem:[#allocation3 + $0x38] sm:$0xff]
    %v158 = vld [vmem:[#allocation3 + $0x40] sm:$0xff]
    %v159 = vld [vmem:[#allocation3 + $0x48] sm:$0xff]
    %v160 = vld [vmem:[#allocation3 + $0x50] sm:$0xff]
    %v161 = vld [vmem:[#allocation3 + $0x58] sm:$0xff]
    %v162 = vld [vmem:[#allocation3 + $0x60] sm:$0xff]
    %v163 = vld [vmem:[#allocation3 + $0x68] sm:$0xff]
    %v164 = vld [vmem:[#allocation3 + $0x70] sm:$0xff]
    %v165 = vld [vmem:[#allocation3 + $0x78] sm:$0xff]
    %182 = vst [vmem:[#allocation1] ss:$2 sm:$0xff] %v150
    %s183 = scalar_lea.vmem [#allocation1], 16
    %184 = vst [vmem:[%s183] ss:$2 sm:$0xff] %v151
    %s185 = scalar_lea.vmem [#allocation1], 32
    %186 = vst [vmem:[%s185] ss:$2 sm:$0xff] %v152
    %s187 = scalar_lea.vmem [#allocation1], 48
    %188 = vst [vmem:[%s187] ss:$2 sm:$0xff] %v153
    %v189 = vld.sshfl [vmem:[#allocation1] sm:$0xff pattern:$0x75316420]
    %v190 = vld.sshfl [vmem:[#allocation1 + $0x8] sm:$0xff pattern:$0x75316420]
    %v191 = vld.sshfl [vmem:[#allocation1 + $0x10] sm:$0xff pattern:$0x75316420]
    %v192 = vld.sshfl [vmem:[#allocation1 + $0x18] sm:$0xff pattern:$0x75316420]
    %v193 = vld.sshfl [vmem:[#allocation1 + $0x20] sm:$0xff pattern:$0x75316420]
    %v194 = vld.sshfl [vmem:[#allocation1 + $0x28] sm:$0xff pattern:$0x75316420]
    %v195 = vld.sshfl [vmem:[#allocation1 + $0x30] sm:$0xff pattern:$0x75316420]
    %v196 = vld.sshfl [vmem:[#allocation1 + $0x38] sm:$0xff pattern:$0x75316420]
    %197 = vst [vmem:[#allocation1] ss:$2 sm:$0xff] %v154
    %198 = vst [vmem:[%s183] ss:$2 sm:$0xff] %v155
    %199 = vst [vmem:[%s185] ss:$2 sm:$0xff] %v156
    %200 = vst [vmem:[%s187] ss:$2 sm:$0xff] %v157
    %v201 = vld.sshfl [vmem:[#allocation1] sm:$0xff pattern:$0x75316420]
    %v202 = vld.sshfl [vmem:[#allocation1 + $0x8] sm:$0xff pattern:$0x75316420]
    %v203 = vld.sshfl [vmem:[#allocation1 + $0x10] sm:$0xff pattern:$0x75316420]
    %v204 = vld.sshfl [vmem:[#allocation1 + $0x18] sm:$0xff pattern:$0x75316420]
    %v205 = vld.sshfl [vmem:[#allocation1 + $0x20] sm:$0xff pattern:$0x75316420]
    %v206 = vld.sshfl [vmem:[#allocation1 + $0x28] sm:$0xff pattern:$0x75316420]
    %v207 = vld.sshfl [vmem:[#allocation1 + $0x30] sm:$0xff pattern:$0x75316420]
    %v208 = vld.sshfl [vmem:[#allocation1 + $0x38] sm:$0xff pattern:$0x75316420]
    %209 = vst [vmem:[#allocation1] ss:$2 sm:$0xff] %v158
    %210 = vst [vmem:[%s183] ss:$2 sm:$0xff] %v159
    %211 = vst [vmem:[%s185] ss:$2 sm:$0xff] %v160
    %212 = vst [vmem:[%s187] ss:$2 sm:$0xff] %v161
    %v213 = vld.sshfl [vmem:[#allocation1] sm:$0xff pattern:$0x75316420]
    %v214 = vld.sshfl [vmem:[#allocation1 + $0x8] sm:$0xff pattern:$0x75316420]
    %v215 = vld.sshfl [vmem:[#allocation1 + $0x10] sm:$0xff pattern:$0x75316420]
    %v216 = vld.sshfl [vmem:[#allocation1 + $0x18] sm:$0xff pattern:$0x75316420]
    %v217 = vld.sshfl [vmem:[#allocation1 + $0x20] sm:$0xff pattern:$0x75316420]
    %v218 = vld.sshfl [vmem:[#allocation1 + $0x28] sm:$0xff pattern:$0x75316420]
    %v219 = vld.sshfl [vmem:[#allocation1 + $0x30] sm:$0xff pattern:$0x75316420]
    %v220 = vld.sshfl [vmem:[#allocation1 + $0x38] sm:$0xff pattern:$0x75316420]
    %221 = vst [vmem:[#allocation1] ss:$2 sm:$0xff] %v162
    %222 = vst [vmem:[%s183] ss:$2 sm:$0xff] %v163
    %223 = vst [vmem:[%s185] ss:$2 sm:$0xff] %v164
    %224 = vst [vmem:[%s187] ss:$2 sm:$0xff] %v165
    %v225 = vld.sshfl [vmem:[#allocation1] sm:$0xff pattern:$0x75316420]
    %v226 = vld.sshfl [vmem:[#allocation1 + $0x8] sm:$0xff pattern:$0x75316420]
    %v227 = vld.sshfl [vmem:[#allocation1 + $0x10] sm:$0xff pattern:$0x75316420]
    %v228 = vld.sshfl [vmem:[#allocation1 + $0x18] sm:$0xff pattern:$0x75316420]
    %v229 = vld.sshfl [vmem:[#allocation1 + $0x20] sm:$0xff pattern:$0x75316420]
    %v230 = vld.sshfl [vmem:[#allocation1 + $0x28] sm:$0xff pattern:$0x75316420]
    %v231 = vld.sshfl [vmem:[#allocation1 + $0x30] sm:$0xff pattern:$0x75316420]
    %v232 = vld.sshfl [vmem:[#allocation1 + $0x38] sm:$0xff pattern:$0x75316420]
    %v265 = vpack.c.bf16 %v189, %v189
    %v266 = vpack.c.bf16 %v190, %v190
    %v267 = vpack.c.bf16 %v191, %v191
    %v268 = vpack.c.bf16 %v192, %v192
    %v269 = vpack.c.bf16 %v193, %v193
    %v270 = vpack.c.bf16 %v194, %v194
    %v271 = vpack.c.bf16 %v195, %v195
    %v272 = vpack.c.bf16 %v196, %v196
    %v273 = vpack.c.bf16 %v201, %v201
    %v274 = vpack.c.bf16 %v202, %v202
    %v275 = vpack.c.bf16 %v203, %v203
    %v276 = vpack.c.bf16 %v204, %v204
    %v277 = vpack.c.bf16 %v205, %v205
    %v278 = vpack.c.bf16 %v206, %v206
    %v279 = vpack.c.bf16 %v207, %v207
    %v280 = vpack.c.bf16 %v208, %v208
    %v281 = vpack.c.bf16 %v213, %v213
    %v282 = vpack.c.bf16 %v214, %v214
    %v283 = vpack.c.bf16 %v215, %v215
    %v284 = vpack.c.bf16 %v216, %v216
    %v285 = vpack.c.bf16 %v217, %v217
    %v286 = vpack.c.bf16 %v218, %v218
    %v287 = vpack.c.bf16 %v219, %v219
    %v288 = vpack.c.bf16 %v220, %v220
    %v289 = vpack.c.bf16 %v225, %v225
    %v290 = vpack.c.bf16 %v226, %v226
    %v291 = vpack.c.bf16 %v227, %v227
    %v292 = vpack.c.bf16 %v228, %v228
    %v293 = vpack.c.bf16 %v229, %v229
    %v294 = vpack.c.bf16 %v230, %v230
    %v295 = vpack.c.bf16 %v231, %v231
    %v296 = vpack.c.bf16 %v232, %v232
    %v297 = vld [vmem:[#allocation7] sm:$0xff]
    %v298 = vld [vmem:[#allocation7 + $0x8] sm:$0xff]
    %v299 = vld [vmem:[#allocation7 + $0x10] sm:$0xff]
    %v300 = vld [vmem:[#allocation7 + $0x18] sm:$0xff]
    %v301 = vld [vmem:[#allocation7 + $0x20] sm:$0xff]
    %v302 = vld [vmem:[#allocation7 + $0x28] sm:$0xff]
    %v303 = vld [vmem:[#allocation7 + $0x30] sm:$0xff]
    %v304 = vld [vmem:[#allocation7 + $0x38] sm:$0xff]
    %v305 = vld [vmem:[#allocation7 + $0x40] sm:$0xff]
    %v306 = vld [vmem:[#allocation7 + $0x48] sm:$0xff]
    %v307 = vld [vmem:[#allocation7 + $0x50] sm:$0xff]
    %v308 = vld [vmem:[#allocation7 + $0x58] sm:$0xff]
    %v309 = vld [vmem:[#allocation7 + $0x60] sm:$0xff]
    %v310 = vld [vmem:[#allocation7 + $0x68] sm:$0xff]
    %v311 = vld [vmem:[#allocation7 + $0x70] sm:$0xff]
    %v312 = vld [vmem:[#allocation7 + $0x78] sm:$0xff]
    %v313 = vld [vmem:[#allocation7 + $0x80] sm:$0xff]
    %v314 = vld [vmem:[#allocation7 + $0x88] sm:$0xff]
    %v315 = vld [vmem:[#allocation7 + $0x90] sm:$0xff]
    %v316 = vld [vmem:[#allocation7 + $0x98] sm:$0xff]
    %v317 = vld [vmem:[#allocation7 + $0xa0] sm:$0xff]
    %v318 = vld [vmem:[#allocation7 + $0xa8] sm:$0xff]
    %v319 = vld [vmem:[#allocation7 + $0xb0] sm:$0xff]
    %v320 = vld [vmem:[#allocation7 + $0xb8] sm:$0xff]
    %v321 = vld [vmem:[#allocation7 + $0xc0] sm:$0xff]
    %v322 = vld [vmem:[#allocation7 + $0xc8] sm:$0xff]
    %v323 = vld [vmem:[#allocation7 + $0xd0] sm:$0xff]
    %v324 = vld [vmem:[#allocation7 + $0xd8] sm:$0xff]
    %v325 = vld [vmem:[#allocation7 + $0xe0] sm:$0xff]
    %v326 = vld [vmem:[#allocation7 + $0xe8] sm:$0xff]
    %v327 = vld [vmem:[#allocation7 + $0xf0] sm:$0xff]
    %v328 = vld [vmem:[#allocation7 + $0xf8] sm:$0xff]
    %v329 = vld [vmem:[#allocation7 + $0x100] sm:$0xff]
    %v330 = vld [vmem:[#allocation7 + $0x108] sm:$0xff]
    %v331 = vld [vmem:[#allocation7 + $0x110] sm:$0xff]
    %v332 = vld [vmem:[#allocation7 + $0x118] sm:$0xff]
    %v333 = vld [vmem:[#allocation7 + $0x120] sm:$0xff]
    %v334 = vld [vmem:[#allocation7 + $0x128] sm:$0xff]
    %v335 = vld [vmem:[#allocation7 + $0x130] sm:$0xff]
    %v336 = vld [vmem:[#allocation7 + $0x138] sm:$0xff]
    %v337 = vld [vmem:[#allocation7 + $0x140] sm:$0xff]
    %v338 = vld [vmem:[#allocation7 + $0x148] sm:$0xff]
    %v339 = vld [vmem:[#allocation7 + $0x150] sm:$0xff]
    %v340 = vld [vmem:[#allocation7 + $0x158] sm:$0xff]
    %v341 = vld [vmem:[#allocation7 + $0x160] sm:$0xff]
    %v342 = vld [vmem:[#allocation7 + $0x168] sm:$0xff]
    %v343 = vld [vmem:[#allocation7 + $0x170] sm:$0xff]
    %v344 = vld [vmem:[#allocation7 + $0x178] sm:$0xff]
    %v345 = vld [vmem:[#allocation7 + $0x180] sm:$0xff]
    %v346 = vld [vmem:[#allocation7 + $0x188] sm:$0xff]
    %v347 = vld [vmem:[#allocation7 + $0x190] sm:$0xff]
    %v348 = vld [vmem:[#allocation7 + $0x198] sm:$0xff]
    %v349 = vld [vmem:[#allocation7 + $0x1a0] sm:$0xff]
    %v350 = vld [vmem:[#allocation7 + $0x1a8] sm:$0xff]
    %v351 = vld [vmem:[#allocation7 + $0x1b0] sm:$0xff]
    %v352 = vld [vmem:[#allocation7 + $0x1b8] sm:$0xff]
    %v353 = vld [vmem:[#allocation7 + $0x1c0] sm:$0xff]
    %v354 = vld [vmem:[#allocation7 + $0x1c8] sm:$0xff]
    %v355 = vld [vmem:[#allocation7 + $0x1d0] sm:$0xff]
    %v356 = vld [vmem:[#allocation7 + $0x1d8] sm:$0xff]
    %v357 = vld [vmem:[#allocation7 + $0x1e0] sm:$0xff]
    %v358 = vld [vmem:[#allocation7 + $0x1e8] sm:$0xff]
    %v359 = vld [vmem:[#allocation7 + $0x1f0] sm:$0xff]
    %v360 = vld [vmem:[#allocation7 + $0x1f8] sm:$0xff]
    %v361 = vld [vmem:[#allocation7 + $0x200] sm:$0xff]
    %v362 = vld [vmem:[#allocation7 + $0x208] sm:$0xff]
    %v363 = vld [vmem:[#allocation7 + $0x210] sm:$0xff]
    %v364 = vld [vmem:[#allocation7 + $0x218] sm:$0xff]
    %v365 = vld [vmem:[#allocation7 + $0x220] sm:$0xff]
    %v366 = vld [vmem:[#allocation7 + $0x228] sm:$0xff]
    %v367 = vld [vmem:[#allocation7 + $0x230] sm:$0xff]
    %v368 = vld [vmem:[#allocation7 + $0x238] sm:$0xff]
    %v369 = vld [vmem:[#allocation7 + $0x240] sm:$0xff]
    %v370 = vld [vmem:[#allocation7 + $0x248] sm:$0xff]
    %v371 = vld [vmem:[#allocation7 + $0x250] sm:$0xff]
    %v372 = vld [vmem:[#allocation7 + $0x258] sm:$0xff]
    %v373 = vld [vmem:[#allocation7 + $0x260] sm:$0xff]
    %v374 = vld [vmem:[#allocation7 + $0x268] sm:$0xff]
    %v375 = vld [vmem:[#allocation7 + $0x270] sm:$0xff]
    %v376 = vld [vmem:[#allocation7 + $0x278] sm:$0xff]
    %v377 = vld [vmem:[#allocation7 + $0x280] sm:$0xff]
    %v378 = vld [vmem:[#allocation7 + $0x288] sm:$0xff]
    %v379 = vld [vmem:[#allocation7 + $0x290] sm:$0xff]
    %v380 = vld [vmem:[#allocation7 + $0x298] sm:$0xff]
    %v381 = vld [vmem:[#allocation7 + $0x2a0] sm:$0xff]
    %v382 = vld [vmem:[#allocation7 + $0x2a8] sm:$0xff]
    %v383 = vld [vmem:[#allocation7 + $0x2b0] sm:$0xff]
    %v384 = vld [vmem:[#allocation7 + $0x2b8] sm:$0xff]
    %v385 = vld [vmem:[#allocation7 + $0x2c0] sm:$0xff]
    %v386 = vld [vmem:[#allocation7 + $0x2c8] sm:$0xff]
    %v387 = vld [vmem:[#allocation7 + $0x2d0] sm:$0xff]
    %v388 = vld [vmem:[#allocation7 + $0x2d8] sm:$0xff]
    %v389 = vld [vmem:[#allocation7 + $0x2e0] sm:$0xff]
    %v390 = vld [vmem:[#allocation7 + $0x2e8] sm:$0xff]
    %v391 = vld [vmem:[#allocation7 + $0x2f0] sm:$0xff]
    %v392 = vld [vmem:[#allocation7 + $0x2f8] sm:$0xff]
    %v393 = vld [vmem:[#allocation7 + $0x300] sm:$0xff]
    %v394 = vld [vmem:[#allocation7 + $0x308] sm:$0xff]
    %v395 = vld [vmem:[#allocation7 + $0x310] sm:$0xff]
    %v396 = vld [vmem:[#allocation7 + $0x318] sm:$0xff]
    %v397 = vld [vmem:[#allocation7 + $0x320] sm:$0xff]
    %v398 = vld [vmem:[#allocation7 + $0x328] sm:$0xff]
    %v399 = vld [vmem:[#allocation7 + $0x330] sm:$0xff]
    %v400 = vld [vmem:[#allocation7 + $0x338] sm:$0xff]
    %v401 = vld [vmem:[#allocation7 + $0x340] sm:$0xff]
    %v402 = vld [vmem:[#allocation7 + $0x348] sm:$0xff]
    %v403 = vld [vmem:[#allocation7 + $0x350] sm:$0xff]
    %v404 = vld [vmem:[#allocation7 + $0x358] sm:$0xff]
    %v405 = vld [vmem:[#allocation7 + $0x360] sm:$0xff]
    %v406 = vld [vmem:[#allocation7 + $0x368] sm:$0xff]
    %v407 = vld [vmem:[#allocation7 + $0x370] sm:$0xff]
    %v408 = vld [vmem:[#allocation7 + $0x378] sm:$0xff]
    %v409 = vld [vmem:[#allocation7 + $0x380] sm:$0xff]
    %v410 = vld [vmem:[#allocation7 + $0x388] sm:$0xff]
    %v411 = vld [vmem:[#allocation7 + $0x390] sm:$0xff]
    %v412 = vld [vmem:[#allocation7 + $0x398] sm:$0xff]
    %v413 = vld [vmem:[#allocation7 + $0x3a0] sm:$0xff]
    %v414 = vld [vmem:[#allocation7 + $0x3a8] sm:$0xff]
    %v415 = vld [vmem:[#allocation7 + $0x3b0] sm:$0xff]
    %v416 = vld [vmem:[#allocation7 + $0x3b8] sm:$0xff]
    %v417 = vld [vmem:[#allocation7 + $0x3c0] sm:$0xff]
    %v418 = vld [vmem:[#allocation7 + $0x3c8] sm:$0xff]
    %v419 = vld [vmem:[#allocation7 + $0x3d0] sm:$0xff]
    %v420 = vld [vmem:[#allocation7 + $0x3d8] sm:$0xff]
    %v421 = vld [vmem:[#allocation7 + $0x3e0] sm:$0xff]
    %v422 = vld [vmem:[#allocation7 + $0x3e8] sm:$0xff]
    %v423 = vld [vmem:[#allocation7 + $0x3f0] sm:$0xff]
    %v424 = vld [vmem:[#allocation7 + $0x3f8] sm:$0xff]
    %v425 = vld [vmem:[#allocation7 + $0x400] sm:$0xff]
    %v426 = vld [vmem:[#allocation7 + $0x408] sm:$0xff]
    %v427 = vld [vmem:[#allocation7 + $0x410] sm:$0xff]
    %v428 = vld [vmem:[#allocation7 + $0x418] sm:$0xff]
    %v429 = vld [vmem:[#allocation7 + $0x420] sm:$0xff]
    %v430 = vld [vmem:[#allocation7 + $0x428] sm:$0xff]
    %v431 = vld [vmem:[#allocation7 + $0x430] sm:$0xff]
    %v432 = vld [vmem:[#allocation7 + $0x438] sm:$0xff]
    %v433 = vld [vmem:[#allocation7 + $0x440] sm:$0xff]
    %v434 = vld [vmem:[#allocation7 + $0x448] sm:$0xff]
    %v435 = vld [vmem:[#allocation7 + $0x450] sm:$0xff]
    %v436 = vld [vmem:[#allocation7 + $0x458] sm:$0xff]
    %v437 = vld [vmem:[#allocation7 + $0x460] sm:$0xff]
    %v438 = vld [vmem:[#allocation7 + $0x468] sm:$0xff]
    %v439 = vld [vmem:[#allocation7 + $0x470] sm:$0xff]
    %v440 = vld [vmem:[#allocation7 + $0x478] sm:$0xff]
    %v441 = vld [vmem:[#allocation7 + $0x480] sm:$0xff]
    %v442 = vld [vmem:[#allocation7 + $0x488] sm:$0xff]
    %v443 = vld [vmem:[#allocation7 + $0x490] sm:$0xff]
    %v444 = vld [vmem:[#allocation7 + $0x498] sm:$0xff]
    %v445 = vld [vmem:[#allocation7 + $0x4a0] sm:$0xff]
    %v446 = vld [vmem:[#allocation7 + $0x4a8] sm:$0xff]
    %v447 = vld [vmem:[#allocation7 + $0x4b0] sm:$0xff]
    %v448 = vld [vmem:[#allocation7 + $0x4b8] sm:$0xff]
    %v449 = vld [vmem:[#allocation7 + $0x4c0] sm:$0xff]
    %v450 = vld [vmem:[#allocation7 + $0x4c8] sm:$0xff]
    %v451 = vld [vmem:[#allocation7 + $0x4d0] sm:$0xff]
    %v452 = vld [vmem:[#allocation7 + $0x4d8] sm:$0xff]
    %v453 = vld [vmem:[#allocation7 + $0x4e0] sm:$0xff]
    %v454 = vld [vmem:[#allocation7 + $0x4e8] sm:$0xff]
    %v455 = vld [vmem:[#allocation7 + $0x4f0] sm:$0xff]
    %v456 = vld [vmem:[#allocation7 + $0x4f8] sm:$0xff]
    %v457 = vld [vmem:[#allocation7 + $0x500] sm:$0xff]
    %v458 = vld [vmem:[#allocation7 + $0x508] sm:$0xff]
    %v459 = vld [vmem:[#allocation7 + $0x510] sm:$0xff]
    %v460 = vld [vmem:[#allocation7 + $0x518] sm:$0xff]
    %v461 = vld [vmem:[#allocation7 + $0x520] sm:$0xff]
    %v462 = vld [vmem:[#allocation7 + $0x528] sm:$0xff]
    %v463 = vld [vmem:[#allocation7 + $0x530] sm:$0xff]
    %v464 = vld [vmem:[#allocation7 + $0x538] sm:$0xff]
    %v465 = vld [vmem:[#allocation7 + $0x540] sm:$0xff]
    %v466 = vld [vmem:[#allocation7 + $0x548] sm:$0xff]
    %v467 = vld [vmem:[#allocation7 + $0x550] sm:$0xff]
    %v468 = vld [vmem:[#allocation7 + $0x558] sm:$0xff]
    %v469 = vld [vmem:[#allocation7 + $0x560] sm:$0xff]
    %v470 = vld [vmem:[#allocation7 + $0x568] sm:$0xff]
    %v471 = vld [vmem:[#allocation7 + $0x570] sm:$0xff]
    %v472 = vld [vmem:[#allocation7 + $0x578] sm:$0xff]
    %v473 = vld [vmem:[#allocation7 + $0x580] sm:$0xff]
    %v474 = vld [vmem:[#allocation7 + $0x588] sm:$0xff]
    %v475 = vld [vmem:[#allocation7 + $0x590] sm:$0xff]
    %v476 = vld [vmem:[#allocation7 + $0x598] sm:$0xff]
    %v477 = vld [vmem:[#allocation7 + $0x5a0] sm:$0xff]
    %v478 = vld [vmem:[#allocation7 + $0x5a8] sm:$0xff]
    %v479 = vld [vmem:[#allocation7 + $0x5b0] sm:$0xff]
    %v480 = vld [vmem:[#allocation7 + $0x5b8] sm:$0xff]
    %v481 = vld [vmem:[#allocation7 + $0x5c0] sm:$0xff]
    %v482 = vld [vmem:[#allocation7 + $0x5c8] sm:$0xff]
    %v483 = vld [vmem:[#allocation7 + $0x5d0] sm:$0xff]
    %v484 = vld [vmem:[#allocation7 + $0x5d8] sm:$0xff]
    %v485 = vld [vmem:[#allocation7 + $0x5e0] sm:$0xff]
    %v486 = vld [vmem:[#allocation7 + $0x5e8] sm:$0xff]
    %v487 = vld [vmem:[#allocation7 + $0x5f0] sm:$0xff]
    %v488 = vld [vmem:[#allocation7 + $0x5f8] sm:$0xff]
    %v489 = vld [vmem:[#allocation7 + $0x600] sm:$0xff]
    %v490 = vld [vmem:[#allocation7 + $0x608] sm:$0xff]
    %v491 = vld [vmem:[#allocation7 + $0x610] sm:$0xff]
    %v492 = vld [vmem:[#allocation7 + $0x618] sm:$0xff]
    %v493 = vld [vmem:[#allocation7 + $0x620] sm:$0xff]
    %v494 = vld [vmem:[#allocation7 + $0x628] sm:$0xff]
    %v495 = vld [vmem:[#allocation7 + $0x630] sm:$0xff]
    %v496 = vld [vmem:[#allocation7 + $0x638] sm:$0xff]
    %v497 = vld [vmem:[#allocation7 + $0x640] sm:$0xff]
    %v498 = vld [vmem:[#allocation7 + $0x648] sm:$0xff]
    %v499 = vld [vmem:[#allocation7 + $0x650] sm:$0xff]
    %v500 = vld [vmem:[#allocation7 + $0x658] sm:$0xff]
    %v501 = vld [vmem:[#allocation7 + $0x660] sm:$0xff]
    %v502 = vld [vmem:[#allocation7 + $0x668] sm:$0xff]
    %v503 = vld [vmem:[#allocation7 + $0x670] sm:$0xff]
    %v504 = vld [vmem:[#allocation7 + $0x678] sm:$0xff]
    %v505 = vld [vmem:[#allocation7 + $0x680] sm:$0xff]
    %v506 = vld [vmem:[#allocation7 + $0x688] sm:$0xff]
    %v507 = vld [vmem:[#allocation7 + $0x690] sm:$0xff]
    %v508 = vld [vmem:[#allocation7 + $0x698] sm:$0xff]
    %v509 = vld [vmem:[#allocation7 + $0x6a0] sm:$0xff]
    %v510 = vld [vmem:[#allocation7 + $0x6a8] sm:$0xff]
    %v511 = vld [vmem:[#allocation7 + $0x6b0] sm:$0xff]
    %v512 = vld [vmem:[#allocation7 + $0x6b8] sm:$0xff]
    %v513 = vld [vmem:[#allocation7 + $0x6c0] sm:$0xff]
    %v514 = vld [vmem:[#allocation7 + $0x6c8] sm:$0xff]
    %v515 = vld [vmem:[#allocation7 + $0x6d0] sm:$0xff]
    %v516 = vld [vmem:[#allocation7 + $0x6d8] sm:$0xff]
    %v517 = vld [vmem:[#allocation7 + $0x6e0] sm:$0xff]
    %v518 = vld [vmem:[#allocation7 + $0x6e8] sm:$0xff]
    %v519 = vld [vmem:[#allocation7 + $0x6f0] sm:$0xff]
    %v520 = vld [vmem:[#allocation7 + $0x6f8] sm:$0xff]
    %v521 = vld [vmem:[#allocation7 + $0x700] sm:$0xff]
    %v522 = vld [vmem:[#allocation7 + $0x708] sm:$0xff]
    %v523 = vld [vmem:[#allocation7 + $0x710] sm:$0xff]
    %v524 = vld [vmem:[#allocation7 + $0x718] sm:$0xff]
    %v525 = vld [vmem:[#allocation7 + $0x720] sm:$0xff]
    %v526 = vld [vmem:[#allocation7 + $0x728] sm:$0xff]
    %v527 = vld [vmem:[#allocation7 + $0x730] sm:$0xff]
    %v528 = vld [vmem:[#allocation7 + $0x738] sm:$0xff]
    %v529 = vld [vmem:[#allocation7 + $0x740] sm:$0xff]
    %v530 = vld [vmem:[#allocation7 + $0x748] sm:$0xff]
    %v531 = vld [vmem:[#allocation7 + $0x750] sm:$0xff]
    %v532 = vld [vmem:[#allocation7 + $0x758] sm:$0xff]
    %v533 = vld [vmem:[#allocation7 + $0x760] sm:$0xff]
    %v534 = vld [vmem:[#allocation7 + $0x768] sm:$0xff]
    %v535 = vld [vmem:[#allocation7 + $0x770] sm:$0xff]
    %v536 = vld [vmem:[#allocation7 + $0x778] sm:$0xff]
    %v537 = vld [vmem:[#allocation7 + $0x780] sm:$0xff]
    %v538 = vld [vmem:[#allocation7 + $0x788] sm:$0xff]
    %v539 = vld [vmem:[#allocation7 + $0x790] sm:$0xff]
    %v540 = vld [vmem:[#allocation7 + $0x798] sm:$0xff]
    %v541 = vld [vmem:[#allocation7 + $0x7a0] sm:$0xff]
    %v542 = vld [vmem:[#allocation7 + $0x7a8] sm:$0xff]
    %v543 = vld [vmem:[#allocation7 + $0x7b0] sm:$0xff]
    %v544 = vld [vmem:[#allocation7 + $0x7b8] sm:$0xff]
    %v545 = vld [vmem:[#allocation7 + $0x7c0] sm:$0xff]
    %v546 = vld [vmem:[#allocation7 + $0x7c8] sm:$0xff]
    %v547 = vld [vmem:[#allocation7 + $0x7d0] sm:$0xff]
    %v548 = vld [vmem:[#allocation7 + $0x7d8] sm:$0xff]
    %v549 = vld [vmem:[#allocation7 + $0x7e0] sm:$0xff]
    %v550 = vld [vmem:[#allocation7 + $0x7e8] sm:$0xff]
    %v551 = vld [vmem:[#allocation7 + $0x7f0] sm:$0xff]
    %v552 = vld [vmem:[#allocation7 + $0x7f8] sm:$0xff]
    %v553 = vld [vmem:[#allocation7 + $0x800] sm:$0xff]
    %v554 = vld [vmem:[#allocation7 + $0x808] sm:$0xff]
    %v555 = vld [vmem:[#allocation7 + $0x810] sm:$0xff]
    %v556 = vld [vmem:[#allocation7 + $0x818] sm:$0xff]
    %v557 = vld [vmem:[#allocation7 + $0x820] sm:$0xff]
    %v558 = vld [vmem:[#allocation7 + $0x828] sm:$0xff]
    %v559 = vld [vmem:[#allocation7 + $0x830] sm:$0xff]
    %v560 = vld [vmem:[#allocation7 + $0x838] sm:$0xff]
    %v561 = vld [vmem:[#allocation7 + $0x840] sm:$0xff]
    %v562 = vld [vmem:[#allocation7 + $0x848] sm:$0xff]
    %v563 = vld [vmem:[#allocation7 + $0x850] sm:$0xff]
    %v564 = vld [vmem:[#allocation7 + $0x858] sm:$0xff]
    %v565 = vld [vmem:[#allocation7 + $0x860] sm:$0xff]
    %v566 = vld [vmem:[#allocation7 + $0x868] sm:$0xff]
    %v567 = vld [vmem:[#allocation7 + $0x870] sm:$0xff]
    %v568 = vld [vmem:[#allocation7 + $0x878] sm:$0xff]
    %v569 = vld [vmem:[#allocation7 + $0x880] sm:$0xff]
    %v570 = vld [vmem:[#allocation7 + $0x888] sm:$0xff]
    %v571 = vld [vmem:[#allocation7 + $0x890] sm:$0xff]
    %v572 = vld [vmem:[#allocation7 + $0x898] sm:$0xff]
    %v573 = vld [vmem:[#allocation7 + $0x8a0] sm:$0xff]
    %v574 = vld [vmem:[#allocation7 + $0x8a8] sm:$0xff]
    %v575 = vld [vmem:[#allocation7 + $0x8b0] sm:$0xff]
    %v576 = vld [vmem:[#allocation7 + $0x8b8] sm:$0xff]
    %v577 = vld [vmem:[#allocation7 + $0x8c0] sm:$0xff]
    %v578 = vld [vmem:[#allocation7 + $0x8c8] sm:$0xff]
    %v579 = vld [vmem:[#allocation7 + $0x8d0] sm:$0xff]
    %v580 = vld [vmem:[#allocation7 + $0x8d8] sm:$0xff]
    %v581 = vld [vmem:[#allocation7 + $0x8e0] sm:$0xff]
    %v582 = vld [vmem:[#allocation7 + $0x8e8] sm:$0xff]
    %v583 = vld [vmem:[#allocation7 + $0x8f0] sm:$0xff]
    %v584 = vld [vmem:[#allocation7 + $0x8f8] sm:$0xff]
    %v585 = vld [vmem:[#allocation7 + $0x900] sm:$0xff]
    %v586 = vld [vmem:[#allocation7 + $0x908] sm:$0xff]
    %v587 = vld [vmem:[#allocation7 + $0x910] sm:$0xff]
    %v588 = vld [vmem:[#allocation7 + $0x918] sm:$0xff]
    %v589 = vld [vmem:[#allocation7 + $0x920] sm:$0xff]
    %v590 = vld [vmem:[#allocation7 + $0x928] sm:$0xff]
    %v591 = vld [vmem:[#allocation7 + $0x930] sm:$0xff]
    %v592 = vld [vmem:[#allocation7 + $0x938] sm:$0xff]
    %v593 = vld [vmem:[#allocation7 + $0x940] sm:$0xff]
    %v594 = vld [vmem:[#allocation7 + $0x948] sm:$0xff]
    %v595 = vld [vmem:[#allocation7 + $0x950] sm:$0xff]
    %v596 = vld [vmem:[#allocation7 + $0x958] sm:$0xff]
    %v597 = vld [vmem:[#allocation7 + $0x960] sm:$0xff]
    %v598 = vld [vmem:[#allocation7 + $0x968] sm:$0xff]
    %v599 = vld [vmem:[#allocation7 + $0x970] sm:$0xff]
    %v600 = vld [vmem:[#allocation7 + $0x978] sm:$0xff]
    %v601 = vld [vmem:[#allocation7 + $0x980] sm:$0xff]
    %v602 = vld [vmem:[#allocation7 + $0x988] sm:$0xff]
    %v603 = vld [vmem:[#allocation7 + $0x990] sm:$0xff]
    %v604 = vld [vmem:[#allocation7 + $0x998] sm:$0xff]
    %v605 = vld [vmem:[#allocation7 + $0x9a0] sm:$0xff]
    %v606 = vld [vmem:[#allocation7 + $0x9a8] sm:$0xff]
    %v607 = vld [vmem:[#allocation7 + $0x9b0] sm:$0xff]
    %v608 = vld [vmem:[#allocation7 + $0x9b8] sm:$0xff]
    %v609 = vld [vmem:[#allocation7 + $0x9c0] sm:$0xff]
    %v610 = vld [vmem:[#allocation7 + $0x9c8] sm:$0xff]
    %v611 = vld [vmem:[#allocation7 + $0x9d0] sm:$0xff]
    %v612 = vld [vmem:[#allocation7 + $0x9d8] sm:$0xff]
    %v613 = vld [vmem:[#allocation7 + $0x9e0] sm:$0xff]
    %v614 = vld [vmem:[#allocation7 + $0x9e8] sm:$0xff]
    %v615 = vld [vmem:[#allocation7 + $0x9f0] sm:$0xff]
    %v616 = vld [vmem:[#allocation7 + $0x9f8] sm:$0xff]
    %v617 = vld [vmem:[#allocation7 + $0xa00] sm:$0xff]
    %v618 = vld [vmem:[#allocation7 + $0xa08] sm:$0xff]
    %v619 = vld [vmem:[#allocation7 + $0xa10] sm:$0xff]
    %v620 = vld [vmem:[#allocation7 + $0xa18] sm:$0xff]
    %v621 = vld [vmem:[#allocation7 + $0xa20] sm:$0xff]
    %v622 = vld [vmem:[#allocation7 + $0xa28] sm:$0xff]
    %v623 = vld [vmem:[#allocation7 + $0xa30] sm:$0xff]
    %v624 = vld [vmem:[#allocation7 + $0xa38] sm:$0xff]
    %v625 = vld [vmem:[#allocation7 + $0xa40] sm:$0xff]
    %v626 = vld [vmem:[#allocation7 + $0xa48] sm:$0xff]
    %v627 = vld [vmem:[#allocation7 + $0xa50] sm:$0xff]
    %v628 = vld [vmem:[#allocation7 + $0xa58] sm:$0xff]
    %v629 = vld [vmem:[#allocation7 + $0xa60] sm:$0xff]
    %v630 = vld [vmem:[#allocation7 + $0xa68] sm:$0xff]
    %v631 = vld [vmem:[#allocation7 + $0xa70] sm:$0xff]
    %v632 = vld [vmem:[#allocation7 + $0xa78] sm:$0xff]
    %v633 = vld [vmem:[#allocation7 + $0xa80] sm:$0xff]
    %v634 = vld [vmem:[#allocation7 + $0xa88] sm:$0xff]
    %v635 = vld [vmem:[#allocation7 + $0xa90] sm:$0xff]
    %v636 = vld [vmem:[#allocation7 + $0xa98] sm:$0xff]
    %v637 = vld [vmem:[#allocation7 + $0xaa0] sm:$0xff]
    %v638 = vld [vmem:[#allocation7 + $0xaa8] sm:$0xff]
    %v639 = vld [vmem:[#allocation7 + $0xab0] sm:$0xff]
    %v640 = vld [vmem:[#allocation7 + $0xab8] sm:$0xff]
    %v641 = vld [vmem:[#allocation7 + $0xac0] sm:$0xff]
    %v642 = vld [vmem:[#allocation7 + $0xac8] sm:$0xff]
    %v643 = vld [vmem:[#allocation7 + $0xad0] sm:$0xff]
    %v644 = vld [vmem:[#allocation7 + $0xad8] sm:$0xff]
    %v645 = vld [vmem:[#allocation7 + $0xae0] sm:$0xff]
    %v646 = vld [vmem:[#allocation7 + $0xae8] sm:$0xff]
    %v647 = vld [vmem:[#allocation7 + $0xaf0] sm:$0xff]
    %v648 = vld [vmem:[#allocation7 + $0xaf8] sm:$0xff]
    %v649 = vld [vmem:[#allocation7 + $0xb00] sm:$0xff]
    %v650 = vld [vmem:[#allocation7 + $0xb08] sm:$0xff]
    %v651 = vld [vmem:[#allocation7 + $0xb10] sm:$0xff]
    %v652 = vld [vmem:[#allocation7 + $0xb18] sm:$0xff]
    %v653 = vld [vmem:[#allocation7 + $0xb20] sm:$0xff]
    %v654 = vld [vmem:[#allocation7 + $0xb28] sm:$0xff]
    %v655 = vld [vmem:[#allocation7 + $0xb30] sm:$0xff]
    %v656 = vld [vmem:[#allocation7 + $0xb38] sm:$0xff]
    %v657 = vld [vmem:[#allocation7 + $0xb40] sm:$0xff]
    %v658 = vld [vmem:[#allocation7 + $0xb48] sm:$0xff]
    %v659 = vld [vmem:[#allocation7 + $0xb50] sm:$0xff]
    %v660 = vld [vmem:[#allocation7 + $0xb58] sm:$0xff]
    %v661 = vld [vmem:[#allocation7 + $0xb60] sm:$0xff]
    %v662 = vld [vmem:[#allocation7 + $0xb68] sm:$0xff]
    %v663 = vld [vmem:[#allocation7 + $0xb70] sm:$0xff]
    %v664 = vld [vmem:[#allocation7 + $0xb78] sm:$0xff]
    %v665 = vld [vmem:[#allocation7 + $0xb80] sm:$0xff]
    %v666 = vld [vmem:[#allocation7 + $0xb88] sm:$0xff]
    %v667 = vld [vmem:[#allocation7 + $0xb90] sm:$0xff]
    %v668 = vld [vmem:[#allocation7 + $0xb98] sm:$0xff]
    %v669 = vld [vmem:[#allocation7 + $0xba0] sm:$0xff]
    %v670 = vld [vmem:[#allocation7 + $0xba8] sm:$0xff]
    %v671 = vld [vmem:[#allocation7 + $0xbb0] sm:$0xff]
    %v672 = vld [vmem:[#allocation7 + $0xbb8] sm:$0xff]
    %v673 = vld [vmem:[#allocation7 + $0xbc0] sm:$0xff]
    %v674 = vld [vmem:[#allocation7 + $0xbc8] sm:$0xff]
    %v675 = vld [vmem:[#allocation7 + $0xbd0] sm:$0xff]
    %v676 = vld [vmem:[#allocation7 + $0xbd8] sm:$0xff]
    %v677 = vld [vmem:[#allocation7 + $0xbe0] sm:$0xff]
    %v678 = vld [vmem:[#allocation7 + $0xbe8] sm:$0xff]
    %v679 = vld [vmem:[#allocation7 + $0xbf0] sm:$0xff]
    %v680 = vld [vmem:[#allocation7 + $0xbf8] sm:$0xff]
    %v681 = vld [vmem:[#allocation7 + $0xc00] sm:$0xff]
    %v682 = vld [vmem:[#allocation7 + $0xc08] sm:$0xff]
    %v683 = vld [vmem:[#allocation7 + $0xc10] sm:$0xff]
    %v684 = vld [vmem:[#allocation7 + $0xc18] sm:$0xff]
    %v685 = vld [vmem:[#allocation7 + $0xc20] sm:$0xff]
    %v686 = vld [vmem:[#allocation7 + $0xc28] sm:$0xff]
    %v687 = vld [vmem:[#allocation7 + $0xc30] sm:$0xff]
    %v688 = vld [vmem:[#allocation7 + $0xc38] sm:$0xff]
    %v689 = vld [vmem:[#allocation7 + $0xc40] sm:$0xff]
    %v690 = vld [vmem:[#allocation7 + $0xc48] sm:$0xff]
    %v691 = vld [vmem:[#allocation7 + $0xc50] sm:$0xff]
    %v692 = vld [vmem:[#allocation7 + $0xc58] sm:$0xff]
    %v693 = vld [vmem:[#allocation7 + $0xc60] sm:$0xff]
    %v694 = vld [vmem:[#allocation7 + $0xc68] sm:$0xff]
    %v695 = vld [vmem:[#allocation7 + $0xc70] sm:$0xff]
    %v696 = vld [vmem:[#allocation7 + $0xc78] sm:$0xff]
    %v697 = vld [vmem:[#allocation7 + $0xc80] sm:$0xff]
    %v698 = vld [vmem:[#allocation7 + $0xc88] sm:$0xff]
    %v699 = vld [vmem:[#allocation7 + $0xc90] sm:$0xff]
    %v700 = vld [vmem:[#allocation7 + $0xc98] sm:$0xff]
    %v701 = vld [vmem:[#allocation7 + $0xca0] sm:$0xff]
    %v702 = vld [vmem:[#allocation7 + $0xca8] sm:$0xff]
    %v703 = vld [vmem:[#allocation7 + $0xcb0] sm:$0xff]
    %v704 = vld [vmem:[#allocation7 + $0xcb8] sm:$0xff]
    %v705 = vld [vmem:[#allocation7 + $0xcc0] sm:$0xff]
    %v706 = vld [vmem:[#allocation7 + $0xcc8] sm:$0xff]
    %v707 = vld [vmem:[#allocation7 + $0xcd0] sm:$0xff]
    %v708 = vld [vmem:[#allocation7 + $0xcd8] sm:$0xff]
    %v709 = vld [vmem:[#allocation7 + $0xce0] sm:$0xff]
    %v710 = vld [vmem:[#allocation7 + $0xce8] sm:$0xff]
    %v711 = vld [vmem:[#allocation7 + $0xcf0] sm:$0xff]
    %v712 = vld [vmem:[#allocation7 + $0xcf8] sm:$0xff]
    %v713 = vld [vmem:[#allocation7 + $0xd00] sm:$0xff]
    %v714 = vld [vmem:[#allocation7 + $0xd08] sm:$0xff]
    %v715 = vld [vmem:[#allocation7 + $0xd10] sm:$0xff]
    %v716 = vld [vmem:[#allocation7 + $0xd18] sm:$0xff]
    %v717 = vld [vmem:[#allocation7 + $0xd20] sm:$0xff]
    %v718 = vld [vmem:[#allocation7 + $0xd28] sm:$0xff]
    %v719 = vld [vmem:[#allocation7 + $0xd30] sm:$0xff]
    %v720 = vld [vmem:[#allocation7 + $0xd38] sm:$0xff]
    %v721 = vld [vmem:[#allocation7 + $0xd40] sm:$0xff]
    %v722 = vld [vmem:[#allocation7 + $0xd48] sm:$0xff]
    %v723 = vld [vmem:[#allocation7 + $0xd50] sm:$0xff]
    %v724 = vld [vmem:[#allocation7 + $0xd58] sm:$0xff]
    %v725 = vld [vmem:[#allocation7 + $0xd60] sm:$0xff]
    %v726 = vld [vmem:[#allocation7 + $0xd68] sm:$0xff]
    %v727 = vld [vmem:[#allocation7 + $0xd70] sm:$0xff]
    %v728 = vld [vmem:[#allocation7 + $0xd78] sm:$0xff]
    %v729 = vld [vmem:[#allocation7 + $0xd80] sm:$0xff]
    %v730 = vld [vmem:[#allocation7 + $0xd88] sm:$0xff]
    %v731 = vld [vmem:[#allocation7 + $0xd90] sm:$0xff]
    %v732 = vld [vmem:[#allocation7 + $0xd98] sm:$0xff]
    %v733 = vld [vmem:[#allocation7 + $0xda0] sm:$0xff]
    %v734 = vld [vmem:[#allocation7 + $0xda8] sm:$0xff]
    %v735 = vld [vmem:[#allocation7 + $0xdb0] sm:$0xff]
    %v736 = vld [vmem:[#allocation7 + $0xdb8] sm:$0xff]
    %v737 = vld [vmem:[#allocation7 + $0xdc0] sm:$0xff]
    %v738 = vld [vmem:[#allocation7 + $0xdc8] sm:$0xff]
    %v739 = vld [vmem:[#allocation7 + $0xdd0] sm:$0xff]
    %v740 = vld [vmem:[#allocation7 + $0xdd8] sm:$0xff]
    %v741 = vld [vmem:[#allocation7 + $0xde0] sm:$0xff]
    %v742 = vld [vmem:[#allocation7 + $0xde8] sm:$0xff]
    %v743 = vld [vmem:[#allocation7 + $0xdf0] sm:$0xff]
    %v744 = vld [vmem:[#allocation7 + $0xdf8] sm:$0xff]
    %v745 = vld [vmem:[#allocation7 + $0xe00] sm:$0xff]
    %v746 = vld [vmem:[#allocation7 + $0xe08] sm:$0xff]
    %v747 = vld [vmem:[#allocation7 + $0xe10] sm:$0xff]
    %v748 = vld [vmem:[#allocation7 + $0xe18] sm:$0xff]
    %v749 = vld [vmem:[#allocation7 + $0xe20] sm:$0xff]
    %v750 = vld [vmem:[#allocation7 + $0xe28] sm:$0xff]
    %v751 = vld [vmem:[#allocation7 + $0xe30] sm:$0xff]
    %v752 = vld [vmem:[#allocation7 + $0xe38] sm:$0xff]
    %v753 = vld [vmem:[#allocation7 + $0xe40] sm:$0xff]
    %v754 = vld [vmem:[#allocation7 + $0xe48] sm:$0xff]
    %v755 = vld [vmem:[#allocation7 + $0xe50] sm:$0xff]
    %v756 = vld [vmem:[#allocation7 + $0xe58] sm:$0xff]
    %v757 = vld [vmem:[#allocation7 + $0xe60] sm:$0xff]
    %v758 = vld [vmem:[#allocation7 + $0xe68] sm:$0xff]
    %v759 = vld [vmem:[#allocation7 + $0xe70] sm:$0xff]
    %v760 = vld [vmem:[#allocation7 + $0xe78] sm:$0xff]
    %v761 = vld [vmem:[#allocation7 + $0xe80] sm:$0xff]
    %v762 = vld [vmem:[#allocation7 + $0xe88] sm:$0xff]
    %v763 = vld [vmem:[#allocation7 + $0xe90] sm:$0xff]
    %v764 = vld [vmem:[#allocation7 + $0xe98] sm:$0xff]
    %v765 = vld [vmem:[#allocation7 + $0xea0] sm:$0xff]
    %v766 = vld [vmem:[#allocation7 + $0xea8] sm:$0xff]
    %v767 = vld [vmem:[#allocation7 + $0xeb0] sm:$0xff]
    %v768 = vld [vmem:[#allocation7 + $0xeb8] sm:$0xff]
    %v769 = vld [vmem:[#allocation7 + $0xec0] sm:$0xff]
    %v770 = vld [vmem:[#allocation7 + $0xec8] sm:$0xff]
    %v771 = vld [vmem:[#allocation7 + $0xed0] sm:$0xff]
    %v772 = vld [vmem:[#allocation7 + $0xed8] sm:$0xff]
    %v773 = vld [vmem:[#allocation7 + $0xee0] sm:$0xff]
    %v774 = vld [vmem:[#allocation7 + $0xee8] sm:$0xff]
    %v775 = vld [vmem:[#allocation7 + $0xef0] sm:$0xff]
    %v776 = vld [vmem:[#allocation7 + $0xef8] sm:$0xff]
    %v777 = vld [vmem:[#allocation7 + $0xf00] sm:$0xff]
    %v778 = vld [vmem:[#allocation7 + $0xf08] sm:$0xff]
    %v779 = vld [vmem:[#allocation7 + $0xf10] sm:$0xff]
    %v780 = vld [vmem:[#allocation7 + $0xf18] sm:$0xff]
    %v781 = vld [vmem:[#allocation7 + $0xf20] sm:$0xff]
    %v782 = vld [vmem:[#allocation7 + $0xf28] sm:$0xff]
    %v783 = vld [vmem:[#allocation7 + $0xf30] sm:$0xff]
    %v784 = vld [vmem:[#allocation7 + $0xf38] sm:$0xff]
    %v785 = vld [vmem:[#allocation7 + $0xf40] sm:$0xff]
    %v786 = vld [vmem:[#allocation7 + $0xf48] sm:$0xff]
    %v787 = vld [vmem:[#allocation7 + $0xf50] sm:$0xff]
    %v788 = vld [vmem:[#allocation7 + $0xf58] sm:$0xff]
    %v789 = vld [vmem:[#allocation7 + $0xf60] sm:$0xff]
    %v790 = vld [vmem:[#allocation7 + $0xf68] sm:$0xff]
    %v791 = vld [vmem:[#allocation7 + $0xf70] sm:$0xff]
    %v792 = vld [vmem:[#allocation7 + $0xf78] sm:$0xff]
    %v793 = vld [vmem:[#allocation7 + $0xf80] sm:$0xff]
    %v794 = vld [vmem:[#allocation7 + $0xf88] sm:$0xff]
    %v795 = vld [vmem:[#allocation7 + $0xf90] sm:$0xff]
    %v796 = vld [vmem:[#allocation7 + $0xf98] sm:$0xff]
    %v797 = vld [vmem:[#allocation7 + $0xfa0] sm:$0xff]
    %v798 = vld [vmem:[#allocation7 + $0xfa8] sm:$0xff]
    %v799 = vld [vmem:[#allocation7 + $0xfb0] sm:$0xff]
    %v800 = vld [vmem:[#allocation7 + $0xfb8] sm:$0xff]
    %v801 = vld [vmem:[#allocation7 + $0xfc0] sm:$0xff]
    %v802 = vld [vmem:[#allocation7 + $0xfc8] sm:$0xff]
    %v803 = vld [vmem:[#allocation7 + $0xfd0] sm:$0xff]
    %v804 = vld [vmem:[#allocation7 + $0xfd8] sm:$0xff]
    %v805 = vld [vmem:[#allocation7 + $0xfe0] sm:$0xff]
    %v806 = vld [vmem:[#allocation7 + $0xfe8] sm:$0xff]
    %v807 = vld [vmem:[#allocation7 + $0xff0] sm:$0xff]
    %v808 = vld [vmem:[#allocation7 + $0xff8] sm:$0xff]
    %v809 = vld [vmem:[#allocation7 + $0x1000] sm:$0xff]
    %v810 = vld [vmem:[#allocation7 + $0x1008] sm:$0xff]
    %v811 = vld [vmem:[#allocation7 + $0x1010] sm:$0xff]
    %v812 = vld [vmem:[#allocation7 + $0x1018] sm:$0xff]
    %v813 = vld [vmem:[#allocation7 + $0x1020] sm:$0xff]
    %v814 = vld [vmem:[#allocation7 + $0x1028] sm:$0xff]
    %v815 = vld [vmem:[#allocation7 + $0x1030] sm:$0xff]
    %v816 = vld [vmem:[#allocation7 + $0x1038] sm:$0xff]
    %v817 = vld [vmem:[#allocation7 + $0x1040] sm:$0xff]
    %v818 = vld [vmem:[#allocation7 + $0x1048] sm:$0xff]
    %v819 = vld [vmem:[#allocation7 + $0x1050] sm:$0xff]
    %v820 = vld [vmem:[#allocation7 + $0x1058] sm:$0xff]
    %v821 = vld [vmem:[#allocation7 + $0x1060] sm:$0xff]
    %v822 = vld [vmem:[#allocation7 + $0x1068] sm:$0xff]
    %v823 = vld [vmem:[#allocation7 + $0x1070] sm:$0xff]
    %v824 = vld [vmem:[#allocation7 + $0x1078] sm:$0xff]
    %v825 = vld [vmem:[#allocation7 + $0x1080] sm:$0xff]
    %v826 = vld [vmem:[#allocation7 + $0x1088] sm:$0xff]
    %v827 = vld [vmem:[#allocation7 + $0x1090] sm:$0xff]
    %v828 = vld [vmem:[#allocation7 + $0x1098] sm:$0xff]
    %v829 = vld [vmem:[#allocation7 + $0x10a0] sm:$0xff]
    %v830 = vld [vmem:[#allocation7 + $0x10a8] sm:$0xff]
    %v831 = vld [vmem:[#allocation7 + $0x10b0] sm:$0xff]
    %v832 = vld [vmem:[#allocation7 + $0x10b8] sm:$0xff]
    %v833 = vld [vmem:[#allocation7 + $0x10c0] sm:$0xff]
    %v834 = vld [vmem:[#allocation7 + $0x10c8] sm:$0xff]
    %v835 = vld [vmem:[#allocation7 + $0x10d0] sm:$0xff]
    %v836 = vld [vmem:[#allocation7 + $0x10d8] sm:$0xff]
    %v837 = vld [vmem:[#allocation7 + $0x10e0] sm:$0xff]
    %v838 = vld [vmem:[#allocation7 + $0x10e8] sm:$0xff]
    %v839 = vld [vmem:[#allocation7 + $0x10f0] sm:$0xff]
    %v840 = vld [vmem:[#allocation7 + $0x10f8] sm:$0xff]
    %v841 = vld [vmem:[#allocation7 + $0x1100] sm:$0xff]
    %v842 = vld [vmem:[#allocation7 + $0x1108] sm:$0xff]
    %v843 = vld [vmem:[#allocation7 + $0x1110] sm:$0xff]
    %v844 = vld [vmem:[#allocation7 + $0x1118] sm:$0xff]
    %v845 = vld [vmem:[#allocation7 + $0x1120] sm:$0xff]
    %v846 = vld [vmem:[#allocation7 + $0x1128] sm:$0xff]
    %v847 = vld [vmem:[#allocation7 + $0x1130] sm:$0xff]
    %v848 = vld [vmem:[#allocation7 + $0x1138] sm:$0xff]
    %v849 = vld [vmem:[#allocation7 + $0x1140] sm:$0xff]
    %v850 = vld [vmem:[#allocation7 + $0x1148] sm:$0xff]
    %v851 = vld [vmem:[#allocation7 + $0x1150] sm:$0xff]
    %v852 = vld [vmem:[#allocation7 + $0x1158] sm:$0xff]
    %v853 = vld [vmem:[#allocation7 + $0x1160] sm:$0xff]
    %v854 = vld [vmem:[#allocation7 + $0x1168] sm:$0xff]
    %v855 = vld [vmem:[#allocation7 + $0x1170] sm:$0xff]
    %v856 = vld [vmem:[#allocation7 + $0x1178] sm:$0xff]
    %v857 = vld [vmem:[#allocation7 + $0x1180] sm:$0xff]
    %v858 = vld [vmem:[#allocation7 + $0x1188] sm:$0xff]
    %v859 = vld [vmem:[#allocation7 + $0x1190] sm:$0xff]
    %v860 = vld [vmem:[#allocation7 + $0x1198] sm:$0xff]
    %v861 = vld [vmem:[#allocation7 + $0x11a0] sm:$0xff]
    %v862 = vld [vmem:[#allocation7 + $0x11a8] sm:$0xff]
    %v863 = vld [vmem:[#allocation7 + $0x11b0] sm:$0xff]
    %v864 = vld [vmem:[#allocation7 + $0x11b8] sm:$0xff]
    %v865 = vld [vmem:[#allocation7 + $0x11c0] sm:$0xff]
    %v866 = vld [vmem:[#allocation7 + $0x11c8] sm:$0xff]
    %v867 = vld [vmem:[#allocation7 + $0x11d0] sm:$0xff]
    %v868 = vld [vmem:[#allocation7 + $0x11d8] sm:$0xff]
    %v869 = vld [vmem:[#allocation7 + $0x11e0] sm:$0xff]
    %v870 = vld [vmem:[#allocation7 + $0x11e8] sm:$0xff]
    %v871 = vld [vmem:[#allocation7 + $0x11f0] sm:$0xff]
    %v872 = vld [vmem:[#allocation7 + $0x11f8] sm:$0xff]
    %v873 = vld [vmem:[#allocation7 + $0x1200] sm:$0xff]
    %v874 = vld [vmem:[#allocation7 + $0x1208] sm:$0xff]
    %v875 = vld [vmem:[#allocation7 + $0x1210] sm:$0xff]
    %v876 = vld [vmem:[#allocation7 + $0x1218] sm:$0xff]
    %v877 = vld [vmem:[#allocation7 + $0x1220] sm:$0xff]
    %v878 = vld [vmem:[#allocation7 + $0x1228] sm:$0xff]
    %v879 = vld [vmem:[#allocation7 + $0x1230] sm:$0xff]
    %v880 = vld [vmem:[#allocation7 + $0x1238] sm:$0xff]
    %v881 = vld [vmem:[#allocation7 + $0x1240] sm:$0xff]
    %v882 = vld [vmem:[#allocation7 + $0x1248] sm:$0xff]
    %v883 = vld [vmem:[#allocation7 + $0x1250] sm:$0xff]
    %v884 = vld [vmem:[#allocation7 + $0x1258] sm:$0xff]
    %v885 = vld [vmem:[#allocation7 + $0x1260] sm:$0xff]
    %v886 = vld [vmem:[#allocation7 + $0x1268] sm:$0xff]
    %v887 = vld [vmem:[#allocation7 + $0x1270] sm:$0xff]
    %v888 = vld [vmem:[#allocation7 + $0x1278] sm:$0xff]
    %v889 = vld [vmem:[#allocation7 + $0x1280] sm:$0xff]
    %v890 = vld [vmem:[#allocation7 + $0x1288] sm:$0xff]
    %v891 = vld [vmem:[#allocation7 + $0x1290] sm:$0xff]
    %v892 = vld [vmem:[#allocation7 + $0x1298] sm:$0xff]
    %v893 = vld [vmem:[#allocation7 + $0x12a0] sm:$0xff]
    %v894 = vld [vmem:[#allocation7 + $0x12a8] sm:$0xff]
    %v895 = vld [vmem:[#allocation7 + $0x12b0] sm:$0xff]
    %v896 = vld [vmem:[#allocation7 + $0x12b8] sm:$0xff]
    %v897 = vld [vmem:[#allocation7 + $0x12c0] sm:$0xff]
    %v898 = vld [vmem:[#allocation7 + $0x12c8] sm:$0xff]
    %v899 = vld [vmem:[#allocation7 + $0x12d0] sm:$0xff]
    %v900 = vld [vmem:[#allocation7 + $0x12d8] sm:$0xff]
    %v901 = vld [vmem:[#allocation7 + $0x12e0] sm:$0xff]
    %v902 = vld [vmem:[#allocation7 + $0x12e8] sm:$0xff]
    %v903 = vld [vmem:[#allocation7 + $0x12f0] sm:$0xff]
    %v904 = vld [vmem:[#allocation7 + $0x12f8] sm:$0xff]
    %v905 = vld [vmem:[#allocation7 + $0x1300] sm:$0xff]
    %v906 = vld [vmem:[#allocation7 + $0x1308] sm:$0xff]
    %v907 = vld [vmem:[#allocation7 + $0x1310] sm:$0xff]
    %v908 = vld [vmem:[#allocation7 + $0x1318] sm:$0xff]
    %v909 = vld [vmem:[#allocation7 + $0x1320] sm:$0xff]
    %v910 = vld [vmem:[#allocation7 + $0x1328] sm:$0xff]
    %v911 = vld [vmem:[#allocation7 + $0x1330] sm:$0xff]
    %v912 = vld [vmem:[#allocation7 + $0x1338] sm:$0xff]
    %v913 = vld [vmem:[#allocation7 + $0x1340] sm:$0xff]
    %v914 = vld [vmem:[#allocation7 + $0x1348] sm:$0xff]
    %v915 = vld [vmem:[#allocation7 + $0x1350] sm:$0xff]
    %v916 = vld [vmem:[#allocation7 + $0x1358] sm:$0xff]
    %v917 = vld [vmem:[#allocation7 + $0x1360] sm:$0xff]
    %v918 = vld [vmem:[#allocation7 + $0x1368] sm:$0xff]
    %v919 = vld [vmem:[#allocation7 + $0x1370] sm:$0xff]
    %v920 = vld [vmem:[#allocation7 + $0x1378] sm:$0xff]
    %v921 = vld [vmem:[#allocation7 + $0x1380] sm:$0xff]
    %v922 = vld [vmem:[#allocation7 + $0x1388] sm:$0xff]
    %v923 = vld [vmem:[#allocation7 + $0x1390] sm:$0xff]
    %v924 = vld [vmem:[#allocation7 + $0x1398] sm:$0xff]
    %v925 = vld [vmem:[#allocation7 + $0x13a0] sm:$0xff]
    %v926 = vld [vmem:[#allocation7 + $0x13a8] sm:$0xff]
    %v927 = vld [vmem:[#allocation7 + $0x13b0] sm:$0xff]
    %v928 = vld [vmem:[#allocation7 + $0x13b8] sm:$0xff]
    %v929 = vld [vmem:[#allocation7 + $0x13c0] sm:$0xff]
    %v930 = vld [vmem:[#allocation7 + $0x13c8] sm:$0xff]
    %v931 = vld [vmem:[#allocation7 + $0x13d0] sm:$0xff]
    %v932 = vld [vmem:[#allocation7 + $0x13d8] sm:$0xff]
    %v933 = vld [vmem:[#allocation7 + $0x13e0] sm:$0xff]
    %v934 = vld [vmem:[#allocation7 + $0x13e8] sm:$0xff]
    %v935 = vld [vmem:[#allocation7 + $0x13f0] sm:$0xff]
    %v936 = vld [vmem:[#allocation7 + $0x13f8] sm:$0xff]
    %v937 = vld [vmem:[#allocation7 + $0x1400] sm:$0xff]
    %v938 = vld [vmem:[#allocation7 + $0x1408] sm:$0xff]
    %v939 = vld [vmem:[#allocation7 + $0x1410] sm:$0xff]
    %v940 = vld [vmem:[#allocation7 + $0x1418] sm:$0xff]
    %v941 = vld [vmem:[#allocation7 + $0x1420] sm:$0xff]
    %v942 = vld [vmem:[#allocation7 + $0x1428] sm:$0xff]
    %v943 = vld [vmem:[#allocation7 + $0x1430] sm:$0xff]
    %v944 = vld [vmem:[#allocation7 + $0x1438] sm:$0xff]
    %v945 = vld [vmem:[#allocation7 + $0x1440] sm:$0xff]
    %v946 = vld [vmem:[#allocation7 + $0x1448] sm:$0xff]
    %v947 = vld [vmem:[#allocation7 + $0x1450] sm:$0xff]
    %v948 = vld [vmem:[#allocation7 + $0x1458] sm:$0xff]
    %v949 = vld [vmem:[#allocation7 + $0x1460] sm:$0xff]
    %v950 = vld [vmem:[#allocation7 + $0x1468] sm:$0xff]
    %v951 = vld [vmem:[#allocation7 + $0x1470] sm:$0xff]
    %v952 = vld [vmem:[#allocation7 + $0x1478] sm:$0xff]
    %v953 = vld [vmem:[#allocation7 + $0x1480] sm:$0xff]
    %v954 = vld [vmem:[#allocation7 + $0x1488] sm:$0xff]
    %v955 = vld [vmem:[#allocation7 + $0x1490] sm:$0xff]
    %v956 = vld [vmem:[#allocation7 + $0x1498] sm:$0xff]
    %v957 = vld [vmem:[#allocation7 + $0x14a0] sm:$0xff]
    %v958 = vld [vmem:[#allocation7 + $0x14a8] sm:$0xff]
    %v959 = vld [vmem:[#allocation7 + $0x14b0] sm:$0xff]
    %v960 = vld [vmem:[#allocation7 + $0x14b8] sm:$0xff]
    %v961 = vld [vmem:[#allocation7 + $0x14c0] sm:$0xff]
    %v962 = vld [vmem:[#allocation7 + $0x14c8] sm:$0xff]
    %v963 = vld [vmem:[#allocation7 + $0x14d0] sm:$0xff]
    %v964 = vld [vmem:[#allocation7 + $0x14d8] sm:$0xff]
    %v965 = vld [vmem:[#allocation7 + $0x14e0] sm:$0xff]
    %v966 = vld [vmem:[#allocation7 + $0x14e8] sm:$0xff]
    %v967 = vld [vmem:[#allocation7 + $0x14f0] sm:$0xff]
    %v968 = vld [vmem:[#allocation7 + $0x14f8] sm:$0xff]
    %v969 = vld [vmem:[#allocation7 + $0x1500] sm:$0xff]
    %v970 = vld [vmem:[#allocation7 + $0x1508] sm:$0xff]
    %v971 = vld [vmem:[#allocation7 + $0x1510] sm:$0xff]
    %v972 = vld [vmem:[#allocation7 + $0x1518] sm:$0xff]
    %v973 = vld [vmem:[#allocation7 + $0x1520] sm:$0xff]
    %v974 = vld [vmem:[#allocation7 + $0x1528] sm:$0xff]
    %v975 = vld [vmem:[#allocation7 + $0x1530] sm:$0xff]
    %v976 = vld [vmem:[#allocation7 + $0x1538] sm:$0xff]
    %v977 = vld [vmem:[#allocation7 + $0x1540] sm:$0xff]
    %v978 = vld [vmem:[#allocation7 + $0x1548] sm:$0xff]
    %v979 = vld [vmem:[#allocation7 + $0x1550] sm:$0xff]
    %v980 = vld [vmem:[#allocation7 + $0x1558] sm:$0xff]
    %v981 = vld [vmem:[#allocation7 + $0x1560] sm:$0xff]
    %v982 = vld [vmem:[#allocation7 + $0x1568] sm:$0xff]
    %v983 = vld [vmem:[#allocation7 + $0x1570] sm:$0xff]
    %v984 = vld [vmem:[#allocation7 + $0x1578] sm:$0xff]
    %v985 = vld [vmem:[#allocation7 + $0x1580] sm:$0xff]
    %v986 = vld [vmem:[#allocation7 + $0x1588] sm:$0xff]
    %v987 = vld [vmem:[#allocation7 + $0x1590] sm:$0xff]
    %v988 = vld [vmem:[#allocation7 + $0x1598] sm:$0xff]
    %v989 = vld [vmem:[#allocation7 + $0x15a0] sm:$0xff]
    %v990 = vld [vmem:[#allocation7 + $0x15a8] sm:$0xff]
    %v991 = vld [vmem:[#allocation7 + $0x15b0] sm:$0xff]
    %v992 = vld [vmem:[#allocation7 + $0x15b8] sm:$0xff]
    %v993 = vld [vmem:[#allocation7 + $0x15c0] sm:$0xff]
    %v994 = vld [vmem:[#allocation7 + $0x15c8] sm:$0xff]
    %v995 = vld [vmem:[#allocation7 + $0x15d0] sm:$0xff]
    %v996 = vld [vmem:[#allocation7 + $0x15d8] sm:$0xff]
    %v997 = vld [vmem:[#allocation7 + $0x15e0] sm:$0xff]
    %v998 = vld [vmem:[#allocation7 + $0x15e8] sm:$0xff]
    %v999 = vld [vmem:[#allocation7 + $0x15f0] sm:$0xff]
    %v1000 = vld [vmem:[#allocation7 + $0x15f8] sm:$0xff]
    %v1001 = vld [vmem:[#allocation7 + $0x1600] sm:$0xff]
    %v1002 = vld [vmem:[#allocation7 + $0x1608] sm:$0xff]
    %v1003 = vld [vmem:[#allocation7 + $0x1610] sm:$0xff]
    %v1004 = vld [vmem:[#allocation7 + $0x1618] sm:$0xff]
    %v1005 = vld [vmem:[#allocation7 + $0x1620] sm:$0xff]
    %v1006 = vld [vmem:[#allocation7 + $0x1628] sm:$0xff]
    %v1007 = vld [vmem:[#allocation7 + $0x1630] sm:$0xff]
    %v1008 = vld [vmem:[#allocation7 + $0x1638] sm:$0xff]
    %v1009 = vld [vmem:[#allocation7 + $0x1640] sm:$0xff]
    %v1010 = vld [vmem:[#allocation7 + $0x1648] sm:$0xff]
    %v1011 = vld [vmem:[#allocation7 + $0x1650] sm:$0xff]
    %v1012 = vld [vmem:[#allocation7 + $0x1658] sm:$0xff]
    %v1013 = vld [vmem:[#allocation7 + $0x1660] sm:$0xff]
    %v1014 = vld [vmem:[#allocation7 + $0x1668] sm:$0xff]
    %v1015 = vld [vmem:[#allocation7 + $0x1670] sm:$0xff]
    %v1016 = vld [vmem:[#allocation7 + $0x1678] sm:$0xff]
    %v1017 = vld [vmem:[#allocation7 + $0x1680] sm:$0xff]
    %v1018 = vld [vmem:[#allocation7 + $0x1688] sm:$0xff]
    %v1019 = vld [vmem:[#allocation7 + $0x1690] sm:$0xff]
    %v1020 = vld [vmem:[#allocation7 + $0x1698] sm:$0xff]
    %v1021 = vld [vmem:[#allocation7 + $0x16a0] sm:$0xff]
    %v1022 = vld [vmem:[#allocation7 + $0x16a8] sm:$0xff]
    %v1023 = vld [vmem:[#allocation7 + $0x16b0] sm:$0xff]
    %v1024 = vld [vmem:[#allocation7 + $0x16b8] sm:$0xff]
    %v1025 = vld [vmem:[#allocation7 + $0x16c0] sm:$0xff]
    %v1026 = vld [vmem:[#allocation7 + $0x16c8] sm:$0xff]
    %v1027 = vld [vmem:[#allocation7 + $0x16d0] sm:$0xff]
    %v1028 = vld [vmem:[#allocation7 + $0x16d8] sm:$0xff]
    %v1029 = vld [vmem:[#allocation7 + $0x16e0] sm:$0xff]
    %v1030 = vld [vmem:[#allocation7 + $0x16e8] sm:$0xff]
    %v1031 = vld [vmem:[#allocation7 + $0x16f0] sm:$0xff]
    %v1032 = vld [vmem:[#allocation7 + $0x16f8] sm:$0xff]
    %v1033 = vld [vmem:[#allocation7 + $0x1700] sm:$0xff]
    %v1034 = vld [vmem:[#allocation7 + $0x1708] sm:$0xff]
    %v1035 = vld [vmem:[#allocation7 + $0x1710] sm:$0xff]
    %v1036 = vld [vmem:[#allocation7 + $0x1718] sm:$0xff]
    %v1037 = vld [vmem:[#allocation7 + $0x1720] sm:$0xff]
    %v1038 = vld [vmem:[#allocation7 + $0x1728] sm:$0xff]
    %v1039 = vld [vmem:[#allocation7 + $0x1730] sm:$0xff]
    %v1040 = vld [vmem:[#allocation7 + $0x1738] sm:$0xff]
    %v1041 = vld [vmem:[#allocation7 + $0x1740] sm:$0xff]
    %v1042 = vld [vmem:[#allocation7 + $0x1748] sm:$0xff]
    %v1043 = vld [vmem:[#allocation7 + $0x1750] sm:$0xff]
    %v1044 = vld [vmem:[#allocation7 + $0x1758] sm:$0xff]
    %v1045 = vld [vmem:[#allocation7 + $0x1760] sm:$0xff]
    %v1046 = vld [vmem:[#allocation7 + $0x1768] sm:$0xff]
    %v1047 = vld [vmem:[#allocation7 + $0x1770] sm:$0xff]
    %v1048 = vld [vmem:[#allocation7 + $0x1778] sm:$0xff]
    %v1049 = vld [vmem:[#allocation7 + $0x1780] sm:$0xff]
    %v1050 = vld [vmem:[#allocation7 + $0x1788] sm:$0xff]
    %v1051 = vld [vmem:[#allocation7 + $0x1790] sm:$0xff]
    %v1052 = vld [vmem:[#allocation7 + $0x1798] sm:$0xff]
    %v1053 = vld [vmem:[#allocation7 + $0x17a0] sm:$0xff]
    %v1054 = vld [vmem:[#allocation7 + $0x17a8] sm:$0xff]
    %v1055 = vld [vmem:[#allocation7 + $0x17b0] sm:$0xff]
    %v1056 = vld [vmem:[#allocation7 + $0x17b8] sm:$0xff]
    %v1057 = vld [vmem:[#allocation7 + $0x17c0] sm:$0xff]
    %v1058 = vld [vmem:[#allocation7 + $0x17c8] sm:$0xff]
    %v1059 = vld [vmem:[#allocation7 + $0x17d0] sm:$0xff]
    %v1060 = vld [vmem:[#allocation7 + $0x17d8] sm:$0xff]
    %v1061 = vld [vmem:[#allocation7 + $0x17e0] sm:$0xff]
    %v1062 = vld [vmem:[#allocation7 + $0x17e8] sm:$0xff]
    %v1063 = vld [vmem:[#allocation7 + $0x17f0] sm:$0xff]
    %v1064 = vld [vmem:[#allocation7 + $0x17f8] sm:$0xff]
    %v1065 = vld [vmem:[#allocation7 + $0x1800] sm:$0xff]
    %v1066 = vld [vmem:[#allocation7 + $0x1808] sm:$0xff]
    %v1067 = vld [vmem:[#allocation7 + $0x1810] sm:$0xff]
    %v1068 = vld [vmem:[#allocation7 + $0x1818] sm:$0xff]
    %v1069 = vld [vmem:[#allocation7 + $0x1820] sm:$0xff]
    %v1070 = vld [vmem:[#allocation7 + $0x1828] sm:$0xff]
    %v1071 = vld [vmem:[#allocation7 + $0x1830] sm:$0xff]
    %v1072 = vld [vmem:[#allocation7 + $0x1838] sm:$0xff]
    %v1073 = vld [vmem:[#allocation7 + $0x1840] sm:$0xff]
    %v1074 = vld [vmem:[#allocation7 + $0x1848] sm:$0xff]
    %v1075 = vld [vmem:[#allocation7 + $0x1850] sm:$0xff]
    %v1076 = vld [vmem:[#allocation7 + $0x1858] sm:$0xff]
    %v1077 = vld [vmem:[#allocation7 + $0x1860] sm:$0xff]
    %v1078 = vld [vmem:[#allocation7 + $0x1868] sm:$0xff]
    %v1079 = vld [vmem:[#allocation7 + $0x1870] sm:$0xff]
    %v1080 = vld [vmem:[#allocation7 + $0x1878] sm:$0xff]
    %v1081 = vld [vmem:[#allocation7 + $0x1880] sm:$0xff]
    %v1082 = vld [vmem:[#allocation7 + $0x1888] sm:$0xff]
    %v1083 = vld [vmem:[#allocation7 + $0x1890] sm:$0xff]
    %v1084 = vld [vmem:[#allocation7 + $0x1898] sm:$0xff]
    %v1085 = vld [vmem:[#allocation7 + $0x18a0] sm:$0xff]
    %v1086 = vld [vmem:[#allocation7 + $0x18a8] sm:$0xff]
    %v1087 = vld [vmem:[#allocation7 + $0x18b0] sm:$0xff]
    %v1088 = vld [vmem:[#allocation7 + $0x18b8] sm:$0xff]
    %v1089 = vld [vmem:[#allocation7 + $0x18c0] sm:$0xff]
    %v1090 = vld [vmem:[#allocation7 + $0x18c8] sm:$0xff]
    %v1091 = vld [vmem:[#allocation7 + $0x18d0] sm:$0xff]
    %v1092 = vld [vmem:[#allocation7 + $0x18d8] sm:$0xff]
    %v1093 = vld [vmem:[#allocation7 + $0x18e0] sm:$0xff]
    %v1094 = vld [vmem:[#allocation7 + $0x18e8] sm:$0xff]
    %v1095 = vld [vmem:[#allocation7 + $0x18f0] sm:$0xff]
    %v1096 = vld [vmem:[#allocation7 + $0x18f8] sm:$0xff]
    %v1097 = vld [vmem:[#allocation7 + $0x1900] sm:$0xff]
    %v1098 = vld [vmem:[#allocation7 + $0x1908] sm:$0xff]
    %v1099 = vld [vmem:[#allocation7 + $0x1910] sm:$0xff]
    %v1100 = vld [vmem:[#allocation7 + $0x1918] sm:$0xff]
    %v1101 = vld [vmem:[#allocation7 + $0x1920] sm:$0xff]
    %v1102 = vld [vmem:[#allocation7 + $0x1928] sm:$0xff]
    %v1103 = vld [vmem:[#allocation7 + $0x1930] sm:$0xff]
    %v1104 = vld [vmem:[#allocation7 + $0x1938] sm:$0xff]
    %v1105 = vld [vmem:[#allocation7 + $0x1940] sm:$0xff]
    %v1106 = vld [vmem:[#allocation7 + $0x1948] sm:$0xff]
    %v1107 = vld [vmem:[#allocation7 + $0x1950] sm:$0xff]
    %v1108 = vld [vmem:[#allocation7 + $0x1958] sm:$0xff]
    %v1109 = vld [vmem:[#allocation7 + $0x1960] sm:$0xff]
    %v1110 = vld [vmem:[#allocation7 + $0x1968] sm:$0xff]
    %v1111 = vld [vmem:[#allocation7 + $0x1970] sm:$0xff]
    %v1112 = vld [vmem:[#allocation7 + $0x1978] sm:$0xff]
    %v1113 = vld [vmem:[#allocation7 + $0x1980] sm:$0xff]
    %v1114 = vld [vmem:[#allocation7 + $0x1988] sm:$0xff]
    %v1115 = vld [vmem:[#allocation7 + $0x1990] sm:$0xff]
    %v1116 = vld [vmem:[#allocation7 + $0x1998] sm:$0xff]
    %v1117 = vld [vmem:[#allocation7 + $0x19a0] sm:$0xff]
    %v1118 = vld [vmem:[#allocation7 + $0x19a8] sm:$0xff]
    %v1119 = vld [vmem:[#allocation7 + $0x19b0] sm:$0xff]
    %v1120 = vld [vmem:[#allocation7 + $0x19b8] sm:$0xff]
    %v1121 = vld [vmem:[#allocation7 + $0x19c0] sm:$0xff]
    %v1122 = vld [vmem:[#allocation7 + $0x19c8] sm:$0xff]
    %v1123 = vld [vmem:[#allocation7 + $0x19d0] sm:$0xff]
    %v1124 = vld [vmem:[#allocation7 + $0x19d8] sm:$0xff]
    %v1125 = vld [vmem:[#allocation7 + $0x19e0] sm:$0xff]
    %v1126 = vld [vmem:[#allocation7 + $0x19e8] sm:$0xff]
    %v1127 = vld [vmem:[#allocation7 + $0x19f0] sm:$0xff]
    %v1128 = vld [vmem:[#allocation7 + $0x19f8] sm:$0xff]
    %v1129 = vld [vmem:[#allocation7 + $0x1a00] sm:$0xff]
    %v1130 = vld [vmem:[#allocation7 + $0x1a08] sm:$0xff]
    %v1131 = vld [vmem:[#allocation7 + $0x1a10] sm:$0xff]
    %v1132 = vld [vmem:[#allocation7 + $0x1a18] sm:$0xff]
    %v1133 = vld [vmem:[#allocation7 + $0x1a20] sm:$0xff]
    %v1134 = vld [vmem:[#allocation7 + $0x1a28] sm:$0xff]
    %v1135 = vld [vmem:[#allocation7 + $0x1a30] sm:$0xff]
    %v1136 = vld [vmem:[#allocation7 + $0x1a38] sm:$0xff]
    %v1137 = vld [vmem:[#allocation7 + $0x1a40] sm:$0xff]
    %v1138 = vld [vmem:[#allocation7 + $0x1a48] sm:$0xff]
    %v1139 = vld [vmem:[#allocation7 + $0x1a50] sm:$0xff]
    %v1140 = vld [vmem:[#allocation7 + $0x1a58] sm:$0xff]
    %v1141 = vld [vmem:[#allocation7 + $0x1a60] sm:$0xff]
    %v1142 = vld [vmem:[#allocation7 + $0x1a68] sm:$0xff]
    %v1143 = vld [vmem:[#allocation7 + $0x1a70] sm:$0xff]
    %v1144 = vld [vmem:[#allocation7 + $0x1a78] sm:$0xff]
    %v1145 = vld [vmem:[#allocation7 + $0x1a80] sm:$0xff]
    %v1146 = vld [vmem:[#allocation7 + $0x1a88] sm:$0xff]
    %v1147 = vld [vmem:[#allocation7 + $0x1a90] sm:$0xff]
    %v1148 = vld [vmem:[#allocation7 + $0x1a98] sm:$0xff]
    %v1149 = vld [vmem:[#allocation7 + $0x1aa0] sm:$0xff]
    %v1150 = vld [vmem:[#allocation7 + $0x1aa8] sm:$0xff]
    %v1151 = vld [vmem:[#allocation7 + $0x1ab0] sm:$0xff]
    %v1152 = vld [vmem:[#allocation7 + $0x1ab8] sm:$0xff]
    %v1153 = vld [vmem:[#allocation7 + $0x1ac0] sm:$0xff]
    %v1154 = vld [vmem:[#allocation7 + $0x1ac8] sm:$0xff]
    %v1155 = vld [vmem:[#allocation7 + $0x1ad0] sm:$0xff]
    %v1156 = vld [vmem:[#allocation7 + $0x1ad8] sm:$0xff]
    %v1157 = vld [vmem:[#allocation7 + $0x1ae0] sm:$0xff]
    %v1158 = vld [vmem:[#allocation7 + $0x1ae8] sm:$0xff]
    %v1159 = vld [vmem:[#allocation7 + $0x1af0] sm:$0xff]
    %v1160 = vld [vmem:[#allocation7 + $0x1af8] sm:$0xff]
    %v1161 = vld [vmem:[#allocation7 + $0x1b00] sm:$0xff]
    %v1162 = vld [vmem:[#allocation7 + $0x1b08] sm:$0xff]
    %v1163 = vld [vmem:[#allocation7 + $0x1b10] sm:$0xff]
    %v1164 = vld [vmem:[#allocation7 + $0x1b18] sm:$0xff]
    %v1165 = vld [vmem:[#allocation7 + $0x1b20] sm:$0xff]
    %v1166 = vld [vmem:[#allocation7 + $0x1b28] sm:$0xff]
    %v1167 = vld [vmem:[#allocation7 + $0x1b30] sm:$0xff]
    %v1168 = vld [vmem:[#allocation7 + $0x1b38] sm:$0xff]
    %v1169 = vld [vmem:[#allocation7 + $0x1b40] sm:$0xff]
    %v1170 = vld [vmem:[#allocation7 + $0x1b48] sm:$0xff]
    %v1171 = vld [vmem:[#allocation7 + $0x1b50] sm:$0xff]
    %v1172 = vld [vmem:[#allocation7 + $0x1b58] sm:$0xff]
    %v1173 = vld [vmem:[#allocation7 + $0x1b60] sm:$0xff]
    %v1174 = vld [vmem:[#allocation7 + $0x1b68] sm:$0xff]
    %v1175 = vld [vmem:[#allocation7 + $0x1b70] sm:$0xff]
    %v1176 = vld [vmem:[#allocation7 + $0x1b78] sm:$0xff]
    %v1177 = vld [vmem:[#allocation7 + $0x1b80] sm:$0xff]
    %v1178 = vld [vmem:[#allocation7 + $0x1b88] sm:$0xff]
    %v1179 = vld [vmem:[#allocation7 + $0x1b90] sm:$0xff]
    %v1180 = vld [vmem:[#allocation7 + $0x1b98] sm:$0xff]
    %v1181 = vld [vmem:[#allocation7 + $0x1ba0] sm:$0xff]
    %v1182 = vld [vmem:[#allocation7 + $0x1ba8] sm:$0xff]
    %v1183 = vld [vmem:[#allocation7 + $0x1bb0] sm:$0xff]
    %v1184 = vld [vmem:[#allocation7 + $0x1bb8] sm:$0xff]
    %v1185 = vld [vmem:[#allocation7 + $0x1bc0] sm:$0xff]
    %v1186 = vld [vmem:[#allocation7 + $0x1bc8] sm:$0xff]
    %v1187 = vld [vmem:[#allocation7 + $0x1bd0] sm:$0xff]
    %v1188 = vld [vmem:[#allocation7 + $0x1bd8] sm:$0xff]
    %v1189 = vld [vmem:[#allocation7 + $0x1be0] sm:$0xff]
    %v1190 = vld [vmem:[#allocation7 + $0x1be8] sm:$0xff]
    %v1191 = vld [vmem:[#allocation7 + $0x1bf0] sm:$0xff]
    %v1192 = vld [vmem:[#allocation7 + $0x1bf8] sm:$0xff]
    %v1193 = vld [vmem:[#allocation7 + $0x1c00] sm:$0xff]
    %v1194 = vld [vmem:[#allocation7 + $0x1c08] sm:$0xff]
    %v1195 = vld [vmem:[#allocation7 + $0x1c10] sm:$0xff]
    %v1196 = vld [vmem:[#allocation7 + $0x1c18] sm:$0xff]
    %v1197 = vld [vmem:[#allocation7 + $0x1c20] sm:$0xff]
    %v1198 = vld [vmem:[#allocation7 + $0x1c28] sm:$0xff]
    %v1199 = vld [vmem:[#allocation7 + $0x1c30] sm:$0xff]
    %v1200 = vld [vmem:[#allocation7 + $0x1c38] sm:$0xff]
    %v1201 = vld [vmem:[#allocation7 + $0x1c40] sm:$0xff]
    %v1202 = vld [vmem:[#allocation7 + $0x1c48] sm:$0xff]
    %v1203 = vld [vmem:[#allocation7 + $0x1c50] sm:$0xff]
    %v1204 = vld [vmem:[#allocation7 + $0x1c58] sm:$0xff]
    %v1205 = vld [vmem:[#allocation7 + $0x1c60] sm:$0xff]
    %v1206 = vld [vmem:[#allocation7 + $0x1c68] sm:$0xff]
    %v1207 = vld [vmem:[#allocation7 + $0x1c70] sm:$0xff]
    %v1208 = vld [vmem:[#allocation7 + $0x1c78] sm:$0xff]
    %v1209 = vld [vmem:[#allocation7 + $0x1c80] sm:$0xff]
    %v1210 = vld [vmem:[#allocation7 + $0x1c88] sm:$0xff]
    %v1211 = vld [vmem:[#allocation7 + $0x1c90] sm:$0xff]
    %v1212 = vld [vmem:[#allocation7 + $0x1c98] sm:$0xff]
    %v1213 = vld [vmem:[#allocation7 + $0x1ca0] sm:$0xff]
    %v1214 = vld [vmem:[#allocation7 + $0x1ca8] sm:$0xff]
    %v1215 = vld [vmem:[#allocation7 + $0x1cb0] sm:$0xff]
    %v1216 = vld [vmem:[#allocation7 + $0x1cb8] sm:$0xff]
    %v1217 = vld [vmem:[#allocation7 + $0x1cc0] sm:$0xff]
    %v1218 = vld [vmem:[#allocation7 + $0x1cc8] sm:$0xff]
    %v1219 = vld [vmem:[#allocation7 + $0x1cd0] sm:$0xff]
    %v1220 = vld [vmem:[#allocation7 + $0x1cd8] sm:$0xff]
    %v1221 = vld [vmem:[#allocation7 + $0x1ce0] sm:$0xff]
    %v1222 = vld [vmem:[#allocation7 + $0x1ce8] sm:$0xff]
    %v1223 = vld [vmem:[#allocation7 + $0x1cf0] sm:$0xff]
    %v1224 = vld [vmem:[#allocation7 + $0x1cf8] sm:$0xff]
    %v1225 = vld [vmem:[#allocation7 + $0x1d00] sm:$0xff]
    %v1226 = vld [vmem:[#allocation7 + $0x1d08] sm:$0xff]
    %v1227 = vld [vmem:[#allocation7 + $0x1d10] sm:$0xff]
    %v1228 = vld [vmem:[#allocation7 + $0x1d18] sm:$0xff]
    %v1229 = vld [vmem:[#allocation7 + $0x1d20] sm:$0xff]
    %v1230 = vld [vmem:[#allocation7 + $0x1d28] sm:$0xff]
    %v1231 = vld [vmem:[#allocation7 + $0x1d30] sm:$0xff]
    %v1232 = vld [vmem:[#allocation7 + $0x1d38] sm:$0xff]
    %v1233 = vld [vmem:[#allocation7 + $0x1d40] sm:$0xff]
    %v1234 = vld [vmem:[#allocation7 + $0x1d48] sm:$0xff]
    %v1235 = vld [vmem:[#allocation7 + $0x1d50] sm:$0xff]
    %v1236 = vld [vmem:[#allocation7 + $0x1d58] sm:$0xff]
    %v1237 = vld [vmem:[#allocation7 + $0x1d60] sm:$0xff]
    %v1238 = vld [vmem:[#allocation7 + $0x1d68] sm:$0xff]
    %v1239 = vld [vmem:[#allocation7 + $0x1d70] sm:$0xff]
    %v1240 = vld [vmem:[#allocation7 + $0x1d78] sm:$0xff]
    %v1241 = vld [vmem:[#allocation7 + $0x1d80] sm:$0xff]
    %v1242 = vld [vmem:[#allocation7 + $0x1d88] sm:$0xff]
    %v1243 = vld [vmem:[#allocation7 + $0x1d90] sm:$0xff]
    %v1244 = vld [vmem:[#allocation7 + $0x1d98] sm:$0xff]
    %v1245 = vld [vmem:[#allocation7 + $0x1da0] sm:$0xff]
    %v1246 = vld [vmem:[#allocation7 + $0x1da8] sm:$0xff]
    %v1247 = vld [vmem:[#allocation7 + $0x1db0] sm:$0xff]
    %v1248 = vld [vmem:[#allocation7 + $0x1db8] sm:$0xff]
    %v1249 = vld [vmem:[#allocation7 + $0x1dc0] sm:$0xff]
    %v1250 = vld [vmem:[#allocation7 + $0x1dc8] sm:$0xff]
    %v1251 = vld [vmem:[#allocation7 + $0x1dd0] sm:$0xff]
    %v1252 = vld [vmem:[#allocation7 + $0x1dd8] sm:$0xff]
    %v1253 = vld [vmem:[#allocation7 + $0x1de0] sm:$0xff]
    %v1254 = vld [vmem:[#allocation7 + $0x1de8] sm:$0xff]
    %v1255 = vld [vmem:[#allocation7 + $0x1df0] sm:$0xff]
    %v1256 = vld [vmem:[#allocation7 + $0x1df8] sm:$0xff]
    %v1257 = vld [vmem:[#allocation7 + $0x1e00] sm:$0xff]
    %v1258 = vld [vmem:[#allocation7 + $0x1e08] sm:$0xff]
    %v1259 = vld [vmem:[#allocation7 + $0x1e10] sm:$0xff]
    %v1260 = vld [vmem:[#allocation7 + $0x1e18] sm:$0xff]
    %v1261 = vld [vmem:[#allocation7 + $0x1e20] sm:$0xff]
    %v1262 = vld [vmem:[#allocation7 + $0x1e28] sm:$0xff]
    %v1263 = vld [vmem:[#allocation7 + $0x1e30] sm:$0xff]
    %v1264 = vld [vmem:[#allocation7 + $0x1e38] sm:$0xff]
    %v1265 = vld [vmem:[#allocation7 + $0x1e40] sm:$0xff]
    %v1266 = vld [vmem:[#allocation7 + $0x1e48] sm:$0xff]
    %v1267 = vld [vmem:[#allocation7 + $0x1e50] sm:$0xff]
    %v1268 = vld [vmem:[#allocation7 + $0x1e58] sm:$0xff]
    %v1269 = vld [vmem:[#allocation7 + $0x1e60] sm:$0xff]
    %v1270 = vld [vmem:[#allocation7 + $0x1e68] sm:$0xff]
    %v1271 = vld [vmem:[#allocation7 + $0x1e70] sm:$0xff]
    %v1272 = vld [vmem:[#allocation7 + $0x1e78] sm:$0xff]
    %v1273 = vld [vmem:[#allocation7 + $0x1e80] sm:$0xff]
    %v1274 = vld [vmem:[#allocation7 + $0x1e88] sm:$0xff]
    %v1275 = vld [vmem:[#allocation7 + $0x1e90] sm:$0xff]
    %v1276 = vld [vmem:[#allocation7 + $0x1e98] sm:$0xff]
    %v1277 = vld [vmem:[#allocation7 + $0x1ea0] sm:$0xff]
    %v1278 = vld [vmem:[#allocation7 + $0x1ea8] sm:$0xff]
    %v1279 = vld [vmem:[#allocation7 + $0x1eb0] sm:$0xff]
    %v1280 = vld [vmem:[#allocation7 + $0x1eb8] sm:$0xff]
    %v1281 = vld [vmem:[#allocation7 + $0x1ec0] sm:$0xff]
    %v1282 = vld [vmem:[#allocation7 + $0x1ec8] sm:$0xff]
    %v1283 = vld [vmem:[#allocation7 + $0x1ed0] sm:$0xff]
    %v1284 = vld [vmem:[#allocation7 + $0x1ed8] sm:$0xff]
    %v1285 = vld [vmem:[#allocation7 + $0x1ee0] sm:$0xff]
    %v1286 = vld [vmem:[#allocation7 + $0x1ee8] sm:$0xff]
    %v1287 = vld [vmem:[#allocation7 + $0x1ef0] sm:$0xff]
    %v1288 = vld [vmem:[#allocation7 + $0x1ef8] sm:$0xff]
    %v1289 = vld [vmem:[#allocation7 + $0x1f00] sm:$0xff]
    %v1290 = vld [vmem:[#allocation7 + $0x1f08] sm:$0xff]
    %v1291 = vld [vmem:[#allocation7 + $0x1f10] sm:$0xff]
    %v1292 = vld [vmem:[#allocation7 + $0x1f18] sm:$0xff]
    %v1293 = vld [vmem:[#allocation7 + $0x1f20] sm:$0xff]
    %v1294 = vld [vmem:[#allocation7 + $0x1f28] sm:$0xff]
    %v1295 = vld [vmem:[#allocation7 + $0x1f30] sm:$0xff]
    %v1296 = vld [vmem:[#allocation7 + $0x1f38] sm:$0xff]
    %v1297 = vld [vmem:[#allocation7 + $0x1f40] sm:$0xff]
    %v1298 = vld [vmem:[#allocation7 + $0x1f48] sm:$0xff]
    %v1299 = vld [vmem:[#allocation7 + $0x1f50] sm:$0xff]
    %v1300 = vld [vmem:[#allocation7 + $0x1f58] sm:$0xff]
    %v1301 = vld [vmem:[#allocation7 + $0x1f60] sm:$0xff]
    %v1302 = vld [vmem:[#allocation7 + $0x1f68] sm:$0xff]
    %v1303 = vld [vmem:[#allocation7 + $0x1f70] sm:$0xff]
    %v1304 = vld [vmem:[#allocation7 + $0x1f78] sm:$0xff]
    %v1305 = vld [vmem:[#allocation7 + $0x1f80] sm:$0xff]
    %v1306 = vld [vmem:[#allocation7 + $0x1f88] sm:$0xff]
    %v1307 = vld [vmem:[#allocation7 + $0x1f90] sm:$0xff]
    %v1308 = vld [vmem:[#allocation7 + $0x1f98] sm:$0xff]
    %v1309 = vld [vmem:[#allocation7 + $0x1fa0] sm:$0xff]
    %v1310 = vld [vmem:[#allocation7 + $0x1fa8] sm:$0xff]
    %v1311 = vld [vmem:[#allocation7 + $0x1fb0] sm:$0xff]
    %v1312 = vld [vmem:[#allocation7 + $0x1fb8] sm:$0xff]
    %v1313 = vld [vmem:[#allocation7 + $0x1fc0] sm:$0xff]
    %v1314 = vld [vmem:[#allocation7 + $0x1fc8] sm:$0xff]
    %v1315 = vld [vmem:[#allocation7 + $0x1fd0] sm:$0xff]
    %v1316 = vld [vmem:[#allocation7 + $0x1fd8] sm:$0xff]
    %v1317 = vld [vmem:[#allocation7 + $0x1fe0] sm:$0xff]
    %v1318 = vld [vmem:[#allocation7 + $0x1fe8] sm:$0xff]
    %v1319 = vld [vmem:[#allocation7 + $0x1ff0] sm:$0xff]
    %v1320 = vld [vmem:[#allocation7 + $0x1ff8] sm:$0xff]
    %v1321 = vld [vmem:[#allocation5] sm:$0xf]
    %v1322 = vpack.c.bf16 %v1321, %v1321
    %v1323 = vld [vmem:[#allocation8] sm:$0xff]
    %v1324 = vld [vmem:[#allocation8 + $0x8] sm:$0xff]
    %v1325 = vld [vmem:[#allocation8 + $0x10] sm:$0x11]
    %v1326 = vld [vmem:[#allocation8 + $0x18] sm:$0x11]
    %v1331 = vunpack.c.l.b16 %v1323
    %v1332 = vunpack.c.h.b16 %v1323
    %v1333 = vunpack.c.l.b16 %v1324
    %v1334 = vunpack.c.h.b16 %v1324
    %v1335 = vunpack.c.l.b16 %v1325
    %v1336 = vunpack.c.h.b16 %v1325
    %v1337 = vunpack.c.l.b16 %v1326
    %v1338 = vunpack.c.h.b16 %v1326
    %v1339 = vpack.c.b16 %v1335, %v1331
    %v1340 = vpack.c.b16 %v1336, %v1332
    %v1341 = vpack.c.b16 %v1337, %v1333
    %v1342 = vpack.c.b16 %v1338, %v1334
    %vm1343 = vcmask 80896
    %v1345 = vsel %vm1343, %v1322, 0
    %vm1347 = vcmask 1044480
    %v1349 = vsel %vm1347, %v1339, 0
    %v1352 = vsel %vm1347, %v1340, 0
    %v1355 = vsel %vm1347, %v1341, 0
    %v1358 = vsel %vm1347, %v1342, 0
    %1360 = vmatpush.bf16.msra.mxu0 0
    %1361 = vmatpush.bf16.msra.mxu0 0
    %1362 = vmatpush.bf16.msra.mxu0 0
    %1363 = vmatpush.bf16.msra.mxu0 0
    %1364 = vmatpush.bf16.msra.mxu0 0
    %1365 = vmatpush.bf16.msra.mxu0 0
    %1366 = vmatpush.bf16.msra.mxu0 0
    %1367 = vmatpush.bf16.msra.mxu0 %v1349
    %1368 = vmatmul.bf16.gmra.mxu0 %v1345
    %v1369 = vpop.f32.mrf.mxu0
    %v1370 = vadd.f32 0.0, %v1369
    %v1371 = vpop.f32.mrf.mxu0
    %1372 = vdwg.mxu0
    %1373 = vmatpush.bf16.msra.mxu0 0
    %1374 = vmatpush.bf16.msra.mxu0 0
    %1375 = vmatpush.bf16.msra.mxu0 0
    %1376 = vmatpush.bf16.msra.mxu0 0
    %1377 = vmatpush.bf16.msra.mxu0 0
    %1378 = vmatpush.bf16.msra.mxu0 0
    %1379 = vmatpush.bf16.msra.mxu0 0
    %1380 = vmatpush.bf16.msra.mxu0 %v1352
    %1381 = vmatmul.bf16.gmra.mxu0 %v1345
    %v1382 = vpop.f32.mrf.mxu0
    %v1383 = vadd.f32 0.0, %v1382
    %v1384 = vpop.f32.mrf.mxu0
    %1385 = vdwg.mxu0
    %1386 = vmatpush.bf16.msra.mxu0 0
    %1387 = vmatpush.bf16.msra.mxu0 0
    %1388 = vmatpush.bf16.msra.mxu0 0
    %1389 = vmatpush.bf16.msra.mxu0 0
    %1390 = vmatpush.bf16.msra.mxu0 0
    %1391 = vmatpush.bf16.msra.mxu0 0
    %1392 = vmatpush.bf16.msra.mxu0 0
    %1393 = vmatpush.bf16.msra.mxu0 %v1355
    %1394 = vmatmul.bf16.gmra.mxu0 %v1345
    %v1395 = vpop.f32.mrf.mxu0
    %v1396 = vadd.f32 0.0, %v1395
    %v1397 = vpop.f32.mrf.mxu0
    %1398 = vdwg.mxu0
    %1399 = vmatpush.bf16.msra.mxu0 0
    %1400 = vmatpush.bf16.msra.mxu0 0
    %1401 = vmatpush.bf16.msra.mxu0 0
    %1402 = vmatpush.bf16.msra.mxu0 0
    %1403 = vmatpush.bf16.msra.mxu0 0
    %1404 = vmatpush.bf16.msra.mxu0 0
    %1405 = vmatpush.bf16.msra.mxu0 0
    %1406 = vmatpush.bf16.msra.mxu0 %v1358
    %1407 = vmatmul.bf16.gmra.mxu0 %v1345
    %v1408 = vpop.f32.mrf.mxu0
    %v1409 = vadd.f32 0.0, %v1408
    %v1410 = vpop.f32.mrf.mxu0
    %1411 = vdwg.mxu0
    %v2436 = vunpack.c.l.b16 %v297
    %v2437 = vunpack.c.h.b16 %v297
    %v2438 = vunpack.c.l.b16 %v298
    %v2439 = vunpack.c.h.b16 %v298
    %v2440 = vunpack.c.l.b16 %v299
    %v2441 = vunpack.c.h.b16 %v299
    %v2442 = vunpack.c.l.b16 %v300
    %v2443 = vunpack.c.h.b16 %v300
    %v2444 = vunpack.c.l.b16 %v301
    %v2445 = vunpack.c.h.b16 %v301
    %v2446 = vunpack.c.l.b16 %v302
    %v2447 = vunpack.c.h.b16 %v302
    %v2448 = vunpack.c.l.b16 %v303
    %v2449 = vunpack.c.h.b16 %v303
    %v2450 = vunpack.c.l.b16 %v304
    %v2451 = vunpack.c.h.b16 %v304
    %v2452 = vunpack.c.l.b16 %v305
    %v2453 = vunpack.c.h.b16 %v305
    %v2454 = vunpack.c.l.b16 %v306
    %v2455 = vunpack.c.h.b16 %v306
    %v2456 = vunpack.c.l.b16 %v307
    %v2457 = vunpack.c.h.b16 %v307
    %v2458 = vunpack.c.l.b16 %v308
    %v2459 = vunpack.c.h.b16 %v308
    %v2460 = vunpack.c.l.b16 %v309
    %v2461 = vunpack.c.h.b16 %v309
    %v2462 = vunpack.c.l.b16 %v310
    %v2463 = vunpack.c.h.b16 %v310
    %v2464 = vunpack.c.l.b16 %v311
    %v2465 = vunpack.c.h.b16 %v311
    %v2466 = vunpack.c.l.b16 %v312
    %v2467 = vunpack.c.h.b16 %v312
    %v2468 = vunpack.c.l.b16 %v313
    %v2469 = vunpack.c.h.b16 %v313
    %v2470 = vunpack.c.l.b16 %v314
    %v2471 = vunpack.c.h.b16 %v314
    %v2472 = vunpack.c.l.b16 %v315
    %v2473 = vunpack.c.h.b16 %v315
    %v2474 = vunpack.c.l.b16 %v316
    %v2475 = vunpack.c.h.b16 %v316
    %v2476 = vunpack.c.l.b16 %v317
    %v2477 = vunpack.c.h.b16 %v317
    %v2478 = vunpack.c.l.b16 %v318
    %v2479 = vunpack.c.h.b16 %v318
    %v2480 = vunpack.c.l.b16 %v319
    %v2481 = vunpack.c.h.b16 %v319
    %v2482 = vunpack.c.l.b16 %v320
    %v2483 = vunpack.c.h.b16 %v320
    %v2484 = vunpack.c.l.b16 %v321
    %v2485 = vunpack.c.h.b16 %v321
    %v2486 = vunpack.c.l.b16 %v322
    %v2487 = vunpack.c.h.b16 %v322
    %v2488 = vunpack.c.l.b16 %v323
    %v2489 = vunpack.c.h.b16 %v323
    %v2490 = vunpack.c.l.b16 %v324
    %v2491 = vunpack.c.h.b16 %v324
    %v2492 = vunpack.c.l.b16 %v325
    %v2493 = vunpack.c.h.b16 %v325
    %v2494 = vunpack.c.l.b16 %v326
    %v2495 = vunpack.c.h.b16 %v326
    %v2496 = vunpack.c.l.b16 %v327
    %v2497 = vunpack.c.h.b16 %v327
    %v2498 = vunpack.c.l.b16 %v328
    %v2499 = vunpack.c.h.b16 %v328
    %v2500 = vunpack.c.l.b16 %v329
    %v2501 = vunpack.c.h.b16 %v329
    %v2502 = vunpack.c.l.b16 %v330
    %v2503 = vunpack.c.h.b16 %v330
    %v2504 = vunpack.c.l.b16 %v331
    %v2505 = vunpack.c.h.b16 %v331
    %v2506 = vunpack.c.l.b16 %v332
    %v2507 = vunpack.c.h.b16 %v332
    %v2508 = vunpack.c.l.b16 %v333
    %v2509 = vunpack.c.h.b16 %v333
    %v2510 = vunpack.c.l.b16 %v334
    %v2511 = vunpack.c.h.b16 %v334
    %v2512 = vunpack.c.l.b16 %v335
    %v2513 = vunpack.c.h.b16 %v335
    %v2514 = vunpack.c.l.b16 %v336
    %v2515 = vunpack.c.h.b16 %v336
    %v2516 = vunpack.c.l.b16 %v337
    %v2517 = vunpack.c.h.b16 %v337
    %v2518 = vunpack.c.l.b16 %v338
    %v2519 = vunpack.c.h.b16 %v338
    %v2520 = vunpack.c.l.b16 %v339
    %v2521 = vunpack.c.h.b16 %v339
    %v2522 = vunpack.c.l.b16 %v340
    %v2523 = vunpack.c.h.b16 %v340
    %v2524 = vunpack.c.l.b16 %v341
    %v2525 = vunpack.c.h.b16 %v341
    %v2526 = vunpack.c.l.b16 %v342
    %v2527 = vunpack.c.h.b16 %v342
    %v2528 = vunpack.c.l.b16 %v343
    %v2529 = vunpack.c.h.b16 %v343
    %v2530 = vunpack.c.l.b16 %v344
    %v2531 = vunpack.c.h.b16 %v344
    %v2532 = vunpack.c.l.b16 %v345
    %v2533 = vunpack.c.h.b16 %v345
    %v2534 = vunpack.c.l.b16 %v346
    %v2535 = vunpack.c.h.b16 %v346
    %v2536 = vunpack.c.l.b16 %v347
    %v2537 = vunpack.c.h.b16 %v347
    %v2538 = vunpack.c.l.b16 %v348
    %v2539 = vunpack.c.h.b16 %v348
    %v2540 = vunpack.c.l.b16 %v349
    %v2541 = vunpack.c.h.b16 %v349
    %v2542 = vunpack.c.l.b16 %v350
    %v2543 = vunpack.c.h.b16 %v350
    %v2544 = vunpack.c.l.b16 %v351
    %v2545 = vunpack.c.h.b16 %v351
    %v2546 = vunpack.c.l.b16 %v352
    %v2547 = vunpack.c.h.b16 %v352
    %v2548 = vunpack.c.l.b16 %v353
    %v2549 = vunpack.c.h.b16 %v353
    %v2550 = vunpack.c.l.b16 %v354
    %v2551 = vunpack.c.h.b16 %v354
    %v2552 = vunpack.c.l.b16 %v355
    %v2553 = vunpack.c.h.b16 %v355
    %v2554 = vunpack.c.l.b16 %v356
    %v2555 = vunpack.c.h.b16 %v356
    %v2556 = vunpack.c.l.b16 %v357
    %v2557 = vunpack.c.h.b16 %v357
    %v2558 = vunpack.c.l.b16 %v358
    %v2559 = vunpack.c.h.b16 %v358
    %v2560 = vunpack.c.l.b16 %v359
    %v2561 = vunpack.c.h.b16 %v359
    %v2562 = vunpack.c.l.b16 %v360
    %v2563 = vunpack.c.h.b16 %v360
    %v2564 = vunpack.c.l.b16 %v361
    %v2565 = vunpack.c.h.b16 %v361
    %v2566 = vunpack.c.l.b16 %v362
    %v2567 = vunpack.c.h.b16 %v362
    %v2568 = vunpack.c.l.b16 %v363
    %v2569 = vunpack.c.h.b16 %v363
    %v2570 = vunpack.c.l.b16 %v364
    %v2571 = vunpack.c.h.b16 %v364
    %v2572 = vunpack.c.l.b16 %v365
    %v2573 = vunpack.c.h.b16 %v365
    %v2574 = vunpack.c.l.b16 %v366
    %v2575 = vunpack.c.h.b16 %v366
    %v2576 = vunpack.c.l.b16 %v367
    %v2577 = vunpack.c.h.b16 %v367
    %v2578 = vunpack.c.l.b16 %v368
    %v2579 = vunpack.c.h.b16 %v368
    %v2580 = vunpack.c.l.b16 %v369
    %v2581 = vunpack.c.h.b16 %v369
    %v2582 = vunpack.c.l.b16 %v370
    %v2583 = vunpack.c.h.b16 %v370
    %v2584 = vunpack.c.l.b16 %v371
    %v2585 = vunpack.c.h.b16 %v371
    %v2586 = vunpack.c.l.b16 %v372
    %v2587 = vunpack.c.h.b16 %v372
    %v2588 = vunpack.c.l.b16 %v373
    %v2589 = vunpack.c.h.b16 %v373
    %v2590 = vunpack.c.l.b16 %v374
    %v2591 = vunpack.c.h.b16 %v374
    %v2592 = vunpack.c.l.b16 %v375
    %v2593 = vunpack.c.h.b16 %v375
    %v2594 = vunpack.c.l.b16 %v376
    %v2595 = vunpack.c.h.b16 %v376
    %v2596 = vunpack.c.l.b16 %v377
    %v2597 = vunpack.c.h.b16 %v377
    %v2598 = vunpack.c.l.b16 %v378
    %v2599 = vunpack.c.h.b16 %v378
    %v2600 = vunpack.c.l.b16 %v379
    %v2601 = vunpack.c.h.b16 %v379
    %v2602 = vunpack.c.l.b16 %v380
    %v2603 = vunpack.c.h.b16 %v380
    %v2604 = vunpack.c.l.b16 %v381
    %v2605 = vunpack.c.h.b16 %v381
    %v2606 = vunpack.c.l.b16 %v382
    %v2607 = vunpack.c.h.b16 %v382
    %v2608 = vunpack.c.l.b16 %v383
    %v2609 = vunpack.c.h.b16 %v383
    %v2610 = vunpack.c.l.b16 %v384
    %v2611 = vunpack.c.h.b16 %v384
    %v2612 = vunpack.c.l.b16 %v385
    %v2613 = vunpack.c.h.b16 %v385
    %v2614 = vunpack.c.l.b16 %v386
    %v2615 = vunpack.c.h.b16 %v386
    %v2616 = vunpack.c.l.b16 %v387
    %v2617 = vunpack.c.h.b16 %v387
    %v2618 = vunpack.c.l.b16 %v388
    %v2619 = vunpack.c.h.b16 %v388
    %v2620 = vunpack.c.l.b16 %v389
    %v2621 = vunpack.c.h.b16 %v389
    %v2622 = vunpack.c.l.b16 %v390
    %v2623 = vunpack.c.h.b16 %v390
    %v2624 = vunpack.c.l.b16 %v391
    %v2625 = vunpack.c.h.b16 %v391
    %v2626 = vunpack.c.l.b16 %v392
    %v2627 = vunpack.c.h.b16 %v392
    %v2628 = vunpack.c.l.b16 %v393
    %v2629 = vunpack.c.h.b16 %v393
    %v2630 = vunpack.c.l.b16 %v394
    %v2631 = vunpack.c.h.b16 %v394
    %v2632 = vunpack.c.l.b16 %v395
    %v2633 = vunpack.c.h.b16 %v395
    %v2634 = vunpack.c.l.b16 %v396
    %v2635 = vunpack.c.h.b16 %v396
    %v2636 = vunpack.c.l.b16 %v397
    %v2637 = vunpack.c.h.b16 %v397
    %v2638 = vunpack.c.l.b16 %v398
    %v2639 = vunpack.c.h.b16 %v398
    %v2640 = vunpack.c.l.b16 %v399
    %v2641 = vunpack.c.h.b16 %v399
    %v2642 = vunpack.c.l.b16 %v400
    %v2643 = vunpack.c.h.b16 %v400
    %v2644 = vunpack.c.l.b16 %v401
    %v2645 = vunpack.c.h.b16 %v401
    %v2646 = vunpack.c.l.b16 %v402
    %v2647 = vunpack.c.h.b16 %v402
    %v2648 = vunpack.c.l.b16 %v403
    %v2649 = vunpack.c.h.b16 %v403
    %v2650 = vunpack.c.l.b16 %v404
    %v2651 = vunpack.c.h.b16 %v404
    %v2652 = vunpack.c.l.b16 %v405
    %v2653 = vunpack.c.h.b16 %v405
    %v2654 = vunpack.c.l.b16 %v406
    %v2655 = vunpack.c.h.b16 %v406
    %v2656 = vunpack.c.l.b16 %v407
    %v2657 = vunpack.c.h.b16 %v407
    %v2658 = vunpack.c.l.b16 %v408
    %v2659 = vunpack.c.h.b16 %v408
    %v2660 = vunpack.c.l.b16 %v409
    %v2661 = vunpack.c.h.b16 %v409
    %v2662 = vunpack.c.l.b16 %v410
    %v2663 = vunpack.c.h.b16 %v410
    %v2664 = vunpack.c.l.b16 %v411
    %v2665 = vunpack.c.h.b16 %v411
    %v2666 = vunpack.c.l.b16 %v412
    %v2667 = vunpack.c.h.b16 %v412
    %v2668 = vunpack.c.l.b16 %v413
    %v2669 = vunpack.c.h.b16 %v413
    %v2670 = vunpack.c.l.b16 %v414
    %v2671 = vunpack.c.h.b16 %v414
    %v2672 = vunpack.c.l.b16 %v415
    %v2673 = vunpack.c.h.b16 %v415
    %v2674 = vunpack.c.l.b16 %v416
    %v2675 = vunpack.c.h.b16 %v416
    %v2676 = vunpack.c.l.b16 %v417
    %v2677 = vunpack.c.h.b16 %v417
    %v2678 = vunpack.c.l.b16 %v418
    %v2679 = vunpack.c.h.b16 %v418
    %v2680 = vunpack.c.l.b16 %v419
    %v2681 = vunpack.c.h.b16 %v419
    %v2682 = vunpack.c.l.b16 %v420
    %v2683 = vunpack.c.h.b16 %v420
    %v2684 = vunpack.c.l.b16 %v421
    %v2685 = vunpack.c.h.b16 %v421
    %v2686 = vunpack.c.l.b16 %v422
    %v2687 = vunpack.c.h.b16 %v422
    %v2688 = vunpack.c.l.b16 %v423
    %v2689 = vunpack.c.h.b16 %v423
    %v2690 = vunpack.c.l.b16 %v424
    %v2691 = vunpack.c.h.b16 %v424
    %v2692 = vunpack.c.l.b16 %v425
    %v2693 = vunpack.c.h.b16 %v425
    %v2694 = vunpack.c.l.b16 %v426
    %v2695 = vunpack.c.h.b16 %v426
    %v2696 = vunpack.c.l.b16 %v427
    %v2697 = vunpack.c.h.b16 %v427
    %v2698 = vunpack.c.l.b16 %v428
    %v2699 = vunpack.c.h.b16 %v428
    %v2700 = vunpack.c.l.b16 %v429
    %v2701 = vunpack.c.h.b16 %v429
    %v2702 = vunpack.c.l.b16 %v430
    %v2703 = vunpack.c.h.b16 %v430
    %v2704 = vunpack.c.l.b16 %v431
    %v2705 = vunpack.c.h.b16 %v431
    %v2706 = vunpack.c.l.b16 %v432
    %v2707 = vunpack.c.h.b16 %v432
    %v2708 = vunpack.c.l.b16 %v433
    %v2709 = vunpack.c.h.b16 %v433
    %v2710 = vunpack.c.l.b16 %v434
    %v2711 = vunpack.c.h.b16 %v434
    %v2712 = vunpack.c.l.b16 %v435
    %v2713 = vunpack.c.h.b16 %v435
    %v2714 = vunpack.c.l.b16 %v436
    %v2715 = vunpack.c.h.b16 %v436
    %v2716 = vunpack.c.l.b16 %v437
    %v2717 = vunpack.c.h.b16 %v437
    %v2718 = vunpack.c.l.b16 %v438
    %v2719 = vunpack.c.h.b16 %v438
    %v2720 = vunpack.c.l.b16 %v439
    %v2721 = vunpack.c.h.b16 %v439
    %v2722 = vunpack.c.l.b16 %v440
    %v2723 = vunpack.c.h.b16 %v440
    %v2724 = vunpack.c.l.b16 %v441
    %v2725 = vunpack.c.h.b16 %v441
    %v2726 = vunpack.c.l.b16 %v442
    %v2727 = vunpack.c.h.b16 %v442
    %v2728 = vunpack.c.l.b16 %v443
    %v2729 = vunpack.c.h.b16 %v443
    %v2730 = vunpack.c.l.b16 %v444
    %v2731 = vunpack.c.h.b16 %v444
    %v2732 = vunpack.c.l.b16 %v445
    %v2733 = vunpack.c.h.b16 %v445
    %v2734 = vunpack.c.l.b16 %v446
    %v2735 = vunpack.c.h.b16 %v446
    %v2736 = vunpack.c.l.b16 %v447
    %v2737 = vunpack.c.h.b16 %v447
    %v2738 = vunpack.c.l.b16 %v448
    %v2739 = vunpack.c.h.b16 %v448
    %v2740 = vunpack.c.l.b16 %v449
    %v2741 = vunpack.c.h.b16 %v449
    %v2742 = vunpack.c.l.b16 %v450
    %v2743 = vunpack.c.h.b16 %v450
    %v2744 = vunpack.c.l.b16 %v451
    %v2745 = vunpack.c.h.b16 %v451
    %v2746 = vunpack.c.l.b16 %v452
    %v2747 = vunpack.c.h.b16 %v452
    %v2748 = vunpack.c.l.b16 %v453
    %v2749 = vunpack.c.h.b16 %v453
    %v2750 = vunpack.c.l.b16 %v454
    %v2751 = vunpack.c.h.b16 %v454
    %v2752 = vunpack.c.l.b16 %v455
    %v2753 = vunpack.c.h.b16 %v455
    %v2754 = vunpack.c.l.b16 %v456
    %v2755 = vunpack.c.h.b16 %v456
    %v2756 = vunpack.c.l.b16 %v457
    %v2757 = vunpack.c.h.b16 %v457
    %v2758 = vunpack.c.l.b16 %v458
    %v2759 = vunpack.c.h.b16 %v458
    %v2760 = vunpack.c.l.b16 %v459
    %v2761 = vunpack.c.h.b16 %v459
    %v2762 = vunpack.c.l.b16 %v460
    %v2763 = vunpack.c.h.b16 %v460
    %v2764 = vunpack.c.l.b16 %v461
    %v2765 = vunpack.c.h.b16 %v461
    %v2766 = vunpack.c.l.b16 %v462
    %v2767 = vunpack.c.h.b16 %v462
    %v2768 = vunpack.c.l.b16 %v463
    %v2769 = vunpack.c.h.b16 %v463
    %v2770 = vunpack.c.l.b16 %v464
    %v2771 = vunpack.c.h.b16 %v464
    %v2772 = vunpack.c.l.b16 %v465
    %v2773 = vunpack.c.h.b16 %v465
    %v2774 = vunpack.c.l.b16 %v466
    %v2775 = vunpack.c.h.b16 %v466
    %v2776 = vunpack.c.l.b16 %v467
    %v2777 = vunpack.c.h.b16 %v467
    %v2778 = vunpack.c.l.b16 %v468
    %v2779 = vunpack.c.h.b16 %v468
    %v2780 = vunpack.c.l.b16 %v469
    %v2781 = vunpack.c.h.b16 %v469
    %v2782 = vunpack.c.l.b16 %v470
    %v2783 = vunpack.c.h.b16 %v470
    %v2784 = vunpack.c.l.b16 %v471
    %v2785 = vunpack.c.h.b16 %v471
    %v2786 = vunpack.c.l.b16 %v472
    %v2787 = vunpack.c.h.b16 %v472
    %v2788 = vunpack.c.l.b16 %v473
    %v2789 = vunpack.c.h.b16 %v473
    %v2790 = vunpack.c.l.b16 %v474
    %v2791 = vunpack.c.h.b16 %v474
    %v2792 = vunpack.c.l.b16 %v475
    %v2793 = vunpack.c.h.b16 %v475
    %v2794 = vunpack.c.l.b16 %v476
    %v2795 = vunpack.c.h.b16 %v476
    %v2796 = vunpack.c.l.b16 %v477
    %v2797 = vunpack.c.h.b16 %v477
    %v2798 = vunpack.c.l.b16 %v478
    %v2799 = vunpack.c.h.b16 %v478
    %v2800 = vunpack.c.l.b16 %v479
    %v2801 = vunpack.c.h.b16 %v479
    %v2802 = vunpack.c.l.b16 %v480
    %v2803 = vunpack.c.h.b16 %v480
    %v2804 = vunpack.c.l.b16 %v481
    %v2805 = vunpack.c.h.b16 %v481
    %v2806 = vunpack.c.l.b16 %v482
    %v2807 = vunpack.c.h.b16 %v482
    %v2808 = vunpack.c.l.b16 %v483
    %v2809 = vunpack.c.h.b16 %v483
    %v2810 = vunpack.c.l.b16 %v484
    %v2811 = vunpack.c.h.b16 %v484
    %v2812 = vunpack.c.l.b16 %v485
    %v2813 = vunpack.c.h.b16 %v485
    %v2814 = vunpack.c.l.b16 %v486
    %v2815 = vunpack.c.h.b16 %v486
    %v2816 = vunpack.c.l.b16 %v487
    %v2817 = vunpack.c.h.b16 %v487
    %v2818 = vunpack.c.l.b16 %v488
    %v2819 = vunpack.c.h.b16 %v488
    %v2820 = vunpack.c.l.b16 %v489
    %v2821 = vunpack.c.h.b16 %v489
    %v2822 = vunpack.c.l.b16 %v490
    %v2823 = vunpack.c.h.b16 %v490
    %v2824 = vunpack.c.l.b16 %v491
    %v2825 = vunpack.c.h.b16 %v491
    %v2826 = vunpack.c.l.b16 %v492
    %v2827 = vunpack.c.h.b16 %v492
    %v2828 = vunpack.c.l.b16 %v493
    %v2829 = vunpack.c.h.b16 %v493
    %v2830 = vunpack.c.l.b16 %v494
    %v2831 = vunpack.c.h.b16 %v494
    %v2832 = vunpack.c.l.b16 %v495
    %v2833 = vunpack.c.h.b16 %v495
    %v2834 = vunpack.c.l.b16 %v496
    %v2835 = vunpack.c.h.b16 %v496
    %v2836 = vunpack.c.l.b16 %v497
    %v2837 = vunpack.c.h.b16 %v497
    %v2838 = vunpack.c.l.b16 %v498
    %v2839 = vunpack.c.h.b16 %v498
    %v2840 = vunpack.c.l.b16 %v499
    %v2841 = vunpack.c.h.b16 %v499
    %v2842 = vunpack.c.l.b16 %v500
    %v2843 = vunpack.c.h.b16 %v500
    %v2844 = vunpack.c.l.b16 %v501
    %v2845 = vunpack.c.h.b16 %v501
    %v2846 = vunpack.c.l.b16 %v502
    %v2847 = vunpack.c.h.b16 %v502
    %v2848 = vunpack.c.l.b16 %v503
    %v2849 = vunpack.c.h.b16 %v503
    %v2850 = vunpack.c.l.b16 %v504
    %v2851 = vunpack.c.h.b16 %v504
    %v2852 = vunpack.c.l.b16 %v505
    %v2853 = vunpack.c.h.b16 %v505
    %v2854 = vunpack.c.l.b16 %v506
    %v2855 = vunpack.c.h.b16 %v506
    %v2856 = vunpack.c.l.b16 %v507
    %v2857 = vunpack.c.h.b16 %v507
    %v2858 = vunpack.c.l.b16 %v508
    %v2859 = vunpack.c.h.b16 %v508
    %v2860 = vunpack.c.l.b16 %v509
    %v2861 = vunpack.c.h.b16 %v509
    %v2862 = vunpack.c.l.b16 %v510
    %v2863 = vunpack.c.h.b16 %v510
    %v2864 = vunpack.c.l.b16 %v511
    %v2865 = vunpack.c.h.b16 %v511
    %v2866 = vunpack.c.l.b16 %v512
    %v2867 = vunpack.c.h.b16 %v512
    %v2868 = vunpack.c.l.b16 %v513
    %v2869 = vunpack.c.h.b16 %v513
    %v2870 = vunpack.c.l.b16 %v514
    %v2871 = vunpack.c.h.b16 %v514
    %v2872 = vunpack.c.l.b16 %v515
    %v2873 = vunpack.c.h.b16 %v515
    %v2874 = vunpack.c.l.b16 %v516
    %v2875 = vunpack.c.h.b16 %v516
    %v2876 = vunpack.c.l.b16 %v517
    %v2877 = vunpack.c.h.b16 %v517
    %v2878 = vunpack.c.l.b16 %v518
    %v2879 = vunpack.c.h.b16 %v518
    %v2880 = vunpack.c.l.b16 %v519
    %v2881 = vunpack.c.h.b16 %v519
    %v2882 = vunpack.c.l.b16 %v520
    %v2883 = vunpack.c.h.b16 %v520
    %v2884 = vunpack.c.l.b16 %v521
    %v2885 = vunpack.c.h.b16 %v521
    %v2886 = vunpack.c.l.b16 %v522
    %v2887 = vunpack.c.h.b16 %v522
    %v2888 = vunpack.c.l.b16 %v523
    %v2889 = vunpack.c.h.b16 %v523
    %v2890 = vunpack.c.l.b16 %v524
    %v2891 = vunpack.c.h.b16 %v524
    %v2892 = vunpack.c.l.b16 %v525
    %v2893 = vunpack.c.h.b16 %v525
    %v2894 = vunpack.c.l.b16 %v526
    %v2895 = vunpack.c.h.b16 %v526
    %v2896 = vunpack.c.l.b16 %v527
    %v2897 = vunpack.c.h.b16 %v527
    %v2898 = vunpack.c.l.b16 %v528
    %v2899 = vunpack.c.h.b16 %v528
    %v2900 = vunpack.c.l.b16 %v529
    %v2901 = vunpack.c.h.b16 %v529
    %v2902 = vunpack.c.l.b16 %v530
    %v2903 = vunpack.c.h.b16 %v530
    %v2904 = vunpack.c.l.b16 %v531
    %v2905 = vunpack.c.h.b16 %v531
    %v2906 = vunpack.c.l.b16 %v532
    %v2907 = vunpack.c.h.b16 %v532
    %v2908 = vunpack.c.l.b16 %v533
    %v2909 = vunpack.c.h.b16 %v533
    %v2910 = vunpack.c.l.b16 %v534
    %v2911 = vunpack.c.h.b16 %v534
    %v2912 = vunpack.c.l.b16 %v535
    %v2913 = vunpack.c.h.b16 %v535
    %v2914 = vunpack.c.l.b16 %v536
    %v2915 = vunpack.c.h.b16 %v536
    %v2916 = vunpack.c.l.b16 %v537
    %v2917 = vunpack.c.h.b16 %v537
    %v2918 = vunpack.c.l.b16 %v538
    %v2919 = vunpack.c.h.b16 %v538
    %v2920 = vunpack.c.l.b16 %v539
    %v2921 = vunpack.c.h.b16 %v539
    %v2922 = vunpack.c.l.b16 %v540
    %v2923 = vunpack.c.h.b16 %v540
    %v2924 = vunpack.c.l.b16 %v541
    %v2925 = vunpack.c.h.b16 %v541
    %v2926 = vunpack.c.l.b16 %v542
    %v2927 = vunpack.c.h.b16 %v542
    %v2928 = vunpack.c.l.b16 %v543
    %v2929 = vunpack.c.h.b16 %v543
    %v2930 = vunpack.c.l.b16 %v544
    %v2931 = vunpack.c.h.b16 %v544
    %v2932 = vunpack.c.l.b16 %v545
    %v2933 = vunpack.c.h.b16 %v545
    %v2934 = vunpack.c.l.b16 %v546
    %v2935 = vunpack.c.h.b16 %v546
    %v2936 = vunpack.c.l.b16 %v547
    %v2937 = vunpack.c.h.b16 %v547
    %v2938 = vunpack.c.l.b16 %v548
    %v2939 = vunpack.c.h.b16 %v548
    %v2940 = vunpack.c.l.b16 %v549
    %v2941 = vunpack.c.h.b16 %v549
    %v2942 = vunpack.c.l.b16 %v550
    %v2943 = vunpack.c.h.b16 %v550
    %v2944 = vunpack.c.l.b16 %v551
    %v2945 = vunpack.c.h.b16 %v551
    %v2946 = vunpack.c.l.b16 %v552
    %v2947 = vunpack.c.h.b16 %v552
    %v2948 = vunpack.c.l.b16 %v553
    %v2949 = vunpack.c.h.b16 %v553
    %v2950 = vunpack.c.l.b16 %v554
    %v2951 = vunpack.c.h.b16 %v554
    %v2952 = vunpack.c.l.b16 %v555
    %v2953 = vunpack.c.h.b16 %v555
    %v2954 = vunpack.c.l.b16 %v556
    %v2955 = vunpack.c.h.b16 %v556
    %v2956 = vunpack.c.l.b16 %v557
    %v2957 = vunpack.c.h.b16 %v557
    %v2958 = vunpack.c.l.b16 %v558
    %v2959 = vunpack.c.h.b16 %v558
    %v2960 = vunpack.c.l.b16 %v559
    %v2961 = vunpack.c.h.b16 %v559
    %v2962 = vunpack.c.l.b16 %v560
    %v2963 = vunpack.c.h.b16 %v560
    %v2964 = vunpack.c.l.b16 %v561
    %v2965 = vunpack.c.h.b16 %v561
    %v2966 = vunpack.c.l.b16 %v562
    %v2967 = vunpack.c.h.b16 %v562
    %v2968 = vunpack.c.l.b16 %v563
    %v2969 = vunpack.c.h.b16 %v563
    %v2970 = vunpack.c.l.b16 %v564
    %v2971 = vunpack.c.h.b16 %v564
    %v2972 = vunpack.c.l.b16 %v565
    %v2973 = vunpack.c.h.b16 %v565
    %v2974 = vunpack.c.l.b16 %v566
    %v2975 = vunpack.c.h.b16 %v566
    %v2976 = vunpack.c.l.b16 %v567
    %v2977 = vunpack.c.h.b16 %v567
    %v2978 = vunpack.c.l.b16 %v568
    %v2979 = vunpack.c.h.b16 %v568
    %v2980 = vunpack.c.l.b16 %v569
    %v2981 = vunpack.c.h.b16 %v569
    %v2982 = vunpack.c.l.b16 %v570
    %v2983 = vunpack.c.h.b16 %v570
    %v2984 = vunpack.c.l.b16 %v571
    %v2985 = vunpack.c.h.b16 %v571
    %v2986 = vunpack.c.l.b16 %v572
    %v2987 = vunpack.c.h.b16 %v572
    %v2988 = vunpack.c.l.b16 %v573
    %v2989 = vunpack.c.h.b16 %v573
    %v2990 = vunpack.c.l.b16 %v574
    %v2991 = vunpack.c.h.b16 %v574
    %v2992 = vunpack.c.l.b16 %v575
    %v2993 = vunpack.c.h.b16 %v575
    %v2994 = vunpack.c.l.b16 %v576
    %v2995 = vunpack.c.h.b16 %v576
    %v2996 = vunpack.c.l.b16 %v577
    %v2997 = vunpack.c.h.b16 %v577
    %v2998 = vunpack.c.l.b16 %v578
    %v2999 = vunpack.c.h.b16 %v578
    %v3000 = vunpack.c.l.b16 %v579
    %v3001 = vunpack.c.h.b16 %v579
    %v3002 = vunpack.c.l.b16 %v580
    %v3003 = vunpack.c.h.b16 %v580
    %v3004 = vunpack.c.l.b16 %v581
    %v3005 = vunpack.c.h.b16 %v581
    %v3006 = vunpack.c.l.b16 %v582
    %v3007 = vunpack.c.h.b16 %v582
    %v3008 = vunpack.c.l.b16 %v583
    %v3009 = vunpack.c.h.b16 %v583
    %v3010 = vunpack.c.l.b16 %v584
    %v3011 = vunpack.c.h.b16 %v584
    %v3012 = vunpack.c.l.b16 %v585
    %v3013 = vunpack.c.h.b16 %v585
    %v3014 = vunpack.c.l.b16 %v586
    %v3015 = vunpack.c.h.b16 %v586
    %v3016 = vunpack.c.l.b16 %v587
    %v3017 = vunpack.c.h.b16 %v587
    %v3018 = vunpack.c.l.b16 %v588
    %v3019 = vunpack.c.h.b16 %v588
    %v3020 = vunpack.c.l.b16 %v589
    %v3021 = vunpack.c.h.b16 %v589
    %v3022 = vunpack.c.l.b16 %v590
    %v3023 = vunpack.c.h.b16 %v590
    %v3024 = vunpack.c.l.b16 %v591
    %v3025 = vunpack.c.h.b16 %v591
    %v3026 = vunpack.c.l.b16 %v592
    %v3027 = vunpack.c.h.b16 %v592
    %v3028 = vunpack.c.l.b16 %v593
    %v3029 = vunpack.c.h.b16 %v593
    %v3030 = vunpack.c.l.b16 %v594
    %v3031 = vunpack.c.h.b16 %v594
    %v3032 = vunpack.c.l.b16 %v595
    %v3033 = vunpack.c.h.b16 %v595
    %v3034 = vunpack.c.l.b16 %v596
    %v3035 = vunpack.c.h.b16 %v596
    %v3036 = vunpack.c.l.b16 %v597
    %v3037 = vunpack.c.h.b16 %v597
    %v3038 = vunpack.c.l.b16 %v598
    %v3039 = vunpack.c.h.b16 %v598
    %v3040 = vunpack.c.l.b16 %v599
    %v3041 = vunpack.c.h.b16 %v599
    %v3042 = vunpack.c.l.b16 %v600
    %v3043 = vunpack.c.h.b16 %v600
    %v3044 = vunpack.c.l.b16 %v601
    %v3045 = vunpack.c.h.b16 %v601
    %v3046 = vunpack.c.l.b16 %v602
    %v3047 = vunpack.c.h.b16 %v602
    %v3048 = vunpack.c.l.b16 %v603
    %v3049 = vunpack.c.h.b16 %v603
    %v3050 = vunpack.c.l.b16 %v604
    %v3051 = vunpack.c.h.b16 %v604
    %v3052 = vunpack.c.l.b16 %v605
    %v3053 = vunpack.c.h.b16 %v605
    %v3054 = vunpack.c.l.b16 %v606
    %v3055 = vunpack.c.h.b16 %v606
    %v3056 = vunpack.c.l.b16 %v607
    %v3057 = vunpack.c.h.b16 %v607
    %v3058 = vunpack.c.l.b16 %v608
    %v3059 = vunpack.c.h.b16 %v608
    %v3060 = vunpack.c.l.b16 %v609
    %v3061 = vunpack.c.h.b16 %v609
    %v3062 = vunpack.c.l.b16 %v610
    %v3063 = vunpack.c.h.b16 %v610
    %v3064 = vunpack.c.l.b16 %v611
    %v3065 = vunpack.c.h.b16 %v611
    %v3066 = vunpack.c.l.b16 %v612
    %v3067 = vunpack.c.h.b16 %v612
    %v3068 = vunpack.c.l.b16 %v613
    %v3069 = vunpack.c.h.b16 %v613
    %v3070 = vunpack.c.l.b16 %v614
    %v3071 = vunpack.c.h.b16 %v614
    %v3072 = vunpack.c.l.b16 %v615
    %v3073 = vunpack.c.h.b16 %v615
    %v3074 = vunpack.c.l.b16 %v616
    %v3075 = vunpack.c.h.b16 %v616
    %v3076 = vunpack.c.l.b16 %v617
    %v3077 = vunpack.c.h.b16 %v617
    %v3078 = vunpack.c.l.b16 %v618
    %v3079 = vunpack.c.h.b16 %v618
    %v3080 = vunpack.c.l.b16 %v619
    %v3081 = vunpack.c.h.b16 %v619
    %v3082 = vunpack.c.l.b16 %v620
    %v3083 = vunpack.c.h.b16 %v620
    %v3084 = vunpack.c.l.b16 %v621
    %v3085 = vunpack.c.h.b16 %v621
    %v3086 = vunpack.c.l.b16 %v622
    %v3087 = vunpack.c.h.b16 %v622
    %v3088 = vunpack.c.l.b16 %v623
    %v3089 = vunpack.c.h.b16 %v623
    %v3090 = vunpack.c.l.b16 %v624
    %v3091 = vunpack.c.h.b16 %v624
    %v3092 = vunpack.c.l.b16 %v625
    %v3093 = vunpack.c.h.b16 %v625
    %v3094 = vunpack.c.l.b16 %v626
    %v3095 = vunpack.c.h.b16 %v626
    %v3096 = vunpack.c.l.b16 %v627
    %v3097 = vunpack.c.h.b16 %v627
    %v3098 = vunpack.c.l.b16 %v628
    %v3099 = vunpack.c.h.b16 %v628
    %v3100 = vunpack.c.l.b16 %v629
    %v3101 = vunpack.c.h.b16 %v629
    %v3102 = vunpack.c.l.b16 %v630
    %v3103 = vunpack.c.h.b16 %v630
    %v3104 = vunpack.c.l.b16 %v631
    %v3105 = vunpack.c.h.b16 %v631
    %v3106 = vunpack.c.l.b16 %v632
    %v3107 = vunpack.c.h.b16 %v632
    %v3108 = vunpack.c.l.b16 %v633
    %v3109 = vunpack.c.h.b16 %v633
    %v3110 = vunpack.c.l.b16 %v634
    %v3111 = vunpack.c.h.b16 %v634
    %v3112 = vunpack.c.l.b16 %v635
    %v3113 = vunpack.c.h.b16 %v635
    %v3114 = vunpack.c.l.b16 %v636
    %v3115 = vunpack.c.h.b16 %v636
    %v3116 = vunpack.c.l.b16 %v637
    %v3117 = vunpack.c.h.b16 %v637
    %v3118 = vunpack.c.l.b16 %v638
    %v3119 = vunpack.c.h.b16 %v638
    %v3120 = vunpack.c.l.b16 %v639
    %v3121 = vunpack.c.h.b16 %v639
    %v3122 = vunpack.c.l.b16 %v640
    %v3123 = vunpack.c.h.b16 %v640
    %v3124 = vunpack.c.l.b16 %v641
    %v3125 = vunpack.c.h.b16 %v641
    %v3126 = vunpack.c.l.b16 %v642
    %v3127 = vunpack.c.h.b16 %v642
    %v3128 = vunpack.c.l.b16 %v643
    %v3129 = vunpack.c.h.b16 %v643
    %v3130 = vunpack.c.l.b16 %v644
    %v3131 = vunpack.c.h.b16 %v644
    %v3132 = vunpack.c.l.b16 %v645
    %v3133 = vunpack.c.h.b16 %v645
    %v3134 = vunpack.c.l.b16 %v646
    %v3135 = vunpack.c.h.b16 %v646
    %v3136 = vunpack.c.l.b16 %v647
    %v3137 = vunpack.c.h.b16 %v647
    %v3138 = vunpack.c.l.b16 %v648
    %v3139 = vunpack.c.h.b16 %v648
    %v3140 = vunpack.c.l.b16 %v649
    %v3141 = vunpack.c.h.b16 %v649
    %v3142 = vunpack.c.l.b16 %v650
    %v3143 = vunpack.c.h.b16 %v650
    %v3144 = vunpack.c.l.b16 %v651
    %v3145 = vunpack.c.h.b16 %v651
    %v3146 = vunpack.c.l.b16 %v652
    %v3147 = vunpack.c.h.b16 %v652
    %v3148 = vunpack.c.l.b16 %v653
    %v3149 = vunpack.c.h.b16 %v653
    %v3150 = vunpack.c.l.b16 %v654
    %v3151 = vunpack.c.h.b16 %v654
    %v3152 = vunpack.c.l.b16 %v655
    %v3153 = vunpack.c.h.b16 %v655
    %v3154 = vunpack.c.l.b16 %v656
    %v3155 = vunpack.c.h.b16 %v656
    %v3156 = vunpack.c.l.b16 %v657
    %v3157 = vunpack.c.h.b16 %v657
    %v3158 = vunpack.c.l.b16 %v658
    %v3159 = vunpack.c.h.b16 %v658
    %v3160 = vunpack.c.l.b16 %v659
    %v3161 = vunpack.c.h.b16 %v659
    %v3162 = vunpack.c.l.b16 %v660
    %v3163 = vunpack.c.h.b16 %v660
    %v3164 = vunpack.c.l.b16 %v661
    %v3165 = vunpack.c.h.b16 %v661
    %v3166 = vunpack.c.l.b16 %v662
    %v3167 = vunpack.c.h.b16 %v662
    %v3168 = vunpack.c.l.b16 %v663
    %v3169 = vunpack.c.h.b16 %v663
    %v3170 = vunpack.c.l.b16 %v664
    %v3171 = vunpack.c.h.b16 %v664
    %v3172 = vunpack.c.l.b16 %v665
    %v3173 = vunpack.c.h.b16 %v665
    %v3174 = vunpack.c.l.b16 %v666
    %v3175 = vunpack.c.h.b16 %v666
    %v3176 = vunpack.c.l.b16 %v667
    %v3177 = vunpack.c.h.b16 %v667
    %v3178 = vunpack.c.l.b16 %v668
    %v3179 = vunpack.c.h.b16 %v668
    %v3180 = vunpack.c.l.b16 %v669
    %v3181 = vunpack.c.h.b16 %v669
    %v3182 = vunpack.c.l.b16 %v670
    %v3183 = vunpack.c.h.b16 %v670
    %v3184 = vunpack.c.l.b16 %v671
    %v3185 = vunpack.c.h.b16 %v671
    %v3186 = vunpack.c.l.b16 %v672
    %v3187 = vunpack.c.h.b16 %v672
    %v3188 = vunpack.c.l.b16 %v673
    %v3189 = vunpack.c.h.b16 %v673
    %v3190 = vunpack.c.l.b16 %v674
    %v3191 = vunpack.c.h.b16 %v674
    %v3192 = vunpack.c.l.b16 %v675
    %v3193 = vunpack.c.h.b16 %v675
    %v3194 = vunpack.c.l.b16 %v676
    %v3195 = vunpack.c.h.b16 %v676
    %v3196 = vunpack.c.l.b16 %v677
    %v3197 = vunpack.c.h.b16 %v677
    %v3198 = vunpack.c.l.b16 %v678
    %v3199 = vunpack.c.h.b16 %v678
    %v3200 = vunpack.c.l.b16 %v679
    %v3201 = vunpack.c.h.b16 %v679
    %v3202 = vunpack.c.l.b16 %v680
    %v3203 = vunpack.c.h.b16 %v680
    %v3204 = vunpack.c.l.b16 %v681
    %v3205 = vunpack.c.h.b16 %v681
    %v3206 = vunpack.c.l.b16 %v682
    %v3207 = vunpack.c.h.b16 %v682
    %v3208 = vunpack.c.l.b16 %v683
    %v3209 = vunpack.c.h.b16 %v683
    %v3210 = vunpack.c.l.b16 %v684
    %v3211 = vunpack.c.h.b16 %v684
    %v3212 = vunpack.c.l.b16 %v685
    %v3213 = vunpack.c.h.b16 %v685
    %v3214 = vunpack.c.l.b16 %v686
    %v3215 = vunpack.c.h.b16 %v686
    %v3216 = vunpack.c.l.b16 %v687
    %v3217 = vunpack.c.h.b16 %v687
    %v3218 = vunpack.c.l.b16 %v688
    %v3219 = vunpack.c.h.b16 %v688
    %v3220 = vunpack.c.l.b16 %v689
    %v3221 = vunpack.c.h.b16 %v689
    %v3222 = vunpack.c.l.b16 %v690
    %v3223 = vunpack.c.h.b16 %v690
    %v3224 = vunpack.c.l.b16 %v691
    %v3225 = vunpack.c.h.b16 %v691
    %v3226 = vunpack.c.l.b16 %v692
    %v3227 = vunpack.c.h.b16 %v692
    %v3228 = vunpack.c.l.b16 %v693
    %v3229 = vunpack.c.h.b16 %v693
    %v3230 = vunpack.c.l.b16 %v694
    %v3231 = vunpack.c.h.b16 %v694
    %v3232 = vunpack.c.l.b16 %v695
    %v3233 = vunpack.c.h.b16 %v695
    %v3234 = vunpack.c.l.b16 %v696
    %v3235 = vunpack.c.h.b16 %v696
    %v3236 = vunpack.c.l.b16 %v697
    %v3237 = vunpack.c.h.b16 %v697
    %v3238 = vunpack.c.l.b16 %v698
    %v3239 = vunpack.c.h.b16 %v698
    %v3240 = vunpack.c.l.b16 %v699
    %v3241 = vunpack.c.h.b16 %v699
    %v3242 = vunpack.c.l.b16 %v700
    %v3243 = vunpack.c.h.b16 %v700
    %v3244 = vunpack.c.l.b16 %v701
    %v3245 = vunpack.c.h.b16 %v701
    %v3246 = vunpack.c.l.b16 %v702
    %v3247 = vunpack.c.h.b16 %v702
    %v3248 = vunpack.c.l.b16 %v703
    %v3249 = vunpack.c.h.b16 %v703
    %v3250 = vunpack.c.l.b16 %v704
    %v3251 = vunpack.c.h.b16 %v704
    %v3252 = vunpack.c.l.b16 %v705
    %v3253 = vunpack.c.h.b16 %v705
    %v3254 = vunpack.c.l.b16 %v706
    %v3255 = vunpack.c.h.b16 %v706
    %v3256 = vunpack.c.l.b16 %v707
    %v3257 = vunpack.c.h.b16 %v707
    %v3258 = vunpack.c.l.b16 %v708
    %v3259 = vunpack.c.h.b16 %v708
    %v3260 = vunpack.c.l.b16 %v709
    %v3261 = vunpack.c.h.b16 %v709
    %v3262 = vunpack.c.l.b16 %v710
    %v3263 = vunpack.c.h.b16 %v710
    %v3264 = vunpack.c.l.b16 %v711
    %v3265 = vunpack.c.h.b16 %v711
    %v3266 = vunpack.c.l.b16 %v712
    %v3267 = vunpack.c.h.b16 %v712
    %v3268 = vunpack.c.l.b16 %v713
    %v3269 = vunpack.c.h.b16 %v713
    %v3270 = vunpack.c.l.b16 %v714
    %v3271 = vunpack.c.h.b16 %v714
    %v3272 = vunpack.c.l.b16 %v715
    %v3273 = vunpack.c.h.b16 %v715
    %v3274 = vunpack.c.l.b16 %v716
    %v3275 = vunpack.c.h.b16 %v716
    %v3276 = vunpack.c.l.b16 %v717
    %v3277 = vunpack.c.h.b16 %v717
    %v3278 = vunpack.c.l.b16 %v718
    %v3279 = vunpack.c.h.b16 %v718
    %v3280 = vunpack.c.l.b16 %v719
    %v3281 = vunpack.c.h.b16 %v719
    %v3282 = vunpack.c.l.b16 %v720
    %v3283 = vunpack.c.h.b16 %v720
    %v3284 = vunpack.c.l.b16 %v721
    %v3285 = vunpack.c.h.b16 %v721
    %v3286 = vunpack.c.l.b16 %v722
    %v3287 = vunpack.c.h.b16 %v722
    %v3288 = vunpack.c.l.b16 %v723
    %v3289 = vunpack.c.h.b16 %v723
    %v3290 = vunpack.c.l.b16 %v724
    %v3291 = vunpack.c.h.b16 %v724
    %v3292 = vunpack.c.l.b16 %v725
    %v3293 = vunpack.c.h.b16 %v725
    %v3294 = vunpack.c.l.b16 %v726
    %v3295 = vunpack.c.h.b16 %v726
    %v3296 = vunpack.c.l.b16 %v727
    %v3297 = vunpack.c.h.b16 %v727
    %v3298 = vunpack.c.l.b16 %v728
    %v3299 = vunpack.c.h.b16 %v728
    %v3300 = vunpack.c.l.b16 %v729
    %v3301 = vunpack.c.h.b16 %v729
    %v3302 = vunpack.c.l.b16 %v730
    %v3303 = vunpack.c.h.b16 %v730
    %v3304 = vunpack.c.l.b16 %v731
    %v3305 = vunpack.c.h.b16 %v731
    %v3306 = vunpack.c.l.b16 %v732
    %v3307 = vunpack.c.h.b16 %v732
    %v3308 = vunpack.c.l.b16 %v733
    %v3309 = vunpack.c.h.b16 %v733
    %v3310 = vunpack.c.l.b16 %v734
    %v3311 = vunpack.c.h.b16 %v734
    %v3312 = vunpack.c.l.b16 %v735
    %v3313 = vunpack.c.h.b16 %v735
    %v3314 = vunpack.c.l.b16 %v736
    %v3315 = vunpack.c.h.b16 %v736
    %v3316 = vunpack.c.l.b16 %v737
    %v3317 = vunpack.c.h.b16 %v737
    %v3318 = vunpack.c.l.b16 %v738
    %v3319 = vunpack.c.h.b16 %v738
    %v3320 = vunpack.c.l.b16 %v739
    %v3321 = vunpack.c.h.b16 %v739
    %v3322 = vunpack.c.l.b16 %v740
    %v3323 = vunpack.c.h.b16 %v740
    %v3324 = vunpack.c.l.b16 %v741
    %v3325 = vunpack.c.h.b16 %v741
    %v3326 = vunpack.c.l.b16 %v742
    %v3327 = vunpack.c.h.b16 %v742
    %v3328 = vunpack.c.l.b16 %v743
    %v3329 = vunpack.c.h.b16 %v743
    %v3330 = vunpack.c.l.b16 %v744
    %v3331 = vunpack.c.h.b16 %v744
    %v3332 = vunpack.c.l.b16 %v745
    %v3333 = vunpack.c.h.b16 %v745
    %v3334 = vunpack.c.l.b16 %v746
    %v3335 = vunpack.c.h.b16 %v746
    %v3336 = vunpack.c.l.b16 %v747
    %v3337 = vunpack.c.h.b16 %v747
    %v3338 = vunpack.c.l.b16 %v748
    %v3339 = vunpack.c.h.b16 %v748
    %v3340 = vunpack.c.l.b16 %v749
    %v3341 = vunpack.c.h.b16 %v749
    %v3342 = vunpack.c.l.b16 %v750
    %v3343 = vunpack.c.h.b16 %v750
    %v3344 = vunpack.c.l.b16 %v751
    %v3345 = vunpack.c.h.b16 %v751
    %v3346 = vunpack.c.l.b16 %v752
    %v3347 = vunpack.c.h.b16 %v752
    %v3348 = vunpack.c.l.b16 %v753
    %v3349 = vunpack.c.h.b16 %v753
    %v3350 = vunpack.c.l.b16 %v754
    %v3351 = vunpack.c.h.b16 %v754
    %v3352 = vunpack.c.l.b16 %v755
    %v3353 = vunpack.c.h.b16 %v755
    %v3354 = vunpack.c.l.b16 %v756
    %v3355 = vunpack.c.h.b16 %v756
    %v3356 = vunpack.c.l.b16 %v757
    %v3357 = vunpack.c.h.b16 %v757
    %v3358 = vunpack.c.l.b16 %v758
    %v3359 = vunpack.c.h.b16 %v758
    %v3360 = vunpack.c.l.b16 %v759
    %v3361 = vunpack.c.h.b16 %v759
    %v3362 = vunpack.c.l.b16 %v760
    %v3363 = vunpack.c.h.b16 %v760
    %v3364 = vunpack.c.l.b16 %v761
    %v3365 = vunpack.c.h.b16 %v761
    %v3366 = vunpack.c.l.b16 %v762
    %v3367 = vunpack.c.h.b16 %v762
    %v3368 = vunpack.c.l.b16 %v763
    %v3369 = vunpack.c.h.b16 %v763
    %v3370 = vunpack.c.l.b16 %v764
    %v3371 = vunpack.c.h.b16 %v764
    %v3372 = vunpack.c.l.b16 %v765
    %v3373 = vunpack.c.h.b16 %v765
    %v3374 = vunpack.c.l.b16 %v766
    %v3375 = vunpack.c.h.b16 %v766
    %v3376 = vunpack.c.l.b16 %v767
    %v3377 = vunpack.c.h.b16 %v767
    %v3378 = vunpack.c.l.b16 %v768
    %v3379 = vunpack.c.h.b16 %v768
    %v3380 = vunpack.c.l.b16 %v769
    %v3381 = vunpack.c.h.b16 %v769
    %v3382 = vunpack.c.l.b16 %v770
    %v3383 = vunpack.c.h.b16 %v770
    %v3384 = vunpack.c.l.b16 %v771
    %v3385 = vunpack.c.h.b16 %v771
    %v3386 = vunpack.c.l.b16 %v772
    %v3387 = vunpack.c.h.b16 %v772
    %v3388 = vunpack.c.l.b16 %v773
    %v3389 = vunpack.c.h.b16 %v773
    %v3390 = vunpack.c.l.b16 %v774
    %v3391 = vunpack.c.h.b16 %v774
    %v3392 = vunpack.c.l.b16 %v775
    %v3393 = vunpack.c.h.b16 %v775
    %v3394 = vunpack.c.l.b16 %v776
    %v3395 = vunpack.c.h.b16 %v776
    %v3396 = vunpack.c.l.b16 %v777
    %v3397 = vunpack.c.h.b16 %v777
    %v3398 = vunpack.c.l.b16 %v778
    %v3399 = vunpack.c.h.b16 %v778
    %v3400 = vunpack.c.l.b16 %v779
    %v3401 = vunpack.c.h.b16 %v779
    %v3402 = vunpack.c.l.b16 %v780
    %v3403 = vunpack.c.h.b16 %v780
    %v3404 = vunpack.c.l.b16 %v781
    %v3405 = vunpack.c.h.b16 %v781
    %v3406 = vunpack.c.l.b16 %v782
    %v3407 = vunpack.c.h.b16 %v782
    %v3408 = vunpack.c.l.b16 %v783
    %v3409 = vunpack.c.h.b16 %v783
    %v3410 = vunpack.c.l.b16 %v784
    %v3411 = vunpack.c.h.b16 %v784
    %v3412 = vunpack.c.l.b16 %v785
    %v3413 = vunpack.c.h.b16 %v785
    %v3414 = vunpack.c.l.b16 %v786
    %v3415 = vunpack.c.h.b16 %v786
    %v3416 = vunpack.c.l.b16 %v787
    %v3417 = vunpack.c.h.b16 %v787
    %v3418 = vunpack.c.l.b16 %v788
    %v3419 = vunpack.c.h.b16 %v788
    %v3420 = vunpack.c.l.b16 %v789
    %v3421 = vunpack.c.h.b16 %v789
    %v3422 = vunpack.c.l.b16 %v790
    %v3423 = vunpack.c.h.b16 %v790
    %v3424 = vunpack.c.l.b16 %v791
    %v3425 = vunpack.c.h.b16 %v791
    %v3426 = vunpack.c.l.b16 %v792
    %v3427 = vunpack.c.h.b16 %v792
    %v3428 = vunpack.c.l.b16 %v793
    %v3429 = vunpack.c.h.b16 %v793
    %v3430 = vunpack.c.l.b16 %v794
    %v3431 = vunpack.c.h.b16 %v794
    %v3432 = vunpack.c.l.b16 %v795
    %v3433 = vunpack.c.h.b16 %v795
    %v3434 = vunpack.c.l.b16 %v796
    %v3435 = vunpack.c.h.b16 %v796
    %v3436 = vunpack.c.l.b16 %v797
    %v3437 = vunpack.c.h.b16 %v797
    %v3438 = vunpack.c.l.b16 %v798
    %v3439 = vunpack.c.h.b16 %v798
    %v3440 = vunpack.c.l.b16 %v799
    %v3441 = vunpack.c.h.b16 %v799
    %v3442 = vunpack.c.l.b16 %v800
    %v3443 = vunpack.c.h.b16 %v800
    %v3444 = vunpack.c.l.b16 %v801
    %v3445 = vunpack.c.h.b16 %v801
    %v3446 = vunpack.c.l.b16 %v802
    %v3447 = vunpack.c.h.b16 %v802
    %v3448 = vunpack.c.l.b16 %v803
    %v3449 = vunpack.c.h.b16 %v803
    %v3450 = vunpack.c.l.b16 %v804
    %v3451 = vunpack.c.h.b16 %v804
    %v3452 = vunpack.c.l.b16 %v805
    %v3453 = vunpack.c.h.b16 %v805
    %v3454 = vunpack.c.l.b16 %v806
    %v3455 = vunpack.c.h.b16 %v806
    %v3456 = vunpack.c.l.b16 %v807
    %v3457 = vunpack.c.h.b16 %v807
    %v3458 = vunpack.c.l.b16 %v808
    %v3459 = vunpack.c.h.b16 %v808
    %v3460 = vunpack.c.l.b16 %v809
    %v3461 = vunpack.c.h.b16 %v809
    %v3462 = vunpack.c.l.b16 %v810
    %v3463 = vunpack.c.h.b16 %v810
    %v3464 = vunpack.c.l.b16 %v811
    %v3465 = vunpack.c.h.b16 %v811
    %v3466 = vunpack.c.l.b16 %v812
    %v3467 = vunpack.c.h.b16 %v812
    %v3468 = vunpack.c.l.b16 %v813
    %v3469 = vunpack.c.h.b16 %v813
    %v3470 = vunpack.c.l.b16 %v814
    %v3471 = vunpack.c.h.b16 %v814
    %v3472 = vunpack.c.l.b16 %v815
    %v3473 = vunpack.c.h.b16 %v815
    %v3474 = vunpack.c.l.b16 %v816
    %v3475 = vunpack.c.h.b16 %v816
    %v3476 = vunpack.c.l.b16 %v817
    %v3477 = vunpack.c.h.b16 %v817
    %v3478 = vunpack.c.l.b16 %v818
    %v3479 = vunpack.c.h.b16 %v818
    %v3480 = vunpack.c.l.b16 %v819
    %v3481 = vunpack.c.h.b16 %v819
    %v3482 = vunpack.c.l.b16 %v820
    %v3483 = vunpack.c.h.b16 %v820
    %v3484 = vunpack.c.l.b16 %v821
    %v3485 = vunpack.c.h.b16 %v821
    %v3486 = vunpack.c.l.b16 %v822
    %v3487 = vunpack.c.h.b16 %v822
    %v3488 = vunpack.c.l.b16 %v823
    %v3489 = vunpack.c.h.b16 %v823
    %v3490 = vunpack.c.l.b16 %v824
    %v3491 = vunpack.c.h.b16 %v824
    %v3492 = vunpack.c.l.b16 %v825
    %v3493 = vunpack.c.h.b16 %v825
    %v3494 = vunpack.c.l.b16 %v826
    %v3495 = vunpack.c.h.b16 %v826
    %v3496 = vunpack.c.l.b16 %v827
    %v3497 = vunpack.c.h.b16 %v827
    %v3498 = vunpack.c.l.b16 %v828
    %v3499 = vunpack.c.h.b16 %v828
    %v3500 = vunpack.c.l.b16 %v829
    %v3501 = vunpack.c.h.b16 %v829
    %v3502 = vunpack.c.l.b16 %v830
    %v3503 = vunpack.c.h.b16 %v830
    %v3504 = vunpack.c.l.b16 %v831
    %v3505 = vunpack.c.h.b16 %v831
    %v3506 = vunpack.c.l.b16 %v832
    %v3507 = vunpack.c.h.b16 %v832
    %v3508 = vunpack.c.l.b16 %v833
    %v3509 = vunpack.c.h.b16 %v833
    %v3510 = vunpack.c.l.b16 %v834
    %v3511 = vunpack.c.h.b16 %v834
    %v3512 = vunpack.c.l.b16 %v835
    %v3513 = vunpack.c.h.b16 %v835
    %v3514 = vunpack.c.l.b16 %v836
    %v3515 = vunpack.c.h.b16 %v836
    %v3516 = vunpack.c.l.b16 %v837
    %v3517 = vunpack.c.h.b16 %v837
    %v3518 = vunpack.c.l.b16 %v838
    %v3519 = vunpack.c.h.b16 %v838
    %v3520 = vunpack.c.l.b16 %v839
    %v3521 = vunpack.c.h.b16 %v839
    %v3522 = vunpack.c.l.b16 %v840
    %v3523 = vunpack.c.h.b16 %v840
    %v3524 = vunpack.c.l.b16 %v841
    %v3525 = vunpack.c.h.b16 %v841
    %v3526 = vunpack.c.l.b16 %v842
    %v3527 = vunpack.c.h.b16 %v842
    %v3528 = vunpack.c.l.b16 %v843
    %v3529 = vunpack.c.h.b16 %v843
    %v3530 = vunpack.c.l.b16 %v844
    %v3531 = vunpack.c.h.b16 %v844
    %v3532 = vunpack.c.l.b16 %v845
    %v3533 = vunpack.c.h.b16 %v845
    %v3534 = vunpack.c.l.b16 %v846
    %v3535 = vunpack.c.h.b16 %v846
    %v3536 = vunpack.c.l.b16 %v847
    %v3537 = vunpack.c.h.b16 %v847
    %v3538 = vunpack.c.l.b16 %v848
    %v3539 = vunpack.c.h.b16 %v848
    %v3540 = vunpack.c.l.b16 %v849
    %v3541 = vunpack.c.h.b16 %v849
    %v3542 = vunpack.c.l.b16 %v850
    %v3543 = vunpack.c.h.b16 %v850
    %v3544 = vunpack.c.l.b16 %v851
    %v3545 = vunpack.c.h.b16 %v851
    %v3546 = vunpack.c.l.b16 %v852
    %v3547 = vunpack.c.h.b16 %v852
    %v3548 = vunpack.c.l.b16 %v853
    %v3549 = vunpack.c.h.b16 %v853
    %v3550 = vunpack.c.l.b16 %v854
    %v3551 = vunpack.c.h.b16 %v854
    %v3552 = vunpack.c.l.b16 %v855
    %v3553 = vunpack.c.h.b16 %v855
    %v3554 = vunpack.c.l.b16 %v856
    %v3555 = vunpack.c.h.b16 %v856
    %v3556 = vunpack.c.l.b16 %v857
    %v3557 = vunpack.c.h.b16 %v857
    %v3558 = vunpack.c.l.b16 %v858
    %v3559 = vunpack.c.h.b16 %v858
    %v3560 = vunpack.c.l.b16 %v859
    %v3561 = vunpack.c.h.b16 %v859
    %v3562 = vunpack.c.l.b16 %v860
    %v3563 = vunpack.c.h.b16 %v860
    %v3564 = vunpack.c.l.b16 %v861
    %v3565 = vunpack.c.h.b16 %v861
    %v3566 = vunpack.c.l.b16 %v862
    %v3567 = vunpack.c.h.b16 %v862
    %v3568 = vunpack.c.l.b16 %v863
    %v3569 = vunpack.c.h.b16 %v863
    %v3570 = vunpack.c.l.b16 %v864
    %v3571 = vunpack.c.h.b16 %v864
    %v3572 = vunpack.c.l.b16 %v865
    %v3573 = vunpack.c.h.b16 %v865
    %v3574 = vunpack.c.l.b16 %v866
    %v3575 = vunpack.c.h.b16 %v866
    %v3576 = vunpack.c.l.b16 %v867
    %v3577 = vunpack.c.h.b16 %v867
    %v3578 = vunpack.c.l.b16 %v868
    %v3579 = vunpack.c.h.b16 %v868
    %v3580 = vunpack.c.l.b16 %v869
    %v3581 = vunpack.c.h.b16 %v869
    %v3582 = vunpack.c.l.b16 %v870
    %v3583 = vunpack.c.h.b16 %v870
    %v3584 = vunpack.c.l.b16 %v871
    %v3585 = vunpack.c.h.b16 %v871
    %v3586 = vunpack.c.l.b16 %v872
    %v3587 = vunpack.c.h.b16 %v872
    %v3588 = vunpack.c.l.b16 %v873
    %v3589 = vunpack.c.h.b16 %v873
    %v3590 = vunpack.c.l.b16 %v874
    %v3591 = vunpack.c.h.b16 %v874
    %v3592 = vunpack.c.l.b16 %v875
    %v3593 = vunpack.c.h.b16 %v875
    %v3594 = vunpack.c.l.b16 %v876
    %v3595 = vunpack.c.h.b16 %v876
    %v3596 = vunpack.c.l.b16 %v877
    %v3597 = vunpack.c.h.b16 %v877
    %v3598 = vunpack.c.l.b16 %v878
    %v3599 = vunpack.c.h.b16 %v878
    %v3600 = vunpack.c.l.b16 %v879
    %v3601 = vunpack.c.h.b16 %v879
    %v3602 = vunpack.c.l.b16 %v880
    %v3603 = vunpack.c.h.b16 %v880
    %v3604 = vunpack.c.l.b16 %v881
    %v3605 = vunpack.c.h.b16 %v881
    %v3606 = vunpack.c.l.b16 %v882
    %v3607 = vunpack.c.h.b16 %v882
    %v3608 = vunpack.c.l.b16 %v883
    %v3609 = vunpack.c.h.b16 %v883
    %v3610 = vunpack.c.l.b16 %v884
    %v3611 = vunpack.c.h.b16 %v884
    %v3612 = vunpack.c.l.b16 %v885
    %v3613 = vunpack.c.h.b16 %v885
    %v3614 = vunpack.c.l.b16 %v886
    %v3615 = vunpack.c.h.b16 %v886
    %v3616 = vunpack.c.l.b16 %v887
    %v3617 = vunpack.c.h.b16 %v887
    %v3618 = vunpack.c.l.b16 %v888
    %v3619 = vunpack.c.h.b16 %v888
    %v3620 = vunpack.c.l.b16 %v889
    %v3621 = vunpack.c.h.b16 %v889
    %v3622 = vunpack.c.l.b16 %v890
    %v3623 = vunpack.c.h.b16 %v890
    %v3624 = vunpack.c.l.b16 %v891
    %v3625 = vunpack.c.h.b16 %v891
    %v3626 = vunpack.c.l.b16 %v892
    %v3627 = vunpack.c.h.b16 %v892
    %v3628 = vunpack.c.l.b16 %v893
    %v3629 = vunpack.c.h.b16 %v893
    %v3630 = vunpack.c.l.b16 %v894
    %v3631 = vunpack.c.h.b16 %v894
    %v3632 = vunpack.c.l.b16 %v895
    %v3633 = vunpack.c.h.b16 %v895
    %v3634 = vunpack.c.l.b16 %v896
    %v3635 = vunpack.c.h.b16 %v896
    %v3636 = vunpack.c.l.b16 %v897
    %v3637 = vunpack.c.h.b16 %v897
    %v3638 = vunpack.c.l.b16 %v898
    %v3639 = vunpack.c.h.b16 %v898
    %v3640 = vunpack.c.l.b16 %v899
    %v3641 = vunpack.c.h.b16 %v899
    %v3642 = vunpack.c.l.b16 %v900
    %v3643 = vunpack.c.h.b16 %v900
    %v3644 = vunpack.c.l.b16 %v901
    %v3645 = vunpack.c.h.b16 %v901
    %v3646 = vunpack.c.l.b16 %v902
    %v3647 = vunpack.c.h.b16 %v902
    %v3648 = vunpack.c.l.b16 %v903
    %v3649 = vunpack.c.h.b16 %v903
    %v3650 = vunpack.c.l.b16 %v904
    %v3651 = vunpack.c.h.b16 %v904
    %v3652 = vunpack.c.l.b16 %v905
    %v3653 = vunpack.c.h.b16 %v905
    %v3654 = vunpack.c.l.b16 %v906
    %v3655 = vunpack.c.h.b16 %v906
    %v3656 = vunpack.c.l.b16 %v907
    %v3657 = vunpack.c.h.b16 %v907
    %v3658 = vunpack.c.l.b16 %v908
    %v3659 = vunpack.c.h.b16 %v908
    %v3660 = vunpack.c.l.b16 %v909
    %v3661 = vunpack.c.h.b16 %v909
    %v3662 = vunpack.c.l.b16 %v910
    %v3663 = vunpack.c.h.b16 %v910
    %v3664 = vunpack.c.l.b16 %v911
    %v3665 = vunpack.c.h.b16 %v911
    %v3666 = vunpack.c.l.b16 %v912
    %v3667 = vunpack.c.h.b16 %v912
    %v3668 = vunpack.c.l.b16 %v913
    %v3669 = vunpack.c.h.b16 %v913
    %v3670 = vunpack.c.l.b16 %v914
    %v3671 = vunpack.c.h.b16 %v914
    %v3672 = vunpack.c.l.b16 %v915
    %v3673 = vunpack.c.h.b16 %v915
    %v3674 = vunpack.c.l.b16 %v916
    %v3675 = vunpack.c.h.b16 %v916
    %v3676 = vunpack.c.l.b16 %v917
    %v3677 = vunpack.c.h.b16 %v917
    %v3678 = vunpack.c.l.b16 %v918
    %v3679 = vunpack.c.h.b16 %v918
    %v3680 = vunpack.c.l.b16 %v919
    %v3681 = vunpack.c.h.b16 %v919
    %v3682 = vunpack.c.l.b16 %v920
    %v3683 = vunpack.c.h.b16 %v920
    %v3684 = vunpack.c.l.b16 %v921
    %v3685 = vunpack.c.h.b16 %v921
    %v3686 = vunpack.c.l.b16 %v922
    %v3687 = vunpack.c.h.b16 %v922
    %v3688 = vunpack.c.l.b16 %v923
    %v3689 = vunpack.c.h.b16 %v923
    %v3690 = vunpack.c.l.b16 %v924
    %v3691 = vunpack.c.h.b16 %v924
    %v3692 = vunpack.c.l.b16 %v925
    %v3693 = vunpack.c.h.b16 %v925
    %v3694 = vunpack.c.l.b16 %v926
    %v3695 = vunpack.c.h.b16 %v926
    %v3696 = vunpack.c.l.b16 %v927
    %v3697 = vunpack.c.h.b16 %v927
    %v3698 = vunpack.c.l.b16 %v928
    %v3699 = vunpack.c.h.b16 %v928
    %v3700 = vunpack.c.l.b16 %v929
    %v3701 = vunpack.c.h.b16 %v929
    %v3702 = vunpack.c.l.b16 %v930
    %v3703 = vunpack.c.h.b16 %v930
    %v3704 = vunpack.c.l.b16 %v931
    %v3705 = vunpack.c.h.b16 %v931
    %v3706 = vunpack.c.l.b16 %v932
    %v3707 = vunpack.c.h.b16 %v932
    %v3708 = vunpack.c.l.b16 %v933
    %v3709 = vunpack.c.h.b16 %v933
    %v3710 = vunpack.c.l.b16 %v934
    %v3711 = vunpack.c.h.b16 %v934
    %v3712 = vunpack.c.l.b16 %v935
    %v3713 = vunpack.c.h.b16 %v935
    %v3714 = vunpack.c.l.b16 %v936
    %v3715 = vunpack.c.h.b16 %v936
    %v3716 = vunpack.c.l.b16 %v937
    %v3717 = vunpack.c.h.b16 %v937
    %v3718 = vunpack.c.l.b16 %v938
    %v3719 = vunpack.c.h.b16 %v938
    %v3720 = vunpack.c.l.b16 %v939
    %v3721 = vunpack.c.h.b16 %v939
    %v3722 = vunpack.c.l.b16 %v940
    %v3723 = vunpack.c.h.b16 %v940
    %v3724 = vunpack.c.l.b16 %v941
    %v3725 = vunpack.c.h.b16 %v941
    %v3726 = vunpack.c.l.b16 %v942
    %v3727 = vunpack.c.h.b16 %v942
    %v3728 = vunpack.c.l.b16 %v943
    %v3729 = vunpack.c.h.b16 %v943
    %v3730 = vunpack.c.l.b16 %v944
    %v3731 = vunpack.c.h.b16 %v944
    %v3732 = vunpack.c.l.b16 %v945
    %v3733 = vunpack.c.h.b16 %v945
    %v3734 = vunpack.c.l.b16 %v946
    %v3735 = vunpack.c.h.b16 %v946
    %v3736 = vunpack.c.l.b16 %v947
    %v3737 = vunpack.c.h.b16 %v947
    %v3738 = vunpack.c.l.b16 %v948
    %v3739 = vunpack.c.h.b16 %v948
    %v3740 = vunpack.c.l.b16 %v949
    %v3741 = vunpack.c.h.b16 %v949
    %v3742 = vunpack.c.l.b16 %v950
    %v3743 = vunpack.c.h.b16 %v950
    %v3744 = vunpack.c.l.b16 %v951
    %v3745 = vunpack.c.h.b16 %v951
    %v3746 = vunpack.c.l.b16 %v952
    %v3747 = vunpack.c.h.b16 %v952
    %v3748 = vunpack.c.l.b16 %v953
    %v3749 = vunpack.c.h.b16 %v953
    %v3750 = vunpack.c.l.b16 %v954
    %v3751 = vunpack.c.h.b16 %v954
    %v3752 = vunpack.c.l.b16 %v955
    %v3753 = vunpack.c.h.b16 %v955
    %v3754 = vunpack.c.l.b16 %v956
    %v3755 = vunpack.c.h.b16 %v956
    %v3756 = vunpack.c.l.b16 %v957
    %v3757 = vunpack.c.h.b16 %v957
    %v3758 = vunpack.c.l.b16 %v958
    %v3759 = vunpack.c.h.b16 %v958
    %v3760 = vunpack.c.l.b16 %v959
    %v3761 = vunpack.c.h.b16 %v959
    %v3762 = vunpack.c.l.b16 %v960
    %v3763 = vunpack.c.h.b16 %v960
    %v3764 = vunpack.c.l.b16 %v961
    %v3765 = vunpack.c.h.b16 %v961
    %v3766 = vunpack.c.l.b16 %v962
    %v3767 = vunpack.c.h.b16 %v962
    %v3768 = vunpack.c.l.b16 %v963
    %v3769 = vunpack.c.h.b16 %v963
    %v3770 = vunpack.c.l.b16 %v964
    %v3771 = vunpack.c.h.b16 %v964
    %v3772 = vunpack.c.l.b16 %v965
    %v3773 = vunpack.c.h.b16 %v965
    %v3774 = vunpack.c.l.b16 %v966
    %v3775 = vunpack.c.h.b16 %v966
    %v3776 = vunpack.c.l.b16 %v967
    %v3777 = vunpack.c.h.b16 %v967
    %v3778 = vunpack.c.l.b16 %v968
    %v3779 = vunpack.c.h.b16 %v968
    %v3780 = vunpack.c.l.b16 %v969
    %v3781 = vunpack.c.h.b16 %v969
    %v3782 = vunpack.c.l.b16 %v970
    %v3783 = vunpack.c.h.b16 %v970
    %v3784 = vunpack.c.l.b16 %v971
    %v3785 = vunpack.c.h.b16 %v971
    %v3786 = vunpack.c.l.b16 %v972
    %v3787 = vunpack.c.h.b16 %v972
    %v3788 = vunpack.c.l.b16 %v973
    %v3789 = vunpack.c.h.b16 %v973
    %v3790 = vunpack.c.l.b16 %v974
    %v3791 = vunpack.c.h.b16 %v974
    %v3792 = vunpack.c.l.b16 %v975
    %v3793 = vunpack.c.h.b16 %v975
    %v3794 = vunpack.c.l.b16 %v976
    %v3795 = vunpack.c.h.b16 %v976
    %v3796 = vunpack.c.l.b16 %v977
    %v3797 = vunpack.c.h.b16 %v977
    %v3798 = vunpack.c.l.b16 %v978
    %v3799 = vunpack.c.h.b16 %v978
    %v3800 = vunpack.c.l.b16 %v979
    %v3801 = vunpack.c.h.b16 %v979
    %v3802 = vunpack.c.l.b16 %v980
    %v3803 = vunpack.c.h.b16 %v980
    %v3804 = vunpack.c.l.b16 %v981
    %v3805 = vunpack.c.h.b16 %v981
    %v3806 = vunpack.c.l.b16 %v982
    %v3807 = vunpack.c.h.b16 %v982
    %v3808 = vunpack.c.l.b16 %v983
    %v3809 = vunpack.c.h.b16 %v983
    %v3810 = vunpack.c.l.b16 %v984
    %v3811 = vunpack.c.h.b16 %v984
    %v3812 = vunpack.c.l.b16 %v985
    %v3813 = vunpack.c.h.b16 %v985
    %v3814 = vunpack.c.l.b16 %v986
    %v3815 = vunpack.c.h.b16 %v986
    %v3816 = vunpack.c.l.b16 %v987
    %v3817 = vunpack.c.h.b16 %v987
    %v3818 = vunpack.c.l.b16 %v988
    %v3819 = vunpack.c.h.b16 %v988
    %v3820 = vunpack.c.l.b16 %v989
    %v3821 = vunpack.c.h.b16 %v989
    %v3822 = vunpack.c.l.b16 %v990
    %v3823 = vunpack.c.h.b16 %v990
    %v3824 = vunpack.c.l.b16 %v991
    %v3825 = vunpack.c.h.b16 %v991
    %v3826 = vunpack.c.l.b16 %v992
    %v3827 = vunpack.c.h.b16 %v992
    %v3828 = vunpack.c.l.b16 %v993
    %v3829 = vunpack.c.h.b16 %v993
    %v3830 = vunpack.c.l.b16 %v994
    %v3831 = vunpack.c.h.b16 %v994
    %v3832 = vunpack.c.l.b16 %v995
    %v3833 = vunpack.c.h.b16 %v995
    %v3834 = vunpack.c.l.b16 %v996
    %v3835 = vunpack.c.h.b16 %v996
    %v3836 = vunpack.c.l.b16 %v997
    %v3837 = vunpack.c.h.b16 %v997
    %v3838 = vunpack.c.l.b16 %v998
    %v3839 = vunpack.c.h.b16 %v998
    %v3840 = vunpack.c.l.b16 %v999
    %v3841 = vunpack.c.h.b16 %v999
    %v3842 = vunpack.c.l.b16 %v1000
    %v3843 = vunpack.c.h.b16 %v1000
    %v3844 = vunpack.c.l.b16 %v1001
    %v3845 = vunpack.c.h.b16 %v1001
    %v3846 = vunpack.c.l.b16 %v1002
    %v3847 = vunpack.c.h.b16 %v1002
    %v3848 = vunpack.c.l.b16 %v1003
    %v3849 = vunpack.c.h.b16 %v1003
    %v3850 = vunpack.c.l.b16 %v1004
    %v3851 = vunpack.c.h.b16 %v1004
    %v3852 = vunpack.c.l.b16 %v1005
    %v3853 = vunpack.c.h.b16 %v1005
    %v3854 = vunpack.c.l.b16 %v1006
    %v3855 = vunpack.c.h.b16 %v1006
    %v3856 = vunpack.c.l.b16 %v1007
    %v3857 = vunpack.c.h.b16 %v1007
    %v3858 = vunpack.c.l.b16 %v1008
    %v3859 = vunpack.c.h.b16 %v1008
    %v3860 = vunpack.c.l.b16 %v1009
    %v3861 = vunpack.c.h.b16 %v1009
    %v3862 = vunpack.c.l.b16 %v1010
    %v3863 = vunpack.c.h.b16 %v1010
    %v3864 = vunpack.c.l.b16 %v1011
    %v3865 = vunpack.c.h.b16 %v1011
    %v3866 = vunpack.c.l.b16 %v1012
    %v3867 = vunpack.c.h.b16 %v1012
    %v3868 = vunpack.c.l.b16 %v1013
    %v3869 = vunpack.c.h.b16 %v1013
    %v3870 = vunpack.c.l.b16 %v1014
    %v3871 = vunpack.c.h.b16 %v1014
    %v3872 = vunpack.c.l.b16 %v1015
    %v3873 = vunpack.c.h.b16 %v1015
    %v3874 = vunpack.c.l.b16 %v1016
    %v3875 = vunpack.c.h.b16 %v1016
    %v3876 = vunpack.c.l.b16 %v1017
    %v3877 = vunpack.c.h.b16 %v1017
    %v3878 = vunpack.c.l.b16 %v1018
    %v3879 = vunpack.c.h.b16 %v1018
    %v3880 = vunpack.c.l.b16 %v1019
    %v3881 = vunpack.c.h.b16 %v1019
    %v3882 = vunpack.c.l.b16 %v1020
    %v3883 = vunpack.c.h.b16 %v1020
    %v3884 = vunpack.c.l.b16 %v1021
    %v3885 = vunpack.c.h.b16 %v1021
    %v3886 = vunpack.c.l.b16 %v1022
    %v3887 = vunpack.c.h.b16 %v1022
    %v3888 = vunpack.c.l.b16 %v1023
    %v3889 = vunpack.c.h.b16 %v1023
    %v3890 = vunpack.c.l.b16 %v1024
    %v3891 = vunpack.c.h.b16 %v1024
    %v3892 = vunpack.c.l.b16 %v1025
    %v3893 = vunpack.c.h.b16 %v1025
    %v3894 = vunpack.c.l.b16 %v1026
    %v3895 = vunpack.c.h.b16 %v1026
    %v3896 = vunpack.c.l.b16 %v1027
    %v3897 = vunpack.c.h.b16 %v1027
    %v3898 = vunpack.c.l.b16 %v1028
    %v3899 = vunpack.c.h.b16 %v1028
    %v3900 = vunpack.c.l.b16 %v1029
    %v3901 = vunpack.c.h.b16 %v1029
    %v3902 = vunpack.c.l.b16 %v1030
    %v3903 = vunpack.c.h.b16 %v1030
    %v3904 = vunpack.c.l.b16 %v1031
    %v3905 = vunpack.c.h.b16 %v1031
    %v3906 = vunpack.c.l.b16 %v1032
    %v3907 = vunpack.c.h.b16 %v1032
    %v3908 = vunpack.c.l.b16 %v1033
    %v3909 = vunpack.c.h.b16 %v1033
    %v3910 = vunpack.c.l.b16 %v1034
    %v3911 = vunpack.c.h.b16 %v1034
    %v3912 = vunpack.c.l.b16 %v1035
    %v3913 = vunpack.c.h.b16 %v1035
    %v3914 = vunpack.c.l.b16 %v1036
    %v3915 = vunpack.c.h.b16 %v1036
    %v3916 = vunpack.c.l.b16 %v1037
    %v3917 = vunpack.c.h.b16 %v1037
    %v3918 = vunpack.c.l.b16 %v1038
    %v3919 = vunpack.c.h.b16 %v1038
    %v3920 = vunpack.c.l.b16 %v1039
    %v3921 = vunpack.c.h.b16 %v1039
    %v3922 = vunpack.c.l.b16 %v1040
    %v3923 = vunpack.c.h.b16 %v1040
    %v3924 = vunpack.c.l.b16 %v1041
    %v3925 = vunpack.c.h.b16 %v1041
    %v3926 = vunpack.c.l.b16 %v1042
    %v3927 = vunpack.c.h.b16 %v1042
    %v3928 = vunpack.c.l.b16 %v1043
    %v3929 = vunpack.c.h.b16 %v1043
    %v3930 = vunpack.c.l.b16 %v1044
    %v3931 = vunpack.c.h.b16 %v1044
    %v3932 = vunpack.c.l.b16 %v1045
    %v3933 = vunpack.c.h.b16 %v1045
    %v3934 = vunpack.c.l.b16 %v1046
    %v3935 = vunpack.c.h.b16 %v1046
    %v3936 = vunpack.c.l.b16 %v1047
    %v3937 = vunpack.c.h.b16 %v1047
    %v3938 = vunpack.c.l.b16 %v1048
    %v3939 = vunpack.c.h.b16 %v1048
    %v3940 = vunpack.c.l.b16 %v1049
    %v3941 = vunpack.c.h.b16 %v1049
    %v3942 = vunpack.c.l.b16 %v1050
    %v3943 = vunpack.c.h.b16 %v1050
    %v3944 = vunpack.c.l.b16 %v1051
    %v3945 = vunpack.c.h.b16 %v1051
    %v3946 = vunpack.c.l.b16 %v1052
    %v3947 = vunpack.c.h.b16 %v1052
    %v3948 = vunpack.c.l.b16 %v1053
    %v3949 = vunpack.c.h.b16 %v1053
    %v3950 = vunpack.c.l.b16 %v1054
    %v3951 = vunpack.c.h.b16 %v1054
    %v3952 = vunpack.c.l.b16 %v1055
    %v3953 = vunpack.c.h.b16 %v1055
    %v3954 = vunpack.c.l.b16 %v1056
    %v3955 = vunpack.c.h.b16 %v1056
    %v3956 = vunpack.c.l.b16 %v1057
    %v3957 = vunpack.c.h.b16 %v1057
    %v3958 = vunpack.c.l.b16 %v1058
    %v3959 = vunpack.c.h.b16 %v1058
    %v3960 = vunpack.c.l.b16 %v1059
    %v3961 = vunpack.c.h.b16 %v1059
    %v3962 = vunpack.c.l.b16 %v1060
    %v3963 = vunpack.c.h.b16 %v1060
    %v3964 = vunpack.c.l.b16 %v1061
    %v3965 = vunpack.c.h.b16 %v1061
    %v3966 = vunpack.c.l.b16 %v1062
    %v3967 = vunpack.c.h.b16 %v1062
    %v3968 = vunpack.c.l.b16 %v1063
    %v3969 = vunpack.c.h.b16 %v1063
    %v3970 = vunpack.c.l.b16 %v1064
    %v3971 = vunpack.c.h.b16 %v1064
    %v3972 = vunpack.c.l.b16 %v1065
    %v3973 = vunpack.c.h.b16 %v1065
    %v3974 = vunpack.c.l.b16 %v1066
    %v3975 = vunpack.c.h.b16 %v1066
    %v3976 = vunpack.c.l.b16 %v1067
    %v3977 = vunpack.c.h.b16 %v1067
    %v3978 = vunpack.c.l.b16 %v1068
    %v3979 = vunpack.c.h.b16 %v1068
    %v3980 = vunpack.c.l.b16 %v1069
    %v3981 = vunpack.c.h.b16 %v1069
    %v3982 = vunpack.c.l.b16 %v1070
    %v3983 = vunpack.c.h.b16 %v1070
    %v3984 = vunpack.c.l.b16 %v1071
    %v3985 = vunpack.c.h.b16 %v1071
    %v3986 = vunpack.c.l.b16 %v1072
    %v3987 = vunpack.c.h.b16 %v1072
    %v3988 = vunpack.c.l.b16 %v1073
    %v3989 = vunpack.c.h.b16 %v1073
    %v3990 = vunpack.c.l.b16 %v1074
    %v3991 = vunpack.c.h.b16 %v1074
    %v3992 = vunpack.c.l.b16 %v1075
    %v3993 = vunpack.c.h.b16 %v1075
    %v3994 = vunpack.c.l.b16 %v1076
    %v3995 = vunpack.c.h.b16 %v1076
    %v3996 = vunpack.c.l.b16 %v1077
    %v3997 = vunpack.c.h.b16 %v1077
    %v3998 = vunpack.c.l.b16 %v1078
    %v3999 = vunpack.c.h.b16 %v1078
    %v4000 = vunpack.c.l.b16 %v1079
    %v4001 = vunpack.c.h.b16 %v1079
    %v4002 = vunpack.c.l.b16 %v1080
    %v4003 = vunpack.c.h.b16 %v1080
    %v4004 = vunpack.c.l.b16 %v1081
    %v4005 = vunpack.c.h.b16 %v1081
    %v4006 = vunpack.c.l.b16 %v1082
    %v4007 = vunpack.c.h.b16 %v1082
    %v4008 = vunpack.c.l.b16 %v1083
    %v4009 = vunpack.c.h.b16 %v1083
    %v4010 = vunpack.c.l.b16 %v1084
    %v4011 = vunpack.c.h.b16 %v1084
    %v4012 = vunpack.c.l.b16 %v1085
    %v4013 = vunpack.c.h.b16 %v1085
    %v4014 = vunpack.c.l.b16 %v1086
    %v4015 = vunpack.c.h.b16 %v1086
    %v4016 = vunpack.c.l.b16 %v1087
    %v4017 = vunpack.c.h.b16 %v1087
    %v4018 = vunpack.c.l.b16 %v1088
    %v4019 = vunpack.c.h.b16 %v1088
    %v4020 = vunpack.c.l.b16 %v1089
    %v4021 = vunpack.c.h.b16 %v1089
    %v4022 = vunpack.c.l.b16 %v1090
    %v4023 = vunpack.c.h.b16 %v1090
    %v4024 = vunpack.c.l.b16 %v1091
    %v4025 = vunpack.c.h.b16 %v1091
    %v4026 = vunpack.c.l.b16 %v1092
    %v4027 = vunpack.c.h.b16 %v1092
    %v4028 = vunpack.c.l.b16 %v1093
    %v4029 = vunpack.c.h.b16 %v1093
    %v4030 = vunpack.c.l.b16 %v1094
    %v4031 = vunpack.c.h.b16 %v1094
    %v4032 = vunpack.c.l.b16 %v1095
    %v4033 = vunpack.c.h.b16 %v1095
    %v4034 = vunpack.c.l.b16 %v1096
    %v4035 = vunpack.c.h.b16 %v1096
    %v4036 = vunpack.c.l.b16 %v1097
    %v4037 = vunpack.c.h.b16 %v1097
    %v4038 = vunpack.c.l.b16 %v1098
    %v4039 = vunpack.c.h.b16 %v1098
    %v4040 = vunpack.c.l.b16 %v1099
    %v4041 = vunpack.c.h.b16 %v1099
    %v4042 = vunpack.c.l.b16 %v1100
    %v4043 = vunpack.c.h.b16 %v1100
    %v4044 = vunpack.c.l.b16 %v1101
    %v4045 = vunpack.c.h.b16 %v1101
    %v4046 = vunpack.c.l.b16 %v1102
    %v4047 = vunpack.c.h.b16 %v1102
    %v4048 = vunpack.c.l.b16 %v1103
    %v4049 = vunpack.c.h.b16 %v1103
    %v4050 = vunpack.c.l.b16 %v1104
    %v4051 = vunpack.c.h.b16 %v1104
    %v4052 = vunpack.c.l.b16 %v1105
    %v4053 = vunpack.c.h.b16 %v1105
    %v4054 = vunpack.c.l.b16 %v1106
    %v4055 = vunpack.c.h.b16 %v1106
    %v4056 = vunpack.c.l.b16 %v1107
    %v4057 = vunpack.c.h.b16 %v1107
    %v4058 = vunpack.c.l.b16 %v1108
    %v4059 = vunpack.c.h.b16 %v1108
    %v4060 = vunpack.c.l.b16 %v1109
    %v4061 = vunpack.c.h.b16 %v1109
    %v4062 = vunpack.c.l.b16 %v1110
    %v4063 = vunpack.c.h.b16 %v1110
    %v4064 = vunpack.c.l.b16 %v1111
    %v4065 = vunpack.c.h.b16 %v1111
    %v4066 = vunpack.c.l.b16 %v1112
    %v4067 = vunpack.c.h.b16 %v1112
    %v4068 = vunpack.c.l.b16 %v1113
    %v4069 = vunpack.c.h.b16 %v1113
    %v4070 = vunpack.c.l.b16 %v1114
    %v4071 = vunpack.c.h.b16 %v1114
    %v4072 = vunpack.c.l.b16 %v1115
    %v4073 = vunpack.c.h.b16 %v1115
    %v4074 = vunpack.c.l.b16 %v1116
    %v4075 = vunpack.c.h.b16 %v1116
    %v4076 = vunpack.c.l.b16 %v1117
    %v4077 = vunpack.c.h.b16 %v1117
    %v4078 = vunpack.c.l.b16 %v1118
    %v4079 = vunpack.c.h.b16 %v1118
    %v4080 = vunpack.c.l.b16 %v1119
    %v4081 = vunpack.c.h.b16 %v1119
    %v4082 = vunpack.c.l.b16 %v1120
    %v4083 = vunpack.c.h.b16 %v1120
    %v4084 = vunpack.c.l.b16 %v1121
    %v4085 = vunpack.c.h.b16 %v1121
    %v4086 = vunpack.c.l.b16 %v1122
    %v4087 = vunpack.c.h.b16 %v1122
    %v4088 = vunpack.c.l.b16 %v1123
    %v4089 = vunpack.c.h.b16 %v1123
    %v4090 = vunpack.c.l.b16 %v1124
    %v4091 = vunpack.c.h.b16 %v1124
    %v4092 = vunpack.c.l.b16 %v1125
    %v4093 = vunpack.c.h.b16 %v1125
    %v4094 = vunpack.c.l.b16 %v1126
    %v4095 = vunpack.c.h.b16 %v1126
    %v4096 = vunpack.c.l.b16 %v1127
    %v4097 = vunpack.c.h.b16 %v1127
    %v4098 = vunpack.c.l.b16 %v1128
    %v4099 = vunpack.c.h.b16 %v1128
    %v4100 = vunpack.c.l.b16 %v1129
    %v4101 = vunpack.c.h.b16 %v1129
    %v4102 = vunpack.c.l.b16 %v1130
    %v4103 = vunpack.c.h.b16 %v1130
    %v4104 = vunpack.c.l.b16 %v1131
    %v4105 = vunpack.c.h.b16 %v1131
    %v4106 = vunpack.c.l.b16 %v1132
    %v4107 = vunpack.c.h.b16 %v1132
    %v4108 = vunpack.c.l.b16 %v1133
    %v4109 = vunpack.c.h.b16 %v1133
    %v4110 = vunpack.c.l.b16 %v1134
    %v4111 = vunpack.c.h.b16 %v1134
    %v4112 = vunpack.c.l.b16 %v1135
    %v4113 = vunpack.c.h.b16 %v1135
    %v4114 = vunpack.c.l.b16 %v1136
    %v4115 = vunpack.c.h.b16 %v1136
    %v4116 = vunpack.c.l.b16 %v1137
    %v4117 = vunpack.c.h.b16 %v1137
    %v4118 = vunpack.c.l.b16 %v1138
    %v4119 = vunpack.c.h.b16 %v1138
    %v4120 = vunpack.c.l.b16 %v1139
    %v4121 = vunpack.c.h.b16 %v1139
    %v4122 = vunpack.c.l.b16 %v1140
    %v4123 = vunpack.c.h.b16 %v1140
    %v4124 = vunpack.c.l.b16 %v1141
    %v4125 = vunpack.c.h.b16 %v1141
    %v4126 = vunpack.c.l.b16 %v1142
    %v4127 = vunpack.c.h.b16 %v1142
    %v4128 = vunpack.c.l.b16 %v1143
    %v4129 = vunpack.c.h.b16 %v1143
    %v4130 = vunpack.c.l.b16 %v1144
    %v4131 = vunpack.c.h.b16 %v1144
    %v4132 = vunpack.c.l.b16 %v1145
    %v4133 = vunpack.c.h.b16 %v1145
    %v4134 = vunpack.c.l.b16 %v1146
    %v4135 = vunpack.c.h.b16 %v1146
    %v4136 = vunpack.c.l.b16 %v1147
    %v4137 = vunpack.c.h.b16 %v1147
    %v4138 = vunpack.c.l.b16 %v1148
    %v4139 = vunpack.c.h.b16 %v1148
    %v4140 = vunpack.c.l.b16 %v1149
    %v4141 = vunpack.c.h.b16 %v1149
    %v4142 = vunpack.c.l.b16 %v1150
    %v4143 = vunpack.c.h.b16 %v1150
    %v4144 = vunpack.c.l.b16 %v1151
    %v4145 = vunpack.c.h.b16 %v1151
    %v4146 = vunpack.c.l.b16 %v1152
    %v4147 = vunpack.c.h.b16 %v1152
    %v4148 = vunpack.c.l.b16 %v1153
    %v4149 = vunpack.c.h.b16 %v1153
    %v4150 = vunpack.c.l.b16 %v1154
    %v4151 = vunpack.c.h.b16 %v1154
    %v4152 = vunpack.c.l.b16 %v1155
    %v4153 = vunpack.c.h.b16 %v1155
    %v4154 = vunpack.c.l.b16 %v1156
    %v4155 = vunpack.c.h.b16 %v1156
    %v4156 = vunpack.c.l.b16 %v1157
    %v4157 = vunpack.c.h.b16 %v1157
    %v4158 = vunpack.c.l.b16 %v1158
    %v4159 = vunpack.c.h.b16 %v1158
    %v4160 = vunpack.c.l.b16 %v1159
    %v4161 = vunpack.c.h.b16 %v1159
    %v4162 = vunpack.c.l.b16 %v1160
    %v4163 = vunpack.c.h.b16 %v1160
    %v4164 = vunpack.c.l.b16 %v1161
    %v4165 = vunpack.c.h.b16 %v1161
    %v4166 = vunpack.c.l.b16 %v1162
    %v4167 = vunpack.c.h.b16 %v1162
    %v4168 = vunpack.c.l.b16 %v1163
    %v4169 = vunpack.c.h.b16 %v1163
    %v4170 = vunpack.c.l.b16 %v1164
    %v4171 = vunpack.c.h.b16 %v1164
    %v4172 = vunpack.c.l.b16 %v1165
    %v4173 = vunpack.c.h.b16 %v1165
    %v4174 = vunpack.c.l.b16 %v1166
    %v4175 = vunpack.c.h.b16 %v1166
    %v4176 = vunpack.c.l.b16 %v1167
    %v4177 = vunpack.c.h.b16 %v1167
    %v4178 = vunpack.c.l.b16 %v1168
    %v4179 = vunpack.c.h.b16 %v1168
    %v4180 = vunpack.c.l.b16 %v1169
    %v4181 = vunpack.c.h.b16 %v1169
    %v4182 = vunpack.c.l.b16 %v1170
    %v4183 = vunpack.c.h.b16 %v1170
    %v4184 = vunpack.c.l.b16 %v1171
    %v4185 = vunpack.c.h.b16 %v1171
    %v4186 = vunpack.c.l.b16 %v1172
    %v4187 = vunpack.c.h.b16 %v1172
    %v4188 = vunpack.c.l.b16 %v1173
    %v4189 = vunpack.c.h.b16 %v1173
    %v4190 = vunpack.c.l.b16 %v1174
    %v4191 = vunpack.c.h.b16 %v1174
    %v4192 = vunpack.c.l.b16 %v1175
    %v4193 = vunpack.c.h.b16 %v1175
    %v4194 = vunpack.c.l.b16 %v1176
    %v4195 = vunpack.c.h.b16 %v1176
    %v4196 = vunpack.c.l.b16 %v1177
    %v4197 = vunpack.c.h.b16 %v1177
    %v4198 = vunpack.c.l.b16 %v1178
    %v4199 = vunpack.c.h.b16 %v1178
    %v4200 = vunpack.c.l.b16 %v1179
    %v4201 = vunpack.c.h.b16 %v1179
    %v4202 = vunpack.c.l.b16 %v1180
    %v4203 = vunpack.c.h.b16 %v1180
    %v4204 = vunpack.c.l.b16 %v1181
    %v4205 = vunpack.c.h.b16 %v1181
    %v4206 = vunpack.c.l.b16 %v1182
    %v4207 = vunpack.c.h.b16 %v1182
    %v4208 = vunpack.c.l.b16 %v1183
    %v4209 = vunpack.c.h.b16 %v1183
    %v4210 = vunpack.c.l.b16 %v1184
    %v4211 = vunpack.c.h.b16 %v1184
    %v4212 = vunpack.c.l.b16 %v1185
    %v4213 = vunpack.c.h.b16 %v1185
    %v4214 = vunpack.c.l.b16 %v1186
    %v4215 = vunpack.c.h.b16 %v1186
    %v4216 = vunpack.c.l.b16 %v1187
    %v4217 = vunpack.c.h.b16 %v1187
    %v4218 = vunpack.c.l.b16 %v1188
    %v4219 = vunpack.c.h.b16 %v1188
    %v4220 = vunpack.c.l.b16 %v1189
    %v4221 = vunpack.c.h.b16 %v1189
    %v4222 = vunpack.c.l.b16 %v1190
    %v4223 = vunpack.c.h.b16 %v1190
    %v4224 = vunpack.c.l.b16 %v1191
    %v4225 = vunpack.c.h.b16 %v1191
    %v4226 = vunpack.c.l.b16 %v1192
    %v4227 = vunpack.c.h.b16 %v1192
    %v4228 = vunpack.c.l.b16 %v1193
    %v4229 = vunpack.c.h.b16 %v1193
    %v4230 = vunpack.c.l.b16 %v1194
    %v4231 = vunpack.c.h.b16 %v1194
    %v4232 = vunpack.c.l.b16 %v1195
    %v4233 = vunpack.c.h.b16 %v1195
    %v4234 = vunpack.c.l.b16 %v1196
    %v4235 = vunpack.c.h.b16 %v1196
    %v4236 = vunpack.c.l.b16 %v1197
    %v4237 = vunpack.c.h.b16 %v1197
    %v4238 = vunpack.c.l.b16 %v1198
    %v4239 = vunpack.c.h.b16 %v1198
    %v4240 = vunpack.c.l.b16 %v1199
    %v4241 = vunpack.c.h.b16 %v1199
    %v4242 = vunpack.c.l.b16 %v1200
    %v4243 = vunpack.c.h.b16 %v1200
    %v4244 = vunpack.c.l.b16 %v1201
    %v4245 = vunpack.c.h.b16 %v1201
    %v4246 = vunpack.c.l.b16 %v1202
    %v4247 = vunpack.c.h.b16 %v1202
    %v4248 = vunpack.c.l.b16 %v1203
    %v4249 = vunpack.c.h.b16 %v1203
    %v4250 = vunpack.c.l.b16 %v1204
    %v4251 = vunpack.c.h.b16 %v1204
    %v4252 = vunpack.c.l.b16 %v1205
    %v4253 = vunpack.c.h.b16 %v1205
    %v4254 = vunpack.c.l.b16 %v1206
    %v4255 = vunpack.c.h.b16 %v1206
    %v4256 = vunpack.c.l.b16 %v1207
    %v4257 = vunpack.c.h.b16 %v1207
    %v4258 = vunpack.c.l.b16 %v1208
    %v4259 = vunpack.c.h.b16 %v1208
    %v4260 = vunpack.c.l.b16 %v1209
    %v4261 = vunpack.c.h.b16 %v1209
    %v4262 = vunpack.c.l.b16 %v1210
    %v4263 = vunpack.c.h.b16 %v1210
    %v4264 = vunpack.c.l.b16 %v1211
    %v4265 = vunpack.c.h.b16 %v1211
    %v4266 = vunpack.c.l.b16 %v1212
    %v4267 = vunpack.c.h.b16 %v1212
    %v4268 = vunpack.c.l.b16 %v1213
    %v4269 = vunpack.c.h.b16 %v1213
    %v4270 = vunpack.c.l.b16 %v1214
    %v4271 = vunpack.c.h.b16 %v1214
    %v4272 = vunpack.c.l.b16 %v1215
    %v4273 = vunpack.c.h.b16 %v1215
    %v4274 = vunpack.c.l.b16 %v1216
    %v4275 = vunpack.c.h.b16 %v1216
    %v4276 = vunpack.c.l.b16 %v1217
    %v4277 = vunpack.c.h.b16 %v1217
    %v4278 = vunpack.c.l.b16 %v1218
    %v4279 = vunpack.c.h.b16 %v1218
    %v4280 = vunpack.c.l.b16 %v1219
    %v4281 = vunpack.c.h.b16 %v1219
    %v4282 = vunpack.c.l.b16 %v1220
    %v4283 = vunpack.c.h.b16 %v1220
    %v4284 = vunpack.c.l.b16 %v1221
    %v4285 = vunpack.c.h.b16 %v1221
    %v4286 = vunpack.c.l.b16 %v1222
    %v4287 = vunpack.c.h.b16 %v1222
    %v4288 = vunpack.c.l.b16 %v1223
    %v4289 = vunpack.c.h.b16 %v1223
    %v4290 = vunpack.c.l.b16 %v1224
    %v4291 = vunpack.c.h.b16 %v1224
    %v4292 = vunpack.c.l.b16 %v1225
    %v4293 = vunpack.c.h.b16 %v1225
    %v4294 = vunpack.c.l.b16 %v1226
    %v4295 = vunpack.c.h.b16 %v1226
    %v4296 = vunpack.c.l.b16 %v1227
    %v4297 = vunpack.c.h.b16 %v1227
    %v4298 = vunpack.c.l.b16 %v1228
    %v4299 = vunpack.c.h.b16 %v1228
    %v4300 = vunpack.c.l.b16 %v1229
    %v4301 = vunpack.c.h.b16 %v1229
    %v4302 = vunpack.c.l.b16 %v1230
    %v4303 = vunpack.c.h.b16 %v1230
    %v4304 = vunpack.c.l.b16 %v1231
    %v4305 = vunpack.c.h.b16 %v1231
    %v4306 = vunpack.c.l.b16 %v1232
    %v4307 = vunpack.c.h.b16 %v1232
    %v4308 = vunpack.c.l.b16 %v1233
    %v4309 = vunpack.c.h.b16 %v1233
    %v4310 = vunpack.c.l.b16 %v1234
    %v4311 = vunpack.c.h.b16 %v1234
    %v4312 = vunpack.c.l.b16 %v1235
    %v4313 = vunpack.c.h.b16 %v1235
    %v4314 = vunpack.c.l.b16 %v1236
    %v4315 = vunpack.c.h.b16 %v1236
    %v4316 = vunpack.c.l.b16 %v1237
    %v4317 = vunpack.c.h.b16 %v1237
    %v4318 = vunpack.c.l.b16 %v1238
    %v4319 = vunpack.c.h.b16 %v1238
    %v4320 = vunpack.c.l.b16 %v1239
    %v4321 = vunpack.c.h.b16 %v1239
    %v4322 = vunpack.c.l.b16 %v1240
    %v4323 = vunpack.c.h.b16 %v1240
    %v4324 = vunpack.c.l.b16 %v1241
    %v4325 = vunpack.c.h.b16 %v1241
    %v4326 = vunpack.c.l.b16 %v1242
    %v4327 = vunpack.c.h.b16 %v1242
    %v4328 = vunpack.c.l.b16 %v1243
    %v4329 = vunpack.c.h.b16 %v1243
    %v4330 = vunpack.c.l.b16 %v1244
    %v4331 = vunpack.c.h.b16 %v1244
    %v4332 = vunpack.c.l.b16 %v1245
    %v4333 = vunpack.c.h.b16 %v1245
    %v4334 = vunpack.c.l.b16 %v1246
    %v4335 = vunpack.c.h.b16 %v1246
    %v4336 = vunpack.c.l.b16 %v1247
    %v4337 = vunpack.c.h.b16 %v1247
    %v4338 = vunpack.c.l.b16 %v1248
    %v4339 = vunpack.c.h.b16 %v1248
    %v4340 = vunpack.c.l.b16 %v1249
    %v4341 = vunpack.c.h.b16 %v1249
    %v4342 = vunpack.c.l.b16 %v1250
    %v4343 = vunpack.c.h.b16 %v1250
    %v4344 = vunpack.c.l.b16 %v1251
    %v4345 = vunpack.c.h.b16 %v1251
    %v4346 = vunpack.c.l.b16 %v1252
    %v4347 = vunpack.c.h.b16 %v1252
    %v4348 = vunpack.c.l.b16 %v1253
    %v4349 = vunpack.c.h.b16 %v1253
    %v4350 = vunpack.c.l.b16 %v1254
    %v4351 = vunpack.c.h.b16 %v1254
    %v4352 = vunpack.c.l.b16 %v1255
    %v4353 = vunpack.c.h.b16 %v1255
    %v4354 = vunpack.c.l.b16 %v1256
    %v4355 = vunpack.c.h.b16 %v1256
    %v4356 = vunpack.c.l.b16 %v1257
    %v4357 = vunpack.c.h.b16 %v1257
    %v4358 = vunpack.c.l.b16 %v1258
    %v4359 = vunpack.c.h.b16 %v1258
    %v4360 = vunpack.c.l.b16 %v1259
    %v4361 = vunpack.c.h.b16 %v1259
    %v4362 = vunpack.c.l.b16 %v1260
    %v4363 = vunpack.c.h.b16 %v1260
    %v4364 = vunpack.c.l.b16 %v1261
    %v4365 = vunpack.c.h.b16 %v1261
    %v4366 = vunpack.c.l.b16 %v1262
    %v4367 = vunpack.c.h.b16 %v1262
    %v4368 = vunpack.c.l.b16 %v1263
    %v4369 = vunpack.c.h.b16 %v1263
    %v4370 = vunpack.c.l.b16 %v1264
    %v4371 = vunpack.c.h.b16 %v1264
    %v4372 = vunpack.c.l.b16 %v1265
    %v4373 = vunpack.c.h.b16 %v1265
    %v4374 = vunpack.c.l.b16 %v1266
    %v4375 = vunpack.c.h.b16 %v1266
    %v4376 = vunpack.c.l.b16 %v1267
    %v4377 = vunpack.c.h.b16 %v1267
    %v4378 = vunpack.c.l.b16 %v1268
    %v4379 = vunpack.c.h.b16 %v1268
    %v4380 = vunpack.c.l.b16 %v1269
    %v4381 = vunpack.c.h.b16 %v1269
    %v4382 = vunpack.c.l.b16 %v1270
    %v4383 = vunpack.c.h.b16 %v1270
    %v4384 = vunpack.c.l.b16 %v1271
    %v4385 = vunpack.c.h.b16 %v1271
    %v4386 = vunpack.c.l.b16 %v1272
    %v4387 = vunpack.c.h.b16 %v1272
    %v4388 = vunpack.c.l.b16 %v1273
    %v4389 = vunpack.c.h.b16 %v1273
    %v4390 = vunpack.c.l.b16 %v1274
    %v4391 = vunpack.c.h.b16 %v1274
    %v4392 = vunpack.c.l.b16 %v1275
    %v4393 = vunpack.c.h.b16 %v1275
    %v4394 = vunpack.c.l.b16 %v1276
    %v4395 = vunpack.c.h.b16 %v1276
    %v4396 = vunpack.c.l.b16 %v1277
    %v4397 = vunpack.c.h.b16 %v1277
    %v4398 = vunpack.c.l.b16 %v1278
    %v4399 = vunpack.c.h.b16 %v1278
    %v4400 = vunpack.c.l.b16 %v1279
    %v4401 = vunpack.c.h.b16 %v1279
    %v4402 = vunpack.c.l.b16 %v1280
    %v4403 = vunpack.c.h.b16 %v1280
    %v4404 = vunpack.c.l.b16 %v1281
    %v4405 = vunpack.c.h.b16 %v1281
    %v4406 = vunpack.c.l.b16 %v1282
    %v4407 = vunpack.c.h.b16 %v1282
    %v4408 = vunpack.c.l.b16 %v1283
    %v4409 = vunpack.c.h.b16 %v1283
    %v4410 = vunpack.c.l.b16 %v1284
    %v4411 = vunpack.c.h.b16 %v1284
    %v4412 = vunpack.c.l.b16 %v1285
    %v4413 = vunpack.c.h.b16 %v1285
    %v4414 = vunpack.c.l.b16 %v1286
    %v4415 = vunpack.c.h.b16 %v1286
    %v4416 = vunpack.c.l.b16 %v1287
    %v4417 = vunpack.c.h.b16 %v1287
    %v4418 = vunpack.c.l.b16 %v1288
    %v4419 = vunpack.c.h.b16 %v1288
    %v4420 = vunpack.c.l.b16 %v1289
    %v4421 = vunpack.c.h.b16 %v1289
    %v4422 = vunpack.c.l.b16 %v1290
    %v4423 = vunpack.c.h.b16 %v1290
    %v4424 = vunpack.c.l.b16 %v1291
    %v4425 = vunpack.c.h.b16 %v1291
    %v4426 = vunpack.c.l.b16 %v1292
    %v4427 = vunpack.c.h.b16 %v1292
    %v4428 = vunpack.c.l.b16 %v1293
    %v4429 = vunpack.c.h.b16 %v1293
    %v4430 = vunpack.c.l.b16 %v1294
    %v4431 = vunpack.c.h.b16 %v1294
    %v4432 = vunpack.c.l.b16 %v1295
    %v4433 = vunpack.c.h.b16 %v1295
    %v4434 = vunpack.c.l.b16 %v1296
    %v4435 = vunpack.c.h.b16 %v1296
    %v4436 = vunpack.c.l.b16 %v1297
    %v4437 = vunpack.c.h.b16 %v1297
    %v4438 = vunpack.c.l.b16 %v1298
    %v4439 = vunpack.c.h.b16 %v1298
    %v4440 = vunpack.c.l.b16 %v1299
    %v4441 = vunpack.c.h.b16 %v1299
    %v4442 = vunpack.c.l.b16 %v1300
    %v4443 = vunpack.c.h.b16 %v1300
    %v4444 = vunpack.c.l.b16 %v1301
    %v4445 = vunpack.c.h.b16 %v1301
    %v4446 = vunpack.c.l.b16 %v1302
    %v4447 = vunpack.c.h.b16 %v1302
    %v4448 = vunpack.c.l.b16 %v1303
    %v4449 = vunpack.c.h.b16 %v1303
    %v4450 = vunpack.c.l.b16 %v1304
    %v4451 = vunpack.c.h.b16 %v1304
    %v4452 = vunpack.c.l.b16 %v1305
    %v4453 = vunpack.c.h.b16 %v1305
    %v4454 = vunpack.c.l.b16 %v1306
    %v4455 = vunpack.c.h.b16 %v1306
    %v4456 = vunpack.c.l.b16 %v1307
    %v4457 = vunpack.c.h.b16 %v1307
    %v4458 = vunpack.c.l.b16 %v1308
    %v4459 = vunpack.c.h.b16 %v1308
    %v4460 = vunpack.c.l.b16 %v1309
    %v4461 = vunpack.c.h.b16 %v1309
    %v4462 = vunpack.c.l.b16 %v1310
    %v4463 = vunpack.c.h.b16 %v1310
    %v4464 = vunpack.c.l.b16 %v1311
    %v4465 = vunpack.c.h.b16 %v1311
    %v4466 = vunpack.c.l.b16 %v1312
    %v4467 = vunpack.c.h.b16 %v1312
    %v4468 = vunpack.c.l.b16 %v1313
    %v4469 = vunpack.c.h.b16 %v1313
    %v4470 = vunpack.c.l.b16 %v1314
    %v4471 = vunpack.c.h.b16 %v1314
    %v4472 = vunpack.c.l.b16 %v1315
    %v4473 = vunpack.c.h.b16 %v1315
    %v4474 = vunpack.c.l.b16 %v1316
    %v4475 = vunpack.c.h.b16 %v1316
    %v4476 = vunpack.c.l.b16 %v1317
    %v4477 = vunpack.c.h.b16 %v1317
    %v4478 = vunpack.c.l.b16 %v1318
    %v4479 = vunpack.c.h.b16 %v1318
    %v4480 = vunpack.c.l.b16 %v1319
    %v4481 = vunpack.c.h.b16 %v1319
    %v4482 = vunpack.c.l.b16 %v1320
    %v4483 = vunpack.c.h.b16 %v1320
    %v4484 = vpack.c.b16 %v2440, %v2436
    %v4485 = vpack.c.b16 %v2441, %v2437
    %v4486 = vpack.c.b16 %v2442, %v2438
    %v4487 = vpack.c.b16 %v2443, %v2439
    %v4488 = vpack.c.b16 %v2448, %v2444
    %v4489 = vpack.c.b16 %v2449, %v2445
    %v4490 = vpack.c.b16 %v2450, %v2446
    %v4491 = vpack.c.b16 %v2451, %v2447
    %v4492 = vpack.c.b16 %v2456, %v2452
    %v4493 = vpack.c.b16 %v2457, %v2453
    %v4494 = vpack.c.b16 %v2458, %v2454
    %v4495 = vpack.c.b16 %v2459, %v2455
    %v4496 = vpack.c.b16 %v2464, %v2460
    %v4497 = vpack.c.b16 %v2465, %v2461
    %v4498 = vpack.c.b16 %v2466, %v2462
    %v4499 = vpack.c.b16 %v2467, %v2463
    %v4500 = vpack.c.b16 %v2472, %v2468
    %v4501 = vpack.c.b16 %v2473, %v2469
    %v4502 = vpack.c.b16 %v2474, %v2470
    %v4503 = vpack.c.b16 %v2475, %v2471
    %v4504 = vpack.c.b16 %v2480, %v2476
    %v4505 = vpack.c.b16 %v2481, %v2477
    %v4506 = vpack.c.b16 %v2482, %v2478
    %v4507 = vpack.c.b16 %v2483, %v2479
    %v4508 = vpack.c.b16 %v2488, %v2484
    %v4509 = vpack.c.b16 %v2489, %v2485
    %v4510 = vpack.c.b16 %v2490, %v2486
    %v4511 = vpack.c.b16 %v2491, %v2487
    %v4512 = vpack.c.b16 %v2496, %v2492
    %v4513 = vpack.c.b16 %v2497, %v2493
    %v4514 = vpack.c.b16 %v2498, %v2494
    %v4515 = vpack.c.b16 %v2499, %v2495
    %v4516 = vpack.c.b16 %v2504, %v2500
    %v4517 = vpack.c.b16 %v2505, %v2501
    %v4518 = vpack.c.b16 %v2506, %v2502
    %v4519 = vpack.c.b16 %v2507, %v2503
    %v4520 = vpack.c.b16 %v2512, %v2508
    %v4521 = vpack.c.b16 %v2513, %v2509
    %v4522 = vpack.c.b16 %v2514, %v2510
    %v4523 = vpack.c.b16 %v2515, %v2511
    %v4524 = vpack.c.b16 %v2520, %v2516
    %v4525 = vpack.c.b16 %v2521, %v2517
    %v4526 = vpack.c.b16 %v2522, %v2518
    %v4527 = vpack.c.b16 %v2523, %v2519
    %v4528 = vpack.c.b16 %v2528, %v2524
    %v4529 = vpack.c.b16 %v2529, %v2525
    %v4530 = vpack.c.b16 %v2530, %v2526
    %v4531 = vpack.c.b16 %v2531, %v2527
    %v4532 = vpack.c.b16 %v2536, %v2532
    %v4533 = vpack.c.b16 %v2537, %v2533
    %v4534 = vpack.c.b16 %v2538, %v2534
    %v4535 = vpack.c.b16 %v2539, %v2535
    %v4536 = vpack.c.b16 %v2544, %v2540
    %v4537 = vpack.c.b16 %v2545, %v2541
    %v4538 = vpack.c.b16 %v2546, %v2542
    %v4539 = vpack.c.b16 %v2547, %v2543
    %v4540 = vpack.c.b16 %v2552, %v2548
    %v4541 = vpack.c.b16 %v2553, %v2549
    %v4542 = vpack.c.b16 %v2554, %v2550
    %v4543 = vpack.c.b16 %v2555, %v2551
    %v4544 = vpack.c.b16 %v2560, %v2556
    %v4545 = vpack.c.b16 %v2561, %v2557
    %v4546 = vpack.c.b16 %v2562, %v2558
    %v4547 = vpack.c.b16 %v2563, %v2559
    %v4548 = vpack.c.b16 %v2568, %v2564
    %v4549 = vpack.c.b16 %v2569, %v2565
    %v4550 = vpack.c.b16 %v2570, %v2566
    %v4551 = vpack.c.b16 %v2571, %v2567
    %v4552 = vpack.c.b16 %v2576, %v2572
    %v4553 = vpack.c.b16 %v2577, %v2573
    %v4554 = vpack.c.b16 %v2578, %v2574
    %v4555 = vpack.c.b16 %v2579, %v2575
    %v4556 = vpack.c.b16 %v2584, %v2580
    %v4557 = vpack.c.b16 %v2585, %v2581
    %v4558 = vpack.c.b16 %v2586, %v2582
    %v4559 = vpack.c.b16 %v2587, %v2583
    %v4560 = vpack.c.b16 %v2592, %v2588
    %v4561 = vpack.c.b16 %v2593, %v2589
    %v4562 = vpack.c.b16 %v2594, %v2590
    %v4563 = vpack.c.b16 %v2595, %v2591
    %v4564 = vpack.c.b16 %v2600, %v2596
    %v4565 = vpack.c.b16 %v2601, %v2597
    %v4566 = vpack.c.b16 %v2602, %v2598
    %v4567 = vpack.c.b16 %v2603, %v2599
    %v4568 = vpack.c.b16 %v2608, %v2604
    %v4569 = vpack.c.b16 %v2609, %v2605
    %v4570 = vpack.c.b16 %v2610, %v2606
    %v4571 = vpack.c.b16 %v2611, %v2607
    %v4572 = vpack.c.b16 %v2616, %v2612
    %v4573 = vpack.c.b16 %v2617, %v2613
    %v4574 = vpack.c.b16 %v2618, %v2614
    %v4575 = vpack.c.b16 %v2619, %v2615
    %v4576 = vpack.c.b16 %v2624, %v2620
    %v4577 = vpack.c.b16 %v2625, %v2621
    %v4578 = vpack.c.b16 %v2626, %v2622
    %v4579 = vpack.c.b16 %v2627, %v2623
    %v4580 = vpack.c.b16 %v2632, %v2628
    %v4581 = vpack.c.b16 %v2633, %v2629
    %v4582 = vpack.c.b16 %v2634, %v2630
    %v4583 = vpack.c.b16 %v2635, %v2631
    %v4584 = vpack.c.b16 %v2640, %v2636
    %v4585 = vpack.c.b16 %v2641, %v2637
    %v4586 = vpack.c.b16 %v2642, %v2638
    %v4587 = vpack.c.b16 %v2643, %v2639
    %v4588 = vpack.c.b16 %v2648, %v2644
    %v4589 = vpack.c.b16 %v2649, %v2645
    %v4590 = vpack.c.b16 %v2650, %v2646
    %v4591 = vpack.c.b16 %v2651, %v2647
    %v4592 = vpack.c.b16 %v2656, %v2652
    %v4593 = vpack.c.b16 %v2657, %v2653
    %v4594 = vpack.c.b16 %v2658, %v2654
    %v4595 = vpack.c.b16 %v2659, %v2655
    %v4596 = vpack.c.b16 %v2664, %v2660
    %v4597 = vpack.c.b16 %v2665, %v2661
    %v4598 = vpack.c.b16 %v2666, %v2662
    %v4599 = vpack.c.b16 %v2667, %v2663
    %v4600 = vpack.c.b16 %v2672, %v2668
    %v4601 = vpack.c.b16 %v2673, %v2669
    %v4602 = vpack.c.b16 %v2674, %v2670
    %v4603 = vpack.c.b16 %v2675, %v2671
    %v4604 = vpack.c.b16 %v2680, %v2676
    %v4605 = vpack.c.b16 %v2681, %v2677
    %v4606 = vpack.c.b16 %v2682, %v2678
    %v4607 = vpack.c.b16 %v2683, %v2679
    %v4608 = vpack.c.b16 %v2688, %v2684
    %v4609 = vpack.c.b16 %v2689, %v2685
    %v4610 = vpack.c.b16 %v2690, %v2686
    %v4611 = vpack.c.b16 %v2691, %v2687
    %v4612 = vpack.c.b16 %v2696, %v2692
    %v4613 = vpack.c.b16 %v2697, %v2693
    %v4614 = vpack.c.b16 %v2698, %v2694
    %v4615 = vpack.c.b16 %v2699, %v2695
    %v4616 = vpack.c.b16 %v2704, %v2700
    %v4617 = vpack.c.b16 %v2705, %v2701
    %v4618 = vpack.c.b16 %v2706, %v2702
    %v4619 = vpack.c.b16 %v2707, %v2703
    %v4620 = vpack.c.b16 %v2712, %v2708
    %v4621 = vpack.c.b16 %v2713, %v2709
    %v4622 = vpack.c.b16 %v2714, %v2710
    %v4623 = vpack.c.b16 %v2715, %v2711
    %v4624 = vpack.c.b16 %v2720, %v2716
    %v4625 = vpack.c.b16 %v2721, %v2717
    %v4626 = vpack.c.b16 %v2722, %v2718
    %v4627 = vpack.c.b16 %v2723, %v2719
    %v4628 = vpack.c.b16 %v2728, %v2724
    %v4629 = vpack.c.b16 %v2729, %v2725
    %v4630 = vpack.c.b16 %v2730, %v2726
    %v4631 = vpack.c.b16 %v2731, %v2727
    %v4632 = vpack.c.b16 %v2736, %v2732
    %v4633 = vpack.c.b16 %v2737, %v2733
    %v4634 = vpack.c.b16 %v2738, %v2734
    %v4635 = vpack.c.b16 %v2739, %v2735
    %v4636 = vpack.c.b16 %v2744, %v2740
    %v4637 = vpack.c.b16 %v2745, %v2741
    %v4638 = vpack.c.b16 %v2746, %v2742
    %v4639 = vpack.c.b16 %v2747, %v2743
    %v4640 = vpack.c.b16 %v2752, %v2748
    %v4641 = vpack.c.b16 %v2753, %v2749
    %v4642 = vpack.c.b16 %v2754, %v2750
    %v4643 = vpack.c.b16 %v2755, %v2751
    %v4644 = vpack.c.b16 %v2760, %v2756
    %v4645 = vpack.c.b16 %v2761, %v2757
    %v4646 = vpack.c.b16 %v2762, %v2758
    %v4647 = vpack.c.b16 %v2763, %v2759
    %v4648 = vpack.c.b16 %v2768, %v2764
    %v4649 = vpack.c.b16 %v2769, %v2765
    %v4650 = vpack.c.b16 %v2770, %v2766
    %v4651 = vpack.c.b16 %v2771, %v2767
    %v4652 = vpack.c.b16 %v2776, %v2772
    %v4653 = vpack.c.b16 %v2777, %v2773
    %v4654 = vpack.c.b16 %v2778, %v2774
    %v4655 = vpack.c.b16 %v2779, %v2775
    %v4656 = vpack.c.b16 %v2784, %v2780
    %v4657 = vpack.c.b16 %v2785, %v2781
    %v4658 = vpack.c.b16 %v2786, %v2782
    %v4659 = vpack.c.b16 %v2787, %v2783
    %v4660 = vpack.c.b16 %v2792, %v2788
    %v4661 = vpack.c.b16 %v2793, %v2789
    %v4662 = vpack.c.b16 %v2794, %v2790
    %v4663 = vpack.c.b16 %v2795, %v2791
    %v4664 = vpack.c.b16 %v2800, %v2796
    %v4665 = vpack.c.b16 %v2801, %v2797
    %v4666 = vpack.c.b16 %v2802, %v2798
    %v4667 = vpack.c.b16 %v2803, %v2799
    %v4668 = vpack.c.b16 %v2808, %v2804
    %v4669 = vpack.c.b16 %v2809, %v2805
    %v4670 = vpack.c.b16 %v2810, %v2806
    %v4671 = vpack.c.b16 %v2811, %v2807
    %v4672 = vpack.c.b16 %v2816, %v2812
    %v4673 = vpack.c.b16 %v2817, %v2813
    %v4674 = vpack.c.b16 %v2818, %v2814
    %v4675 = vpack.c.b16 %v2819, %v2815
    %v4676 = vpack.c.b16 %v2824, %v2820
    %v4677 = vpack.c.b16 %v2825, %v2821
    %v4678 = vpack.c.b16 %v2826, %v2822
    %v4679 = vpack.c.b16 %v2827, %v2823
    %v4680 = vpack.c.b16 %v2832, %v2828
    %v4681 = vpack.c.b16 %v2833, %v2829
    %v4682 = vpack.c.b16 %v2834, %v2830
    %v4683 = vpack.c.b16 %v2835, %v2831
    %v4684 = vpack.c.b16 %v2840, %v2836
    %v4685 = vpack.c.b16 %v2841, %v2837
    %v4686 = vpack.c.b16 %v2842, %v2838
    %v4687 = vpack.c.b16 %v2843, %v2839
    %v4688 = vpack.c.b16 %v2848, %v2844
    %v4689 = vpack.c.b16 %v2849, %v2845
    %v4690 = vpack.c.b16 %v2850, %v2846
    %v4691 = vpack.c.b16 %v2851, %v2847
    %v4692 = vpack.c.b16 %v2856, %v2852
    %v4693 = vpack.c.b16 %v2857, %v2853
    %v4694 = vpack.c.b16 %v2858, %v2854
    %v4695 = vpack.c.b16 %v2859, %v2855
    %v4696 = vpack.c.b16 %v2864, %v2860
    %v4697 = vpack.c.b16 %v2865, %v2861
    %v4698 = vpack.c.b16 %v2866, %v2862
    %v4699 = vpack.c.b16 %v2867, %v2863
    %v4700 = vpack.c.b16 %v2872, %v2868
    %v4701 = vpack.c.b16 %v2873, %v2869
    %v4702 = vpack.c.b16 %v2874, %v2870
    %v4703 = vpack.c.b16 %v2875, %v2871
    %v4704 = vpack.c.b16 %v2880, %v2876
    %v4705 = vpack.c.b16 %v2881, %v2877
    %v4706 = vpack.c.b16 %v2882, %v2878
    %v4707 = vpack.c.b16 %v2883, %v2879
    %v4708 = vpack.c.b16 %v2888, %v2884
    %v4709 = vpack.c.b16 %v2889, %v2885
    %v4710 = vpack.c.b16 %v2890, %v2886
    %v4711 = vpack.c.b16 %v2891, %v2887
    %v4712 = vpack.c.b16 %v2896, %v2892
    %v4713 = vpack.c.b16 %v2897, %v2893
    %v4714 = vpack.c.b16 %v2898, %v2894
    %v4715 = vpack.c.b16 %v2899, %v2895
    %v4716 = vpack.c.b16 %v2904, %v2900
    %v4717 = vpack.c.b16 %v2905, %v2901
    %v4718 = vpack.c.b16 %v2906, %v2902
    %v4719 = vpack.c.b16 %v2907, %v2903
    %v4720 = vpack.c.b16 %v2912, %v2908
    %v4721 = vpack.c.b16 %v2913, %v2909
    %v4722 = vpack.c.b16 %v2914, %v2910
    %v4723 = vpack.c.b16 %v2915, %v2911
    %v4724 = vpack.c.b16 %v2920, %v2916
    %v4725 = vpack.c.b16 %v2921, %v2917
    %v4726 = vpack.c.b16 %v2922, %v2918
    %v4727 = vpack.c.b16 %v2923, %v2919
    %v4728 = vpack.c.b16 %v2928, %v2924
    %v4729 = vpack.c.b16 %v2929, %v2925
    %v4730 = vpack.c.b16 %v2930, %v2926
    %v4731 = vpack.c.b16 %v2931, %v2927
    %v4732 = vpack.c.b16 %v2936, %v2932
    %v4733 = vpack.c.b16 %v2937, %v2933
    %v4734 = vpack.c.b16 %v2938, %v2934
    %v4735 = vpack.c.b16 %v2939, %v2935
    %v4736 = vpack.c.b16 %v2944, %v2940
    %v4737 = vpack.c.b16 %v2945, %v2941
    %v4738 = vpack.c.b16 %v2946, %v2942
    %v4739 = vpack.c.b16 %v2947, %v2943
    %v4740 = vpack.c.b16 %v2952, %v2948
    %v4741 = vpack.c.b16 %v2953, %v2949
    %v4742 = vpack.c.b16 %v2954, %v2950
    %v4743 = vpack.c.b16 %v2955, %v2951
    %v4744 = vpack.c.b16 %v2960, %v2956
    %v4745 = vpack.c.b16 %v2961, %v2957
    %v4746 = vpack.c.b16 %v2962, %v2958
    %v4747 = vpack.c.b16 %v2963, %v2959
    %v4748 = vpack.c.b16 %v2968, %v2964
    %v4749 = vpack.c.b16 %v2969, %v2965
    %v4750 = vpack.c.b16 %v2970, %v2966
    %v4751 = vpack.c.b16 %v2971, %v2967
    %v4752 = vpack.c.b16 %v2976, %v2972
    %v4753 = vpack.c.b16 %v2977, %v2973
    %v4754 = vpack.c.b16 %v2978, %v2974
    %v4755 = vpack.c.b16 %v2979, %v2975
    %v4756 = vpack.c.b16 %v2984, %v2980
    %v4757 = vpack.c.b16 %v2985, %v2981
    %v4758 = vpack.c.b16 %v2986, %v2982
    %v4759 = vpack.c.b16 %v2987, %v2983
    %v4760 = vpack.c.b16 %v2992, %v2988
    %v4761 = vpack.c.b16 %v2993, %v2989
    %v4762 = vpack.c.b16 %v2994, %v2990
    %v4763 = vpack.c.b16 %v2995, %v2991
    %v4764 = vpack.c.b16 %v3000, %v2996
    %v4765 = vpack.c.b16 %v3001, %v2997
    %v4766 = vpack.c.b16 %v3002, %v2998
    %v4767 = vpack.c.b16 %v3003, %v2999
    %v4768 = vpack.c.b16 %v3008, %v3004
    %v4769 = vpack.c.b16 %v3009, %v3005
    %v4770 = vpack.c.b16 %v3010, %v3006
    %v4771 = vpack.c.b16 %v3011, %v3007
    %v4772 = vpack.c.b16 %v3016, %v3012
    %v4773 = vpack.c.b16 %v3017, %v3013
    %v4774 = vpack.c.b16 %v3018, %v3014
    %v4775 = vpack.c.b16 %v3019, %v3015
    %v4776 = vpack.c.b16 %v3024, %v3020
    %v4777 = vpack.c.b16 %v3025, %v3021
    %v4778 = vpack.c.b16 %v3026, %v3022
    %v4779 = vpack.c.b16 %v3027, %v3023
    %v4780 = vpack.c.b16 %v3032, %v3028
    %v4781 = vpack.c.b16 %v3033, %v3029
    %v4782 = vpack.c.b16 %v3034, %v3030
    %v4783 = vpack.c.b16 %v3035, %v3031
    %v4784 = vpack.c.b16 %v3040, %v3036
    %v4785 = vpack.c.b16 %v3041, %v3037
    %v4786 = vpack.c.b16 %v3042, %v3038
    %v4787 = vpack.c.b16 %v3043, %v3039
    %v4788 = vpack.c.b16 %v3048, %v3044
    %v4789 = vpack.c.b16 %v3049, %v3045
    %v4790 = vpack.c.b16 %v3050, %v3046
    %v4791 = vpack.c.b16 %v3051, %v3047
    %v4792 = vpack.c.b16 %v3056, %v3052
    %v4793 = vpack.c.b16 %v3057, %v3053
    %v4794 = vpack.c.b16 %v3058, %v3054
    %v4795 = vpack.c.b16 %v3059, %v3055
    %v4796 = vpack.c.b16 %v3064, %v3060
    %v4797 = vpack.c.b16 %v3065, %v3061
    %v4798 = vpack.c.b16 %v3066, %v3062
    %v4799 = vpack.c.b16 %v3067, %v3063
    %v4800 = vpack.c.b16 %v3072, %v3068
    %v4801 = vpack.c.b16 %v3073, %v3069
    %v4802 = vpack.c.b16 %v3074, %v3070
    %v4803 = vpack.c.b16 %v3075, %v3071
    %v4804 = vpack.c.b16 %v3080, %v3076
    %v4805 = vpack.c.b16 %v3081, %v3077
    %v4806 = vpack.c.b16 %v3082, %v3078
    %v4807 = vpack.c.b16 %v3083, %v3079
    %v4808 = vpack.c.b16 %v3088, %v3084
    %v4809 = vpack.c.b16 %v3089, %v3085
    %v4810 = vpack.c.b16 %v3090, %v3086
    %v4811 = vpack.c.b16 %v3091, %v3087
    %v4812 = vpack.c.b16 %v3096, %v3092
    %v4813 = vpack.c.b16 %v3097, %v3093
    %v4814 = vpack.c.b16 %v3098, %v3094
    %v4815 = vpack.c.b16 %v3099, %v3095
    %v4816 = vpack.c.b16 %v3104, %v3100
    %v4817 = vpack.c.b16 %v3105, %v3101
    %v4818 = vpack.c.b16 %v3106, %v3102
    %v4819 = vpack.c.b16 %v3107, %v3103
    %v4820 = vpack.c.b16 %v3112, %v3108
    %v4821 = vpack.c.b16 %v3113, %v3109
    %v4822 = vpack.c.b16 %v3114, %v3110
    %v4823 = vpack.c.b16 %v3115, %v3111
    %v4824 = vpack.c.b16 %v3120, %v3116
    %v4825 = vpack.c.b16 %v3121, %v3117
    %v4826 = vpack.c.b16 %v3122, %v3118
    %v4827 = vpack.c.b16 %v3123, %v3119
    %v4828 = vpack.c.b16 %v3128, %v3124
    %v4829 = vpack.c.b16 %v3129, %v3125
    %v4830 = vpack.c.b16 %v3130, %v3126
    %v4831 = vpack.c.b16 %v3131, %v3127
    %v4832 = vpack.c.b16 %v3136, %v3132
    %v4833 = vpack.c.b16 %v3137, %v3133
    %v4834 = vpack.c.b16 %v3138, %v3134
    %v4835 = vpack.c.b16 %v3139, %v3135
    %v4836 = vpack.c.b16 %v3144, %v3140
    %v4837 = vpack.c.b16 %v3145, %v3141
    %v4838 = vpack.c.b16 %v3146, %v3142
    %v4839 = vpack.c.b16 %v3147, %v3143
    %v4840 = vpack.c.b16 %v3152, %v3148
    %v4841 = vpack.c.b16 %v3153, %v3149
    %v4842 = vpack.c.b16 %v3154, %v3150
    %v4843 = vpack.c.b16 %v3155, %v3151
    %v4844 = vpack.c.b16 %v3160, %v3156
    %v4845 = vpack.c.b16 %v3161, %v3157
    %v4846 = vpack.c.b16 %v3162, %v3158
    %v4847 = vpack.c.b16 %v3163, %v3159
    %v4848 = vpack.c.b16 %v3168, %v3164
    %v4849 = vpack.c.b16 %v3169, %v3165
    %v4850 = vpack.c.b16 %v3170, %v3166
    %v4851 = vpack.c.b16 %v3171, %v3167
    %v4852 = vpack.c.b16 %v3176, %v3172
    %v4853 = vpack.c.b16 %v3177, %v3173
    %v4854 = vpack.c.b16 %v3178, %v3174
    %v4855 = vpack.c.b16 %v3179, %v3175
    %v4856 = vpack.c.b16 %v3184, %v3180
    %v4857 = vpack.c.b16 %v3185, %v3181
    %v4858 = vpack.c.b16 %v3186, %v3182
    %v4859 = vpack.c.b16 %v3187, %v3183
    %v4860 = vpack.c.b16 %v3192, %v3188
    %v4861 = vpack.c.b16 %v3193, %v3189
    %v4862 = vpack.c.b16 %v3194, %v3190
    %v4863 = vpack.c.b16 %v3195, %v3191
    %v4864 = vpack.c.b16 %v3200, %v3196
    %v4865 = vpack.c.b16 %v3201, %v3197
    %v4866 = vpack.c.b16 %v3202, %v3198
    %v4867 = vpack.c.b16 %v3203, %v3199
    %v4868 = vpack.c.b16 %v3208, %v3204
    %v4869 = vpack.c.b16 %v3209, %v3205
    %v4870 = vpack.c.b16 %v3210, %v3206
    %v4871 = vpack.c.b16 %v3211, %v3207
    %v4872 = vpack.c.b16 %v3216, %v3212
    %v4873 = vpack.c.b16 %v3217, %v3213
    %v4874 = vpack.c.b16 %v3218, %v3214
    %v4875 = vpack.c.b16 %v3219, %v3215
    %v4876 = vpack.c.b16 %v3224, %v3220
    %v4877 = vpack.c.b16 %v3225, %v3221
    %v4878 = vpack.c.b16 %v3226, %v3222
    %v4879 = vpack.c.b16 %v3227, %v3223
    %v4880 = vpack.c.b16 %v3232, %v3228
    %v4881 = vpack.c.b16 %v3233, %v3229
    %v4882 = vpack.c.b16 %v3234, %v3230
    %v4883 = vpack.c.b16 %v3235, %v3231
    %v4884 = vpack.c.b16 %v3240, %v3236
    %v4885 = vpack.c.b16 %v3241, %v3237
    %v4886 = vpack.c.b16 %v3242, %v3238
    %v4887 = vpack.c.b16 %v3243, %v3239
    %v4888 = vpack.c.b16 %v3248, %v3244
    %v4889 = vpack.c.b16 %v3249, %v3245
    %v4890 = vpack.c.b16 %v3250, %v3246
    %v4891 = vpack.c.b16 %v3251, %v3247
    %v4892 = vpack.c.b16 %v3256, %v3252
    %v4893 = vpack.c.b16 %v3257, %v3253
    %v4894 = vpack.c.b16 %v3258, %v3254
    %v4895 = vpack.c.b16 %v3259, %v3255
    %v4896 = vpack.c.b16 %v3264, %v3260
    %v4897 = vpack.c.b16 %v3265, %v3261
    %v4898 = vpack.c.b16 %v3266, %v3262
    %v4899 = vpack.c.b16 %v3267, %v3263
    %v4900 = vpack.c.b16 %v3272, %v3268
    %v4901 = vpack.c.b16 %v3273, %v3269
    %v4902 = vpack.c.b16 %v3274, %v3270
    %v4903 = vpack.c.b16 %v3275, %v3271
    %v4904 = vpack.c.b16 %v3280, %v3276
    %v4905 = vpack.c.b16 %v3281, %v3277
    %v4906 = vpack.c.b16 %v3282, %v3278
    %v4907 = vpack.c.b16 %v3283, %v3279
    %v4908 = vpack.c.b16 %v3288, %v3284
    %v4909 = vpack.c.b16 %v3289, %v3285
    %v4910 = vpack.c.b16 %v3290, %v3286
    %v4911 = vpack.c.b16 %v3291, %v3287
    %v4912 = vpack.c.b16 %v3296, %v3292
    %v4913 = vpack.c.b16 %v3297, %v3293
    %v4914 = vpack.c.b16 %v3298, %v3294
    %v4915 = vpack.c.b16 %v3299, %v3295
    %v4916 = vpack.c.b16 %v3304, %v3300
    %v4917 = vpack.c.b16 %v3305, %v3301
    %v4918 = vpack.c.b16 %v3306, %v3302
    %v4919 = vpack.c.b16 %v3307, %v3303
    %v4920 = vpack.c.b16 %v3312, %v3308
    %v4921 = vpack.c.b16 %v3313, %v3309
    %v4922 = vpack.c.b16 %v3314, %v3310
    %v4923 = vpack.c.b16 %v3315, %v3311
    %v4924 = vpack.c.b16 %v3320, %v3316
    %v4925 = vpack.c.b16 %v3321, %v3317
    %v4926 = vpack.c.b16 %v3322, %v3318
    %v4927 = vpack.c.b16 %v3323, %v3319
    %v4928 = vpack.c.b16 %v3328, %v3324
    %v4929 = vpack.c.b16 %v3329, %v3325
    %v4930 = vpack.c.b16 %v3330, %v3326
    %v4931 = vpack.c.b16 %v3331, %v3327
    %v4932 = vpack.c.b16 %v3336, %v3332
    %v4933 = vpack.c.b16 %v3337, %v3333
    %v4934 = vpack.c.b16 %v3338, %v3334
    %v4935 = vpack.c.b16 %v3339, %v3335
    %v4936 = vpack.c.b16 %v3344, %v3340
    %v4937 = vpack.c.b16 %v3345, %v3341
    %v4938 = vpack.c.b16 %v3346, %v3342
    %v4939 = vpack.c.b16 %v3347, %v3343
    %v4940 = vpack.c.b16 %v3352, %v3348
    %v4941 = vpack.c.b16 %v3353, %v3349
    %v4942 = vpack.c.b16 %v3354, %v3350
    %v4943 = vpack.c.b16 %v3355, %v3351
    %v4944 = vpack.c.b16 %v3360, %v3356
    %v4945 = vpack.c.b16 %v3361, %v3357
    %v4946 = vpack.c.b16 %v3362, %v3358
    %v4947 = vpack.c.b16 %v3363, %v3359
    %v4948 = vpack.c.b16 %v3368, %v3364
    %v4949 = vpack.c.b16 %v3369, %v3365
    %v4950 = vpack.c.b16 %v3370, %v3366
    %v4951 = vpack.c.b16 %v3371, %v3367
    %v4952 = vpack.c.b16 %v3376, %v3372
    %v4953 = vpack.c.b16 %v3377, %v3373
    %v4954 = vpack.c.b16 %v3378, %v3374
    %v4955 = vpack.c.b16 %v3379, %v3375
    %v4956 = vpack.c.b16 %v3384, %v3380
    %v4957 = vpack.c.b16 %v3385, %v3381
    %v4958 = vpack.c.b16 %v3386, %v3382
    %v4959 = vpack.c.b16 %v3387, %v3383
    %v4960 = vpack.c.b16 %v3392, %v3388
    %v4961 = vpack.c.b16 %v3393, %v3389
    %v4962 = vpack.c.b16 %v3394, %v3390
    %v4963 = vpack.c.b16 %v3395, %v3391
    %v4964 = vpack.c.b16 %v3400, %v3396
    %v4965 = vpack.c.b16 %v3401, %v3397
    %v4966 = vpack.c.b16 %v3402, %v3398
    %v4967 = vpack.c.b16 %v3403, %v3399
    %v4968 = vpack.c.b16 %v3408, %v3404
    %v4969 = vpack.c.b16 %v3409, %v3405
    %v4970 = vpack.c.b16 %v3410, %v3406
    %v4971 = vpack.c.b16 %v3411, %v3407
    %v4972 = vpack.c.b16 %v3416, %v3412
    %v4973 = vpack.c.b16 %v3417, %v3413
    %v4974 = vpack.c.b16 %v3418, %v3414
    %v4975 = vpack.c.b16 %v3419, %v3415
    %v4976 = vpack.c.b16 %v3424, %v3420
    %v4977 = vpack.c.b16 %v3425, %v3421
    %v4978 = vpack.c.b16 %v3426, %v3422
    %v4979 = vpack.c.b16 %v3427, %v3423
    %v4980 = vpack.c.b16 %v3432, %v3428
    %v4981 = vpack.c.b16 %v3433, %v3429
    %v4982 = vpack.c.b16 %v3434, %v3430
    %v4983 = vpack.c.b16 %v3435, %v3431
    %v4984 = vpack.c.b16 %v3440, %v3436
    %v4985 = vpack.c.b16 %v3441, %v3437
    %v4986 = vpack.c.b16 %v3442, %v3438
    %v4987 = vpack.c.b16 %v3443, %v3439
    %v4988 = vpack.c.b16 %v3448, %v3444
    %v4989 = vpack.c.b16 %v3449, %v3445
    %v4990 = vpack.c.b16 %v3450, %v3446
    %v4991 = vpack.c.b16 %v3451, %v3447
    %v4992 = vpack.c.b16 %v3456, %v3452
    %v4993 = vpack.c.b16 %v3457, %v3453
    %v4994 = vpack.c.b16 %v3458, %v3454
    %v4995 = vpack.c.b16 %v3459, %v3455
    %v4996 = vpack.c.b16 %v3464, %v3460
    %v4997 = vpack.c.b16 %v3465, %v3461
    %v4998 = vpack.c.b16 %v3466, %v3462
    %v4999 = vpack.c.b16 %v3467, %v3463
    %v5000 = vpack.c.b16 %v3472, %v3468
    %v5001 = vpack.c.b16 %v3473, %v3469
    %v5002 = vpack.c.b16 %v3474, %v3470
    %v5003 = vpack.c.b16 %v3475, %v3471
    %v5004 = vpack.c.b16 %v3480, %v3476
    %v5005 = vpack.c.b16 %v3481, %v3477
    %v5006 = vpack.c.b16 %v3482, %v3478
    %v5007 = vpack.c.b16 %v3483, %v3479
    %v5008 = vpack.c.b16 %v3488, %v3484
    %v5009 = vpack.c.b16 %v3489, %v3485
    %v5010 = vpack.c.b16 %v3490, %v3486
    %v5011 = vpack.c.b16 %v3491, %v3487
    %v5012 = vpack.c.b16 %v3496, %v3492
    %v5013 = vpack.c.b16 %v3497, %v3493
    %v5014 = vpack.c.b16 %v3498, %v3494
    %v5015 = vpack.c.b16 %v3499, %v3495
    %v5016 = vpack.c.b16 %v3504, %v3500
    %v5017 = vpack.c.b16 %v3505, %v3501
    %v5018 = vpack.c.b16 %v3506, %v3502
    %v5019 = vpack.c.b16 %v3507, %v3503
    %v5020 = vpack.c.b16 %v3512, %v3508
    %v5021 = vpack.c.b16 %v3513, %v3509
    %v5022 = vpack.c.b16 %v3514, %v3510
    %v5023 = vpack.c.b16 %v3515, %v3511
    %v5024 = vpack.c.b16 %v3520, %v3516
    %v5025 = vpack.c.b16 %v3521, %v3517
    %v5026 = vpack.c.b16 %v3522, %v3518
    %v5027 = vpack.c.b16 %v3523, %v3519
    %v5028 = vpack.c.b16 %v3528, %v3524
    %v5029 = vpack.c.b16 %v3529, %v3525
    %v5030 = vpack.c.b16 %v3530, %v3526
    %v5031 = vpack.c.b16 %v3531, %v3527
    %v5032 = vpack.c.b16 %v3536, %v3532
    %v5033 = vpack.c.b16 %v3537, %v3533
    %v5034 = vpack.c.b16 %v3538, %v3534
    %v5035 = vpack.c.b16 %v3539, %v3535
    %v5036 = vpack.c.b16 %v3544, %v3540
    %v5037 = vpack.c.b16 %v3545, %v3541
    %v5038 = vpack.c.b16 %v3546, %v3542
    %v5039 = vpack.c.b16 %v3547, %v3543
    %v5040 = vpack.c.b16 %v3552, %v3548
    %v5041 = vpack.c.b16 %v3553, %v3549
    %v5042 = vpack.c.b16 %v3554, %v3550
    %v5043 = vpack.c.b16 %v3555, %v3551
    %v5044 = vpack.c.b16 %v3560, %v3556
    %v5045 = vpack.c.b16 %v3561, %v3557
    %v5046 = vpack.c.b16 %v3562, %v3558
    %v5047 = vpack.c.b16 %v3563, %v3559
    %v5048 = vpack.c.b16 %v3568, %v3564
    %v5049 = vpack.c.b16 %v3569, %v3565
    %v5050 = vpack.c.b16 %v3570, %v3566
    %v5051 = vpack.c.b16 %v3571, %v3567
    %v5052 = vpack.c.b16 %v3576, %v3572
    %v5053 = vpack.c.b16 %v3577, %v3573
    %v5054 = vpack.c.b16 %v3578, %v3574
    %v5055 = vpack.c.b16 %v3579, %v3575
    %v5056 = vpack.c.b16 %v3584, %v3580
    %v5057 = vpack.c.b16 %v3585, %v3581
    %v5058 = vpack.c.b16 %v3586, %v3582
    %v5059 = vpack.c.b16 %v3587, %v3583
    %v5060 = vpack.c.b16 %v3592, %v3588
    %v5061 = vpack.c.b16 %v3593, %v3589
    %v5062 = vpack.c.b16 %v3594, %v3590
    %v5063 = vpack.c.b16 %v3595, %v3591
    %v5064 = vpack.c.b16 %v3600, %v3596
    %v5065 = vpack.c.b16 %v3601, %v3597
    %v5066 = vpack.c.b16 %v3602, %v3598
    %v5067 = vpack.c.b16 %v3603, %v3599
    %v5068 = vpack.c.b16 %v3608, %v3604
    %v5069 = vpack.c.b16 %v3609, %v3605
    %v5070 = vpack.c.b16 %v3610, %v3606
    %v5071 = vpack.c.b16 %v3611, %v3607
    %v5072 = vpack.c.b16 %v3616, %v3612
    %v5073 = vpack.c.b16 %v3617, %v3613
    %v5074 = vpack.c.b16 %v3618, %v3614
    %v5075 = vpack.c.b16 %v3619, %v3615
    %v5076 = vpack.c.b16 %v3624, %v3620
    %v5077 = vpack.c.b16 %v3625, %v3621
    %v5078 = vpack.c.b16 %v3626, %v3622
    %v5079 = vpack.c.b16 %v3627, %v3623
    %v5080 = vpack.c.b16 %v3632, %v3628
    %v5081 = vpack.c.b16 %v3633, %v3629
    %v5082 = vpack.c.b16 %v3634, %v3630
    %v5083 = vpack.c.b16 %v3635, %v3631
    %v5084 = vpack.c.b16 %v3640, %v3636
    %v5085 = vpack.c.b16 %v3641, %v3637
    %v5086 = vpack.c.b16 %v3642, %v3638
    %v5087 = vpack.c.b16 %v3643, %v3639
    %v5088 = vpack.c.b16 %v3648, %v3644
    %v5089 = vpack.c.b16 %v3649, %v3645
    %v5090 = vpack.c.b16 %v3650, %v3646
    %v5091 = vpack.c.b16 %v3651, %v3647
    %v5092 = vpack.c.b16 %v3656, %v3652
    %v5093 = vpack.c.b16 %v3657, %v3653
    %v5094 = vpack.c.b16 %v3658, %v3654
    %v5095 = vpack.c.b16 %v3659, %v3655
    %v5096 = vpack.c.b16 %v3664, %v3660
    %v5097 = vpack.c.b16 %v3665, %v3661
    %v5098 = vpack.c.b16 %v3666, %v3662
    %v5099 = vpack.c.b16 %v3667, %v3663
    %v5100 = vpack.c.b16 %v3672, %v3668
    %v5101 = vpack.c.b16 %v3673, %v3669
    %v5102 = vpack.c.b16 %v3674, %v3670
    %v5103 = vpack.c.b16 %v3675, %v3671
    %v5104 = vpack.c.b16 %v3680, %v3676
    %v5105 = vpack.c.b16 %v3681, %v3677
    %v5106 = vpack.c.b16 %v3682, %v3678
    %v5107 = vpack.c.b16 %v3683, %v3679
    %v5108 = vpack.c.b16 %v3688, %v3684
    %v5109 = vpack.c.b16 %v3689, %v3685
    %v5110 = vpack.c.b16 %v3690, %v3686
    %v5111 = vpack.c.b16 %v3691, %v3687
    %v5112 = vpack.c.b16 %v3696, %v3692
    %v5113 = vpack.c.b16 %v3697, %v3693
    %v5114 = vpack.c.b16 %v3698, %v3694
    %v5115 = vpack.c.b16 %v3699, %v3695
    %v5116 = vpack.c.b16 %v3704, %v3700
    %v5117 = vpack.c.b16 %v3705, %v3701
    %v5118 = vpack.c.b16 %v3706, %v3702
    %v5119 = vpack.c.b16 %v3707, %v3703
    %v5120 = vpack.c.b16 %v3712, %v3708
    %v5121 = vpack.c.b16 %v3713, %v3709
    %v5122 = vpack.c.b16 %v3714, %v3710
    %v5123 = vpack.c.b16 %v3715, %v3711
    %v5124 = vpack.c.b16 %v3720, %v3716
    %v5125 = vpack.c.b16 %v3721, %v3717
    %v5126 = vpack.c.b16 %v3722, %v3718
    %v5127 = vpack.c.b16 %v3723, %v3719
    %v5128 = vpack.c.b16 %v3728, %v3724
    %v5129 = vpack.c.b16 %v3729, %v3725
    %v5130 = vpack.c.b16 %v3730, %v3726
    %v5131 = vpack.c.b16 %v3731, %v3727
    %v5132 = vpack.c.b16 %v3736, %v3732
    %v5133 = vpack.c.b16 %v3737, %v3733
    %v5134 = vpack.c.b16 %v3738, %v3734
    %v5135 = vpack.c.b16 %v3739, %v3735
    %v5136 = vpack.c.b16 %v3744, %v3740
    %v5137 = vpack.c.b16 %v3745, %v3741
    %v5138 = vpack.c.b16 %v3746, %v3742
    %v5139 = vpack.c.b16 %v3747, %v3743
    %v5140 = vpack.c.b16 %v3752, %v3748
    %v5141 = vpack.c.b16 %v3753, %v3749
    %v5142 = vpack.c.b16 %v3754, %v3750
    %v5143 = vpack.c.b16 %v3755, %v3751
    %v5144 = vpack.c.b16 %v3760, %v3756
    %v5145 = vpack.c.b16 %v3761, %v3757
    %v5146 = vpack.c.b16 %v3762, %v3758
    %v5147 = vpack.c.b16 %v3763, %v3759
    %v5148 = vpack.c.b16 %v3768, %v3764
    %v5149 = vpack.c.b16 %v3769, %v3765
    %v5150 = vpack.c.b16 %v3770, %v3766
    %v5151 = vpack.c.b16 %v3771, %v3767
    %v5152 = vpack.c.b16 %v3776, %v3772
    %v5153 = vpack.c.b16 %v3777, %v3773
    %v5154 = vpack.c.b16 %v3778, %v3774
    %v5155 = vpack.c.b16 %v3779, %v3775
    %v5156 = vpack.c.b16 %v3784, %v3780
    %v5157 = vpack.c.b16 %v3785, %v3781
    %v5158 = vpack.c.b16 %v3786, %v3782
    %v5159 = vpack.c.b16 %v3787, %v3783
    %v5160 = vpack.c.b16 %v3792, %v3788
    %v5161 = vpack.c.b16 %v3793, %v3789
    %v5162 = vpack.c.b16 %v3794, %v3790
    %v5163 = vpack.c.b16 %v3795, %v3791
    %v5164 = vpack.c.b16 %v3800, %v3796
    %v5165 = vpack.c.b16 %v3801, %v3797
    %v5166 = vpack.c.b16 %v3802, %v3798
    %v5167 = vpack.c.b16 %v3803, %v3799
    %v5168 = vpack.c.b16 %v3808, %v3804
    %v5169 = vpack.c.b16 %v3809, %v3805
    %v5170 = vpack.c.b16 %v3810, %v3806
    %v5171 = vpack.c.b16 %v3811, %v3807
    %v5172 = vpack.c.b16 %v3816, %v3812
    %v5173 = vpack.c.b16 %v3817, %v3813
    %v5174 = vpack.c.b16 %v3818, %v3814
    %v5175 = vpack.c.b16 %v3819, %v3815
    %v5176 = vpack.c.b16 %v3824, %v3820
    %v5177 = vpack.c.b16 %v3825, %v3821
    %v5178 = vpack.c.b16 %v3826, %v3822
    %v5179 = vpack.c.b16 %v3827, %v3823
    %v5180 = vpack.c.b16 %v3832, %v3828
    %v5181 = vpack.c.b16 %v3833, %v3829
    %v5182 = vpack.c.b16 %v3834, %v3830
    %v5183 = vpack.c.b16 %v3835, %v3831
    %v5184 = vpack.c.b16 %v3840, %v3836
    %v5185 = vpack.c.b16 %v3841, %v3837
    %v5186 = vpack.c.b16 %v3842, %v3838
    %v5187 = vpack.c.b16 %v3843, %v3839
    %v5188 = vpack.c.b16 %v3848, %v3844
    %v5189 = vpack.c.b16 %v3849, %v3845
    %v5190 = vpack.c.b16 %v3850, %v3846
    %v5191 = vpack.c.b16 %v3851, %v3847
    %v5192 = vpack.c.b16 %v3856, %v3852
    %v5193 = vpack.c.b16 %v3857, %v3853
    %v5194 = vpack.c.b16 %v3858, %v3854
    %v5195 = vpack.c.b16 %v3859, %v3855
    %v5196 = vpack.c.b16 %v3864, %v3860
    %v5197 = vpack.c.b16 %v3865, %v3861
    %v5198 = vpack.c.b16 %v3866, %v3862
    %v5199 = vpack.c.b16 %v3867, %v3863
    %v5200 = vpack.c.b16 %v3872, %v3868
    %v5201 = vpack.c.b16 %v3873, %v3869
    %v5202 = vpack.c.b16 %v3874, %v3870
    %v5203 = vpack.c.b16 %v3875, %v3871
    %v5204 = vpack.c.b16 %v3880, %v3876
    %v5205 = vpack.c.b16 %v3881, %v3877
    %v5206 = vpack.c.b16 %v3882, %v3878
    %v5207 = vpack.c.b16 %v3883, %v3879
    %v5208 = vpack.c.b16 %v3888, %v3884
    %v5209 = vpack.c.b16 %v3889, %v3885
    %v5210 = vpack.c.b16 %v3890, %v3886
    %v5211 = vpack.c.b16 %v3891, %v3887
    %v5212 = vpack.c.b16 %v3896, %v3892
    %v5213 = vpack.c.b16 %v3897, %v3893
    %v5214 = vpack.c.b16 %v3898, %v3894
    %v5215 = vpack.c.b16 %v3899, %v3895
    %v5216 = vpack.c.b16 %v3904, %v3900
    %v5217 = vpack.c.b16 %v3905, %v3901
    %v5218 = vpack.c.b16 %v3906, %v3902
    %v5219 = vpack.c.b16 %v3907, %v3903
    %v5220 = vpack.c.b16 %v3912, %v3908
    %v5221 = vpack.c.b16 %v3913, %v3909
    %v5222 = vpack.c.b16 %v3914, %v3910
    %v5223 = vpack.c.b16 %v3915, %v3911
    %v5224 = vpack.c.b16 %v3920, %v3916
    %v5225 = vpack.c.b16 %v3921, %v3917
    %v5226 = vpack.c.b16 %v3922, %v3918
    %v5227 = vpack.c.b16 %v3923, %v3919
    %v5228 = vpack.c.b16 %v3928, %v3924
    %v5229 = vpack.c.b16 %v3929, %v3925
    %v5230 = vpack.c.b16 %v3930, %v3926
    %v5231 = vpack.c.b16 %v3931, %v3927
    %v5232 = vpack.c.b16 %v3936, %v3932
    %v5233 = vpack.c.b16 %v3937, %v3933
    %v5234 = vpack.c.b16 %v3938, %v3934
    %v5235 = vpack.c.b16 %v3939, %v3935
    %v5236 = vpack.c.b16 %v3944, %v3940
    %v5237 = vpack.c.b16 %v3945, %v3941
    %v5238 = vpack.c.b16 %v3946, %v3942
    %v5239 = vpack.c.b16 %v3947, %v3943
    %v5240 = vpack.c.b16 %v3952, %v3948
    %v5241 = vpack.c.b16 %v3953, %v3949
    %v5242 = vpack.c.b16 %v3954, %v3950
    %v5243 = vpack.c.b16 %v3955, %v3951
    %v5244 = vpack.c.b16 %v3960, %v3956
    %v5245 = vpack.c.b16 %v3961, %v3957
    %v5246 = vpack.c.b16 %v3962, %v3958
    %v5247 = vpack.c.b16 %v3963, %v3959
    %v5248 = vpack.c.b16 %v3968, %v3964
    %v5249 = vpack.c.b16 %v3969, %v3965
    %v5250 = vpack.c.b16 %v3970, %v3966
    %v5251 = vpack.c.b16 %v3971, %v3967
    %v5252 = vpack.c.b16 %v3976, %v3972
    %v5253 = vpack.c.b16 %v3977, %v3973
    %v5254 = vpack.c.b16 %v3978, %v3974
    %v5255 = vpack.c.b16 %v3979, %v3975
    %v5256 = vpack.c.b16 %v3984, %v3980
    %v5257 = vpack.c.b16 %v3985, %v3981
    %v5258 = vpack.c.b16 %v3986, %v3982
    %v5259 = vpack.c.b16 %v3987, %v3983
    %v5260 = vpack.c.b16 %v3992, %v3988
    %v5261 = vpack.c.b16 %v3993, %v3989
    %v5262 = vpack.c.b16 %v3994, %v3990
    %v5263 = vpack.c.b16 %v3995, %v3991
    %v5264 = vpack.c.b16 %v4000, %v3996
    %v5265 = vpack.c.b16 %v4001, %v3997
    %v5266 = vpack.c.b16 %v4002, %v3998
    %v5267 = vpack.c.b16 %v4003, %v3999
    %v5268 = vpack.c.b16 %v4008, %v4004
    %v5269 = vpack.c.b16 %v4009, %v4005
    %v5270 = vpack.c.b16 %v4010, %v4006
    %v5271 = vpack.c.b16 %v4011, %v4007
    %v5272 = vpack.c.b16 %v4016, %v4012
    %v5273 = vpack.c.b16 %v4017, %v4013
    %v5274 = vpack.c.b16 %v4018, %v4014
    %v5275 = vpack.c.b16 %v4019, %v4015
    %v5276 = vpack.c.b16 %v4024, %v4020
    %v5277 = vpack.c.b16 %v4025, %v4021
    %v5278 = vpack.c.b16 %v4026, %v4022
    %v5279 = vpack.c.b16 %v4027, %v4023
    %v5280 = vpack.c.b16 %v4032, %v4028
    %v5281 = vpack.c.b16 %v4033, %v4029
    %v5282 = vpack.c.b16 %v4034, %v4030
    %v5283 = vpack.c.b16 %v4035, %v4031
    %v5284 = vpack.c.b16 %v4040, %v4036
    %v5285 = vpack.c.b16 %v4041, %v4037
    %v5286 = vpack.c.b16 %v4042, %v4038
    %v5287 = vpack.c.b16 %v4043, %v4039
    %v5288 = vpack.c.b16 %v4048, %v4044
    %v5289 = vpack.c.b16 %v4049, %v4045
    %v5290 = vpack.c.b16 %v4050, %v4046
    %v5291 = vpack.c.b16 %v4051, %v4047
    %v5292 = vpack.c.b16 %v4056, %v4052
    %v5293 = vpack.c.b16 %v4057, %v4053
    %v5294 = vpack.c.b16 %v4058, %v4054
    %v5295 = vpack.c.b16 %v4059, %v4055
    %v5296 = vpack.c.b16 %v4064, %v4060
    %v5297 = vpack.c.b16 %v4065, %v4061
    %v5298 = vpack.c.b16 %v4066, %v4062
    %v5299 = vpack.c.b16 %v4067, %v4063
    %v5300 = vpack.c.b16 %v4072, %v4068
    %v5301 = vpack.c.b16 %v4073, %v4069
    %v5302 = vpack.c.b16 %v4074, %v4070
    %v5303 = vpack.c.b16 %v4075, %v4071
    %v5304 = vpack.c.b16 %v4080, %v4076
    %v5305 = vpack.c.b16 %v4081, %v4077
    %v5306 = vpack.c.b16 %v4082, %v4078
    %v5307 = vpack.c.b16 %v4083, %v4079
    %v5308 = vpack.c.b16 %v4088, %v4084
    %v5309 = vpack.c.b16 %v4089, %v4085
    %v5310 = vpack.c.b16 %v4090, %v4086
    %v5311 = vpack.c.b16 %v4091, %v4087
    %v5312 = vpack.c.b16 %v4096, %v4092
    %v5313 = vpack.c.b16 %v4097, %v4093
    %v5314 = vpack.c.b16 %v4098, %v4094
    %v5315 = vpack.c.b16 %v4099, %v4095
    %v5316 = vpack.c.b16 %v4104, %v4100
    %v5317 = vpack.c.b16 %v4105, %v4101
    %v5318 = vpack.c.b16 %v4106, %v4102
    %v5319 = vpack.c.b16 %v4107, %v4103
    %v5320 = vpack.c.b16 %v4112, %v4108
    %v5321 = vpack.c.b16 %v4113, %v4109
    %v5322 = vpack.c.b16 %v4114, %v4110
    %v5323 = vpack.c.b16 %v4115, %v4111
    %v5324 = vpack.c.b16 %v4120, %v4116
    %v5325 = vpack.c.b16 %v4121, %v4117
    %v5326 = vpack.c.b16 %v4122, %v4118
    %v5327 = vpack.c.b16 %v4123, %v4119
    %v5328 = vpack.c.b16 %v4128, %v4124
    %v5329 = vpack.c.b16 %v4129, %v4125
    %v5330 = vpack.c.b16 %v4130, %v4126
    %v5331 = vpack.c.b16 %v4131, %v4127
    %v5332 = vpack.c.b16 %v4136, %v4132
    %v5333 = vpack.c.b16 %v4137, %v4133
    %v5334 = vpack.c.b16 %v4138, %v4134
    %v5335 = vpack.c.b16 %v4139, %v4135
    %v5336 = vpack.c.b16 %v4144, %v4140
    %v5337 = vpack.c.b16 %v4145, %v4141
    %v5338 = vpack.c.b16 %v4146, %v4142
    %v5339 = vpack.c.b16 %v4147, %v4143
    %v5340 = vpack.c.b16 %v4152, %v4148
    %v5341 = vpack.c.b16 %v4153, %v4149
    %v5342 = vpack.c.b16 %v4154, %v4150
    %v5343 = vpack.c.b16 %v4155, %v4151
    %v5344 = vpack.c.b16 %v4160, %v4156
    %v5345 = vpack.c.b16 %v4161, %v4157
    %v5346 = vpack.c.b16 %v4162, %v4158
    %v5347 = vpack.c.b16 %v4163, %v4159
    %v5348 = vpack.c.b16 %v4168, %v4164
    %v5349 = vpack.c.b16 %v4169, %v4165
    %v5350 = vpack.c.b16 %v4170, %v4166
    %v5351 = vpack.c.b16 %v4171, %v4167
    %v5352 = vpack.c.b16 %v4176, %v4172
    %v5353 = vpack.c.b16 %v4177, %v4173
    %v5354 = vpack.c.b16 %v4178, %v4174
    %v5355 = vpack.c.b16 %v4179, %v4175
    %v5356 = vpack.c.b16 %v4184, %v4180
    %v5357 = vpack.c.b16 %v4185, %v4181
    %v5358 = vpack.c.b16 %v4186, %v4182
    %v5359 = vpack.c.b16 %v4187, %v4183
    %v5360 = vpack.c.b16 %v4192, %v4188
    %v5361 = vpack.c.b16 %v4193, %v4189
    %v5362 = vpack.c.b16 %v4194, %v4190
    %v5363 = vpack.c.b16 %v4195, %v4191
    %v5364 = vpack.c.b16 %v4200, %v4196
    %v5365 = vpack.c.b16 %v4201, %v4197
    %v5366 = vpack.c.b16 %v4202, %v4198
    %v5367 = vpack.c.b16 %v4203, %v4199
    %v5368 = vpack.c.b16 %v4208, %v4204
    %v5369 = vpack.c.b16 %v4209, %v4205
    %v5370 = vpack.c.b16 %v4210, %v4206
    %v5371 = vpack.c.b16 %v4211, %v4207
    %v5372 = vpack.c.b16 %v4216, %v4212
    %v5373 = vpack.c.b16 %v4217, %v4213
    %v5374 = vpack.c.b16 %v4218, %v4214
    %v5375 = vpack.c.b16 %v4219, %v4215
    %v5376 = vpack.c.b16 %v4224, %v4220
    %v5377 = vpack.c.b16 %v4225, %v4221
    %v5378 = vpack.c.b16 %v4226, %v4222
    %v5379 = vpack.c.b16 %v4227, %v4223
    %v5380 = vpack.c.b16 %v4232, %v4228
    %v5381 = vpack.c.b16 %v4233, %v4229
    %v5382 = vpack.c.b16 %v4234, %v4230
    %v5383 = vpack.c.b16 %v4235, %v4231
    %v5384 = vpack.c.b16 %v4240, %v4236
    %v5385 = vpack.c.b16 %v4241, %v4237
    %v5386 = vpack.c.b16 %v4242, %v4238
    %v5387 = vpack.c.b16 %v4243, %v4239
    %v5388 = vpack.c.b16 %v4248, %v4244
    %v5389 = vpack.c.b16 %v4249, %v4245
    %v5390 = vpack.c.b16 %v4250, %v4246
    %v5391 = vpack.c.b16 %v4251, %v4247
    %v5392 = vpack.c.b16 %v4256, %v4252
    %v5393 = vpack.c.b16 %v4257, %v4253
    %v5394 = vpack.c.b16 %v4258, %v4254
    %v5395 = vpack.c.b16 %v4259, %v4255
    %v5396 = vpack.c.b16 %v4264, %v4260
    %v5397 = vpack.c.b16 %v4265, %v4261
    %v5398 = vpack.c.b16 %v4266, %v4262
    %v5399 = vpack.c.b16 %v4267, %v4263
    %v5400 = vpack.c.b16 %v4272, %v4268
    %v5401 = vpack.c.b16 %v4273, %v4269
    %v5402 = vpack.c.b16 %v4274, %v4270
    %v5403 = vpack.c.b16 %v4275, %v4271
    %v5404 = vpack.c.b16 %v4280, %v4276
    %v5405 = vpack.c.b16 %v4281, %v4277
    %v5406 = vpack.c.b16 %v4282, %v4278
    %v5407 = vpack.c.b16 %v4283, %v4279
    %v5408 = vpack.c.b16 %v4288, %v4284
    %v5409 = vpack.c.b16 %v4289, %v4285
    %v5410 = vpack.c.b16 %v4290, %v4286
    %v5411 = vpack.c.b16 %v4291, %v4287
    %v5412 = vpack.c.b16 %v4296, %v4292
    %v5413 = vpack.c.b16 %v4297, %v4293
    %v5414 = vpack.c.b16 %v4298, %v4294
    %v5415 = vpack.c.b16 %v4299, %v4295
    %v5416 = vpack.c.b16 %v4304, %v4300
    %v5417 = vpack.c.b16 %v4305, %v4301
    %v5418 = vpack.c.b16 %v4306, %v4302
    %v5419 = vpack.c.b16 %v4307, %v4303
    %v5420 = vpack.c.b16 %v4312, %v4308
    %v5421 = vpack.c.b16 %v4313, %v4309
    %v5422 = vpack.c.b16 %v4314, %v4310
    %v5423 = vpack.c.b16 %v4315, %v4311
    %v5424 = vpack.c.b16 %v4320, %v4316
    %v5425 = vpack.c.b16 %v4321, %v4317
    %v5426 = vpack.c.b16 %v4322, %v4318
    %v5427 = vpack.c.b16 %v4323, %v4319
    %v5428 = vpack.c.b16 %v4328, %v4324
    %v5429 = vpack.c.b16 %v4329, %v4325
    %v5430 = vpack.c.b16 %v4330, %v4326
    %v5431 = vpack.c.b16 %v4331, %v4327
    %v5432 = vpack.c.b16 %v4336, %v4332
    %v5433 = vpack.c.b16 %v4337, %v4333
    %v5434 = vpack.c.b16 %v4338, %v4334
    %v5435 = vpack.c.b16 %v4339, %v4335
    %v5436 = vpack.c.b16 %v4344, %v4340
    %v5437 = vpack.c.b16 %v4345, %v4341
    %v5438 = vpack.c.b16 %v4346, %v4342
    %v5439 = vpack.c.b16 %v4347, %v4343
    %v5440 = vpack.c.b16 %v4352, %v4348
    %v5441 = vpack.c.b16 %v4353, %v4349
    %v5442 = vpack.c.b16 %v4354, %v4350
    %v5443 = vpack.c.b16 %v4355, %v4351
    %v5444 = vpack.c.b16 %v4360, %v4356
    %v5445 = vpack.c.b16 %v4361, %v4357
    %v5446 = vpack.c.b16 %v4362, %v4358
    %v5447 = vpack.c.b16 %v4363, %v4359
    %v5448 = vpack.c.b16 %v4368, %v4364
    %v5449 = vpack.c.b16 %v4369, %v4365
    %v5450 = vpack.c.b16 %v4370, %v4366
    %v5451 = vpack.c.b16 %v4371, %v4367
    %v5452 = vpack.c.b16 %v4376, %v4372
    %v5453 = vpack.c.b16 %v4377, %v4373
    %v5454 = vpack.c.b16 %v4378, %v4374
    %v5455 = vpack.c.b16 %v4379, %v4375
    %v5456 = vpack.c.b16 %v4384, %v4380
    %v5457 = vpack.c.b16 %v4385, %v4381
    %v5458 = vpack.c.b16 %v4386, %v4382
    %v5459 = vpack.c.b16 %v4387, %v4383
    %v5460 = vpack.c.b16 %v4392, %v4388
    %v5461 = vpack.c.b16 %v4393, %v4389
    %v5462 = vpack.c.b16 %v4394, %v4390
    %v5463 = vpack.c.b16 %v4395, %v4391
    %v5464 = vpack.c.b16 %v4400, %v4396
    %v5465 = vpack.c.b16 %v4401, %v4397
    %v5466 = vpack.c.b16 %v4402, %v4398
    %v5467 = vpack.c.b16 %v4403, %v4399
    %v5468 = vpack.c.b16 %v4408, %v4404
    %v5469 = vpack.c.b16 %v4409, %v4405
    %v5470 = vpack.c.b16 %v4410, %v4406
    %v5471 = vpack.c.b16 %v4411, %v4407
    %v5472 = vpack.c.b16 %v4416, %v4412
    %v5473 = vpack.c.b16 %v4417, %v4413
    %v5474 = vpack.c.b16 %v4418, %v4414
    %v5475 = vpack.c.b16 %v4419, %v4415
    %v5476 = vpack.c.b16 %v4424, %v4420
    %v5477 = vpack.c.b16 %v4425, %v4421
    %v5478 = vpack.c.b16 %v4426, %v4422
    %v5479 = vpack.c.b16 %v4427, %v4423
    %v5480 = vpack.c.b16 %v4432, %v4428
    %v5481 = vpack.c.b16 %v4433, %v4429
    %v5482 = vpack.c.b16 %v4434, %v4430
    %v5483 = vpack.c.b16 %v4435, %v4431
    %v5484 = vpack.c.b16 %v4440, %v4436
    %v5485 = vpack.c.b16 %v4441, %v4437
    %v5486 = vpack.c.b16 %v4442, %v4438
    %v5487 = vpack.c.b16 %v4443, %v4439
    %v5488 = vpack.c.b16 %v4448, %v4444
    %v5489 = vpack.c.b16 %v4449, %v4445
    %v5490 = vpack.c.b16 %v4450, %v4446
    %v5491 = vpack.c.b16 %v4451, %v4447
    %v5492 = vpack.c.b16 %v4456, %v4452
    %v5493 = vpack.c.b16 %v4457, %v4453
    %v5494 = vpack.c.b16 %v4458, %v4454
    %v5495 = vpack.c.b16 %v4459, %v4455
    %v5496 = vpack.c.b16 %v4464, %v4460
    %v5497 = vpack.c.b16 %v4465, %v4461
    %v5498 = vpack.c.b16 %v4466, %v4462
    %v5499 = vpack.c.b16 %v4467, %v4463
    %v5500 = vpack.c.b16 %v4472, %v4468
    %v5501 = vpack.c.b16 %v4473, %v4469
    %v5502 = vpack.c.b16 %v4474, %v4470
    %v5503 = vpack.c.b16 %v4475, %v4471
    %v5504 = vpack.c.b16 %v4480, %v4476
    %v5505 = vpack.c.b16 %v4481, %v4477
    %v5506 = vpack.c.b16 %v4482, %v4478
    %v5507 = vpack.c.b16 %v4483, %v4479
    %6532 = vmatpush.bf16.msra.mxu0 %v4512
    %6533 = vmatpush.bf16.msra.mxu0 %v4508
    %6534 = vmatpush.bf16.msra.mxu0 %v4504
    %6535 = vmatpush.bf16.msra.mxu0 %v4500
    %6536 = vmatpush.bf16.msra.mxu0 %v4496
    %6537 = vmatpush.bf16.msra.mxu0 %v4492
    %6538 = vmatpush.bf16.msra.mxu0 %v4488
    %6539 = vmatpush.bf16.msra.mxu0 %v4484
    %6540 = vmatmul.bf16.gmra.mxu0 %v265
    %v6541 = vpop.f32.mrf.mxu0
    %v6542 = vadd.f32 %v1370, %v6541
    %v6543 = vpop.f32.mrf.mxu0
    %6544 = vdwg.mxu0
    %6545 = vmatpush.bf16.msra.mxu0 %v4544
    %6546 = vmatpush.bf16.msra.mxu0 %v4540
    %6547 = vmatpush.bf16.msra.mxu0 %v4536
    %6548 = vmatpush.bf16.msra.mxu0 %v4532
    %6549 = vmatpush.bf16.msra.mxu0 %v4528
    %6550 = vmatpush.bf16.msra.mxu0 %v4524
    %6551 = vmatpush.bf16.msra.mxu0 %v4520
    %6552 = vmatpush.bf16.msra.mxu0 %v4516
    %6553 = vmatmul.bf16.gmra.mxu0 %v266
    %v6554 = vpop.f32.mrf.mxu0
    %v6555 = vadd.f32 %v6542, %v6554
    %v6556 = vpop.f32.mrf.mxu0
    %6557 = vdwg.mxu0
    %6558 = vmatpush.bf16.msra.mxu0 %v4576
    %6559 = vmatpush.bf16.msra.mxu0 %v4572
    %6560 = vmatpush.bf16.msra.mxu0 %v4568
    %6561 = vmatpush.bf16.msra.mxu0 %v4564
    %6562 = vmatpush.bf16.msra.mxu0 %v4560
    %6563 = vmatpush.bf16.msra.mxu0 %v4556
    %6564 = vmatpush.bf16.msra.mxu0 %v4552
    %6565 = vmatpush.bf16.msra.mxu0 %v4548
    %6566 = vmatmul.bf16.gmra.mxu0 %v267
    %v6567 = vpop.f32.mrf.mxu0
    %v6568 = vadd.f32 %v6555, %v6567
    %v6569 = vpop.f32.mrf.mxu0
    %6570 = vdwg.mxu0
    %6571 = vmatpush.bf16.msra.mxu0 %v4608
    %6572 = vmatpush.bf16.msra.mxu0 %v4604
    %6573 = vmatpush.bf16.msra.mxu0 %v4600
    %6574 = vmatpush.bf16.msra.mxu0 %v4596
    %6575 = vmatpush.bf16.msra.mxu0 %v4592
    %6576 = vmatpush.bf16.msra.mxu0 %v4588
    %6577 = vmatpush.bf16.msra.mxu0 %v4584
    %6578 = vmatpush.bf16.msra.mxu0 %v4580
    %6579 = vmatmul.bf16.gmra.mxu0 %v268
    %v6580 = vpop.f32.mrf.mxu0
    %v6581 = vadd.f32 %v6568, %v6580
    %v6582 = vpop.f32.mrf.mxu0
    %6583 = vdwg.mxu0
    %6584 = vmatpush.bf16.msra.mxu0 %v4640
    %6585 = vmatpush.bf16.msra.mxu0 %v4636
    %6586 = vmatpush.bf16.msra.mxu0 %v4632
    %6587 = vmatpush.bf16.msra.mxu0 %v4628
    %6588 = vmatpush.bf16.msra.mxu0 %v4624
    %6589 = vmatpush.bf16.msra.mxu0 %v4620
    %6590 = vmatpush.bf16.msra.mxu0 %v4616
    %6591 = vmatpush.bf16.msra.mxu0 %v4612
    %6592 = vmatmul.bf16.gmra.mxu0 %v269
    %v6593 = vpop.f32.mrf.mxu0
    %v6594 = vadd.f32 %v6581, %v6593
    %v6595 = vpop.f32.mrf.mxu0
    %6596 = vdwg.mxu0
    %6597 = vmatpush.bf16.msra.mxu0 %v4672
    %6598 = vmatpush.bf16.msra.mxu0 %v4668
    %6599 = vmatpush.bf16.msra.mxu0 %v4664
    %6600 = vmatpush.bf16.msra.mxu0 %v4660
    %6601 = vmatpush.bf16.msra.mxu0 %v4656
    %6602 = vmatpush.bf16.msra.mxu0 %v4652
    %6603 = vmatpush.bf16.msra.mxu0 %v4648
    %6604 = vmatpush.bf16.msra.mxu0 %v4644
    %6605 = vmatmul.bf16.gmra.mxu0 %v270
    %v6606 = vpop.f32.mrf.mxu0
    %v6607 = vadd.f32 %v6594, %v6606
    %v6608 = vpop.f32.mrf.mxu0
    %6609 = vdwg.mxu0
    %6610 = vmatpush.bf16.msra.mxu0 %v4704
    %6611 = vmatpush.bf16.msra.mxu0 %v4700
    %6612 = vmatpush.bf16.msra.mxu0 %v4696
    %6613 = vmatpush.bf16.msra.mxu0 %v4692
    %6614 = vmatpush.bf16.msra.mxu0 %v4688
    %6615 = vmatpush.bf16.msra.mxu0 %v4684
    %6616 = vmatpush.bf16.msra.mxu0 %v4680
    %6617 = vmatpush.bf16.msra.mxu0 %v4676
    %6618 = vmatmul.bf16.gmra.mxu0 %v271
    %v6619 = vpop.f32.mrf.mxu0
    %v6620 = vadd.f32 %v6607, %v6619
    %v6621 = vpop.f32.mrf.mxu0
    %6622 = vdwg.mxu0
    %6623 = vmatpush.bf16.msra.mxu0 %v4736
    %6624 = vmatpush.bf16.msra.mxu0 %v4732
    %6625 = vmatpush.bf16.msra.mxu0 %v4728
    %6626 = vmatpush.bf16.msra.mxu0 %v4724
    %6627 = vmatpush.bf16.msra.mxu0 %v4720
    %6628 = vmatpush.bf16.msra.mxu0 %v4716
    %6629 = vmatpush.bf16.msra.mxu0 %v4712
    %6630 = vmatpush.bf16.msra.mxu0 %v4708
    %6631 = vmatmul.bf16.gmra.mxu0 %v272
    %v6632 = vpop.f32.mrf.mxu0
    %v6633 = vadd.f32 %v6620, %v6632
    %v6634 = vpop.f32.mrf.mxu0
    %6635 = vdwg.mxu0
    %6636 = vmatpush.bf16.msra.mxu0 %v4768
    %6637 = vmatpush.bf16.msra.mxu0 %v4764
    %6638 = vmatpush.bf16.msra.mxu0 %v4760
    %6639 = vmatpush.bf16.msra.mxu0 %v4756
    %6640 = vmatpush.bf16.msra.mxu0 %v4752
    %6641 = vmatpush.bf16.msra.mxu0 %v4748
    %6642 = vmatpush.bf16.msra.mxu0 %v4744
    %6643 = vmatpush.bf16.msra.mxu0 %v4740
    %6644 = vmatmul.bf16.gmra.mxu0 %v273
    %v6645 = vpop.f32.mrf.mxu0
    %v6646 = vadd.f32 %v6633, %v6645
    %v6647 = vpop.f32.mrf.mxu0
    %6648 = vdwg.mxu0
    %6649 = vmatpush.bf16.msra.mxu0 %v4800
    %6650 = vmatpush.bf16.msra.mxu0 %v4796
    %6651 = vmatpush.bf16.msra.mxu0 %v4792
    %6652 = vmatpush.bf16.msra.mxu0 %v4788
    %6653 = vmatpush.bf16.msra.mxu0 %v4784
    %6654 = vmatpush.bf16.msra.mxu0 %v4780
    %6655 = vmatpush.bf16.msra.mxu0 %v4776
    %6656 = vmatpush.bf16.msra.mxu0 %v4772
    %6657 = vmatmul.bf16.gmra.mxu0 %v274
    %v6658 = vpop.f32.mrf.mxu0
    %v6659 = vadd.f32 %v6646, %v6658
    %v6660 = vpop.f32.mrf.mxu0
    %6661 = vdwg.mxu0
    %6662 = vmatpush.bf16.msra.mxu0 %v4832
    %6663 = vmatpush.bf16.msra.mxu0 %v4828
    %6664 = vmatpush.bf16.msra.mxu0 %v4824
    %6665 = vmatpush.bf16.msra.mxu0 %v4820
    %6666 = vmatpush.bf16.msra.mxu0 %v4816
    %6667 = vmatpush.bf16.msra.mxu0 %v4812
    %6668 = vmatpush.bf16.msra.mxu0 %v4808
    %6669 = vmatpush.bf16.msra.mxu0 %v4804
    %6670 = vmatmul.bf16.gmra.mxu0 %v275
    %v6671 = vpop.f32.mrf.mxu0
    %v6672 = vadd.f32 %v6659, %v6671
    %v6673 = vpop.f32.mrf.mxu0
    %6674 = vdwg.mxu0
    %6675 = vmatpush.bf16.msra.mxu0 %v4864
    %6676 = vmatpush.bf16.msra.mxu0 %v4860
    %6677 = vmatpush.bf16.msra.mxu0 %v4856
    %6678 = vmatpush.bf16.msra.mxu0 %v4852
    %6679 = vmatpush.bf16.msra.mxu0 %v4848
    %6680 = vmatpush.bf16.msra.mxu0 %v4844
    %6681 = vmatpush.bf16.msra.mxu0 %v4840
    %6682 = vmatpush.bf16.msra.mxu0 %v4836
    %6683 = vmatmul.bf16.gmra.mxu0 %v276
    %v6684 = vpop.f32.mrf.mxu0
    %v6685 = vadd.f32 %v6672, %v6684
    %v6686 = vpop.f32.mrf.mxu0
    %6687 = vdwg.mxu0
    %6688 = vmatpush.bf16.msra.mxu0 %v4896
    %6689 = vmatpush.bf16.msra.mxu0 %v4892
    %6690 = vmatpush.bf16.msra.mxu0 %v4888
    %6691 = vmatpush.bf16.msra.mxu0 %v4884
    %6692 = vmatpush.bf16.msra.mxu0 %v4880
    %6693 = vmatpush.bf16.msra.mxu0 %v4876
    %6694 = vmatpush.bf16.msra.mxu0 %v4872
    %6695 = vmatpush.bf16.msra.mxu0 %v4868
    %6696 = vmatmul.bf16.gmra.mxu0 %v277
    %v6697 = vpop.f32.mrf.mxu0
    %v6698 = vadd.f32 %v6685, %v6697
    %v6699 = vpop.f32.mrf.mxu0
    %6700 = vdwg.mxu0
    %6701 = vmatpush.bf16.msra.mxu0 %v4928
    %6702 = vmatpush.bf16.msra.mxu0 %v4924
    %6703 = vmatpush.bf16.msra.mxu0 %v4920
    %6704 = vmatpush.bf16.msra.mxu0 %v4916
    %6705 = vmatpush.bf16.msra.mxu0 %v4912
    %6706 = vmatpush.bf16.msra.mxu0 %v4908
    %6707 = vmatpush.bf16.msra.mxu0 %v4904
    %6708 = vmatpush.bf16.msra.mxu0 %v4900
    %6709 = vmatmul.bf16.gmra.mxu0 %v278
    %v6710 = vpop.f32.mrf.mxu0
    %v6711 = vadd.f32 %v6698, %v6710
    %v6712 = vpop.f32.mrf.mxu0
    %6713 = vdwg.mxu0
    %6714 = vmatpush.bf16.msra.mxu0 %v4960
    %6715 = vmatpush.bf16.msra.mxu0 %v4956
    %6716 = vmatpush.bf16.msra.mxu0 %v4952
    %6717 = vmatpush.bf16.msra.mxu0 %v4948
    %6718 = vmatpush.bf16.msra.mxu0 %v4944
    %6719 = vmatpush.bf16.msra.mxu0 %v4940
    %6720 = vmatpush.bf16.msra.mxu0 %v4936
    %6721 = vmatpush.bf16.msra.mxu0 %v4932
    %6722 = vmatmul.bf16.gmra.mxu0 %v279
    %v6723 = vpop.f32.mrf.mxu0
    %v6724 = vadd.f32 %v6711, %v6723
    %v6725 = vpop.f32.mrf.mxu0
    %6726 = vdwg.mxu0
    %6727 = vmatpush.bf16.msra.mxu0 %v4992
    %6728 = vmatpush.bf16.msra.mxu0 %v4988
    %6729 = vmatpush.bf16.msra.mxu0 %v4984
    %6730 = vmatpush.bf16.msra.mxu0 %v4980
    %6731 = vmatpush.bf16.msra.mxu0 %v4976
    %6732 = vmatpush.bf16.msra.mxu0 %v4972
    %6733 = vmatpush.bf16.msra.mxu0 %v4968
    %6734 = vmatpush.bf16.msra.mxu0 %v4964
    %6735 = vmatmul.bf16.gmra.mxu0 %v280
    %v6736 = vpop.f32.mrf.mxu0
    %v6737 = vadd.f32 %v6724, %v6736
    %v6738 = vpop.f32.mrf.mxu0
    %6739 = vdwg.mxu0
    %6740 = vmatpush.bf16.msra.mxu0 %v5024
    %6741 = vmatpush.bf16.msra.mxu0 %v5020
    %6742 = vmatpush.bf16.msra.mxu0 %v5016
    %6743 = vmatpush.bf16.msra.mxu0 %v5012
    %6744 = vmatpush.bf16.msra.mxu0 %v5008
    %6745 = vmatpush.bf16.msra.mxu0 %v5004
    %6746 = vmatpush.bf16.msra.mxu0 %v5000
    %6747 = vmatpush.bf16.msra.mxu0 %v4996
    %6748 = vmatmul.bf16.gmra.mxu0 %v281
    %v6749 = vpop.f32.mrf.mxu0
    %v6750 = vadd.f32 %v6737, %v6749
    %v6751 = vpop.f32.mrf.mxu0
    %6752 = vdwg.mxu0
    %6753 = vmatpush.bf16.msra.mxu0 %v5056
    %6754 = vmatpush.bf16.msra.mxu0 %v5052
    %6755 = vmatpush.bf16.msra.mxu0 %v5048
    %6756 = vmatpush.bf16.msra.mxu0 %v5044
    %6757 = vmatpush.bf16.msra.mxu0 %v5040
    %6758 = vmatpush.bf16.msra.mxu0 %v5036
    %6759 = vmatpush.bf16.msra.mxu0 %v5032
    %6760 = vmatpush.bf16.msra.mxu0 %v5028
    %6761 = vmatmul.bf16.gmra.mxu0 %v282
    %v6762 = vpop.f32.mrf.mxu0
    %v6763 = vadd.f32 %v6750, %v6762
    %v6764 = vpop.f32.mrf.mxu0
    %6765 = vdwg.mxu0
    %6766 = vmatpush.bf16.msra.mxu0 %v5088
    %6767 = vmatpush.bf16.msra.mxu0 %v5084
    %6768 = vmatpush.bf16.msra.mxu0 %v5080
    %6769 = vmatpush.bf16.msra.mxu0 %v5076
    %6770 = vmatpush.bf16.msra.mxu0 %v5072
    %6771 = vmatpush.bf16.msra.mxu0 %v5068
    %6772 = vmatpush.bf16.msra.mxu0 %v5064
    %6773 = vmatpush.bf16.msra.mxu0 %v5060
    %6774 = vmatmul.bf16.gmra.mxu0 %v283
    %v6775 = vpop.f32.mrf.mxu0
    %v6776 = vadd.f32 %v6763, %v6775
    %v6777 = vpop.f32.mrf.mxu0
    %6778 = vdwg.mxu0
    %6779 = vmatpush.bf16.msra.mxu0 %v5120
    %6780 = vmatpush.bf16.msra.mxu0 %v5116
    %6781 = vmatpush.bf16.msra.mxu0 %v5112
    %6782 = vmatpush.bf16.msra.mxu0 %v5108
    %6783 = vmatpush.bf16.msra.mxu0 %v5104
    %6784 = vmatpush.bf16.msra.mxu0 %v5100
    %6785 = vmatpush.bf16.msra.mxu0 %v5096
    %6786 = vmatpush.bf16.msra.mxu0 %v5092
    %6787 = vmatmul.bf16.gmra.mxu0 %v284
    %v6788 = vpop.f32.mrf.mxu0
    %v6789 = vadd.f32 %v6776, %v6788
    %v6790 = vpop.f32.mrf.mxu0
    %6791 = vdwg.mxu0
    %6792 = vmatpush.bf16.msra.mxu0 %v5152
    %6793 = vmatpush.bf16.msra.mxu0 %v5148
    %6794 = vmatpush.bf16.msra.mxu0 %v5144
    %6795 = vmatpush.bf16.msra.mxu0 %v5140
    %6796 = vmatpush.bf16.msra.mxu0 %v5136
    %6797 = vmatpush.bf16.msra.mxu0 %v5132
    %6798 = vmatpush.bf16.msra.mxu0 %v5128
    %6799 = vmatpush.bf16.msra.mxu0 %v5124
    %6800 = vmatmul.bf16.gmra.mxu0 %v285
    %v6801 = vpop.f32.mrf.mxu0
    %v6802 = vadd.f32 %v6789, %v6801
    %v6803 = vpop.f32.mrf.mxu0
    %6804 = vdwg.mxu0
    %6805 = vmatpush.bf16.msra.mxu0 %v5184
    %6806 = vmatpush.bf16.msra.mxu0 %v5180
    %6807 = vmatpush.bf16.msra.mxu0 %v5176
    %6808 = vmatpush.bf16.msra.mxu0 %v5172
    %6809 = vmatpush.bf16.msra.mxu0 %v5168
    %6810 = vmatpush.bf16.msra.mxu0 %v5164
    %6811 = vmatpush.bf16.msra.mxu0 %v5160
    %6812 = vmatpush.bf16.msra.mxu0 %v5156
    %6813 = vmatmul.bf16.gmra.mxu0 %v286
    %v6814 = vpop.f32.mrf.mxu0
    %v6815 = vadd.f32 %v6802, %v6814
    %v6816 = vpop.f32.mrf.mxu0
    %6817 = vdwg.mxu0
    %6818 = vmatpush.bf16.msra.mxu0 %v5216
    %6819 = vmatpush.bf16.msra.mxu0 %v5212
    %6820 = vmatpush.bf16.msra.mxu0 %v5208
    %6821 = vmatpush.bf16.msra.mxu0 %v5204
    %6822 = vmatpush.bf16.msra.mxu0 %v5200
    %6823 = vmatpush.bf16.msra.mxu0 %v5196
    %6824 = vmatpush.bf16.msra.mxu0 %v5192
    %6825 = vmatpush.bf16.msra.mxu0 %v5188
    %6826 = vmatmul.bf16.gmra.mxu0 %v287
    %v6827 = vpop.f32.mrf.mxu0
    %v6828 = vadd.f32 %v6815, %v6827
    %v6829 = vpop.f32.mrf.mxu0
    %6830 = vdwg.mxu0
    %6831 = vmatpush.bf16.msra.mxu0 %v5248
    %6832 = vmatpush.bf16.msra.mxu0 %v5244
    %6833 = vmatpush.bf16.msra.mxu0 %v5240
    %6834 = vmatpush.bf16.msra.mxu0 %v5236
    %6835 = vmatpush.bf16.msra.mxu0 %v5232
    %6836 = vmatpush.bf16.msra.mxu0 %v5228
    %6837 = vmatpush.bf16.msra.mxu0 %v5224
    %6838 = vmatpush.bf16.msra.mxu0 %v5220
    %6839 = vmatmul.bf16.gmra.mxu0 %v288
    %v6840 = vpop.f32.mrf.mxu0
    %v6841 = vadd.f32 %v6828, %v6840
    %v6842 = vpop.f32.mrf.mxu0
    %6843 = vdwg.mxu0
    %6844 = vmatpush.bf16.msra.mxu0 %v5280
    %6845 = vmatpush.bf16.msra.mxu0 %v5276
    %6846 = vmatpush.bf16.msra.mxu0 %v5272
    %6847 = vmatpush.bf16.msra.mxu0 %v5268
    %6848 = vmatpush.bf16.msra.mxu0 %v5264
    %6849 = vmatpush.bf16.msra.mxu0 %v5260
    %6850 = vmatpush.bf16.msra.mxu0 %v5256
    %6851 = vmatpush.bf16.msra.mxu0 %v5252
    %6852 = vmatmul.bf16.gmra.mxu0 %v289
    %v6853 = vpop.f32.mrf.mxu0
    %v6854 = vadd.f32 %v6841, %v6853
    %v6855 = vpop.f32.mrf.mxu0
    %6856 = vdwg.mxu0
    %6857 = vmatpush.bf16.msra.mxu0 %v5312
    %6858 = vmatpush.bf16.msra.mxu0 %v5308
    %6859 = vmatpush.bf16.msra.mxu0 %v5304
    %6860 = vmatpush.bf16.msra.mxu0 %v5300
    %6861 = vmatpush.bf16.msra.mxu0 %v5296
    %6862 = vmatpush.bf16.msra.mxu0 %v5292
    %6863 = vmatpush.bf16.msra.mxu0 %v5288
    %6864 = vmatpush.bf16.msra.mxu0 %v5284
    %6865 = vmatmul.bf16.gmra.mxu0 %v290
    %v6866 = vpop.f32.mrf.mxu0
    %v6867 = vadd.f32 %v6854, %v6866
    %v6868 = vpop.f32.mrf.mxu0
    %6869 = vdwg.mxu0
    %6870 = vmatpush.bf16.msra.mxu0 %v5344
    %6871 = vmatpush.bf16.msra.mxu0 %v5340
    %6872 = vmatpush.bf16.msra.mxu0 %v5336
    %6873 = vmatpush.bf16.msra.mxu0 %v5332
    %6874 = vmatpush.bf16.msra.mxu0 %v5328
    %6875 = vmatpush.bf16.msra.mxu0 %v5324
    %6876 = vmatpush.bf16.msra.mxu0 %v5320
    %6877 = vmatpush.bf16.msra.mxu0 %v5316
    %6878 = vmatmul.bf16.gmra.mxu0 %v291
    %v6879 = vpop.f32.mrf.mxu0
    %v6880 = vadd.f32 %v6867, %v6879
    %v6881 = vpop.f32.mrf.mxu0
    %6882 = vdwg.mxu0
    %6883 = vmatpush.bf16.msra.mxu0 %v5376
    %6884 = vmatpush.bf16.msra.mxu0 %v5372
    %6885 = vmatpush.bf16.msra.mxu0 %v5368
    %6886 = vmatpush.bf16.msra.mxu0 %v5364
    %6887 = vmatpush.bf16.msra.mxu0 %v5360
    %6888 = vmatpush.bf16.msra.mxu0 %v5356
    %6889 = vmatpush.bf16.msra.mxu0 %v5352
    %6890 = vmatpush.bf16.msra.mxu0 %v5348
    %6891 = vmatmul.bf16.gmra.mxu0 %v292
    %v6892 = vpop.f32.mrf.mxu0
    %v6893 = vadd.f32 %v6880, %v6892
    %v6894 = vpop.f32.mrf.mxu0
    %6895 = vdwg.mxu0
    %6896 = vmatpush.bf16.msra.mxu0 %v5408
    %6897 = vmatpush.bf16.msra.mxu0 %v5404
    %6898 = vmatpush.bf16.msra.mxu0 %v5400
    %6899 = vmatpush.bf16.msra.mxu0 %v5396
    %6900 = vmatpush.bf16.msra.mxu0 %v5392
    %6901 = vmatpush.bf16.msra.mxu0 %v5388
    %6902 = vmatpush.bf16.msra.mxu0 %v5384
    %6903 = vmatpush.bf16.msra.mxu0 %v5380
    %6904 = vmatmul.bf16.gmra.mxu0 %v293
    %v6905 = vpop.f32.mrf.mxu0
    %v6906 = vadd.f32 %v6893, %v6905
    %v6907 = vpop.f32.mrf.mxu0
    %6908 = vdwg.mxu0
    %6909 = vmatpush.bf16.msra.mxu0 %v5440
    %6910 = vmatpush.bf16.msra.mxu0 %v5436
    %6911 = vmatpush.bf16.msra.mxu0 %v5432
    %6912 = vmatpush.bf16.msra.mxu0 %v5428
    %6913 = vmatpush.bf16.msra.mxu0 %v5424
    %6914 = vmatpush.bf16.msra.mxu0 %v5420
    %6915 = vmatpush.bf16.msra.mxu0 %v5416
    %6916 = vmatpush.bf16.msra.mxu0 %v5412
    %6917 = vmatmul.bf16.gmra.mxu0 %v294
    %v6918 = vpop.f32.mrf.mxu0
    %v6919 = vadd.f32 %v6906, %v6918
    %v6920 = vpop.f32.mrf.mxu0
    %6921 = vdwg.mxu0
    %6922 = vmatpush.bf16.msra.mxu0 %v5472
    %6923 = vmatpush.bf16.msra.mxu0 %v5468
    %6924 = vmatpush.bf16.msra.mxu0 %v5464
    %6925 = vmatpush.bf16.msra.mxu0 %v5460
    %6926 = vmatpush.bf16.msra.mxu0 %v5456
    %6927 = vmatpush.bf16.msra.mxu0 %v5452
    %6928 = vmatpush.bf16.msra.mxu0 %v5448
    %6929 = vmatpush.bf16.msra.mxu0 %v5444
    %6930 = vmatmul.bf16.gmra.mxu0 %v295
    %v6931 = vpop.f32.mrf.mxu0
    %v6932 = vadd.f32 %v6919, %v6931
    %v6933 = vpop.f32.mrf.mxu0
    %6934 = vdwg.mxu0
    %6935 = vmatpush.bf16.msra.mxu0 %v5504
    %6936 = vmatpush.bf16.msra.mxu0 %v5500
    %6937 = vmatpush.bf16.msra.mxu0 %v5496
    %6938 = vmatpush.bf16.msra.mxu0 %v5492
    %6939 = vmatpush.bf16.msra.mxu0 %v5488
    %6940 = vmatpush.bf16.msra.mxu0 %v5484
    %6941 = vmatpush.bf16.msra.mxu0 %v5480
    %6942 = vmatpush.bf16.msra.mxu0 %v5476
    %6943 = vmatmul.bf16.gmra.mxu0 %v296
    %v6944 = vpop.f32.mrf.mxu0
    %v6945 = vadd.f32 %v6932, %v6944
    %v6946 = vpop.f32.mrf.mxu0
    %6947 = vdwg.mxu0
    %6948 = vmatpush.bf16.msra.mxu0 %v4513
    %6949 = vmatpush.bf16.msra.mxu0 %v4509
    %6950 = vmatpush.bf16.msra.mxu0 %v4505
    %6951 = vmatpush.bf16.msra.mxu0 %v4501
    %6952 = vmatpush.bf16.msra.mxu0 %v4497
    %6953 = vmatpush.bf16.msra.mxu0 %v4493
    %6954 = vmatpush.bf16.msra.mxu0 %v4489
    %6955 = vmatpush.bf16.msra.mxu0 %v4485
    %6956 = vmatmul.bf16.gmra.mxu0 %v265
    %v6957 = vpop.f32.mrf.mxu0
    %v6958 = vadd.f32 %v1383, %v6957
    %v6959 = vpop.f32.mrf.mxu0
    %6960 = vdwg.mxu0
    %6961 = vmatpush.bf16.msra.mxu0 %v4545
    %6962 = vmatpush.bf16.msra.mxu0 %v4541
    %6963 = vmatpush.bf16.msra.mxu0 %v4537
    %6964 = vmatpush.bf16.msra.mxu0 %v4533
    %6965 = vmatpush.bf16.msra.mxu0 %v4529
    %6966 = vmatpush.bf16.msra.mxu0 %v4525
    %6967 = vmatpush.bf16.msra.mxu0 %v4521
    %6968 = vmatpush.bf16.msra.mxu0 %v4517
    %6969 = vmatmul.bf16.gmra.mxu0 %v266
    %v6970 = vpop.f32.mrf.mxu0
    %v6971 = vadd.f32 %v6958, %v6970
    %v6972 = vpop.f32.mrf.mxu0
    %6973 = vdwg.mxu0
    %6974 = vmatpush.bf16.msra.mxu0 %v4577
    %6975 = vmatpush.bf16.msra.mxu0 %v4573
    %6976 = vmatpush.bf16.msra.mxu0 %v4569
    %6977 = vmatpush.bf16.msra.mxu0 %v4565
    %6978 = vmatpush.bf16.msra.mxu0 %v4561
    %6979 = vmatpush.bf16.msra.mxu0 %v4557
    %6980 = vmatpush.bf16.msra.mxu0 %v4553
    %6981 = vmatpush.bf16.msra.mxu0 %v4549
    %6982 = vmatmul.bf16.gmra.mxu0 %v267
    %v6983 = vpop.f32.mrf.mxu0
    %v6984 = vadd.f32 %v6971, %v6983
    %v6985 = vpop.f32.mrf.mxu0
    %6986 = vdwg.mxu0
    %6987 = vmatpush.bf16.msra.mxu0 %v4609
    %6988 = vmatpush.bf16.msra.mxu0 %v4605
    %6989 = vmatpush.bf16.msra.mxu0 %v4601
    %6990 = vmatpush.bf16.msra.mxu0 %v4597
    %6991 = vmatpush.bf16.msra.mxu0 %v4593
    %6992 = vmatpush.bf16.msra.mxu0 %v4589
    %6993 = vmatpush.bf16.msra.mxu0 %v4585
    %6994 = vmatpush.bf16.msra.mxu0 %v4581
    %6995 = vmatmul.bf16.gmra.mxu0 %v268
    %v6996 = vpop.f32.mrf.mxu0
    %v6997 = vadd.f32 %v6984, %v6996
    %v6998 = vpop.f32.mrf.mxu0
    %6999 = vdwg.mxu0
    %7000 = vmatpush.bf16.msra.mxu0 %v4641
    %7001 = vmatpush.bf16.msra.mxu0 %v4637
    %7002 = vmatpush.bf16.msra.mxu0 %v4633
    %7003 = vmatpush.bf16.msra.mxu0 %v4629
    %7004 = vmatpush.bf16.msra.mxu0 %v4625
    %7005 = vmatpush.bf16.msra.mxu0 %v4621
    %7006 = vmatpush.bf16.msra.mxu0 %v4617
    %7007 = vmatpush.bf16.msra.mxu0 %v4613
    %7008 = vmatmul.bf16.gmra.mxu0 %v269
    %v7009 = vpop.f32.mrf.mxu0
    %v7010 = vadd.f32 %v6997, %v7009
    %v7011 = vpop.f32.mrf.mxu0
    %7012 = vdwg.mxu0
    %7013 = vmatpush.bf16.msra.mxu0 %v4673
    %7014 = vmatpush.bf16.msra.mxu0 %v4669
    %7015 = vmatpush.bf16.msra.mxu0 %v4665
    %7016 = vmatpush.bf16.msra.mxu0 %v4661
    %7017 = vmatpush.bf16.msra.mxu0 %v4657
    %7018 = vmatpush.bf16.msra.mxu0 %v4653
    %7019 = vmatpush.bf16.msra.mxu0 %v4649
    %7020 = vmatpush.bf16.msra.mxu0 %v4645
    %7021 = vmatmul.bf16.gmra.mxu0 %v270
    %v7022 = vpop.f32.mrf.mxu0
    %v7023 = vadd.f32 %v7010, %v7022
    %v7024 = vpop.f32.mrf.mxu0
    %7025 = vdwg.mxu0
    %7026 = vmatpush.bf16.msra.mxu0 %v4705
    %7027 = vmatpush.bf16.msra.mxu0 %v4701
    %7028 = vmatpush.bf16.msra.mxu0 %v4697
    %7029 = vmatpush.bf16.msra.mxu0 %v4693
    %7030 = vmatpush.bf16.msra.mxu0 %v4689
    %7031 = vmatpush.bf16.msra.mxu0 %v4685
    %7032 = vmatpush.bf16.msra.mxu0 %v4681
    %7033 = vmatpush.bf16.msra.mxu0 %v4677
    %7034 = vmatmul.bf16.gmra.mxu0 %v271
    %v7035 = vpop.f32.mrf.mxu0
    %v7036 = vadd.f32 %v7023, %v7035
    %v7037 = vpop.f32.mrf.mxu0
    %7038 = vdwg.mxu0
    %7039 = vmatpush.bf16.msra.mxu0 %v4737
    %7040 = vmatpush.bf16.msra.mxu0 %v4733
    %7041 = vmatpush.bf16.msra.mxu0 %v4729
    %7042 = vmatpush.bf16.msra.mxu0 %v4725
    %7043 = vmatpush.bf16.msra.mxu0 %v4721
    %7044 = vmatpush.bf16.msra.mxu0 %v4717
    %7045 = vmatpush.bf16.msra.mxu0 %v4713
    %7046 = vmatpush.bf16.msra.mxu0 %v4709
    %7047 = vmatmul.bf16.gmra.mxu0 %v272
    %v7048 = vpop.f32.mrf.mxu0
    %v7049 = vadd.f32 %v7036, %v7048
    %v7050 = vpop.f32.mrf.mxu0
    %7051 = vdwg.mxu0
    %7052 = vmatpush.bf16.msra.mxu0 %v4769
    %7053 = vmatpush.bf16.msra.mxu0 %v4765
    %7054 = vmatpush.bf16.msra.mxu0 %v4761
    %7055 = vmatpush.bf16.msra.mxu0 %v4757
    %7056 = vmatpush.bf16.msra.mxu0 %v4753
    %7057 = vmatpush.bf16.msra.mxu0 %v4749
    %7058 = vmatpush.bf16.msra.mxu0 %v4745
    %7059 = vmatpush.bf16.msra.mxu0 %v4741
    %7060 = vmatmul.bf16.gmra.mxu0 %v273
    %v7061 = vpop.f32.mrf.mxu0
    %v7062 = vadd.f32 %v7049, %v7061
    %v7063 = vpop.f32.mrf.mxu0
    %7064 = vdwg.mxu0
    %7065 = vmatpush.bf16.msra.mxu0 %v4801
    %7066 = vmatpush.bf16.msra.mxu0 %v4797
    %7067 = vmatpush.bf16.msra.mxu0 %v4793
    %7068 = vmatpush.bf16.msra.mxu0 %v4789
    %7069 = vmatpush.bf16.msra.mxu0 %v4785
    %7070 = vmatpush.bf16.msra.mxu0 %v4781
    %7071 = vmatpush.bf16.msra.mxu0 %v4777
    %7072 = vmatpush.bf16.msra.mxu0 %v4773
    %7073 = vmatmul.bf16.gmra.mxu0 %v274
    %v7074 = vpop.f32.mrf.mxu0
    %v7075 = vadd.f32 %v7062, %v7074
    %v7076 = vpop.f32.mrf.mxu0
    %7077 = vdwg.mxu0
    %7078 = vmatpush.bf16.msra.mxu0 %v4833
    %7079 = vmatpush.bf16.msra.mxu0 %v4829
    %7080 = vmatpush.bf16.msra.mxu0 %v4825
    %7081 = vmatpush.bf16.msra.mxu0 %v4821
    %7082 = vmatpush.bf16.msra.mxu0 %v4817
    %7083 = vmatpush.bf16.msra.mxu0 %v4813
    %7084 = vmatpush.bf16.msra.mxu0 %v4809
    %7085 = vmatpush.bf16.msra.mxu0 %v4805
    %7086 = vmatmul.bf16.gmra.mxu0 %v275
    %v7087 = vpop.f32.mrf.mxu0
    %v7088 = vadd.f32 %v7075, %v7087
    %v7089 = vpop.f32.mrf.mxu0
    %7090 = vdwg.mxu0
    %7091 = vmatpush.bf16.msra.mxu0 %v4865
    %7092 = vmatpush.bf16.msra.mxu0 %v4861
    %7093 = vmatpush.bf16.msra.mxu0 %v4857
    %7094 = vmatpush.bf16.msra.mxu0 %v4853
    %7095 = vmatpush.bf16.msra.mxu0 %v4849
    %7096 = vmatpush.bf16.msra.mxu0 %v4845
    %7097 = vmatpush.bf16.msra.mxu0 %v4841
    %7098 = vmatpush.bf16.msra.mxu0 %v4837
    %7099 = vmatmul.bf16.gmra.mxu0 %v276
    %v7100 = vpop.f32.mrf.mxu0
    %v7101 = vadd.f32 %v7088, %v7100
    %v7102 = vpop.f32.mrf.mxu0
    %7103 = vdwg.mxu0
    %7104 = vmatpush.bf16.msra.mxu0 %v4897
    %7105 = vmatpush.bf16.msra.mxu0 %v4893
    %7106 = vmatpush.bf16.msra.mxu0 %v4889
    %7107 = vmatpush.bf16.msra.mxu0 %v4885
    %7108 = vmatpush.bf16.msra.mxu0 %v4881
    %7109 = vmatpush.bf16.msra.mxu0 %v4877
    %7110 = vmatpush.bf16.msra.mxu0 %v4873
    %7111 = vmatpush.bf16.msra.mxu0 %v4869
    %7112 = vmatmul.bf16.gmra.mxu0 %v277
    %v7113 = vpop.f32.mrf.mxu0
    %v7114 = vadd.f32 %v7101, %v7113
    %v7115 = vpop.f32.mrf.mxu0
    %7116 = vdwg.mxu0
    %7117 = vmatpush.bf16.msra.mxu0 %v4929
    %7118 = vmatpush.bf16.msra.mxu0 %v4925
    %7119 = vmatpush.bf16.msra.mxu0 %v4921
    %7120 = vmatpush.bf16.msra.mxu0 %v4917
    %7121 = vmatpush.bf16.msra.mxu0 %v4913
    %7122 = vmatpush.bf16.msra.mxu0 %v4909
    %7123 = vmatpush.bf16.msra.mxu0 %v4905
    %7124 = vmatpush.bf16.msra.mxu0 %v4901
    %7125 = vmatmul.bf16.gmra.mxu0 %v278
    %v7126 = vpop.f32.mrf.mxu0
    %v7127 = vadd.f32 %v7114, %v7126
    %v7128 = vpop.f32.mrf.mxu0
    %7129 = vdwg.mxu0
    %7130 = vmatpush.bf16.msra.mxu0 %v4961
    %7131 = vmatpush.bf16.msra.mxu0 %v4957
    %7132 = vmatpush.bf16.msra.mxu0 %v4953
    %7133 = vmatpush.bf16.msra.mxu0 %v4949
    %7134 = vmatpush.bf16.msra.mxu0 %v4945
    %7135 = vmatpush.bf16.msra.mxu0 %v4941
    %7136 = vmatpush.bf16.msra.mxu0 %v4937
    %7137 = vmatpush.bf16.msra.mxu0 %v4933
    %7138 = vmatmul.bf16.gmra.mxu0 %v279
    %v7139 = vpop.f32.mrf.mxu0
    %v7140 = vadd.f32 %v7127, %v7139
    %v7141 = vpop.f32.mrf.mxu0
    %7142 = vdwg.mxu0
    %7143 = vmatpush.bf16.msra.mxu0 %v4993
    %7144 = vmatpush.bf16.msra.mxu0 %v4989
    %7145 = vmatpush.bf16.msra.mxu0 %v4985
    %7146 = vmatpush.bf16.msra.mxu0 %v4981
    %7147 = vmatpush.bf16.msra.mxu0 %v4977
    %7148 = vmatpush.bf16.msra.mxu0 %v4973
    %7149 = vmatpush.bf16.msra.mxu0 %v4969
    %7150 = vmatpush.bf16.msra.mxu0 %v4965
    %7151 = vmatmul.bf16.gmra.mxu0 %v280
    %v7152 = vpop.f32.mrf.mxu0
    %v7153 = vadd.f32 %v7140, %v7152
    %v7154 = vpop.f32.mrf.mxu0
    %7155 = vdwg.mxu0
    %7156 = vmatpush.bf16.msra.mxu0 %v5025
    %7157 = vmatpush.bf16.msra.mxu0 %v5021
    %7158 = vmatpush.bf16.msra.mxu0 %v5017
    %7159 = vmatpush.bf16.msra.mxu0 %v5013
    %7160 = vmatpush.bf16.msra.mxu0 %v5009
    %7161 = vmatpush.bf16.msra.mxu0 %v5005
    %7162 = vmatpush.bf16.msra.mxu0 %v5001
    %7163 = vmatpush.bf16.msra.mxu0 %v4997
    %7164 = vmatmul.bf16.gmra.mxu0 %v281
    %v7165 = vpop.f32.mrf.mxu0
    %v7166 = vadd.f32 %v7153, %v7165
    %v7167 = vpop.f32.mrf.mxu0
    %7168 = vdwg.mxu0
    %7169 = vmatpush.bf16.msra.mxu0 %v5057
    %7170 = vmatpush.bf16.msra.mxu0 %v5053
    %7171 = vmatpush.bf16.msra.mxu0 %v5049
    %7172 = vmatpush.bf16.msra.mxu0 %v5045
    %7173 = vmatpush.bf16.msra.mxu0 %v5041
    %7174 = vmatpush.bf16.msra.mxu0 %v5037
    %7175 = vmatpush.bf16.msra.mxu0 %v5033
    %7176 = vmatpush.bf16.msra.mxu0 %v5029
    %7177 = vmatmul.bf16.gmra.mxu0 %v282
    %v7178 = vpop.f32.mrf.mxu0
    %v7179 = vadd.f32 %v7166, %v7178
    %v7180 = vpop.f32.mrf.mxu0
    %7181 = vdwg.mxu0
    %7182 = vmatpush.bf16.msra.mxu0 %v5089
    %7183 = vmatpush.bf16.msra.mxu0 %v5085
    %7184 = vmatpush.bf16.msra.mxu0 %v5081
    %7185 = vmatpush.bf16.msra.mxu0 %v5077
    %7186 = vmatpush.bf16.msra.mxu0 %v5073
    %7187 = vmatpush.bf16.msra.mxu0 %v5069
    %7188 = vmatpush.bf16.msra.mxu0 %v5065
    %7189 = vmatpush.bf16.msra.mxu0 %v5061
    %7190 = vmatmul.bf16.gmra.mxu0 %v283
    %v7191 = vpop.f32.mrf.mxu0
    %v7192 = vadd.f32 %v7179, %v7191
    %v7193 = vpop.f32.mrf.mxu0
    %7194 = vdwg.mxu0
    %7195 = vmatpush.bf16.msra.mxu0 %v5121
    %7196 = vmatpush.bf16.msra.mxu0 %v5117
    %7197 = vmatpush.bf16.msra.mxu0 %v5113
    %7198 = vmatpush.bf16.msra.mxu0 %v5109
    %7199 = vmatpush.bf16.msra.mxu0 %v5105
    %7200 = vmatpush.bf16.msra.mxu0 %v5101
    %7201 = vmatpush.bf16.msra.mxu0 %v5097
    %7202 = vmatpush.bf16.msra.mxu0 %v5093
    %7203 = vmatmul.bf16.gmra.mxu0 %v284
    %v7204 = vpop.f32.mrf.mxu0
    %v7205 = vadd.f32 %v7192, %v7204
    %v7206 = vpop.f32.mrf.mxu0
    %7207 = vdwg.mxu0
    %7208 = vmatpush.bf16.msra.mxu0 %v5153
    %7209 = vmatpush.bf16.msra.mxu0 %v5149
    %7210 = vmatpush.bf16.msra.mxu0 %v5145
    %7211 = vmatpush.bf16.msra.mxu0 %v5141
    %7212 = vmatpush.bf16.msra.mxu0 %v5137
    %7213 = vmatpush.bf16.msra.mxu0 %v5133
    %7214 = vmatpush.bf16.msra.mxu0 %v5129
    %7215 = vmatpush.bf16.msra.mxu0 %v5125
    %7216 = vmatmul.bf16.gmra.mxu0 %v285
    %v7217 = vpop.f32.mrf.mxu0
    %v7218 = vadd.f32 %v7205, %v7217
    %v7219 = vpop.f32.mrf.mxu0
    %7220 = vdwg.mxu0
    %7221 = vmatpush.bf16.msra.mxu0 %v5185
    %7222 = vmatpush.bf16.msra.mxu0 %v5181
    %7223 = vmatpush.bf16.msra.mxu0 %v5177
    %7224 = vmatpush.bf16.msra.mxu0 %v5173
    %7225 = vmatpush.bf16.msra.mxu0 %v5169
    %7226 = vmatpush.bf16.msra.mxu0 %v5165
    %7227 = vmatpush.bf16.msra.mxu0 %v5161
    %7228 = vmatpush.bf16.msra.mxu0 %v5157
    %7229 = vmatmul.bf16.gmra.mxu0 %v286
    %v7230 = vpop.f32.mrf.mxu0
    %v7231 = vadd.f32 %v7218, %v7230
    %v7232 = vpop.f32.mrf.mxu0
    %7233 = vdwg.mxu0
    %7234 = vmatpush.bf16.msra.mxu0 %v5217
    %7235 = vmatpush.bf16.msra.mxu0 %v5213
    %7236 = vmatpush.bf16.msra.mxu0 %v5209
    %7237 = vmatpush.bf16.msra.mxu0 %v5205
    %7238 = vmatpush.bf16.msra.mxu0 %v5201
    %7239 = vmatpush.bf16.msra.mxu0 %v5197
    %7240 = vmatpush.bf16.msra.mxu0 %v5193
    %7241 = vmatpush.bf16.msra.mxu0 %v5189
    %7242 = vmatmul.bf16.gmra.mxu0 %v287
    %v7243 = vpop.f32.mrf.mxu0
    %v7244 = vadd.f32 %v7231, %v7243
    %v7245 = vpop.f32.mrf.mxu0
    %7246 = vdwg.mxu0
    %7247 = vmatpush.bf16.msra.mxu0 %v5249
    %7248 = vmatpush.bf16.msra.mxu0 %v5245
    %7249 = vmatpush.bf16.msra.mxu0 %v5241
    %7250 = vmatpush.bf16.msra.mxu0 %v5237
    %7251 = vmatpush.bf16.msra.mxu0 %v5233
    %7252 = vmatpush.bf16.msra.mxu0 %v5229
    %7253 = vmatpush.bf16.msra.mxu0 %v5225
    %7254 = vmatpush.bf16.msra.mxu0 %v5221
    %7255 = vmatmul.bf16.gmra.mxu0 %v288
    %v7256 = vpop.f32.mrf.mxu0
    %v7257 = vadd.f32 %v7244, %v7256
    %v7258 = vpop.f32.mrf.mxu0
    %7259 = vdwg.mxu0
    %7260 = vmatpush.bf16.msra.mxu0 %v5281
    %7261 = vmatpush.bf16.msra.mxu0 %v5277
    %7262 = vmatpush.bf16.msra.mxu0 %v5273
    %7263 = vmatpush.bf16.msra.mxu0 %v5269
    %7264 = vmatpush.bf16.msra.mxu0 %v5265
    %7265 = vmatpush.bf16.msra.mxu0 %v5261
    %7266 = vmatpush.bf16.msra.mxu0 %v5257
    %7267 = vmatpush.bf16.msra.mxu0 %v5253
    %7268 = vmatmul.bf16.gmra.mxu0 %v289
    %v7269 = vpop.f32.mrf.mxu0
    %v7270 = vadd.f32 %v7257, %v7269
    %v7271 = vpop.f32.mrf.mxu0
    %7272 = vdwg.mxu0
    %7273 = vmatpush.bf16.msra.mxu0 %v5313
    %7274 = vmatpush.bf16.msra.mxu0 %v5309
    %7275 = vmatpush.bf16.msra.mxu0 %v5305
    %7276 = vmatpush.bf16.msra.mxu0 %v5301
    %7277 = vmatpush.bf16.msra.mxu0 %v5297
    %7278 = vmatpush.bf16.msra.mxu0 %v5293
    %7279 = vmatpush.bf16.msra.mxu0 %v5289
    %7280 = vmatpush.bf16.msra.mxu0 %v5285
    %7281 = vmatmul.bf16.gmra.mxu0 %v290
    %v7282 = vpop.f32.mrf.mxu0
    %v7283 = vadd.f32 %v7270, %v7282
    %v7284 = vpop.f32.mrf.mxu0
    %7285 = vdwg.mxu0
    %7286 = vmatpush.bf16.msra.mxu0 %v5345
    %7287 = vmatpush.bf16.msra.mxu0 %v5341
    %7288 = vmatpush.bf16.msra.mxu0 %v5337
    %7289 = vmatpush.bf16.msra.mxu0 %v5333
    %7290 = vmatpush.bf16.msra.mxu0 %v5329
    %7291 = vmatpush.bf16.msra.mxu0 %v5325
    %7292 = vmatpush.bf16.msra.mxu0 %v5321
    %7293 = vmatpush.bf16.msra.mxu0 %v5317
    %7294 = vmatmul.bf16.gmra.mxu0 %v291
    %v7295 = vpop.f32.mrf.mxu0
    %v7296 = vadd.f32 %v7283, %v7295
    %v7297 = vpop.f32.mrf.mxu0
    %7298 = vdwg.mxu0
    %7299 = vmatpush.bf16.msra.mxu0 %v5377
    %7300 = vmatpush.bf16.msra.mxu0 %v5373
    %7301 = vmatpush.bf16.msra.mxu0 %v5369
    %7302 = vmatpush.bf16.msra.mxu0 %v5365
    %7303 = vmatpush.bf16.msra.mxu0 %v5361
    %7304 = vmatpush.bf16.msra.mxu0 %v5357
    %7305 = vmatpush.bf16.msra.mxu0 %v5353
    %7306 = vmatpush.bf16.msra.mxu0 %v5349
    %7307 = vmatmul.bf16.gmra.mxu0 %v292
    %v7308 = vpop.f32.mrf.mxu0
    %v7309 = vadd.f32 %v7296, %v7308
    %v7310 = vpop.f32.mrf.mxu0
    %7311 = vdwg.mxu0
    %7312 = vmatpush.bf16.msra.mxu0 %v5409
    %7313 = vmatpush.bf16.msra.mxu0 %v5405
    %7314 = vmatpush.bf16.msra.mxu0 %v5401
    %7315 = vmatpush.bf16.msra.mxu0 %v5397
    %7316 = vmatpush.bf16.msra.mxu0 %v5393
    %7317 = vmatpush.bf16.msra.mxu0 %v5389
    %7318 = vmatpush.bf16.msra.mxu0 %v5385
    %7319 = vmatpush.bf16.msra.mxu0 %v5381
    %7320 = vmatmul.bf16.gmra.mxu0 %v293
    %v7321 = vpop.f32.mrf.mxu0
    %v7322 = vadd.f32 %v7309, %v7321
    %v7323 = vpop.f32.mrf.mxu0
    %7324 = vdwg.mxu0
    %7325 = vmatpush.bf16.msra.mxu0 %v5441
    %7326 = vmatpush.bf16.msra.mxu0 %v5437
    %7327 = vmatpush.bf16.msra.mxu0 %v5433
    %7328 = vmatpush.bf16.msra.mxu0 %v5429
    %7329 = vmatpush.bf16.msra.mxu0 %v5425
    %7330 = vmatpush.bf16.msra.mxu0 %v5421
    %7331 = vmatpush.bf16.msra.mxu0 %v5417
    %7332 = vmatpush.bf16.msra.mxu0 %v5413
    %7333 = vmatmul.bf16.gmra.mxu0 %v294
    %v7334 = vpop.f32.mrf.mxu0
    %v7335 = vadd.f32 %v7322, %v7334
    %v7336 = vpop.f32.mrf.mxu0
    %7337 = vdwg.mxu0
    %7338 = vmatpush.bf16.msra.mxu0 %v5473
    %7339 = vmatpush.bf16.msra.mxu0 %v5469
    %7340 = vmatpush.bf16.msra.mxu0 %v5465
    %7341 = vmatpush.bf16.msra.mxu0 %v5461
    %7342 = vmatpush.bf16.msra.mxu0 %v5457
    %7343 = vmatpush.bf16.msra.mxu0 %v5453
    %7344 = vmatpush.bf16.msra.mxu0 %v5449
    %7345 = vmatpush.bf16.msra.mxu0 %v5445
    %7346 = vmatmul.bf16.gmra.mxu0 %v295
    %v7347 = vpop.f32.mrf.mxu0
    %v7348 = vadd.f32 %v7335, %v7347
    %v7349 = vpop.f32.mrf.mxu0
    %7350 = vdwg.mxu0
    %7351 = vmatpush.bf16.msra.mxu0 %v5505
    %7352 = vmatpush.bf16.msra.mxu0 %v5501
    %7353 = vmatpush.bf16.msra.mxu0 %v5497
    %7354 = vmatpush.bf16.msra.mxu0 %v5493
    %7355 = vmatpush.bf16.msra.mxu0 %v5489
    %7356 = vmatpush.bf16.msra.mxu0 %v5485
    %7357 = vmatpush.bf16.msra.mxu0 %v5481
    %7358 = vmatpush.bf16.msra.mxu0 %v5477
    %7359 = vmatmul.bf16.gmra.mxu0 %v296
    %v7360 = vpop.f32.mrf.mxu0
    %v7361 = vadd.f32 %v7348, %v7360
    %v7362 = vpop.f32.mrf.mxu0
    %7363 = vdwg.mxu0
    %7364 = vmatpush.bf16.msra.mxu0 %v4514
    %7365 = vmatpush.bf16.msra.mxu0 %v4510
    %7366 = vmatpush.bf16.msra.mxu0 %v4506
    %7367 = vmatpush.bf16.msra.mxu0 %v4502
    %7368 = vmatpush.bf16.msra.mxu0 %v4498
    %7369 = vmatpush.bf16.msra.mxu0 %v4494
    %7370 = vmatpush.bf16.msra.mxu0 %v4490
    %7371 = vmatpush.bf16.msra.mxu0 %v4486
    %7372 = vmatmul.bf16.gmra.mxu0 %v265
    %v7373 = vpop.f32.mrf.mxu0
    %v7374 = vadd.f32 %v1396, %v7373
    %v7375 = vpop.f32.mrf.mxu0
    %7376 = vdwg.mxu0
    %7377 = vmatpush.bf16.msra.mxu0 %v4546
    %7378 = vmatpush.bf16.msra.mxu0 %v4542
    %7379 = vmatpush.bf16.msra.mxu0 %v4538
    %7380 = vmatpush.bf16.msra.mxu0 %v4534
    %7381 = vmatpush.bf16.msra.mxu0 %v4530
    %7382 = vmatpush.bf16.msra.mxu0 %v4526
    %7383 = vmatpush.bf16.msra.mxu0 %v4522
    %7384 = vmatpush.bf16.msra.mxu0 %v4518
    %7385 = vmatmul.bf16.gmra.mxu0 %v266
    %v7386 = vpop.f32.mrf.mxu0
    %v7387 = vadd.f32 %v7374, %v7386
    %v7388 = vpop.f32.mrf.mxu0
    %7389 = vdwg.mxu0
    %7390 = vmatpush.bf16.msra.mxu0 %v4578
    %7391 = vmatpush.bf16.msra.mxu0 %v4574
    %7392 = vmatpush.bf16.msra.mxu0 %v4570
    %7393 = vmatpush.bf16.msra.mxu0 %v4566
    %7394 = vmatpush.bf16.msra.mxu0 %v4562
    %7395 = vmatpush.bf16.msra.mxu0 %v4558
    %7396 = vmatpush.bf16.msra.mxu0 %v4554
    %7397 = vmatpush.bf16.msra.mxu0 %v4550
    %7398 = vmatmul.bf16.gmra.mxu0 %v267
    %v7399 = vpop.f32.mrf.mxu0
    %v7400 = vadd.f32 %v7387, %v7399
    %v7401 = vpop.f32.mrf.mxu0
    %7402 = vdwg.mxu0
    %7403 = vmatpush.bf16.msra.mxu0 %v4610
    %7404 = vmatpush.bf16.msra.mxu0 %v4606
    %7405 = vmatpush.bf16.msra.mxu0 %v4602
    %7406 = vmatpush.bf16.msra.mxu0 %v4598
    %7407 = vmatpush.bf16.msra.mxu0 %v4594
    %7408 = vmatpush.bf16.msra.mxu0 %v4590
    %7409 = vmatpush.bf16.msra.mxu0 %v4586
    %7410 = vmatpush.bf16.msra.mxu0 %v4582
    %7411 = vmatmul.bf16.gmra.mxu0 %v268
    %v7412 = vpop.f32.mrf.mxu0
    %v7413 = vadd.f32 %v7400, %v7412
    %v7414 = vpop.f32.mrf.mxu0
    %7415 = vdwg.mxu0
    %7416 = vmatpush.bf16.msra.mxu0 %v4642
    %7417 = vmatpush.bf16.msra.mxu0 %v4638
    %7418 = vmatpush.bf16.msra.mxu0 %v4634
    %7419 = vmatpush.bf16.msra.mxu0 %v4630
    %7420 = vmatpush.bf16.msra.mxu0 %v4626
    %7421 = vmatpush.bf16.msra.mxu0 %v4622
    %7422 = vmatpush.bf16.msra.mxu0 %v4618
    %7423 = vmatpush.bf16.msra.mxu0 %v4614
    %7424 = vmatmul.bf16.gmra.mxu0 %v269
    %v7425 = vpop.f32.mrf.mxu0
    %v7426 = vadd.f32 %v7413, %v7425
    %v7427 = vpop.f32.mrf.mxu0
    %7428 = vdwg.mxu0
    %7429 = vmatpush.bf16.msra.mxu0 %v4674
    %7430 = vmatpush.bf16.msra.mxu0 %v4670
    %7431 = vmatpush.bf16.msra.mxu0 %v4666
    %7432 = vmatpush.bf16.msra.mxu0 %v4662
    %7433 = vmatpush.bf16.msra.mxu0 %v4658
    %7434 = vmatpush.bf16.msra.mxu0 %v4654
    %7435 = vmatpush.bf16.msra.mxu0 %v4650
    %7436 = vmatpush.bf16.msra.mxu0 %v4646
    %7437 = vmatmul.bf16.gmra.mxu0 %v270
    %v7438 = vpop.f32.mrf.mxu0
    %v7439 = vadd.f32 %v7426, %v7438
    %v7440 = vpop.f32.mrf.mxu0
    %7441 = vdwg.mxu0
    %7442 = vmatpush.bf16.msra.mxu0 %v4706
    %7443 = vmatpush.bf16.msra.mxu0 %v4702
    %7444 = vmatpush.bf16.msra.mxu0 %v4698
    %7445 = vmatpush.bf16.msra.mxu0 %v4694
    %7446 = vmatpush.bf16.msra.mxu0 %v4690
    %7447 = vmatpush.bf16.msra.mxu0 %v4686
    %7448 = vmatpush.bf16.msra.mxu0 %v4682
    %7449 = vmatpush.bf16.msra.mxu0 %v4678
    %7450 = vmatmul.bf16.gmra.mxu0 %v271
    %v7451 = vpop.f32.mrf.mxu0
    %v7452 = vadd.f32 %v7439, %v7451
    %v7453 = vpop.f32.mrf.mxu0
    %7454 = vdwg.mxu0
    %7455 = vmatpush.bf16.msra.mxu0 %v4738
    %7456 = vmatpush.bf16.msra.mxu0 %v4734
    %7457 = vmatpush.bf16.msra.mxu0 %v4730
    %7458 = vmatpush.bf16.msra.mxu0 %v4726
    %7459 = vmatpush.bf16.msra.mxu0 %v4722
    %7460 = vmatpush.bf16.msra.mxu0 %v4718
    %7461 = vmatpush.bf16.msra.mxu0 %v4714
    %7462 = vmatpush.bf16.msra.mxu0 %v4710
    %7463 = vmatmul.bf16.gmra.mxu0 %v272
    %v7464 = vpop.f32.mrf.mxu0
    %v7465 = vadd.f32 %v7452, %v7464
    %v7466 = vpop.f32.mrf.mxu0
    %7467 = vdwg.mxu0
    %7468 = vmatpush.bf16.msra.mxu0 %v4770
    %7469 = vmatpush.bf16.msra.mxu0 %v4766
    %7470 = vmatpush.bf16.msra.mxu0 %v4762
    %7471 = vmatpush.bf16.msra.mxu0 %v4758
    %7472 = vmatpush.bf16.msra.mxu0 %v4754
    %7473 = vmatpush.bf16.msra.mxu0 %v4750
    %7474 = vmatpush.bf16.msra.mxu0 %v4746
    %7475 = vmatpush.bf16.msra.mxu0 %v4742
    %7476 = vmatmul.bf16.gmra.mxu0 %v273
    %v7477 = vpop.f32.mrf.mxu0
    %v7478 = vadd.f32 %v7465, %v7477
    %v7479 = vpop.f32.mrf.mxu0
    %7480 = vdwg.mxu0
    %7481 = vmatpush.bf16.msra.mxu0 %v4802
    %7482 = vmatpush.bf16.msra.mxu0 %v4798
    %7483 = vmatpush.bf16.msra.mxu0 %v4794
    %7484 = vmatpush.bf16.msra.mxu0 %v4790
    %7485 = vmatpush.bf16.msra.mxu0 %v4786
    %7486 = vmatpush.bf16.msra.mxu0 %v4782
    %7487 = vmatpush.bf16.msra.mxu0 %v4778
    %7488 = vmatpush.bf16.msra.mxu0 %v4774
    %7489 = vmatmul.bf16.gmra.mxu0 %v274
    %v7490 = vpop.f32.mrf.mxu0
    %v7491 = vadd.f32 %v7478, %v7490
    %v7492 = vpop.f32.mrf.mxu0
    %7493 = vdwg.mxu0
    %7494 = vmatpush.bf16.msra.mxu0 %v4834
    %7495 = vmatpush.bf16.msra.mxu0 %v4830
    %7496 = vmatpush.bf16.msra.mxu0 %v4826
    %7497 = vmatpush.bf16.msra.mxu0 %v4822
    %7498 = vmatpush.bf16.msra.mxu0 %v4818
    %7499 = vmatpush.bf16.msra.mxu0 %v4814
    %7500 = vmatpush.bf16.msra.mxu0 %v4810
    %7501 = vmatpush.bf16.msra.mxu0 %v4806
    %7502 = vmatmul.bf16.gmra.mxu0 %v275
    %v7503 = vpop.f32.mrf.mxu0
    %v7504 = vadd.f32 %v7491, %v7503
    %v7505 = vpop.f32.mrf.mxu0
    %7506 = vdwg.mxu0
    %7507 = vmatpush.bf16.msra.mxu0 %v4866
    %7508 = vmatpush.bf16.msra.mxu0 %v4862
    %7509 = vmatpush.bf16.msra.mxu0 %v4858
    %7510 = vmatpush.bf16.msra.mxu0 %v4854
    %7511 = vmatpush.bf16.msra.mxu0 %v4850
    %7512 = vmatpush.bf16.msra.mxu0 %v4846
    %7513 = vmatpush.bf16.msra.mxu0 %v4842
    %7514 = vmatpush.bf16.msra.mxu0 %v4838
    %7515 = vmatmul.bf16.gmra.mxu0 %v276
    %v7516 = vpop.f32.mrf.mxu0
    %v7517 = vadd.f32 %v7504, %v7516
    %v7518 = vpop.f32.mrf.mxu0
    %7519 = vdwg.mxu0
    %7520 = vmatpush.bf16.msra.mxu0 %v4898
    %7521 = vmatpush.bf16.msra.mxu0 %v4894
    %7522 = vmatpush.bf16.msra.mxu0 %v4890
    %7523 = vmatpush.bf16.msra.mxu0 %v4886
    %7524 = vmatpush.bf16.msra.mxu0 %v4882
    %7525 = vmatpush.bf16.msra.mxu0 %v4878
    %7526 = vmatpush.bf16.msra.mxu0 %v4874
    %7527 = vmatpush.bf16.msra.mxu0 %v4870
    %7528 = vmatmul.bf16.gmra.mxu0 %v277
    %v7529 = vpop.f32.mrf.mxu0
    %v7530 = vadd.f32 %v7517, %v7529
    %v7531 = vpop.f32.mrf.mxu0
    %7532 = vdwg.mxu0
    %7533 = vmatpush.bf16.msra.mxu0 %v4930
    %7534 = vmatpush.bf16.msra.mxu0 %v4926
    %7535 = vmatpush.bf16.msra.mxu0 %v4922
    %7536 = vmatpush.bf16.msra.mxu0 %v4918
    %7537 = vmatpush.bf16.msra.mxu0 %v4914
    %7538 = vmatpush.bf16.msra.mxu0 %v4910
    %7539 = vmatpush.bf16.msra.mxu0 %v4906
    %7540 = vmatpush.bf16.msra.mxu0 %v4902
    %7541 = vmatmul.bf16.gmra.mxu0 %v278
    %v7542 = vpop.f32.mrf.mxu0
    %v7543 = vadd.f32 %v7530, %v7542
    %v7544 = vpop.f32.mrf.mxu0
    %7545 = vdwg.mxu0
    %7546 = vmatpush.bf16.msra.mxu0 %v4962
    %7547 = vmatpush.bf16.msra.mxu0 %v4958
    %7548 = vmatpush.bf16.msra.mxu0 %v4954
    %7549 = vmatpush.bf16.msra.mxu0 %v4950
    %7550 = vmatpush.bf16.msra.mxu0 %v4946
    %7551 = vmatpush.bf16.msra.mxu0 %v4942
    %7552 = vmatpush.bf16.msra.mxu0 %v4938
    %7553 = vmatpush.bf16.msra.mxu0 %v4934
    %7554 = vmatmul.bf16.gmra.mxu0 %v279
    %v7555 = vpop.f32.mrf.mxu0
    %v7556 = vadd.f32 %v7543, %v7555
    %v7557 = vpop.f32.mrf.mxu0
    %7558 = vdwg.mxu0
    %7559 = vmatpush.bf16.msra.mxu0 %v4994
    %7560 = vmatpush.bf16.msra.mxu0 %v4990
    %7561 = vmatpush.bf16.msra.mxu0 %v4986
    %7562 = vmatpush.bf16.msra.mxu0 %v4982
    %7563 = vmatpush.bf16.msra.mxu0 %v4978
    %7564 = vmatpush.bf16.msra.mxu0 %v4974
    %7565 = vmatpush.bf16.msra.mxu0 %v4970
    %7566 = vmatpush.bf16.msra.mxu0 %v4966
    %7567 = vmatmul.bf16.gmra.mxu0 %v280
    %v7568 = vpop.f32.mrf.mxu0
    %v7569 = vadd.f32 %v7556, %v7568
    %v7570 = vpop.f32.mrf.mxu0
    %7571 = vdwg.mxu0
    %7572 = vmatpush.bf16.msra.mxu0 %v5026
    %7573 = vmatpush.bf16.msra.mxu0 %v5022
    %7574 = vmatpush.bf16.msra.mxu0 %v5018
    %7575 = vmatpush.bf16.msra.mxu0 %v5014
    %7576 = vmatpush.bf16.msra.mxu0 %v5010
    %7577 = vmatpush.bf16.msra.mxu0 %v5006
    %7578 = vmatpush.bf16.msra.mxu0 %v5002
    %7579 = vmatpush.bf16.msra.mxu0 %v4998
    %7580 = vmatmul.bf16.gmra.mxu0 %v281
    %v7581 = vpop.f32.mrf.mxu0
    %v7582 = vadd.f32 %v7569, %v7581
    %v7583 = vpop.f32.mrf.mxu0
    %7584 = vdwg.mxu0
    %7585 = vmatpush.bf16.msra.mxu0 %v5058
    %7586 = vmatpush.bf16.msra.mxu0 %v5054
    %7587 = vmatpush.bf16.msra.mxu0 %v5050
    %7588 = vmatpush.bf16.msra.mxu0 %v5046
    %7589 = vmatpush.bf16.msra.mxu0 %v5042
    %7590 = vmatpush.bf16.msra.mxu0 %v5038
    %7591 = vmatpush.bf16.msra.mxu0 %v5034
    %7592 = vmatpush.bf16.msra.mxu0 %v5030
    %7593 = vmatmul.bf16.gmra.mxu0 %v282
    %v7594 = vpop.f32.mrf.mxu0
    %v7595 = vadd.f32 %v7582, %v7594
    %v7596 = vpop.f32.mrf.mxu0
    %7597 = vdwg.mxu0
    %7598 = vmatpush.bf16.msra.mxu0 %v5090
    %7599 = vmatpush.bf16.msra.mxu0 %v5086
    %7600 = vmatpush.bf16.msra.mxu0 %v5082
    %7601 = vmatpush.bf16.msra.mxu0 %v5078
    %7602 = vmatpush.bf16.msra.mxu0 %v5074
    %7603 = vmatpush.bf16.msra.mxu0 %v5070
    %7604 = vmatpush.bf16.msra.mxu0 %v5066
    %7605 = vmatpush.bf16.msra.mxu0 %v5062
    %7606 = vmatmul.bf16.gmra.mxu0 %v283
    %v7607 = vpop.f32.mrf.mxu0
    %v7608 = vadd.f32 %v7595, %v7607
    %v7609 = vpop.f32.mrf.mxu0
    %7610 = vdwg.mxu0
    %7611 = vmatpush.bf16.msra.mxu0 %v5122
    %7612 = vmatpush.bf16.msra.mxu0 %v5118
    %7613 = vmatpush.bf16.msra.mxu0 %v5114
    %7614 = vmatpush.bf16.msra.mxu0 %v5110
    %7615 = vmatpush.bf16.msra.mxu0 %v5106
    %7616 = vmatpush.bf16.msra.mxu0 %v5102
    %7617 = vmatpush.bf16.msra.mxu0 %v5098
    %7618 = vmatpush.bf16.msra.mxu0 %v5094
    %7619 = vmatmul.bf16.gmra.mxu0 %v284
    %v7620 = vpop.f32.mrf.mxu0
    %v7621 = vadd.f32 %v7608, %v7620
    %v7622 = vpop.f32.mrf.mxu0
    %7623 = vdwg.mxu0
    %7624 = vmatpush.bf16.msra.mxu0 %v5154
    %7625 = vmatpush.bf16.msra.mxu0 %v5150
    %7626 = vmatpush.bf16.msra.mxu0 %v5146
    %7627 = vmatpush.bf16.msra.mxu0 %v5142
    %7628 = vmatpush.bf16.msra.mxu0 %v5138
    %7629 = vmatpush.bf16.msra.mxu0 %v5134
    %7630 = vmatpush.bf16.msra.mxu0 %v5130
    %7631 = vmatpush.bf16.msra.mxu0 %v5126
    %7632 = vmatmul.bf16.gmra.mxu0 %v285
    %v7633 = vpop.f32.mrf.mxu0
    %v7634 = vadd.f32 %v7621, %v7633
    %v7635 = vpop.f32.mrf.mxu0
    %7636 = vdwg.mxu0
    %7637 = vmatpush.bf16.msra.mxu0 %v5186
    %7638 = vmatpush.bf16.msra.mxu0 %v5182
    %7639 = vmatpush.bf16.msra.mxu0 %v5178
    %7640 = vmatpush.bf16.msra.mxu0 %v5174
    %7641 = vmatpush.bf16.msra.mxu0 %v5170
    %7642 = vmatpush.bf16.msra.mxu0 %v5166
    %7643 = vmatpush.bf16.msra.mxu0 %v5162
    %7644 = vmatpush.bf16.msra.mxu0 %v5158
    %7645 = vmatmul.bf16.gmra.mxu0 %v286
    %v7646 = vpop.f32.mrf.mxu0
    %v7647 = vadd.f32 %v7634, %v7646
    %v7648 = vpop.f32.mrf.mxu0
    %7649 = vdwg.mxu0
    %7650 = vmatpush.bf16.msra.mxu0 %v5218
    %7651 = vmatpush.bf16.msra.mxu0 %v5214
    %7652 = vmatpush.bf16.msra.mxu0 %v5210
    %7653 = vmatpush.bf16.msra.mxu0 %v5206
    %7654 = vmatpush.bf16.msra.mxu0 %v5202
    %7655 = vmatpush.bf16.msra.mxu0 %v5198
    %7656 = vmatpush.bf16.msra.mxu0 %v5194
    %7657 = vmatpush.bf16.msra.mxu0 %v5190
    %7658 = vmatmul.bf16.gmra.mxu0 %v287
    %v7659 = vpop.f32.mrf.mxu0
    %v7660 = vadd.f32 %v7647, %v7659
    %v7661 = vpop.f32.mrf.mxu0
    %7662 = vdwg.mxu0
    %7663 = vmatpush.bf16.msra.mxu0 %v5250
    %7664 = vmatpush.bf16.msra.mxu0 %v5246
    %7665 = vmatpush.bf16.msra.mxu0 %v5242
    %7666 = vmatpush.bf16.msra.mxu0 %v5238
    %7667 = vmatpush.bf16.msra.mxu0 %v5234
    %7668 = vmatpush.bf16.msra.mxu0 %v5230
    %7669 = vmatpush.bf16.msra.mxu0 %v5226
    %7670 = vmatpush.bf16.msra.mxu0 %v5222
    %7671 = vmatmul.bf16.gmra.mxu0 %v288
    %v7672 = vpop.f32.mrf.mxu0
    %v7673 = vadd.f32 %v7660, %v7672
    %v7674 = vpop.f32.mrf.mxu0
    %7675 = vdwg.mxu0
    %7676 = vmatpush.bf16.msra.mxu0 %v5282
    %7677 = vmatpush.bf16.msra.mxu0 %v5278
    %7678 = vmatpush.bf16.msra.mxu0 %v5274
    %7679 = vmatpush.bf16.msra.mxu0 %v5270
    %7680 = vmatpush.bf16.msra.mxu0 %v5266
    %7681 = vmatpush.bf16.msra.mxu0 %v5262
    %7682 = vmatpush.bf16.msra.mxu0 %v5258
    %7683 = vmatpush.bf16.msra.mxu0 %v5254
    %7684 = vmatmul.bf16.gmra.mxu0 %v289
    %v7685 = vpop.f32.mrf.mxu0
    %v7686 = vadd.f32 %v7673, %v7685
    %v7687 = vpop.f32.mrf.mxu0
    %7688 = vdwg.mxu0
    %7689 = vmatpush.bf16.msra.mxu0 %v5314
    %7690 = vmatpush.bf16.msra.mxu0 %v5310
    %7691 = vmatpush.bf16.msra.mxu0 %v5306
    %7692 = vmatpush.bf16.msra.mxu0 %v5302
    %7693 = vmatpush.bf16.msra.mxu0 %v5298
    %7694 = vmatpush.bf16.msra.mxu0 %v5294
    %7695 = vmatpush.bf16.msra.mxu0 %v5290
    %7696 = vmatpush.bf16.msra.mxu0 %v5286
    %7697 = vmatmul.bf16.gmra.mxu0 %v290
    %v7698 = vpop.f32.mrf.mxu0
    %v7699 = vadd.f32 %v7686, %v7698
    %v7700 = vpop.f32.mrf.mxu0
    %7701 = vdwg.mxu0
    %7702 = vmatpush.bf16.msra.mxu0 %v5346
    %7703 = vmatpush.bf16.msra.mxu0 %v5342
    %7704 = vmatpush.bf16.msra.mxu0 %v5338
    %7705 = vmatpush.bf16.msra.mxu0 %v5334
    %7706 = vmatpush.bf16.msra.mxu0 %v5330
    %7707 = vmatpush.bf16.msra.mxu0 %v5326
    %7708 = vmatpush.bf16.msra.mxu0 %v5322
    %7709 = vmatpush.bf16.msra.mxu0 %v5318
    %7710 = vmatmul.bf16.gmra.mxu0 %v291
    %v7711 = vpop.f32.mrf.mxu0
    %v7712 = vadd.f32 %v7699, %v7711
    %v7713 = vpop.f32.mrf.mxu0
    %7714 = vdwg.mxu0
    %7715 = vmatpush.bf16.msra.mxu0 %v5378
    %7716 = vmatpush.bf16.msra.mxu0 %v5374
    %7717 = vmatpush.bf16.msra.mxu0 %v5370
    %7718 = vmatpush.bf16.msra.mxu0 %v5366
    %7719 = vmatpush.bf16.msra.mxu0 %v5362
    %7720 = vmatpush.bf16.msra.mxu0 %v5358
    %7721 = vmatpush.bf16.msra.mxu0 %v5354
    %7722 = vmatpush.bf16.msra.mxu0 %v5350
    %7723 = vmatmul.bf16.gmra.mxu0 %v292
    %v7724 = vpop.f32.mrf.mxu0
    %v7725 = vadd.f32 %v7712, %v7724
    %v7726 = vpop.f32.mrf.mxu0
    %7727 = vdwg.mxu0
    %7728 = vmatpush.bf16.msra.mxu0 %v5410
    %7729 = vmatpush.bf16.msra.mxu0 %v5406
    %7730 = vmatpush.bf16.msra.mxu0 %v5402
    %7731 = vmatpush.bf16.msra.mxu0 %v5398
    %7732 = vmatpush.bf16.msra.mxu0 %v5394
    %7733 = vmatpush.bf16.msra.mxu0 %v5390
    %7734 = vmatpush.bf16.msra.mxu0 %v5386
    %7735 = vmatpush.bf16.msra.mxu0 %v5382
    %7736 = vmatmul.bf16.gmra.mxu0 %v293
    %v7737 = vpop.f32.mrf.mxu0
    %v7738 = vadd.f32 %v7725, %v7737
    %v7739 = vpop.f32.mrf.mxu0
    %7740 = vdwg.mxu0
    %7741 = vmatpush.bf16.msra.mxu0 %v5442
    %7742 = vmatpush.bf16.msra.mxu0 %v5438
    %7743 = vmatpush.bf16.msra.mxu0 %v5434
    %7744 = vmatpush.bf16.msra.mxu0 %v5430
    %7745 = vmatpush.bf16.msra.mxu0 %v5426
    %7746 = vmatpush.bf16.msra.mxu0 %v5422
    %7747 = vmatpush.bf16.msra.mxu0 %v5418
    %7748 = vmatpush.bf16.msra.mxu0 %v5414
    %7749 = vmatmul.bf16.gmra.mxu0 %v294
    %v7750 = vpop.f32.mrf.mxu0
    %v7751 = vadd.f32 %v7738, %v7750
    %v7752 = vpop.f32.mrf.mxu0
    %7753 = vdwg.mxu0
    %7754 = vmatpush.bf16.msra.mxu0 %v5474
    %7755 = vmatpush.bf16.msra.mxu0 %v5470
    %7756 = vmatpush.bf16.msra.mxu0 %v5466
    %7757 = vmatpush.bf16.msra.mxu0 %v5462
    %7758 = vmatpush.bf16.msra.mxu0 %v5458
    %7759 = vmatpush.bf16.msra.mxu0 %v5454
    %7760 = vmatpush.bf16.msra.mxu0 %v5450
    %7761 = vmatpush.bf16.msra.mxu0 %v5446
    %7762 = vmatmul.bf16.gmra.mxu0 %v295
    %v7763 = vpop.f32.mrf.mxu0
    %v7764 = vadd.f32 %v7751, %v7763
    %v7765 = vpop.f32.mrf.mxu0
    %7766 = vdwg.mxu0
    %7767 = vmatpush.bf16.msra.mxu0 %v5506
    %7768 = vmatpush.bf16.msra.mxu0 %v5502
    %7769 = vmatpush.bf16.msra.mxu0 %v5498
    %7770 = vmatpush.bf16.msra.mxu0 %v5494
    %7771 = vmatpush.bf16.msra.mxu0 %v5490
    %7772 = vmatpush.bf16.msra.mxu0 %v5486
    %7773 = vmatpush.bf16.msra.mxu0 %v5482
    %7774 = vmatpush.bf16.msra.mxu0 %v5478
    %7775 = vmatmul.bf16.gmra.mxu0 %v296
    %v7776 = vpop.f32.mrf.mxu0
    %v7777 = vadd.f32 %v7764, %v7776
    %v7778 = vpop.f32.mrf.mxu0
    %7779 = vdwg.mxu0
    %7780 = vmatpush.bf16.msra.mxu0 %v4515
    %7781 = vmatpush.bf16.msra.mxu0 %v4511
    %7782 = vmatpush.bf16.msra.mxu0 %v4507
    %7783 = vmatpush.bf16.msra.mxu0 %v4503
    %7784 = vmatpush.bf16.msra.mxu0 %v4499
    %7785 = vmatpush.bf16.msra.mxu0 %v4495
    %7786 = vmatpush.bf16.msra.mxu0 %v4491
    %7787 = vmatpush.bf16.msra.mxu0 %v4487
    %7788 = vmatmul.bf16.gmra.mxu0 %v265
    %v7789 = vpop.f32.mrf.mxu0
    %v7790 = vadd.f32 %v1409, %v7789
    %v7791 = vpop.f32.mrf.mxu0
    %7792 = vdwg.mxu0
    %7793 = vmatpush.bf16.msra.mxu0 %v4547
    %7794 = vmatpush.bf16.msra.mxu0 %v4543
    %7795 = vmatpush.bf16.msra.mxu0 %v4539
    %7796 = vmatpush.bf16.msra.mxu0 %v4535
    %7797 = vmatpush.bf16.msra.mxu0 %v4531
    %7798 = vmatpush.bf16.msra.mxu0 %v4527
    %7799 = vmatpush.bf16.msra.mxu0 %v4523
    %7800 = vmatpush.bf16.msra.mxu0 %v4519
    %7801 = vmatmul.bf16.gmra.mxu0 %v266
    %v7802 = vpop.f32.mrf.mxu0
    %v7803 = vadd.f32 %v7790, %v7802
    %v7804 = vpop.f32.mrf.mxu0
    %7805 = vdwg.mxu0
    %7806 = vmatpush.bf16.msra.mxu0 %v4579
    %7807 = vmatpush.bf16.msra.mxu0 %v4575
    %7808 = vmatpush.bf16.msra.mxu0 %v4571
    %7809 = vmatpush.bf16.msra.mxu0 %v4567
    %7810 = vmatpush.bf16.msra.mxu0 %v4563
    %7811 = vmatpush.bf16.msra.mxu0 %v4559
    %7812 = vmatpush.bf16.msra.mxu0 %v4555
    %7813 = vmatpush.bf16.msra.mxu0 %v4551
    %7814 = vmatmul.bf16.gmra.mxu0 %v267
    %v7815 = vpop.f32.mrf.mxu0
    %v7816 = vadd.f32 %v7803, %v7815
    %v7817 = vpop.f32.mrf.mxu0
    %7818 = vdwg.mxu0
    %7819 = vmatpush.bf16.msra.mxu0 %v4611
    %7820 = vmatpush.bf16.msra.mxu0 %v4607
    %7821 = vmatpush.bf16.msra.mxu0 %v4603
    %7822 = vmatpush.bf16.msra.mxu0 %v4599
    %7823 = vmatpush.bf16.msra.mxu0 %v4595
    %7824 = vmatpush.bf16.msra.mxu0 %v4591
    %7825 = vmatpush.bf16.msra.mxu0 %v4587
    %7826 = vmatpush.bf16.msra.mxu0 %v4583
    %7827 = vmatmul.bf16.gmra.mxu0 %v268
    %v7828 = vpop.f32.mrf.mxu0
    %v7829 = vadd.f32 %v7816, %v7828
    %v7830 = vpop.f32.mrf.mxu0
    %7831 = vdwg.mxu0
    %7832 = vmatpush.bf16.msra.mxu0 %v4643
    %7833 = vmatpush.bf16.msra.mxu0 %v4639
    %7834 = vmatpush.bf16.msra.mxu0 %v4635
    %7835 = vmatpush.bf16.msra.mxu0 %v4631
    %7836 = vmatpush.bf16.msra.mxu0 %v4627
    %7837 = vmatpush.bf16.msra.mxu0 %v4623
    %7838 = vmatpush.bf16.msra.mxu0 %v4619
    %7839 = vmatpush.bf16.msra.mxu0 %v4615
    %7840 = vmatmul.bf16.gmra.mxu0 %v269
    %v7841 = vpop.f32.mrf.mxu0
    %v7842 = vadd.f32 %v7829, %v7841
    %v7843 = vpop.f32.mrf.mxu0
    %7844 = vdwg.mxu0
    %7845 = vmatpush.bf16.msra.mxu0 %v4675
    %7846 = vmatpush.bf16.msra.mxu0 %v4671
    %7847 = vmatpush.bf16.msra.mxu0 %v4667
    %7848 = vmatpush.bf16.msra.mxu0 %v4663
    %7849 = vmatpush.bf16.msra.mxu0 %v4659
    %7850 = vmatpush.bf16.msra.mxu0 %v4655
    %7851 = vmatpush.bf16.msra.mxu0 %v4651
    %7852 = vmatpush.bf16.msra.mxu0 %v4647
    %7853 = vmatmul.bf16.gmra.mxu0 %v270
    %v7854 = vpop.f32.mrf.mxu0
    %v7855 = vadd.f32 %v7842, %v7854
    %v7856 = vpop.f32.mrf.mxu0
    %7857 = vdwg.mxu0
    %7858 = vmatpush.bf16.msra.mxu0 %v4707
    %7859 = vmatpush.bf16.msra.mxu0 %v4703
    %7860 = vmatpush.bf16.msra.mxu0 %v4699
    %7861 = vmatpush.bf16.msra.mxu0 %v4695
    %7862 = vmatpush.bf16.msra.mxu0 %v4691
    %7863 = vmatpush.bf16.msra.mxu0 %v4687
    %7864 = vmatpush.bf16.msra.mxu0 %v4683
    %7865 = vmatpush.bf16.msra.mxu0 %v4679
    %7866 = vmatmul.bf16.gmra.mxu0 %v271
    %v7867 = vpop.f32.mrf.mxu0
    %v7868 = vadd.f32 %v7855, %v7867
    %v7869 = vpop.f32.mrf.mxu0
    %7870 = vdwg.mxu0
    %7871 = vmatpush.bf16.msra.mxu0 %v4739
    %7872 = vmatpush.bf16.msra.mxu0 %v4735
    %7873 = vmatpush.bf16.msra.mxu0 %v4731
    %7874 = vmatpush.bf16.msra.mxu0 %v4727
    %7875 = vmatpush.bf16.msra.mxu0 %v4723
    %7876 = vmatpush.bf16.msra.mxu0 %v4719
    %7877 = vmatpush.bf16.msra.mxu0 %v4715
    %7878 = vmatpush.bf16.msra.mxu0 %v4711
    %7879 = vmatmul.bf16.gmra.mxu0 %v272
    %v7880 = vpop.f32.mrf.mxu0
    %v7881 = vadd.f32 %v7868, %v7880
    %v7882 = vpop.f32.mrf.mxu0
    %7883 = vdwg.mxu0
    %7884 = vmatpush.bf16.msra.mxu0 %v4771
    %7885 = vmatpush.bf16.msra.mxu0 %v4767
    %7886 = vmatpush.bf16.msra.mxu0 %v4763
    %7887 = vmatpush.bf16.msra.mxu0 %v4759
    %7888 = vmatpush.bf16.msra.mxu0 %v4755
    %7889 = vmatpush.bf16.msra.mxu0 %v4751
    %7890 = vmatpush.bf16.msra.mxu0 %v4747
    %7891 = vmatpush.bf16.msra.mxu0 %v4743
    %7892 = vmatmul.bf16.gmra.mxu0 %v273
    %v7893 = vpop.f32.mrf.mxu0
    %v7894 = vadd.f32 %v7881, %v7893
    %v7895 = vpop.f32.mrf.mxu0
    %7896 = vdwg.mxu0
    %7897 = vmatpush.bf16.msra.mxu0 %v4803
    %7898 = vmatpush.bf16.msra.mxu0 %v4799
    %7899 = vmatpush.bf16.msra.mxu0 %v4795
    %7900 = vmatpush.bf16.msra.mxu0 %v4791
    %7901 = vmatpush.bf16.msra.mxu0 %v4787
    %7902 = vmatpush.bf16.msra.mxu0 %v4783
    %7903 = vmatpush.bf16.msra.mxu0 %v4779
    %7904 = vmatpush.bf16.msra.mxu0 %v4775
    %7905 = vmatmul.bf16.gmra.mxu0 %v274
    %v7906 = vpop.f32.mrf.mxu0
    %v7907 = vadd.f32 %v7894, %v7906
    %v7908 = vpop.f32.mrf.mxu0
    %7909 = vdwg.mxu0
    %7910 = vmatpush.bf16.msra.mxu0 %v4835
    %7911 = vmatpush.bf16.msra.mxu0 %v4831
    %7912 = vmatpush.bf16.msra.mxu0 %v4827
    %7913 = vmatpush.bf16.msra.mxu0 %v4823
    %7914 = vmatpush.bf16.msra.mxu0 %v4819
    %7915 = vmatpush.bf16.msra.mxu0 %v4815
    %7916 = vmatpush.bf16.msra.mxu0 %v4811
    %7917 = vmatpush.bf16.msra.mxu0 %v4807
    %7918 = vmatmul.bf16.gmra.mxu0 %v275
    %v7919 = vpop.f32.mrf.mxu0
    %v7920 = vadd.f32 %v7907, %v7919
    %v7921 = vpop.f32.mrf.mxu0
    %7922 = vdwg.mxu0
    %7923 = vmatpush.bf16.msra.mxu0 %v4867
    %7924 = vmatpush.bf16.msra.mxu0 %v4863
    %7925 = vmatpush.bf16.msra.mxu0 %v4859
    %7926 = vmatpush.bf16.msra.mxu0 %v4855
    %7927 = vmatpush.bf16.msra.mxu0 %v4851
    %7928 = vmatpush.bf16.msra.mxu0 %v4847
    %7929 = vmatpush.bf16.msra.mxu0 %v4843
    %7930 = vmatpush.bf16.msra.mxu0 %v4839
    %7931 = vmatmul.bf16.gmra.mxu0 %v276
    %v7932 = vpop.f32.mrf.mxu0
    %v7933 = vadd.f32 %v7920, %v7932
    %v7934 = vpop.f32.mrf.mxu0
    %7935 = vdwg.mxu0
    %7936 = vmatpush.bf16.msra.mxu0 %v4899
    %7937 = vmatpush.bf16.msra.mxu0 %v4895
    %7938 = vmatpush.bf16.msra.mxu0 %v4891
    %7939 = vmatpush.bf16.msra.mxu0 %v4887
    %7940 = vmatpush.bf16.msra.mxu0 %v4883
    %7941 = vmatpush.bf16.msra.mxu0 %v4879
    %7942 = vmatpush.bf16.msra.mxu0 %v4875
    %7943 = vmatpush.bf16.msra.mxu0 %v4871
    %7944 = vmatmul.bf16.gmra.mxu0 %v277
    %v7945 = vpop.f32.mrf.mxu0
    %v7946 = vadd.f32 %v7933, %v7945
    %v7947 = vpop.f32.mrf.mxu0
    %7948 = vdwg.mxu0
    %7949 = vmatpush.bf16.msra.mxu0 %v4931
    %7950 = vmatpush.bf16.msra.mxu0 %v4927
    %7951 = vmatpush.bf16.msra.mxu0 %v4923
    %7952 = vmatpush.bf16.msra.mxu0 %v4919
    %7953 = vmatpush.bf16.msra.mxu0 %v4915
    %7954 = vmatpush.bf16.msra.mxu0 %v4911
    %7955 = vmatpush.bf16.msra.mxu0 %v4907
    %7956 = vmatpush.bf16.msra.mxu0 %v4903
    %7957 = vmatmul.bf16.gmra.mxu0 %v278
    %v7958 = vpop.f32.mrf.mxu0
    %v7959 = vadd.f32 %v7946, %v7958
    %v7960 = vpop.f32.mrf.mxu0
    %7961 = vdwg.mxu0
    %7962 = vmatpush.bf16.msra.mxu0 %v4963
    %7963 = vmatpush.bf16.msra.mxu0 %v4959
    %7964 = vmatpush.bf16.msra.mxu0 %v4955
    %7965 = vmatpush.bf16.msra.mxu0 %v4951
    %7966 = vmatpush.bf16.msra.mxu0 %v4947
    %7967 = vmatpush.bf16.msra.mxu0 %v4943
    %7968 = vmatpush.bf16.msra.mxu0 %v4939
    %7969 = vmatpush.bf16.msra.mxu0 %v4935
    %7970 = vmatmul.bf16.gmra.mxu0 %v279
    %v7971 = vpop.f32.mrf.mxu0
    %v7972 = vadd.f32 %v7959, %v7971
    %v7973 = vpop.f32.mrf.mxu0
    %7974 = vdwg.mxu0
    %7975 = vmatpush.bf16.msra.mxu0 %v4995
    %7976 = vmatpush.bf16.msra.mxu0 %v4991
    %7977 = vmatpush.bf16.msra.mxu0 %v4987
    %7978 = vmatpush.bf16.msra.mxu0 %v4983
    %7979 = vmatpush.bf16.msra.mxu0 %v4979
    %7980 = vmatpush.bf16.msra.mxu0 %v4975
    %7981 = vmatpush.bf16.msra.mxu0 %v4971
    %7982 = vmatpush.bf16.msra.mxu0 %v4967
    %7983 = vmatmul.bf16.gmra.mxu0 %v280
    %v7984 = vpop.f32.mrf.mxu0
    %v7985 = vadd.f32 %v7972, %v7984
    %v7986 = vpop.f32.mrf.mxu0
    %7987 = vdwg.mxu0
    %7988 = vmatpush.bf16.msra.mxu0 %v5027
    %7989 = vmatpush.bf16.msra.mxu0 %v5023
    %7990 = vmatpush.bf16.msra.mxu0 %v5019
    %7991 = vmatpush.bf16.msra.mxu0 %v5015
    %7992 = vmatpush.bf16.msra.mxu0 %v5011
    %7993 = vmatpush.bf16.msra.mxu0 %v5007
    %7994 = vmatpush.bf16.msra.mxu0 %v5003
    %7995 = vmatpush.bf16.msra.mxu0 %v4999
    %7996 = vmatmul.bf16.gmra.mxu0 %v281
    %v7997 = vpop.f32.mrf.mxu0
    %v7998 = vadd.f32 %v7985, %v7997
    %v7999 = vpop.f32.mrf.mxu0
    %8000 = vdwg.mxu0
    %8001 = vmatpush.bf16.msra.mxu0 %v5059
    %8002 = vmatpush.bf16.msra.mxu0 %v5055
    %8003 = vmatpush.bf16.msra.mxu0 %v5051
    %8004 = vmatpush.bf16.msra.mxu0 %v5047
    %8005 = vmatpush.bf16.msra.mxu0 %v5043
    %8006 = vmatpush.bf16.msra.mxu0 %v5039
    %8007 = vmatpush.bf16.msra.mxu0 %v5035
    %8008 = vmatpush.bf16.msra.mxu0 %v5031
    %8009 = vmatmul.bf16.gmra.mxu0 %v282
    %v8010 = vpop.f32.mrf.mxu0
    %v8011 = vadd.f32 %v7998, %v8010
    %v8012 = vpop.f32.mrf.mxu0
    %8013 = vdwg.mxu0
    %8014 = vmatpush.bf16.msra.mxu0 %v5091
    %8015 = vmatpush.bf16.msra.mxu0 %v5087
    %8016 = vmatpush.bf16.msra.mxu0 %v5083
    %8017 = vmatpush.bf16.msra.mxu0 %v5079
    %8018 = vmatpush.bf16.msra.mxu0 %v5075
    %8019 = vmatpush.bf16.msra.mxu0 %v5071
    %8020 = vmatpush.bf16.msra.mxu0 %v5067
    %8021 = vmatpush.bf16.msra.mxu0 %v5063
    %8022 = vmatmul.bf16.gmra.mxu0 %v283
    %v8023 = vpop.f32.mrf.mxu0
    %v8024 = vadd.f32 %v8011, %v8023
    %v8025 = vpop.f32.mrf.mxu0
    %8026 = vdwg.mxu0
    %8027 = vmatpush.bf16.msra.mxu0 %v5123
    %8028 = vmatpush.bf16.msra.mxu0 %v5119
    %8029 = vmatpush.bf16.msra.mxu0 %v5115
    %8030 = vmatpush.bf16.msra.mxu0 %v5111
    %8031 = vmatpush.bf16.msra.mxu0 %v5107
    %8032 = vmatpush.bf16.msra.mxu0 %v5103
    %8033 = vmatpush.bf16.msra.mxu0 %v5099
    %8034 = vmatpush.bf16.msra.mxu0 %v5095
    %8035 = vmatmul.bf16.gmra.mxu0 %v284
    %v8036 = vpop.f32.mrf.mxu0
    %v8037 = vadd.f32 %v8024, %v8036
    %v8038 = vpop.f32.mrf.mxu0
    %8039 = vdwg.mxu0
    %8040 = vmatpush.bf16.msra.mxu0 %v5155
    %8041 = vmatpush.bf16.msra.mxu0 %v5151
    %8042 = vmatpush.bf16.msra.mxu0 %v5147
    %8043 = vmatpush.bf16.msra.mxu0 %v5143
    %8044 = vmatpush.bf16.msra.mxu0 %v5139
    %8045 = vmatpush.bf16.msra.mxu0 %v5135
    %8046 = vmatpush.bf16.msra.mxu0 %v5131
    %8047 = vmatpush.bf16.msra.mxu0 %v5127
    %8048 = vmatmul.bf16.gmra.mxu0 %v285
    %v8049 = vpop.f32.mrf.mxu0
    %v8050 = vadd.f32 %v8037, %v8049
    %v8051 = vpop.f32.mrf.mxu0
    %8052 = vdwg.mxu0
    %8053 = vmatpush.bf16.msra.mxu0 %v5187
    %8054 = vmatpush.bf16.msra.mxu0 %v5183
    %8055 = vmatpush.bf16.msra.mxu0 %v5179
    %8056 = vmatpush.bf16.msra.mxu0 %v5175
    %8057 = vmatpush.bf16.msra.mxu0 %v5171
    %8058 = vmatpush.bf16.msra.mxu0 %v5167
    %8059 = vmatpush.bf16.msra.mxu0 %v5163
    %8060 = vmatpush.bf16.msra.mxu0 %v5159
    %8061 = vmatmul.bf16.gmra.mxu0 %v286
    %v8062 = vpop.f32.mrf.mxu0
    %v8063 = vadd.f32 %v8050, %v8062
    %v8064 = vpop.f32.mrf.mxu0
    %8065 = vdwg.mxu0
    %8066 = vmatpush.bf16.msra.mxu0 %v5219
    %8067 = vmatpush.bf16.msra.mxu0 %v5215
    %8068 = vmatpush.bf16.msra.mxu0 %v5211
    %8069 = vmatpush.bf16.msra.mxu0 %v5207
    %8070 = vmatpush.bf16.msra.mxu0 %v5203
    %8071 = vmatpush.bf16.msra.mxu0 %v5199
    %8072 = vmatpush.bf16.msra.mxu0 %v5195
    %8073 = vmatpush.bf16.msra.mxu0 %v5191
    %8074 = vmatmul.bf16.gmra.mxu0 %v287
    %v8075 = vpop.f32.mrf.mxu0
    %v8076 = vadd.f32 %v8063, %v8075
    %v8077 = vpop.f32.mrf.mxu0
    %8078 = vdwg.mxu0
    %8079 = vmatpush.bf16.msra.mxu0 %v5251
    %8080 = vmatpush.bf16.msra.mxu0 %v5247
    %8081 = vmatpush.bf16.msra.mxu0 %v5243
    %8082 = vmatpush.bf16.msra.mxu0 %v5239
    %8083 = vmatpush.bf16.msra.mxu0 %v5235
    %8084 = vmatpush.bf16.msra.mxu0 %v5231
    %8085 = vmatpush.bf16.msra.mxu0 %v5227
    %8086 = vmatpush.bf16.msra.mxu0 %v5223
    %8087 = vmatmul.bf16.gmra.mxu0 %v288
    %v8088 = vpop.f32.mrf.mxu0
    %v8089 = vadd.f32 %v8076, %v8088
    %v8090 = vpop.f32.mrf.mxu0
    %8091 = vdwg.mxu0
    %8092 = vmatpush.bf16.msra.mxu0 %v5283
    %8093 = vmatpush.bf16.msra.mxu0 %v5279
    %8094 = vmatpush.bf16.msra.mxu0 %v5275
    %8095 = vmatpush.bf16.msra.mxu0 %v5271
    %8096 = vmatpush.bf16.msra.mxu0 %v5267
    %8097 = vmatpush.bf16.msra.mxu0 %v5263
    %8098 = vmatpush.bf16.msra.mxu0 %v5259
    %8099 = vmatpush.bf16.msra.mxu0 %v5255
    %8100 = vmatmul.bf16.gmra.mxu0 %v289
    %v8101 = vpop.f32.mrf.mxu0
    %v8102 = vadd.f32 %v8089, %v8101
    %v8103 = vpop.f32.mrf.mxu0
    %8104 = vdwg.mxu0
    %8105 = vmatpush.bf16.msra.mxu0 %v5315
    %8106 = vmatpush.bf16.msra.mxu0 %v5311
    %8107 = vmatpush.bf16.msra.mxu0 %v5307
    %8108 = vmatpush.bf16.msra.mxu0 %v5303
    %8109 = vmatpush.bf16.msra.mxu0 %v5299
    %8110 = vmatpush.bf16.msra.mxu0 %v5295
    %8111 = vmatpush.bf16.msra.mxu0 %v5291
    %8112 = vmatpush.bf16.msra.mxu0 %v5287
    %8113 = vmatmul.bf16.gmra.mxu0 %v290
    %v8114 = vpop.f32.mrf.mxu0
    %v8115 = vadd.f32 %v8102, %v8114
    %v8116 = vpop.f32.mrf.mxu0
    %8117 = vdwg.mxu0
    %8118 = vmatpush.bf16.msra.mxu0 %v5347
    %8119 = vmatpush.bf16.msra.mxu0 %v5343
    %8120 = vmatpush.bf16.msra.mxu0 %v5339
    %8121 = vmatpush.bf16.msra.mxu0 %v5335
    %8122 = vmatpush.bf16.msra.mxu0 %v5331
    %8123 = vmatpush.bf16.msra.mxu0 %v5327
    %8124 = vmatpush.bf16.msra.mxu0 %v5323
    %8125 = vmatpush.bf16.msra.mxu0 %v5319
    %8126 = vmatmul.bf16.gmra.mxu0 %v291
    %v8127 = vpop.f32.mrf.mxu0
    %v8128 = vadd.f32 %v8115, %v8127
    %v8129 = vpop.f32.mrf.mxu0
    %8130 = vdwg.mxu0
    %8131 = vmatpush.bf16.msra.mxu0 %v5379
    %8132 = vmatpush.bf16.msra.mxu0 %v5375
    %8133 = vmatpush.bf16.msra.mxu0 %v5371
    %8134 = vmatpush.bf16.msra.mxu0 %v5367
    %8135 = vmatpush.bf16.msra.mxu0 %v5363
    %8136 = vmatpush.bf16.msra.mxu0 %v5359
    %8137 = vmatpush.bf16.msra.mxu0 %v5355
    %8138 = vmatpush.bf16.msra.mxu0 %v5351
    %8139 = vmatmul.bf16.gmra.mxu0 %v292
    %v8140 = vpop.f32.mrf.mxu0
    %v8141 = vadd.f32 %v8128, %v8140
    %v8142 = vpop.f32.mrf.mxu0
    %8143 = vdwg.mxu0
    %8144 = vmatpush.bf16.msra.mxu0 %v5411
    %8145 = vmatpush.bf16.msra.mxu0 %v5407
    %8146 = vmatpush.bf16.msra.mxu0 %v5403
    %8147 = vmatpush.bf16.msra.mxu0 %v5399
    %8148 = vmatpush.bf16.msra.mxu0 %v5395
    %8149 = vmatpush.bf16.msra.mxu0 %v5391
    %8150 = vmatpush.bf16.msra.mxu0 %v5387
    %8151 = vmatpush.bf16.msra.mxu0 %v5383
    %8152 = vmatmul.bf16.gmra.mxu0 %v293
    %v8153 = vpop.f32.mrf.mxu0
    %v8154 = vadd.f32 %v8141, %v8153
    %v8155 = vpop.f32.mrf.mxu0
    %8156 = vdwg.mxu0
    %8157 = vmatpush.bf16.msra.mxu0 %v5443
    %8158 = vmatpush.bf16.msra.mxu0 %v5439
    %8159 = vmatpush.bf16.msra.mxu0 %v5435
    %8160 = vmatpush.bf16.msra.mxu0 %v5431
    %8161 = vmatpush.bf16.msra.mxu0 %v5427
    %8162 = vmatpush.bf16.msra.mxu0 %v5423
    %8163 = vmatpush.bf16.msra.mxu0 %v5419
    %8164 = vmatpush.bf16.msra.mxu0 %v5415
    %8165 = vmatmul.bf16.gmra.mxu0 %v294
    %v8166 = vpop.f32.mrf.mxu0
    %v8167 = vadd.f32 %v8154, %v8166
    %v8168 = vpop.f32.mrf.mxu0
    %8169 = vdwg.mxu0
    %8170 = vmatpush.bf16.msra.mxu0 %v5475
    %8171 = vmatpush.bf16.msra.mxu0 %v5471
    %8172 = vmatpush.bf16.msra.mxu0 %v5467
    %8173 = vmatpush.bf16.msra.mxu0 %v5463
    %8174 = vmatpush.bf16.msra.mxu0 %v5459
    %8175 = vmatpush.bf16.msra.mxu0 %v5455
    %8176 = vmatpush.bf16.msra.mxu0 %v5451
    %8177 = vmatpush.bf16.msra.mxu0 %v5447
    %8178 = vmatmul.bf16.gmra.mxu0 %v295
    %v8179 = vpop.f32.mrf.mxu0
    %v8180 = vadd.f32 %v8167, %v8179
    %v8181 = vpop.f32.mrf.mxu0
    %8182 = vdwg.mxu0
    %8183 = vmatpush.bf16.msra.mxu0 %v5507
    %8184 = vmatpush.bf16.msra.mxu0 %v5503
    %8185 = vmatpush.bf16.msra.mxu0 %v5499
    %8186 = vmatpush.bf16.msra.mxu0 %v5495
    %8187 = vmatpush.bf16.msra.mxu0 %v5491
    %8188 = vmatpush.bf16.msra.mxu0 %v5487
    %8189 = vmatpush.bf16.msra.mxu0 %v5483
    %8190 = vmatpush.bf16.msra.mxu0 %v5479
    %8191 = vmatmul.bf16.gmra.mxu0 %v296
    %v8192 = vpop.f32.mrf.mxu0
    %v8193 = vadd.f32 %v8180, %v8192
    %v8194 = vpop.f32.mrf.mxu0
    %8195 = vdwg.mxu0
    %v8196 = vld [vmem:[#allocation10] sm:$0xf]
    %v8198 = vperm.slane %v8196, 0
    %v8199 = vperm.slane %v8196, 1
    %v8200 = vperm.slane %v8196, 2
    %v8201 = vperm.slane %v8196, 3
    %v8206 = vadd.f32 %v6945, %v8198
    %v8207 = vadd.f32 %v7361, %v8199
    %v8208 = vadd.f32 %v7777, %v8200
    %v8209 = vadd.f32 %v8193, %v8201
    %vm8210 = vcmp.gt.f32.partialorder %v8206, 0.0
    %vm8211 = vcmp.gt.f32.partialorder %v8207, 0.0
    %vm8212 = vcmp.gt.f32.partialorder %v8208, 0.0
    %vm8213 = vcmp.gt.f32.partialorder %v8209, 0.0
    %v8214 = vmul.f32 %v8206, 0.2
    %v8215 = vmul.f32 %v8207, 0.2
    %v8216 = vmul.f32 %v8208, 0.2
    %v8217 = vmul.f32 %v8209, 0.2
    %v8218 = vsel %vm8210, %v8206, %v8214
    %v8219 = vsel %vm8211, %v8207, %v8215
    %v8220 = vsel %vm8212, %v8208, %v8216
    %v8221 = vsel %vm8213, %v8209, %v8217
    %v8222 = vpack.c.bf16 %v8218, %v8218
    %v8223 = vpack.c.bf16 %v8219, %v8219
    %v8224 = vpack.c.bf16 %v8220, %v8220
    %v8225 = vpack.c.bf16 %v8221, %v8221
    %v8226 = vld [vmem:[#allocation11] sm:$0xff]
    %v8227 = vld [vmem:[#allocation11 + $0x8] sm:$0xff]
    %v8228 = vld [vmem:[#allocation11 + $0x10] sm:$0xff]
    %v8229 = vld [vmem:[#allocation11 + $0x18] sm:$0xff]
    %v8230 = vld [vmem:[#allocation11 + $0x20] sm:$0xff]
    %v8231 = vld [vmem:[#allocation11 + $0x28] sm:$0xff]
    %v8232 = vld [vmem:[#allocation11 + $0x30] sm:$0xff]
    %v8233 = vld [vmem:[#allocation11 + $0x38] sm:$0xff]
    %v8234 = vld [vmem:[#allocation11 + $0x40] sm:$0xff]
    %v8235 = vld [vmem:[#allocation11 + $0x48] sm:$0xff]
    %v8236 = vld [vmem:[#allocation11 + $0x50] sm:$0xff]
    %v8237 = vld [vmem:[#allocation11 + $0x58] sm:$0xff]
    %v8238 = vld [vmem:[#allocation11 + $0x60] sm:$0xff]
    %v8239 = vld [vmem:[#allocation11 + $0x68] sm:$0xff]
    %v8240 = vld [vmem:[#allocation11 + $0x70] sm:$0xff]
    %v8241 = vld [vmem:[#allocation11 + $0x78] sm:$0xff]
    %v8242 = vld [vmem:[#allocation11 + $0x80] sm:$0xff]
    %v8243 = vld [vmem:[#allocation11 + $0x88] sm:$0xff]
    %v8244 = vld [vmem:[#allocation11 + $0x90] sm:$0xff]
    %v8245 = vld [vmem:[#allocation11 + $0x98] sm:$0xff]
    %v8246 = vld [vmem:[#allocation11 + $0xa0] sm:$0xff]
    %v8247 = vld [vmem:[#allocation11 + $0xa8] sm:$0xff]
    %v8248 = vld [vmem:[#allocation11 + $0xb0] sm:$0xff]
    %v8249 = vld [vmem:[#allocation11 + $0xb8] sm:$0xff]
    %v8250 = vld [vmem:[#allocation11 + $0xc0] sm:$0xff]
    %v8251 = vld [vmem:[#allocation11 + $0xc8] sm:$0xff]
    %v8252 = vld [vmem:[#allocation11 + $0xd0] sm:$0xff]
    %v8253 = vld [vmem:[#allocation11 + $0xd8] sm:$0xff]
    %v8254 = vld [vmem:[#allocation11 + $0xe0] sm:$0xff]
    %v8255 = vld [vmem:[#allocation11 + $0xe8] sm:$0xff]
    %v8256 = vld [vmem:[#allocation11 + $0xf0] sm:$0xff]
    %v8257 = vld [vmem:[#allocation11 + $0xf8] sm:$0xff]
    %v8258 = vld [vmem:[#allocation11 + $0x100] sm:$0xff]
    %v8259 = vld [vmem:[#allocation11 + $0x108] sm:$0xff]
    %v8260 = vld [vmem:[#allocation11 + $0x110] sm:$0xff]
    %v8261 = vld [vmem:[#allocation11 + $0x118] sm:$0xff]
    %v8262 = vld [vmem:[#allocation11 + $0x120] sm:$0xff]
    %v8263 = vld [vmem:[#allocation11 + $0x128] sm:$0xff]
    %v8264 = vld [vmem:[#allocation11 + $0x130] sm:$0xff]
    %v8265 = vld [vmem:[#allocation11 + $0x138] sm:$0xff]
    %v8266 = vld [vmem:[#allocation11 + $0x140] sm:$0xff]
    %v8267 = vld [vmem:[#allocation11 + $0x148] sm:$0xff]
    %v8268 = vld [vmem:[#allocation11 + $0x150] sm:$0xff]
    %v8269 = vld [vmem:[#allocation11 + $0x158] sm:$0xff]
    %v8270 = vld [vmem:[#allocation11 + $0x160] sm:$0xff]
    %v8271 = vld [vmem:[#allocation11 + $0x168] sm:$0xff]
    %v8272 = vld [vmem:[#allocation11 + $0x170] sm:$0xff]
    %v8273 = vld [vmem:[#allocation11 + $0x178] sm:$0xff]
    %v8274 = vld [vmem:[#allocation11 + $0x180] sm:$0xff]
    %v8275 = vld [vmem:[#allocation11 + $0x188] sm:$0xff]
    %v8276 = vld [vmem:[#allocation11 + $0x190] sm:$0xff]
    %v8277 = vld [vmem:[#allocation11 + $0x198] sm:$0xff]
    %v8278 = vld [vmem:[#allocation11 + $0x1a0] sm:$0xff]
    %v8279 = vld [vmem:[#allocation11 + $0x1a8] sm:$0xff]
    %v8280 = vld [vmem:[#allocation11 + $0x1b0] sm:$0xff]
    %v8281 = vld [vmem:[#allocation11 + $0x1b8] sm:$0xff]
    %v8282 = vld [vmem:[#allocation11 + $0x1c0] sm:$0xff]
    %v8283 = vld [vmem:[#allocation11 + $0x1c8] sm:$0xff]
    %v8284 = vld [vmem:[#allocation11 + $0x1d0] sm:$0xff]
    %v8285 = vld [vmem:[#allocation11 + $0x1d8] sm:$0xff]
    %v8286 = vld [vmem:[#allocation11 + $0x1e0] sm:$0xff]
    %v8287 = vld [vmem:[#allocation11 + $0x1e8] sm:$0xff]
    %v8288 = vld [vmem:[#allocation11 + $0x1f0] sm:$0xff]
    %v8289 = vld [vmem:[#allocation11 + $0x1f8] sm:$0xff]
    %v8290 = vld [vmem:[#allocation13] sm:$0x3]
    %v8292 = vperm.slane %v8290, 0
    %v8293 = vperm.slane %v8290, 1
    %v8360 = vunpack.c.l.b16 %v8226
    %v8361 = vunpack.c.h.b16 %v8226
    %v8362 = vunpack.c.l.b16 %v8227
    %v8363 = vunpack.c.h.b16 %v8227
    %v8364 = vunpack.c.l.b16 %v8228
    %v8365 = vunpack.c.h.b16 %v8228
    %v8366 = vunpack.c.l.b16 %v8229
    %v8367 = vunpack.c.h.b16 %v8229
    %v8368 = vunpack.c.l.b16 %v8230
    %v8369 = vunpack.c.h.b16 %v8230
    %v8370 = vunpack.c.l.b16 %v8231
    %v8371 = vunpack.c.h.b16 %v8231
    %v8372 = vunpack.c.l.b16 %v8232
    %v8373 = vunpack.c.h.b16 %v8232
    %v8374 = vunpack.c.l.b16 %v8233
    %v8375 = vunpack.c.h.b16 %v8233
    %v8376 = vunpack.c.l.b16 %v8234
    %v8377 = vunpack.c.h.b16 %v8234
    %v8378 = vunpack.c.l.b16 %v8235
    %v8379 = vunpack.c.h.b16 %v8235
    %v8380 = vunpack.c.l.b16 %v8236
    %v8381 = vunpack.c.h.b16 %v8236
    %v8382 = vunpack.c.l.b16 %v8237
    %v8383 = vunpack.c.h.b16 %v8237
    %v8384 = vunpack.c.l.b16 %v8238
    %v8385 = vunpack.c.h.b16 %v8238
    %v8386 = vunpack.c.l.b16 %v8239
    %v8387 = vunpack.c.h.b16 %v8239
    %v8388 = vunpack.c.l.b16 %v8240
    %v8389 = vunpack.c.h.b16 %v8240
    %v8390 = vunpack.c.l.b16 %v8241
    %v8391 = vunpack.c.h.b16 %v8241
    %v8392 = vunpack.c.l.b16 %v8242
    %v8393 = vunpack.c.h.b16 %v8242
    %v8394 = vunpack.c.l.b16 %v8243
    %v8395 = vunpack.c.h.b16 %v8243
    %v8396 = vunpack.c.l.b16 %v8244
    %v8397 = vunpack.c.h.b16 %v8244
    %v8398 = vunpack.c.l.b16 %v8245
    %v8399 = vunpack.c.h.b16 %v8245
    %v8400 = vunpack.c.l.b16 %v8246
    %v8401 = vunpack.c.h.b16 %v8246
    %v8402 = vunpack.c.l.b16 %v8247
    %v8403 = vunpack.c.h.b16 %v8247
    %v8404 = vunpack.c.l.b16 %v8248
    %v8405 = vunpack.c.h.b16 %v8248
    %v8406 = vunpack.c.l.b16 %v8249
    %v8407 = vunpack.c.h.b16 %v8249
    %v8408 = vunpack.c.l.b16 %v8250
    %v8409 = vunpack.c.h.b16 %v8250
    %v8410 = vunpack.c.l.b16 %v8251
    %v8411 = vunpack.c.h.b16 %v8251
    %v8412 = vunpack.c.l.b16 %v8252
    %v8413 = vunpack.c.h.b16 %v8252
    %v8414 = vunpack.c.l.b16 %v8253
    %v8415 = vunpack.c.h.b16 %v8253
    %v8416 = vunpack.c.l.b16 %v8254
    %v8417 = vunpack.c.h.b16 %v8254
    %v8418 = vunpack.c.l.b16 %v8255
    %v8419 = vunpack.c.h.b16 %v8255
    %v8420 = vunpack.c.l.b16 %v8256
    %v8421 = vunpack.c.h.b16 %v8256
    %v8422 = vunpack.c.l.b16 %v8257
    %v8423 = vunpack.c.h.b16 %v8257
    %v8424 = vunpack.c.l.b16 %v8258
    %v8425 = vunpack.c.h.b16 %v8258
    %v8426 = vunpack.c.l.b16 %v8259
    %v8427 = vunpack.c.h.b16 %v8259
    %v8428 = vunpack.c.l.b16 %v8260
    %v8429 = vunpack.c.h.b16 %v8260
    %v8430 = vunpack.c.l.b16 %v8261
    %v8431 = vunpack.c.h.b16 %v8261
    %v8432 = vunpack.c.l.b16 %v8262
    %v8433 = vunpack.c.h.b16 %v8262
    %v8434 = vunpack.c.l.b16 %v8263
    %v8435 = vunpack.c.h.b16 %v8263
    %v8436 = vunpack.c.l.b16 %v8264
    %v8437 = vunpack.c.h.b16 %v8264
    %v8438 = vunpack.c.l.b16 %v8265
    %v8439 = vunpack.c.h.b16 %v8265
    %v8440 = vunpack.c.l.b16 %v8266
    %v8441 = vunpack.c.h.b16 %v8266
    %v8442 = vunpack.c.l.b16 %v8267
    %v8443 = vunpack.c.h.b16 %v8267
    %v8444 = vunpack.c.l.b16 %v8268
    %v8445 = vunpack.c.h.b16 %v8268
    %v8446 = vunpack.c.l.b16 %v8269
    %v8447 = vunpack.c.h.b16 %v8269
    %v8448 = vunpack.c.l.b16 %v8270
    %v8449 = vunpack.c.h.b16 %v8270
    %v8450 = vunpack.c.l.b16 %v8271
    %v8451 = vunpack.c.h.b16 %v8271
    %v8452 = vunpack.c.l.b16 %v8272
    %v8453 = vunpack.c.h.b16 %v8272
    %v8454 = vunpack.c.l.b16 %v8273
    %v8455 = vunpack.c.h.b16 %v8273
    %v8456 = vunpack.c.l.b16 %v8274
    %v8457 = vunpack.c.h.b16 %v8274
    %v8458 = vunpack.c.l.b16 %v8275
    %v8459 = vunpack.c.h.b16 %v8275
    %v8460 = vunpack.c.l.b16 %v8276
    %v8461 = vunpack.c.h.b16 %v8276
    %v8462 = vunpack.c.l.b16 %v8277
    %v8463 = vunpack.c.h.b16 %v8277
    %v8464 = vunpack.c.l.b16 %v8278
    %v8465 = vunpack.c.h.b16 %v8278
    %v8466 = vunpack.c.l.b16 %v8279
    %v8467 = vunpack.c.h.b16 %v8279
    %v8468 = vunpack.c.l.b16 %v8280
    %v8469 = vunpack.c.h.b16 %v8280
    %v8470 = vunpack.c.l.b16 %v8281
    %v8471 = vunpack.c.h.b16 %v8281
    %v8472 = vunpack.c.l.b16 %v8282
    %v8473 = vunpack.c.h.b16 %v8282
    %v8474 = vunpack.c.l.b16 %v8283
    %v8475 = vunpack.c.h.b16 %v8283
    %v8476 = vunpack.c.l.b16 %v8284
    %v8477 = vunpack.c.h.b16 %v8284
    %v8478 = vunpack.c.l.b16 %v8285
    %v8479 = vunpack.c.h.b16 %v8285
    %v8480 = vunpack.c.l.b16 %v8286
    %v8481 = vunpack.c.h.b16 %v8286
    %v8482 = vunpack.c.l.b16 %v8287
    %v8483 = vunpack.c.h.b16 %v8287
    %v8484 = vunpack.c.l.b16 %v8288
    %v8485 = vunpack.c.h.b16 %v8288
    %v8486 = vunpack.c.l.b16 %v8289
    %v8487 = vunpack.c.h.b16 %v8289
    %v8488 = vpack.c.b16 %v8362, %v8360
    %v8489 = vpack.c.b16 %v8363, %v8361
    %v8490 = vpack.c.b16 %v8366, %v8364
    %v8491 = vpack.c.b16 %v8367, %v8365
    %v8492 = vpack.c.b16 %v8370, %v8368
    %v8493 = vpack.c.b16 %v8371, %v8369
    %v8494 = vpack.c.b16 %v8374, %v8372
    %v8495 = vpack.c.b16 %v8375, %v8373
    %v8496 = vpack.c.b16 %v8378, %v8376
    %v8497 = vpack.c.b16 %v8379, %v8377
    %v8498 = vpack.c.b16 %v8382, %v8380
    %v8499 = vpack.c.b16 %v8383, %v8381
    %v8500 = vpack.c.b16 %v8386, %v8384
    %v8501 = vpack.c.b16 %v8387, %v8385
    %v8502 = vpack.c.b16 %v8390, %v8388
    %v8503 = vpack.c.b16 %v8391, %v8389
    %v8504 = vpack.c.b16 %v8394, %v8392
    %v8505 = vpack.c.b16 %v8395, %v8393
    %v8506 = vpack.c.b16 %v8398, %v8396
    %v8507 = vpack.c.b16 %v8399, %v8397
    %v8508 = vpack.c.b16 %v8402, %v8400
    %v8509 = vpack.c.b16 %v8403, %v8401
    %v8510 = vpack.c.b16 %v8406, %v8404
    %v8511 = vpack.c.b16 %v8407, %v8405
    %v8512 = vpack.c.b16 %v8410, %v8408
    %v8513 = vpack.c.b16 %v8411, %v8409
    %v8514 = vpack.c.b16 %v8414, %v8412
    %v8515 = vpack.c.b16 %v8415, %v8413
    %v8516 = vpack.c.b16 %v8418, %v8416
    %v8517 = vpack.c.b16 %v8419, %v8417
    %v8518 = vpack.c.b16 %v8422, %v8420
    %v8519 = vpack.c.b16 %v8423, %v8421
    %v8520 = vpack.c.b16 %v8426, %v8424
    %v8521 = vpack.c.b16 %v8427, %v8425
    %v8522 = vpack.c.b16 %v8430, %v8428
    %v8523 = vpack.c.b16 %v8431, %v8429
    %v8524 = vpack.c.b16 %v8434, %v8432
    %v8525 = vpack.c.b16 %v8435, %v8433
    %v8526 = vpack.c.b16 %v8438, %v8436
    %v8527 = vpack.c.b16 %v8439, %v8437
    %v8528 = vpack.c.b16 %v8442, %v8440
    %v8529 = vpack.c.b16 %v8443, %v8441
    %v8530 = vpack.c.b16 %v8446, %v8444
    %v8531 = vpack.c.b16 %v8447, %v8445
    %v8532 = vpack.c.b16 %v8450, %v8448
    %v8533 = vpack.c.b16 %v8451, %v8449
    %v8534 = vpack.c.b16 %v8454, %v8452
    %v8535 = vpack.c.b16 %v8455, %v8453
    %v8536 = vpack.c.b16 %v8458, %v8456
    %v8537 = vpack.c.b16 %v8459, %v8457
    %v8538 = vpack.c.b16 %v8462, %v8460
    %v8539 = vpack.c.b16 %v8463, %v8461
    %v8540 = vpack.c.b16 %v8466, %v8464
    %v8541 = vpack.c.b16 %v8467, %v8465
    %v8542 = vpack.c.b16 %v8470, %v8468
    %v8543 = vpack.c.b16 %v8471, %v8469
    %v8544 = vpack.c.b16 %v8474, %v8472
    %v8545 = vpack.c.b16 %v8475, %v8473
    %v8546 = vpack.c.b16 %v8478, %v8476
    %v8547 = vpack.c.b16 %v8479, %v8477
    %v8548 = vpack.c.b16 %v8482, %v8480
    %v8549 = vpack.c.b16 %v8483, %v8481
    %v8550 = vpack.c.b16 %v8486, %v8484
    %v8551 = vpack.c.b16 %v8487, %v8485
    %8616 = vmatpush.bf16.msra.mxu0 %v8502
    %8617 = vmatpush.bf16.msra.mxu0 %v8500
    %8618 = vmatpush.bf16.msra.mxu0 %v8498
    %8619 = vmatpush.bf16.msra.mxu0 %v8496
    %8620 = vmatpush.bf16.msra.mxu0 %v8494
    %8621 = vmatpush.bf16.msra.mxu0 %v8492
    %8622 = vmatpush.bf16.msra.mxu0 %v8490
    %8623 = vmatpush.bf16.msra.mxu0 %v8488
    %8624 = vmatmul.bf16.gmra.mxu0 %v8222
    %v8625 = vpop.f32.mrf.mxu0
    %v8626 = vadd.f32 %v8292, %v8625
    %v8627 = vpop.f32.mrf.mxu0
    %8628 = vdwg.mxu0
    %8629 = vmatpush.bf16.msra.mxu0 %v8518
    %8630 = vmatpush.bf16.msra.mxu0 %v8516
    %8631 = vmatpush.bf16.msra.mxu0 %v8514
    %8632 = vmatpush.bf16.msra.mxu0 %v8512
    %8633 = vmatpush.bf16.msra.mxu0 %v8510
    %8634 = vmatpush.bf16.msra.mxu0 %v8508
    %8635 = vmatpush.bf16.msra.mxu0 %v8506
    %8636 = vmatpush.bf16.msra.mxu0 %v8504
    %8637 = vmatmul.bf16.gmra.mxu0 %v8223
    %v8638 = vpop.f32.mrf.mxu0
    %v8639 = vadd.f32 %v8626, %v8638
    %v8640 = vpop.f32.mrf.mxu0
    %8641 = vdwg.mxu0
    %8642 = vmatpush.bf16.msra.mxu0 %v8534
    %8643 = vmatpush.bf16.msra.mxu0 %v8532
    %8644 = vmatpush.bf16.msra.mxu0 %v8530
    %8645 = vmatpush.bf16.msra.mxu0 %v8528
    %8646 = vmatpush.bf16.msra.mxu0 %v8526
    %8647 = vmatpush.bf16.msra.mxu0 %v8524
    %8648 = vmatpush.bf16.msra.mxu0 %v8522
    %8649 = vmatpush.bf16.msra.mxu0 %v8520
    %8650 = vmatmul.bf16.gmra.mxu0 %v8224
    %v8651 = vpop.f32.mrf.mxu0
    %v8652 = vadd.f32 %v8639, %v8651
    %v8653 = vpop.f32.mrf.mxu0
    %8654 = vdwg.mxu0
    %8655 = vmatpush.bf16.msra.mxu0 %v8550
    %8656 = vmatpush.bf16.msra.mxu0 %v8548
    %8657 = vmatpush.bf16.msra.mxu0 %v8546
    %8658 = vmatpush.bf16.msra.mxu0 %v8544
    %8659 = vmatpush.bf16.msra.mxu0 %v8542
    %8660 = vmatpush.bf16.msra.mxu0 %v8540
    %8661 = vmatpush.bf16.msra.mxu0 %v8538
    %8662 = vmatpush.bf16.msra.mxu0 %v8536
    %8663 = vmatmul.bf16.gmra.mxu0 %v8225
    %v8664 = vpop.f32.mrf.mxu0
    %v8665 = vadd.f32 %v8652, %v8664
    %v8666 = vpop.f32.mrf.mxu0
    %8667 = vdwg.mxu0
    %8668 = vmatpush.bf16.msra.mxu0 %v8503
    %8669 = vmatpush.bf16.msra.mxu0 %v8501
    %8670 = vmatpush.bf16.msra.mxu0 %v8499
    %8671 = vmatpush.bf16.msra.mxu0 %v8497
    %8672 = vmatpush.bf16.msra.mxu0 %v8495
    %8673 = vmatpush.bf16.msra.mxu0 %v8493
    %8674 = vmatpush.bf16.msra.mxu0 %v8491
    %8675 = vmatpush.bf16.msra.mxu0 %v8489
    %8676 = vmatmul.bf16.gmra.mxu0 %v8222
    %v8677 = vpop.f32.mrf.mxu0
    %v8678 = vadd.f32 %v8293, %v8677
    %v8679 = vpop.f32.mrf.mxu0
    %8680 = vdwg.mxu0
    %8681 = vmatpush.bf16.msra.mxu0 %v8519
    %8682 = vmatpush.bf16.msra.mxu0 %v8517
    %8683 = vmatpush.bf16.msra.mxu0 %v8515
    %8684 = vmatpush.bf16.msra.mxu0 %v8513
    %8685 = vmatpush.bf16.msra.mxu0 %v8511
    %8686 = vmatpush.bf16.msra.mxu0 %v8509
    %8687 = vmatpush.bf16.msra.mxu0 %v8507
    %8688 = vmatpush.bf16.msra.mxu0 %v8505
    %8689 = vmatmul.bf16.gmra.mxu0 %v8223
    %v8690 = vpop.f32.mrf.mxu0
    %v8691 = vadd.f32 %v8678, %v8690
    %v8692 = vpop.f32.mrf.mxu0
    %8693 = vdwg.mxu0
    %8694 = vmatpush.bf16.msra.mxu0 %v8535
    %8695 = vmatpush.bf16.msra.mxu0 %v8533
    %8696 = vmatpush.bf16.msra.mxu0 %v8531
    %8697 = vmatpush.bf16.msra.mxu0 %v8529
    %8698 = vmatpush.bf16.msra.mxu0 %v8527
    %8699 = vmatpush.bf16.msra.mxu0 %v8525
    %8700 = vmatpush.bf16.msra.mxu0 %v8523
    %8701 = vmatpush.bf16.msra.mxu0 %v8521
    %8702 = vmatmul.bf16.gmra.mxu0 %v8224
    %v8703 = vpop.f32.mrf.mxu0
    %v8704 = vadd.f32 %v8691, %v8703
    %v8705 = vpop.f32.mrf.mxu0
    %8706 = vdwg.mxu0
    %8707 = vmatpush.bf16.msra.mxu0 %v8551
    %8708 = vmatpush.bf16.msra.mxu0 %v8549
    %8709 = vmatpush.bf16.msra.mxu0 %v8547
    %8710 = vmatpush.bf16.msra.mxu0 %v8545
    %8711 = vmatpush.bf16.msra.mxu0 %v8543
    %8712 = vmatpush.bf16.msra.mxu0 %v8541
    %8713 = vmatpush.bf16.msra.mxu0 %v8539
    %8714 = vmatpush.bf16.msra.mxu0 %v8537
    %8715 = vmatmul.bf16.gmra.mxu0 %v8225
    %v8716 = vpop.f32.mrf.mxu0
    %v8717 = vadd.f32 %v8704, %v8716
    %v8718 = vpop.f32.mrf.mxu0
    %8719 = vdwg.mxu0
    %vm8720 = vcmp.gt.f32.partialorder %v8665, 0.0
    %vm8721 = vcmp.gt.f32.partialorder %v8717, 0.0
    %v8722 = vmul.f32 %v8665, 0.2
    %v8723 = vmul.f32 %v8717, 0.2
    %v8724 = vsel %vm8720, %v8665, %v8722
    %v8725 = vsel %vm8721, %v8717, %v8723
    %v8726 = vld [vmem:[#allocation14] sm:$0x3]
    %v8728 = vperm.slane %v8726, 0
    %v8729 = vperm.slane %v8726, 1
    %v8732 = vmul.f32 %v8724, %v8728
    %v8733 = vmul.f32 %v8725, %v8729
    %vm8734 = vcmask 1043456
    %v8735 = vsel %vm8734, %v8732, 0.0
    %v8736 = vsel %vm8734, %v8733, 0.0
    %v8737 = vadd.f32 %v8735, %v8736
    %8738 = vadd.xlane.f32.xlu0 %v8737
    %v8739 = vpop.xlane.xlu0 %8738
    %v8740 = vld [vmem:[#allocation2] sm:$0x1]
    %v8742 = vperm.slane %v8740, 0
    %v8744 = vadd.f32 %v8739, %v8742
    %v8745 = vsub.f32 0.0, %v8744
    %v8746 = vmul.f32 %v8745, 1.442695
    %v8747 = vpow.pop %v8746
    %v8748 = vadd.f32 %v8747, 1.0
    %v8749 = vrcp.pop %v8748
    %vm8750 = vcmask 3072
    %8751 = vst.msk [vmem:[%s9] sm:$0xf] %vm8750, %v8749
    // Predicated region
    $region70: #{tpu_custom_call.1} parent=1 // pred_check
      _
    $region71: #{tpu_custom_call.1} parent=1 // pred_check_branch
      %8753 = sbr.rel (0) target = $region73
    $region72: #{tpu_custom_call.1} parent=1 // pred_region
      _
    $region73: #{tpu_custom_call.1} parent=1 // pred_fallthru
      _
    // Predicated region
    $region74: #{tpu_custom_call.1} parent=1 // pred_check
      _
    $region75: #{tpu_custom_call.1} parent=1 // pred_check_branch
      %8755 = sbr.rel (0) target = $region77
    $region76: #{tpu_custom_call.1} parent=1 // pred_region
      _
    $region77: #{tpu_custom_call.1} parent=1 // pred_fallthru
      _
    %8756 = vsyncpa [#allocation4], 1
    %8757 = vsyncpa [#allocation6], 1
    %8758 = vsyncpa [#allocation9], 1
    %8759 = vsyncpa [#allocation12], 1
    %8760 = vsyncpa [#allocation15], 1

</llo_original>
